<compile_context>
chip_gen: v5e
topology: v5e:2x2
jax: 0.10.0
libtpu: 0.0.40
codegen_flags: <defaults>
</compile_context>

<pallas_src>
import math
import functools

import jax
import jax.numpy as jnp
from jax.experimental import pallas as pl
from jax.experimental.pallas import tpu as pltpu


# ----------------------------------------------------------------------------- #
# In-kernel helpers (operate on VMEM values, all f32 stats / bf16 matmul operands)
# ----------------------------------------------------------------------------- #
def _layer_norm_f32(y, g, b, eps=1e-5):
    mu = jnp.mean(y, axis=-1, keepdims=True)
    var = jnp.mean((y - mu) ** 2, axis=-1, keepdims=True)
    return (y - mu) * jax.lax.rsqrt(var + eps) * g + b


def _mha_residual_ln(x_bf, x_f32, kv_bf,
                     wq, bq, wk, bk, wv, bv, wo, bo, g, beta,
                     *, B, Sq, Sk, nhead, causal):
    """Multi-head attention + residual + post-LayerNorm.

    x_bf/kv_bf: (B*Sq, D)/(B*Sk, D) bf16 matmul operands; x_f32: residual source (f32).
    Returns (B*Sq, D) f32.
    """
    D = x_bf.shape[-1]
    hd = D // nhead
    scale = 1.0 / math.sqrt(hd)
    f32 = jnp.float32

    # merged full-D projections (one MXU dot each, batch folded into rows)
    q = (jnp.dot(x_bf, wq, preferred_element_type=f32) + bq).astype(jnp.bfloat16)
    k = (jnp.dot(kv_bf, wk, preferred_element_type=f32) + bk).astype(jnp.bfloat16)
    v = (jnp.dot(kv_bf, wv, preferred_element_type=f32) + bv).astype(jnp.bfloat16)

    if causal:
        row = jax.lax.broadcasted_iota(jnp.int32, (Sq, Sk), 0)
        col = jax.lax.broadcasted_iota(jnp.int32, (Sq, Sk), 1)
        neg = jnp.where(col > row, -1e9, 0.0).astype(f32)   # finite mask, hoisted

    batch_outs = []
    for b in range(B):                       # static unroll; B is tiny
        qb = q[b * Sq:(b + 1) * Sq, :]
        kb = k[b * Sk:(b + 1) * Sk, :]
        vb = v[b * Sk:(b + 1) * Sk, :]
        head_outs = []
        for h in range(nhead):               # static unroll; per-head score matmuls
            qh = qb[:, h * hd:(h + 1) * hd]
            kh = kb[:, h * hd:(h + 1) * hd]
            vh = vb[:, h * hd:(h + 1) * hd]
            s = jax.lax.dot_general(qh, kh, (((1,), (1,)), ((), ())),
                                    preferred_element_type=f32) * scale
            if causal:
                s = s + neg
            s = s - jnp.max(s, axis=-1, keepdims=True)
            p = jnp.exp(s)
            p = p * pl.reciprocal(jnp.sum(p, axis=-1, keepdims=True), approx=True)
            head_outs.append(jnp.dot(p.astype(jnp.bfloat16), vh,
                                     preferred_element_type=f32))
        batch_outs.append(jnp.concatenate(head_outs, axis=1))    # (Sq, D)
    ctx = jnp.concatenate(batch_outs, axis=0)                    # (B*Sq, D)

    # single merged output projection over all heads / all batch rows
    attn = jnp.dot(ctx.astype(jnp.bfloat16), wo, preferred_element_type=f32) + bo
    return _layer_norm_f32(x_f32 + attn, g, beta)


def _ffn_residual_ln(x_f32, w1, b1, w2, b2, g, beta):
    f32 = jnp.float32
    h = jnp.dot(x_f32.astype(jnp.bfloat16), w1, preferred_element_type=f32) + b1
    h = jnp.maximum(h, 0.0)
    y = x_f32 + jnp.dot(h.astype(jnp.bfloat16), w2, preferred_element_type=f32) + b2
    return _layer_norm_f32(y, g, beta)


# ----------------------------------------------------------------------------- #
# Fused encoder layer kernel: MHA + LN + FFN + LN (+ optional final encoder LN)
# ----------------------------------------------------------------------------- #
def _encoder_layer_kernel(*refs, B, S, nhead, final_norm):
    if final_norm:
        (x_ref,
         wq, bq, wk, bk, wv, bv, wo, bo, g1, e1,
         w1, b1, w2, b2, g2, e2, gf, ef, o_ref) = refs
    else:
        (x_ref,
         wq, bq, wk, bk, wv, bv, wo, bo, g1, e1,
         w1, b1, w2, b2, g2, e2, o_ref) = refs

    x_bf = x_ref[...]                         # (B*S, D) bf16
    x_f32 = x_bf.astype(jnp.float32)

    y = _mha_residual_ln(x_bf, x_f32, x_bf,
                         wq[...], bq[...], wk[...], bk[...], wv[...], bv[...],
                         wo[...], bo[...], g1[...], e1[...],
                         B=B, Sq=S, Sk=S, nhead=nhead, causal=False)
    y = _ffn_residual_ln(y, w1[...], b1[...], w2[...], b2[...], g2[...], e2[...])
    if final_norm:
        y = _layer_norm_f32(y, gf[...], ef[...])
    o_ref[...] = y.astype(o_ref.dtype)


def encoder_layer(x2, p, B, S, nhead, final_norm_params=None):
    D = x2.shape[-1]
    a, f = p["attn"], p["ffn"]
    args = [x2,
            a["wq"], a["bq"], a["wk"], a["bk"], a["wv"], a["bv"],
            a["wo"], a["bo"], a["ln_g"], a["ln_b"],
            f["w1"], f["b1"], f["w2"], f["b2"], f["ln_g"], f["ln_b"]]
    final = final_norm_params is not None
    if final:
        args += [final_norm_params[0], final_norm_params[1]]
    vmem = pl.BlockSpec(memory_space=pltpu.MemorySpace.VMEM)
    return pl.pallas_call(
        functools.partial(_encoder_layer_kernel, B=B, S=S, nhead=nhead, final_norm=final),
        out_shape=jax.ShapeDtypeStruct((B * S, D), jnp.bfloat16),
        in_specs=[vmem] * len(args),
        out_specs=vmem,
    )(*args)


# ----------------------------------------------------------------------------- #
# Fused decoder layer kernel: masked self-MHA + LN + cross-MHA + LN + FFN + LN
# ----------------------------------------------------------------------------- #
def _decoder_layer_kernel(*refs, B, St, Ss, nhead):
    (y_ref, mem_ref,
     swq, sbq, swk, sbk, swv, sbv, swo, sbo, sg, se,
     cwq, cbq, cwk, cbk, cwv, cbv, cwo, cbo, cg, ce,
     w1, b1, w2, b2, g2, e2,
     o_ref) = refs

    y_bf = y_ref[...]                         # (B*St, D) bf16
    y_f32 = y_bf.astype(jnp.float32)
    mem_bf = mem_ref[...]                     # (B*Ss, D) bf16

    # masked self-attention (causal mask generated in-kernel)
    y1 = _mha_residual_ln(y_bf, y_f32, y_bf,
                          swq[...], sbq[...], swk[...], sbk[...], swv[...], sbv[...],
                          swo[...], sbo[...], sg[...], se[...],
                          B=B, Sq=St, Sk=St, nhead=nhead, causal=True)
    # cross-attention over encoder memory
    y2 = _mha_residual_ln(y1.astype(jnp.bfloat16), y1, mem_bf,
                          cwq[...], cbq[...], cwk[...], cbk[...], cwv[...], cbv[...],
                          cwo[...], cbo[...], cg[...], ce[...],
                          B=B, Sq=St, Sk=Ss, nhead=nhead, causal=False)
    # feed-forward
    y3 = _ffn_residual_ln(y2, w1[...], b1[...], w2[...], b2[...], g2[...], e2[...])
    o_ref[...] = y3.astype(o_ref.dtype)


def decoder_layer(y2, mem2, p, B, St, Ss, nhead):
    D = y2.shape[-1]
    sa, ca, f = p["self_attn"], p["cross_attn"], p["ffn"]
    args = [y2, mem2,
            sa["wq"], sa["bq"], sa["wk"], sa["bk"], sa["wv"], sa["bv"],
            sa["wo"], sa["bo"], sa["ln_g"], sa["ln_b"],
            ca["wq"], ca["bq"], ca["wk"], ca["bk"], ca["wv"], ca["bv"],
            ca["wo"], ca["bo"], ca["ln_g"], ca["ln_b"],
            f["w1"], f["b1"], f["w2"], f["b2"], f["ln_g"], f["ln_b"]]
    vmem = pl.BlockSpec(memory_space=pltpu.MemorySpace.VMEM)
    return pl.pallas_call(
        functools.partial(_decoder_layer_kernel, B=B, St=St, Ss=Ss, nhead=nhead),
        out_shape=jax.ShapeDtypeStruct((B * St, D), jnp.bfloat16),
        in_specs=[vmem] * len(args),
        out_specs=vmem,
    )(*args)


# ----------------------------------------------------------------------------- #
# Fused decoder-final-LayerNorm + vocab projection (lane-dense, tiled over vocab)
# ----------------------------------------------------------------------------- #
def _final_proj_kernel(y_ref, g_ref, b_ref, w_ref, bias_ref, o_ref):
    y = _layer_norm_f32(y_ref[...].astype(jnp.float32), g_ref[...], b_ref[...])
    o_ref[...] = (jnp.dot(y.astype(jnp.bfloat16), w_ref[...],
                          preferred_element_type=jnp.float32)
                  + bias_ref[...]).astype(o_ref.dtype)


def final_projection(y2, g, b, w, bias):
    M, D = y2.shape
    Vp = w.shape[1]
    tn = 512 if Vp % 512 == 0 else 128        # vocab tiles: scales to large V on v7x VMEM
    return pl.pallas_call(
        _final_proj_kernel,
        out_shape=jax.ShapeDtypeStruct((M, Vp), jnp.float32),
        grid=(Vp // tn,),
        in_specs=[
            pl.BlockSpec((M, D), lambda j: (0, 0)),     # activations resident across tiles
            pl.BlockSpec((1, D), lambda j: (0, 0)),
            pl.BlockSpec((1, D), lambda j: (0, 0)),
            pl.BlockSpec((D, tn), lambda j: (0, j)),
            pl.BlockSpec((1, tn), lambda j: (0, j)),
        ],
        out_specs=pl.BlockSpec((M, tn), lambda j: (0, j)),
        compiler_params=pltpu.CompilerParams(dimension_semantics=("arbitrary",)),
    )(y2, g, b, w, bias)


# ----------------------------------------------------------------------------- #
# Model glue
# ----------------------------------------------------------------------------- #
def positional_encoding_table(max_len, d_model):
    position = jnp.arange(max_len, dtype=jnp.float32)[:, None]
    div_term = jnp.exp(jnp.arange(0, d_model, 2, dtype=jnp.float32)
                       * (-math.log(10000.0) / d_model))
    pe = jnp.zeros((max_len, d_model), jnp.float32)
    pe = pe.at[:, 0::2].set(jnp.sin(position * div_term))
    pe = pe.at[:, 1::2].set(jnp.cos(position * div_term))
    return pe


def transformer_forward(params, src, tgt, cfg):
    D, nhead = cfg["d_model"], cfg["nhead"]
    V = cfg["tgt_vocab_size"]
    B, Ss = src.shape
    St = tgt.shape[1]
    scale = math.sqrt(D)
    pe = params["pe"]

    # TODO(synk): embedding gather + positional-encoding add stay in plain JAX
    # (data-dependent row gather; not worth a Pallas kernel at these sizes).
    src_emb = (jnp.take(params["enc_emb"], src, axis=0) * scale
               + pe[None, :Ss]).astype(jnp.bfloat16)
    tgt_emb = (jnp.take(params["dec_emb"], tgt, axis=0) * scale
               + pe[None, :St]).astype(jnp.bfloat16)

    # ---- encoder: one fused pallas_call per layer; final enc-LN folded into last one ----
    x = src_emb.reshape(B * Ss, D)
    n_enc = len(params["enc_layers"])
    for li, lp in enumerate(params["enc_layers"]):
        final = ((params["enc_norm_g"], params["enc_norm_b"])
                 if li == n_enc - 1 else None)
        x = encoder_layer(x, lp, B, Ss, nhead, final)
    memory = x                                 # (B*Ss, D) bf16, already final-normed

    # ---- decoder: one fused pallas_call per layer ----
    y = tgt_emb.reshape(B * St, D)
    for lp in params["dec_layers"]:
        y = decoder_layer(y, memory, lp, B, St, Ss, nhead)

    # ---- fused final decoder LN + vocab projection (128-padded lane-dense output) ----
    logits_p = final_projection(y, params["dec_norm_g"], params["dec_norm_b"],
                                params["out_w"], params["out_b"])
    return logits_p[:, :V].reshape(B, St, V)


# ----------------------------------------------------------------------------- #
# Deterministic parameter init (xavier_uniform for >1-D params, zeros/ones else)
# ----------------------------------------------------------------------------- #
def init_params(key, cfg):
    keys = iter(jax.random.split(key, 256))
    D, F = cfg["d_model"], cfg["dim_feedforward"]
    assert D % cfg["nhead"] == 0

    def xav(shape):
        bound = math.sqrt(6.0 / (shape[0] + shape[1]))
        return jax.random.uniform(next(keys), shape, jnp.float32, -bound, bound)

    def wbf(shape):                           # bf16 matmul weights
        return xav(shape).astype(jnp.bfloat16)

    def mha_p():
        return dict(wq=wbf((D, D)), bq=jnp.zeros((1, D), jnp.float32),
                    wk=wbf((D, D)), bk=jnp.zeros((1, D), jnp.float32),
                    wv=wbf((D, D)), bv=jnp.zeros((1, D), jnp.float32),
                    wo=wbf((D, D)), bo=jnp.zeros((1, D), jnp.float32),
                    ln_g=jnp.ones((1, D), jnp.float32),
                    ln_b=jnp.zeros((1, D), jnp.float32))

    def ffn_p():
        return dict(w1=wbf((D, F)), b1=jnp.zeros((1, F), jnp.float32),
                    w2=wbf((F, D)), b2=jnp.zeros((1, D), jnp.float32),
                    ln_g=jnp.ones((1, D), jnp.float32),
                    ln_b=jnp.zeros((1, D), jnp.float32))

    V = cfg["tgt_vocab_size"]
    Vp = ((V + 127) // 128) * 128             # lane-dense (128-aligned) padded vocab
    out_w = jnp.zeros((D, Vp), jnp.float32).at[:, :V].set(xav((D, V))).astype(jnp.bfloat16)
    out_b = jnp.zeros((1, Vp), jnp.float32)

    return dict(
        enc_emb=xav((cfg["src_vocab_size"], D)),
        dec_emb=xav((cfg["tgt_vocab_size"], D)),
        pe=positional_encoding_table(cfg["max_len"], D),
        enc_layers=[dict(attn=mha_p(), ffn=ffn_p())
                    for _ in range(cfg["num_encoder_layers"])],
        dec_layers=[dict(self_attn=mha_p(), cross_attn=mha_p(), ffn=ffn_p())
                    for _ in range(cfg["num_decoder_layers"])],
        enc_norm_g=jnp.ones((1, D), jnp.float32), enc_norm_b=jnp.zeros((1, D), jnp.float32),
        dec_norm_g=jnp.ones((1, D), jnp.float32), dec_norm_b=jnp.zeros((1, D), jnp.float32),
        out_w=out_w, out_b=out_b,
    )


# ----------------------------------------------------------------------------- #
# Main
# ----------------------------------------------------------------------------- #
if __name__ == "__main__":
    cfg = dict(
        src_vocab_size=50,
        tgt_vocab_size=60,
        d_model=32,
        nhead=4,
        num_encoder_layers=2,
        num_decoder_layers=2,
        dim_feedforward=64,
        dropout=0.0,        # dropout is identity in this (inference-semantics) kernel
        max_len=64,
    )

    key = jax.random.PRNGKey(0)
    pkey, skey, tkey = jax.random.split(key, 3)
    params = init_params(pkey, cfg)

    B, S_src, S_tgt = 2, 10, 8
    src = jax.random.randint(skey, (B, S_src), 0, cfg["src_vocab_size"], dtype=jnp.int32)
    tgt = jax.random.randint(tkey, (B, S_tgt), 0, cfg["tgt_vocab_size"], dtype=jnp.int32)

    fwd = jax.jit(functools.partial(transformer_forward, cfg=cfg))
    logits = fwd(params, src, tgt)
    jax.block_until_ready(logits)

    assert logits.shape == (B, S_tgt, cfg["tgt_vocab_size"]), logits.shape
    assert bool(jnp.all(jnp.isfinite(logits)))
    print("KERNEL_OK")
</pallas_src>

<mosaic_0001>
module attributes {stable_mosaic.version = 11 : i64} {
  func.func @_encoder_layer_kernel(%arg0: memref<20x32xbf16, #tpu.memory_space<vmem>>, %arg1: memref<32x32xbf16, #tpu.memory_space<vmem>>, %arg2: memref<1x32xf32, #tpu.memory_space<vmem>>, %arg3: memref<32x32xbf16, #tpu.memory_space<vmem>>, %arg4: memref<1x32xf32, #tpu.memory_space<vmem>>, %arg5: memref<32x32xbf16, #tpu.memory_space<vmem>>, %arg6: memref<1x32xf32, #tpu.memory_space<vmem>>, %arg7: memref<32x32xbf16, #tpu.memory_space<vmem>>, %arg8: memref<1x32xf32, #tpu.memory_space<vmem>>, %arg9: memref<1x32xf32, #tpu.memory_space<vmem>>, %arg10: memref<1x32xf32, #tpu.memory_space<vmem>>, %arg11: memref<32x64xbf16, #tpu.memory_space<vmem>>, %arg12: memref<1x64xf32, #tpu.memory_space<vmem>>, %arg13: memref<64x32xbf16, #tpu.memory_space<vmem>>, %arg14: memref<1x32xf32, #tpu.memory_space<vmem>>, %arg15: memref<1x32xf32, #tpu.memory_space<vmem>>, %arg16: memref<1x32xf32, #tpu.memory_space<vmem>>, %arg17: memref<1x32xf32, #tpu.memory_space<vmem>>, %arg18: memref<1x32xf32, #tpu.memory_space<vmem>>, %arg19: memref<20x32xbf16, #tpu.memory_space<vmem>>) attributes {dimension_semantics = [], scalar_prefetch = 0 : i64, scratch_operands = 0 : i64, tpu.core_type = #tpu.core_type<tc>} {
    %c0 = arith.constant 0 : index
    %c0_0 = arith.constant 0 : index
    %0 = vector.load %arg0[%c0, %c0_0] : memref<20x32xbf16, #tpu.memory_space<vmem>>, vector<20x32xbf16>
    %1 = arith.extf %0 : vector<20x32xbf16> to vector<20x32xf32>
    %c0_1 = arith.constant 0 : index
    %c0_2 = arith.constant 0 : index
    %2 = vector.load %arg1[%c0_1, %c0_2] : memref<32x32xbf16, #tpu.memory_space<vmem>>, vector<32x32xbf16>
    %c0_3 = arith.constant 0 : index
    %c0_4 = arith.constant 0 : index
    %3 = vector.load %arg2[%c0_3, %c0_4] : memref<1x32xf32, #tpu.memory_space<vmem>>, vector<1x32xf32>
    %c0_5 = arith.constant 0 : index
    %c0_6 = arith.constant 0 : index
    %4 = vector.load %arg3[%c0_5, %c0_6] : memref<32x32xbf16, #tpu.memory_space<vmem>>, vector<32x32xbf16>
    %c0_7 = arith.constant 0 : index
    %c0_8 = arith.constant 0 : index
    %5 = vector.load %arg4[%c0_7, %c0_8] : memref<1x32xf32, #tpu.memory_space<vmem>>, vector<1x32xf32>
    %c0_9 = arith.constant 0 : index
    %c0_10 = arith.constant 0 : index
    %6 = vector.load %arg5[%c0_9, %c0_10] : memref<32x32xbf16, #tpu.memory_space<vmem>>, vector<32x32xbf16>
    %c0_11 = arith.constant 0 : index
    %c0_12 = arith.constant 0 : index
    %7 = vector.load %arg6[%c0_11, %c0_12] : memref<1x32xf32, #tpu.memory_space<vmem>>, vector<1x32xf32>
    %c0_13 = arith.constant 0 : index
    %c0_14 = arith.constant 0 : index
    %8 = vector.load %arg7[%c0_13, %c0_14] : memref<32x32xbf16, #tpu.memory_space<vmem>>, vector<32x32xbf16>
    %c0_15 = arith.constant 0 : index
    %c0_16 = arith.constant 0 : index
    %9 = vector.load %arg8[%c0_15, %c0_16] : memref<1x32xf32, #tpu.memory_space<vmem>>, vector<1x32xf32>
    %c0_17 = arith.constant 0 : index
    %c0_18 = arith.constant 0 : index
    %10 = vector.load %arg9[%c0_17, %c0_18] : memref<1x32xf32, #tpu.memory_space<vmem>>, vector<1x32xf32>
    %c0_19 = arith.constant 0 : index
    %c0_20 = arith.constant 0 : index
    %11 = vector.load %arg10[%c0_19, %c0_20] : memref<1x32xf32, #tpu.memory_space<vmem>>, vector<1x32xf32>
    %cst = arith.constant dense<0.000000e+00> : vector<20x32xf32>
    %12 = tpu.matmul %0, %2, %cst {dimension_numbers = #tpu.dot_dimension_numbers<[1], [0], [0], [1], [0, 0, 1, 1], [], []>} : vector<20x32xbf16>, vector<32x32xbf16>, vector<20x32xf32> -> vector<20x32xf32>
    %13 = vector.broadcast %3 : vector<1x32xf32> to vector<20x32xf32>
    %14 = arith.addf %12, %13 : vector<20x32xf32>
    %15 = arith.truncf %14 : vector<20x32xf32> to vector<20x32xbf16>
    %cst_21 = arith.constant dense<0.000000e+00> : vector<20x32xf32>
    %16 = tpu.matmul %0, %4, %cst_21 {dimension_numbers = #tpu.dot_dimension_numbers<[1], [0], [0], [1], [0, 0, 1, 1], [], []>} : vector<20x32xbf16>, vector<32x32xbf16>, vector<20x32xf32> -> vector<20x32xf32>
    %17 = vector.broadcast %5 : vector<1x32xf32> to vector<20x32xf32>
    %18 = arith.addf %16, %17 : vector<20x32xf32>
    %19 = arith.truncf %18 : vector<20x32xf32> to vector<20x32xbf16>
    %cst_22 = arith.constant dense<0.000000e+00> : vector<20x32xf32>
    %20 = tpu.matmul %0, %6, %cst_22 {dimension_numbers = #tpu.dot_dimension_numbers<[1], [0], [0], [1], [0, 0, 1, 1], [], []>} : vector<20x32xbf16>, vector<32x32xbf16>, vector<20x32xf32> -> vector<20x32xf32>
    %21 = vector.broadcast %7 : vector<1x32xf32> to vector<20x32xf32>
    %22 = arith.addf %20, %21 : vector<20x32xf32>
    %23 = arith.truncf %22 : vector<20x32xf32> to vector<20x32xbf16>
    %24 = vector.extract_strided_slice %15 {offsets = [0, 0], sizes = [10, 32], strides = [1, 1]} : vector<20x32xbf16> to vector<10x32xbf16>
    %25 = vector.extract_strided_slice %19 {offsets = [0, 0], sizes = [10, 32], strides = [1, 1]} : vector<20x32xbf16> to vector<10x32xbf16>
    %26 = vector.extract_strided_slice %23 {offsets = [0, 0], sizes = [10, 32], strides = [1, 1]} : vector<20x32xbf16> to vector<10x32xbf16>
    %27 = vector.extract_strided_slice %24 {offsets = [0, 0], sizes = [10, 8], strides = [1, 1]} : vector<10x32xbf16> to vector<10x8xbf16>
    %28 = vector.extract_strided_slice %25 {offsets = [0, 0], sizes = [10, 8], strides = [1, 1]} : vector<10x32xbf16> to vector<10x8xbf16>
    %29 = vector.extract_strided_slice %26 {offsets = [0, 0], sizes = [10, 8], strides = [1, 1]} : vector<10x32xbf16> to vector<10x8xbf16>
    %cst_23 = arith.constant dense<0.000000e+00> : vector<10x10xf32>
    %30 = tpu.matmul %27, %28, %cst_23 {dimension_numbers = #tpu.dot_dimension_numbers<[1], [1], [0], [0], [0, 0, 1, 0], [], []>} : vector<10x8xbf16>, vector<10x8xbf16>, vector<10x10xf32> -> vector<10x10xf32>
    %cst_24 = arith.constant 0.353553385 : f32
    %31 = vector.broadcast %cst_24 : f32 to vector<10x10xf32>
    %32 = arith.mulf %30, %31 : vector<10x10xf32>
    %cst_25 = arith.constant dense<0xFF800000> : vector<10xf32>
    %33 = vector.multi_reduction <maximumf>, %32, %cst_25 [1] : vector<10x10xf32> to vector<10xf32>
    %34 = vector.shape_cast %33 : vector<10xf32> to vector<10x1xf32>
    %35 = vector.broadcast %34 : vector<10x1xf32> to vector<10x10xf32>
    %36 = arith.subf %32, %35 : vector<10x10xf32>
    %37 = math.exp %36 : vector<10x10xf32>
    %cst_26 = arith.constant dense<0.000000e+00> : vector<10xf32>
    %38 = vector.multi_reduction <add>, %37, %cst_26 [1] : vector<10x10xf32> to vector<10xf32>
    %39 = vector.shape_cast %38 : vector<10xf32> to vector<10x1xf32>
    %40 = tpu.reciprocal %39 {approx = true} : vector<10x1xf32> -> vector<10x1xf32>
    %41 = vector.broadcast %40 : vector<10x1xf32> to vector<10x10xf32>
    %42 = arith.mulf %37, %41 : vector<10x10xf32>
    %43 = arith.truncf %42 : vector<10x10xf32> to vector<10x10xbf16>
    %cst_27 = arith.constant dense<0.000000e+00> : vector<10x8xf32>
    %44 = tpu.matmul %43, %29, %cst_27 {dimension_numbers = #tpu.dot_dimension_numbers<[1], [0], [0], [1], [0, 0, 1, 1], [], []>} : vector<10x10xbf16>, vector<10x8xbf16>, vector<10x8xf32> -> vector<10x8xf32>
    %45 = vector.extract_strided_slice %24 {offsets = [0, 8], sizes = [10, 8], strides = [1, 1]} : vector<10x32xbf16> to vector<10x8xbf16>
    %46 = vector.extract_strided_slice %25 {offsets = [0, 8], sizes = [10, 8], strides = [1, 1]} : vector<10x32xbf16> to vector<10x8xbf16>
    %47 = vector.extract_strided_slice %26 {offsets = [0, 8], sizes = [10, 8], strides = [1, 1]} : vector<10x32xbf16> to vector<10x8xbf16>
    %cst_28 = arith.constant dense<0.000000e+00> : vector<10x10xf32>
    %48 = tpu.matmul %45, %46, %cst_28 {dimension_numbers = #tpu.dot_dimension_numbers<[1], [1], [0], [0], [0, 0, 1, 0], [], []>} : vector<10x8xbf16>, vector<10x8xbf16>, vector<10x10xf32> -> vector<10x10xf32>
    %cst_29 = arith.constant 0.353553385 : f32
    %49 = vector.broadcast %cst_29 : f32 to vector<10x10xf32>
    %50 = arith.mulf %48, %49 : vector<10x10xf32>
    %cst_30 = arith.constant dense<0xFF800000> : vector<10xf32>
    %51 = vector.multi_reduction <maximumf>, %50, %cst_30 [1] : vector<10x10xf32> to vector<10xf32>
    %52 = vector.shape_cast %51 : vector<10xf32> to vector<10x1xf32>
    %53 = vector.broadcast %52 : vector<10x1xf32> to vector<10x10xf32>
    %54 = arith.subf %50, %53 : vector<10x10xf32>
    %55 = math.exp %54 : vector<10x10xf32>
    %cst_31 = arith.constant dense<0.000000e+00> : vector<10xf32>
    %56 = vector.multi_reduction <add>, %55, %cst_31 [1] : vector<10x10xf32> to vector<10xf32>
    %57 = vector.shape_cast %56 : vector<10xf32> to vector<10x1xf32>
    %58 = tpu.reciprocal %57 {approx = true} : vector<10x1xf32> -> vector<10x1xf32>
    %59 = vector.broadcast %58 : vector<10x1xf32> to vector<10x10xf32>
    %60 = arith.mulf %55, %59 : vector<10x10xf32>
    %61 = arith.truncf %60 : vector<10x10xf32> to vector<10x10xbf16>
    %cst_32 = arith.constant dense<0.000000e+00> : vector<10x8xf32>
    %62 = tpu.matmul %61, %47, %cst_32 {dimension_numbers = #tpu.dot_dimension_numbers<[1], [0], [0], [1], [0, 0, 1, 1], [], []>} : vector<10x10xbf16>, vector<10x8xbf16>, vector<10x8xf32> -> vector<10x8xf32>
    %63 = vector.extract_strided_slice %24 {offsets = [0, 16], sizes = [10, 8], strides = [1, 1]} : vector<10x32xbf16> to vector<10x8xbf16>
    %64 = vector.extract_strided_slice %25 {offsets = [0, 16], sizes = [10, 8], strides = [1, 1]} : vector<10x32xbf16> to vector<10x8xbf16>
    %65 = vector.extract_strided_slice %26 {offsets = [0, 16], sizes = [10, 8], strides = [1, 1]} : vector<10x32xbf16> to vector<10x8xbf16>
    %cst_33 = arith.constant dense<0.000000e+00> : vector<10x10xf32>
    %66 = tpu.matmul %63, %64, %cst_33 {dimension_numbers = #tpu.dot_dimension_numbers<[1], [1], [0], [0], [0, 0, 1, 0], [], []>} : vector<10x8xbf16>, vector<10x8xbf16>, vector<10x10xf32> -> vector<10x10xf32>
    %cst_34 = arith.constant 0.353553385 : f32
    %67 = vector.broadcast %cst_34 : f32 to vector<10x10xf32>
    %68 = arith.mulf %66, %67 : vector<10x10xf32>
    %cst_35 = arith.constant dense<0xFF800000> : vector<10xf32>
    %69 = vector.multi_reduction <maximumf>, %68, %cst_35 [1] : vector<10x10xf32> to vector<10xf32>
    %70 = vector.shape_cast %69 : vector<10xf32> to vector<10x1xf32>
    %71 = vector.broadcast %70 : vector<10x1xf32> to vector<10x10xf32>
    %72 = arith.subf %68, %71 : vector<10x10xf32>
    %73 = math.exp %72 : vector<10x10xf32>
    %cst_36 = arith.constant dense<0.000000e+00> : vector<10xf32>
    %74 = vector.multi_reduction <add>, %73, %cst_36 [1] : vector<10x10xf32> to vector<10xf32>
    %75 = vector.shape_cast %74 : vector<10xf32> to vector<10x1xf32>
    %76 = tpu.reciprocal %75 {approx = true} : vector<10x1xf32> -> vector<10x1xf32>
    %77 = vector.broadcast %76 : vector<10x1xf32> to vector<10x10xf32>
    %78 = arith.mulf %73, %77 : vector<10x10xf32>
    %79 = arith.truncf %78 : vector<10x10xf32> to vector<10x10xbf16>
    %cst_37 = arith.constant dense<0.000000e+00> : vector<10x8xf32>
    %80 = tpu.matmul %79, %65, %cst_37 {dimension_numbers = #tpu.dot_dimension_numbers<[1], [0], [0], [1], [0, 0, 1, 1], [], []>} : vector<10x10xbf16>, vector<10x8xbf16>, vector<10x8xf32> -> vector<10x8xf32>
    %81 = vector.extract_strided_slice %24 {offsets = [0, 24], sizes = [10, 8], strides = [1, 1]} : vector<10x32xbf16> to vector<10x8xbf16>
    %82 = vector.extract_strided_slice %25 {offsets = [0, 24], sizes = [10, 8], strides = [1, 1]} : vector<10x32xbf16> to vector<10x8xbf16>
    %83 = vector.extract_strided_slice %26 {offsets = [0, 24], sizes = [10, 8], strides = [1, 1]} : vector<10x32xbf16> to vector<10x8xbf16>
    %cst_38 = arith.constant dense<0.000000e+00> : vector<10x10xf32>
    %84 = tpu.matmul %81, %82, %cst_38 {dimension_numbers = #tpu.dot_dimension_numbers<[1], [1], [0], [0], [0, 0, 1, 0], [], []>} : vector<10x8xbf16>, vector<10x8xbf16>, vector<10x10xf32> -> vector<10x10xf32>
    %cst_39 = arith.constant 0.353553385 : f32
    %85 = vector.broadcast %cst_39 : f32 to vector<10x10xf32>
    %86 = arith.mulf %84, %85 : vector<10x10xf32>
    %cst_40 = arith.constant dense<0xFF800000> : vector<10xf32>
    %87 = vector.multi_reduction <maximumf>, %86, %cst_40 [1] : vector<10x10xf32> to vector<10xf32>
    %88 = vector.shape_cast %87 : vector<10xf32> to vector<10x1xf32>
    %89 = vector.broadcast %88 : vector<10x1xf32> to vector<10x10xf32>
    %90 = arith.subf %86, %89 : vector<10x10xf32>
    %91 = math.exp %90 : vector<10x10xf32>
    %cst_41 = arith.constant dense<0.000000e+00> : vector<10xf32>
    %92 = vector.multi_reduction <add>, %91, %cst_41 [1] : vector<10x10xf32> to vector<10xf32>
    %93 = vector.shape_cast %92 : vector<10xf32> to vector<10x1xf32>
    %94 = tpu.reciprocal %93 {approx = true} : vector<10x1xf32> -> vector<10x1xf32>
    %95 = vector.broadcast %94 : vector<10x1xf32> to vector<10x10xf32>
    %96 = arith.mulf %91, %95 : vector<10x10xf32>
    %97 = arith.truncf %96 : vector<10x10xf32> to vector<10x10xbf16>
    %cst_42 = arith.constant dense<0.000000e+00> : vector<10x8xf32>
    %98 = tpu.matmul %97, %83, %cst_42 {dimension_numbers = #tpu.dot_dimension_numbers<[1], [0], [0], [1], [0, 0, 1, 1], [], []>} : vector<10x10xbf16>, vector<10x8xbf16>, vector<10x8xf32> -> vector<10x8xf32>
    %99 = tpu.concatenate %44, %62, %80, %98 in 1 : vector<10x8xf32>, vector<10x8xf32>, vector<10x8xf32>, vector<10x8xf32> -> vector<10x32xf32>
    %100 = vector.extract_strided_slice %15 {offsets = [10, 0], sizes = [10, 32], strides = [1, 1]} : vector<20x32xbf16> to vector<10x32xbf16>
    %101 = vector.extract_strided_slice %19 {offsets = [10, 0], sizes = [10, 32], strides = [1, 1]} : vector<20x32xbf16> to vector<10x32xbf16>
    %102 = vector.extract_strided_slice %23 {offsets = [10, 0], sizes = [10, 32], strides = [1, 1]} : vector<20x32xbf16> to vector<10x32xbf16>
    %103 = vector.extract_strided_slice %100 {offsets = [0, 0], sizes = [10, 8], strides = [1, 1]} : vector<10x32xbf16> to vector<10x8xbf16>
    %104 = vector.extract_strided_slice %101 {offsets = [0, 0], sizes = [10, 8], strides = [1, 1]} : vector<10x32xbf16> to vector<10x8xbf16>
    %105 = vector.extract_strided_slice %102 {offsets = [0, 0], sizes = [10, 8], strides = [1, 1]} : vector<10x32xbf16> to vector<10x8xbf16>
    %cst_43 = arith.constant dense<0.000000e+00> : vector<10x10xf32>
    %106 = tpu.matmul %103, %104, %cst_43 {dimension_numbers = #tpu.dot_dimension_numbers<[1], [1], [0], [0], [0, 0, 1, 0], [], []>} : vector<10x8xbf16>, vector<10x8xbf16>, vector<10x10xf32> -> vector<10x10xf32>
    %cst_44 = arith.constant 0.353553385 : f32
    %107 = vector.broadcast %cst_44 : f32 to vector<10x10xf32>
    %108 = arith.mulf %106, %107 : vector<10x10xf32>
    %cst_45 = arith.constant dense<0xFF800000> : vector<10xf32>
    %109 = vector.multi_reduction <maximumf>, %108, %cst_45 [1] : vector<10x10xf32> to vector<10xf32>
    %110 = vector.shape_cast %109 : vector<10xf32> to vector<10x1xf32>
    %111 = vector.broadcast %110 : vector<10x1xf32> to vector<10x10xf32>
    %112 = arith.subf %108, %111 : vector<10x10xf32>
    %113 = math.exp %112 : vector<10x10xf32>
    %cst_46 = arith.constant dense<0.000000e+00> : vector<10xf32>
    %114 = vector.multi_reduction <add>, %113, %cst_46 [1] : vector<10x10xf32> to vector<10xf32>
    %115 = vector.shape_cast %114 : vector<10xf32> to vector<10x1xf32>
    %116 = tpu.reciprocal %115 {approx = true} : vector<10x1xf32> -> vector<10x1xf32>
    %117 = vector.broadcast %116 : vector<10x1xf32> to vector<10x10xf32>
    %118 = arith.mulf %113, %117 : vector<10x10xf32>
    %119 = arith.truncf %118 : vector<10x10xf32> to vector<10x10xbf16>
    %cst_47 = arith.constant dense<0.000000e+00> : vector<10x8xf32>
    %120 = tpu.matmul %119, %105, %cst_47 {dimension_numbers = #tpu.dot_dimension_numbers<[1], [0], [0], [1], [0, 0, 1, 1], [], []>} : vector<10x10xbf16>, vector<10x8xbf16>, vector<10x8xf32> -> vector<10x8xf32>
    %121 = vector.extract_strided_slice %100 {offsets = [0, 8], sizes = [10, 8], strides = [1, 1]} : vector<10x32xbf16> to vector<10x8xbf16>
    %122 = vector.extract_strided_slice %101 {offsets = [0, 8], sizes = [10, 8], strides = [1, 1]} : vector<10x32xbf16> to vector<10x8xbf16>
    %123 = vector.extract_strided_slice %102 {offsets = [0, 8], sizes = [10, 8], strides = [1, 1]} : vector<10x32xbf16> to vector<10x8xbf16>
    %cst_48 = arith.constant dense<0.000000e+00> : vector<10x10xf32>
    %124 = tpu.matmul %121, %122, %cst_48 {dimension_numbers = #tpu.dot_dimension_numbers<[1], [1], [0], [0], [0, 0, 1, 0], [], []>} : vector<10x8xbf16>, vector<10x8xbf16>, vector<10x10xf32> -> vector<10x10xf32>
    %cst_49 = arith.constant 0.353553385 : f32
    %125 = vector.broadcast %cst_49 : f32 to vector<10x10xf32>
    %126 = arith.mulf %124, %125 : vector<10x10xf32>
    %cst_50 = arith.constant dense<0xFF800000> : vector<10xf32>
    %127 = vector.multi_reduction <maximumf>, %126, %cst_50 [1] : vector<10x10xf32> to vector<10xf32>
    %128 = vector.shape_cast %127 : vector<10xf32> to vector<10x1xf32>
    %129 = vector.broadcast %128 : vector<10x1xf32> to vector<10x10xf32>
    %130 = arith.subf %126, %129 : vector<10x10xf32>
    %131 = math.exp %130 : vector<10x10xf32>
    %cst_51 = arith.constant dense<0.000000e+00> : vector<10xf32>
    %132 = vector.multi_reduction <add>, %131, %cst_51 [1] : vector<10x10xf32> to vector<10xf32>
    %133 = vector.shape_cast %132 : vector<10xf32> to vector<10x1xf32>
    %134 = tpu.reciprocal %133 {approx = true} : vector<10x1xf32> -> vector<10x1xf32>
    %135 = vector.broadcast %134 : vector<10x1xf32> to vector<10x10xf32>
    %136 = arith.mulf %131, %135 : vector<10x10xf32>
    %137 = arith.truncf %136 : vector<10x10xf32> to vector<10x10xbf16>
    %cst_52 = arith.constant dense<0.000000e+00> : vector<10x8xf32>
    %138 = tpu.matmul %137, %123, %cst_52 {dimension_numbers = #tpu.dot_dimension_numbers<[1], [0], [0], [1], [0, 0, 1, 1], [], []>} : vector<10x10xbf16>, vector<10x8xbf16>, vector<10x8xf32> -> vector<10x8xf32>
    %139 = vector.extract_strided_slice %100 {offsets = [0, 16], sizes = [10, 8], strides = [1, 1]} : vector<10x32xbf16> to vector<10x8xbf16>
    %140 = vector.extract_strided_slice %101 {offsets = [0, 16], sizes = [10, 8], strides = [1, 1]} : vector<10x32xbf16> to vector<10x8xbf16>
    %141 = vector.extract_strided_slice %102 {offsets = [0, 16], sizes = [10, 8], strides = [1, 1]} : vector<10x32xbf16> to vector<10x8xbf16>
    %cst_53 = arith.constant dense<0.000000e+00> : vector<10x10xf32>
    %142 = tpu.matmul %139, %140, %cst_53 {dimension_numbers = #tpu.dot_dimension_numbers<[1], [1], [0], [0], [0, 0, 1, 0], [], []>} : vector<10x8xbf16>, vector<10x8xbf16>, vector<10x10xf32> -> vector<10x10xf32>
    %cst_54 = arith.constant 0.353553385 : f32
    %143 = vector.broadcast %cst_54 : f32 to vector<10x10xf32>
    %144 = arith.mulf %142, %143 : vector<10x10xf32>
    %cst_55 = arith.constant dense<0xFF800000> : vector<10xf32>
    %145 = vector.multi_reduction <maximumf>, %144, %cst_55 [1] : vector<10x10xf32> to vector<10xf32>
    %146 = vector.shape_cast %145 : vector<10xf32> to vector<10x1xf32>
    %147 = vector.broadcast %146 : vector<10x1xf32> to vector<10x10xf32>
    %148 = arith.subf %144, %147 : vector<10x10xf32>
    %149 = math.exp %148 : vector<10x10xf32>
    %cst_56 = arith.constant dense<0.000000e+00> : vector<10xf32>
    %150 = vector.multi_reduction <add>, %149, %cst_56 [1] : vector<10x10xf32> to vector<10xf32>
    %151 = vector.shape_cast %150 : vector<10xf32> to vector<10x1xf32>
    %152 = tpu.reciprocal %151 {approx = true} : vector<10x1xf32> -> vector<10x1xf32>
    %153 = vector.broadcast %152 : vector<10x1xf32> to vector<10x10xf32>
    %154 = arith.mulf %149, %153 : vector<10x10xf32>
    %155 = arith.truncf %154 : vector<10x10xf32> to vector<10x10xbf16>
    %cst_57 = arith.constant dense<0.000000e+00> : vector<10x8xf32>
    %156 = tpu.matmul %155, %141, %cst_57 {dimension_numbers = #tpu.dot_dimension_numbers<[1], [0], [0], [1], [0, 0, 1, 1], [], []>} : vector<10x10xbf16>, vector<10x8xbf16>, vector<10x8xf32> -> vector<10x8xf32>
    %157 = vector.extract_strided_slice %100 {offsets = [0, 24], sizes = [10, 8], strides = [1, 1]} : vector<10x32xbf16> to vector<10x8xbf16>
    %158 = vector.extract_strided_slice %101 {offsets = [0, 24], sizes = [10, 8], strides = [1, 1]} : vector<10x32xbf16> to vector<10x8xbf16>
    %159 = vector.extract_strided_slice %102 {offsets = [0, 24], sizes = [10, 8], strides = [1, 1]} : vector<10x32xbf16> to vector<10x8xbf16>
    %cst_58 = arith.constant dense<0.000000e+00> : vector<10x10xf32>
    %160 = tpu.matmul %157, %158, %cst_58 {dimension_numbers = #tpu.dot_dimension_numbers<[1], [1], [0], [0], [0, 0, 1, 0], [], []>} : vector<10x8xbf16>, vector<10x8xbf16>, vector<10x10xf32> -> vector<10x10xf32>
    %cst_59 = arith.constant 0.353553385 : f32
    %161 = vector.broadcast %cst_59 : f32 to vector<10x10xf32>
    %162 = arith.mulf %160, %161 : vector<10x10xf32>
    %cst_60 = arith.constant dense<0xFF800000> : vector<10xf32>
    %163 = vector.multi_reduction <maximumf>, %162, %cst_60 [1] : vector<10x10xf32> to vector<10xf32>
    %164 = vector.shape_cast %163 : vector<10xf32> to vector<10x1xf32>
    %165 = vector.broadcast %164 : vector<10x1xf32> to vector<10x10xf32>
    %166 = arith.subf %162, %165 : vector<10x10xf32>
    %167 = math.exp %166 : vector<10x10xf32>
    %cst_61 = arith.constant dense<0.000000e+00> : vector<10xf32>
    %168 = vector.multi_reduction <add>, %167, %cst_61 [1] : vector<10x10xf32> to vector<10xf32>
    %169 = vector.shape_cast %168 : vector<10xf32> to vector<10x1xf32>
    %170 = tpu.reciprocal %169 {approx = true} : vector<10x1xf32> -> vector<10x1xf32>
    %171 = vector.broadcast %170 : vector<10x1xf32> to vector<10x10xf32>
    %172 = arith.mulf %167, %171 : vector<10x10xf32>
    %173 = arith.truncf %172 : vector<10x10xf32> to vector<10x10xbf16>
    %cst_62 = arith.constant dense<0.000000e+00> : vector<10x8xf32>
    %174 = tpu.matmul %173, %159, %cst_62 {dimension_numbers = #tpu.dot_dimension_numbers<[1], [0], [0], [1], [0, 0, 1, 1], [], []>} : vector<10x10xbf16>, vector<10x8xbf16>, vector<10x8xf32> -> vector<10x8xf32>
    %175 = tpu.concatenate %120, %138, %156, %174 in 1 : vector<10x8xf32>, vector<10x8xf32>, vector<10x8xf32>, vector<10x8xf32> -> vector<10x32xf32>
    %176 = tpu.concatenate %99, %175 in 0 : vector<10x32xf32>, vector<10x32xf32> -> vector<20x32xf32>
    %177 = arith.truncf %176 : vector<20x32xf32> to vector<20x32xbf16>
    %cst_63 = arith.constant dense<0.000000e+00> : vector<20x32xf32>
    %178 = tpu.matmul %177, %8, %cst_63 {dimension_numbers = #tpu.dot_dimension_numbers<[1], [0], [0], [1], [0, 0, 1, 1], [], []>} : vector<20x32xbf16>, vector<32x32xbf16>, vector<20x32xf32> -> vector<20x32xf32>
    %179 = vector.broadcast %9 : vector<1x32xf32> to vector<20x32xf32>
    %180 = arith.addf %178, %179 : vector<20x32xf32>
    %181 = arith.addf %1, %180 : vector<20x32xf32>
    %cst_64 = arith.constant dense<0.000000e+00> : vector<20xf32>
    %182 = vector.multi_reduction <add>, %181, %cst_64 [1] : vector<20x32xf32> to vector<20xf32>
    %183 = vector.shape_cast %182 : vector<20xf32> to vector<20x1xf32>
    %cst_65 = arith.constant 3.200000e+01 : f32
    %184 = vector.broadcast %cst_65 : f32 to vector<20x1xf32>
    %185 = arith.divf %183, %184 : vector<20x1xf32>
    %186 = vector.broadcast %185 : vector<20x1xf32> to vector<20x32xf32>
    %187 = arith.subf %181, %186 : vector<20x32xf32>
    %188 = arith.mulf %187, %187 : vector<20x32xf32>
    %cst_66 = arith.constant dense<0.000000e+00> : vector<20xf32>
    %189 = vector.multi_reduction <add>, %188, %cst_66 [1] : vector<20x32xf32> to vector<20xf32>
    %190 = vector.shape_cast %189 : vector<20xf32> to vector<20x1xf32>
    %cst_67 = arith.constant 3.200000e+01 : f32
    %191 = vector.broadcast %cst_67 : f32 to vector<20x1xf32>
    %192 = arith.divf %190, %191 : vector<20x1xf32>
    %193 = vector.broadcast %185 : vector<20x1xf32> to vector<20x32xf32>
    %194 = arith.subf %181, %193 : vector<20x32xf32>
    %cst_68 = arith.constant 9.99999974E-6 : f32
    %195 = vector.broadcast %cst_68 : f32 to vector<20x1xf32>
    %196 = arith.addf %192, %195 : vector<20x1xf32>
    %197 = math.rsqrt %196 : vector<20x1xf32>
    %198 = vector.broadcast %197 : vector<20x1xf32> to vector<20x32xf32>
    %199 = arith.mulf %194, %198 : vector<20x32xf32>
    %200 = vector.broadcast %10 : vector<1x32xf32> to vector<20x32xf32>
    %201 = arith.mulf %199, %200 : vector<20x32xf32>
    %202 = vector.broadcast %11 : vector<1x32xf32> to vector<20x32xf32>
    %203 = arith.addf %201, %202 : vector<20x32xf32>
    %c0_69 = arith.constant 0 : index
    %c0_70 = arith.constant 0 : index
    %204 = vector.load %arg11[%c0_69, %c0_70] : memref<32x64xbf16, #tpu.memory_space<vmem>>, vector<32x64xbf16>
    %c0_71 = arith.constant 0 : index
    %c0_72 = arith.constant 0 : index
    %205 = vector.load %arg12[%c0_71, %c0_72] : memref<1x64xf32, #tpu.memory_space<vmem>>, vector<1x64xf32>
    %c0_73 = arith.constant 0 : index
    %c0_74 = arith.constant 0 : index
    %206 = vector.load %arg13[%c0_73, %c0_74] : memref<64x32xbf16, #tpu.memory_space<vmem>>, vector<64x32xbf16>
    %c0_75 = arith.constant 0 : index
    %c0_76 = arith.constant 0 : index
    %207 = vector.load %arg14[%c0_75, %c0_76] : memref<1x32xf32, #tpu.memory_space<vmem>>, vector<1x32xf32>
    %c0_77 = arith.constant 0 : index
    %c0_78 = arith.constant 0 : index
    %208 = vector.load %arg15[%c0_77, %c0_78] : memref<1x32xf32, #tpu.memory_space<vmem>>, vector<1x32xf32>
    %c0_79 = arith.constant 0 : index
    %c0_80 = arith.constant 0 : index
    %209 = vector.load %arg16[%c0_79, %c0_80] : memref<1x32xf32, #tpu.memory_space<vmem>>, vector<1x32xf32>
    %210 = arith.truncf %203 : vector<20x32xf32> to vector<20x32xbf16>
    %cst_81 = arith.constant dense<0.000000e+00> : vector<20x64xf32>
    %211 = tpu.matmul %210, %204, %cst_81 {dimension_numbers = #tpu.dot_dimension_numbers<[1], [0], [0], [1], [0, 0, 1, 1], [], []>} : vector<20x32xbf16>, vector<32x64xbf16>, vector<20x64xf32> -> vector<20x64xf32>
    %212 = vector.broadcast %205 : vector<1x64xf32> to vector<20x64xf32>
    %213 = arith.addf %211, %212 : vector<20x64xf32>
    %cst_82 = arith.constant 0.000000e+00 : f32
    %214 = vector.broadcast %cst_82 : f32 to vector<20x64xf32>
    %215 = arith.maximumf %213, %214 : vector<20x64xf32>
    %216 = arith.truncf %215 : vector<20x64xf32> to vector<20x64xbf16>
    %cst_83 = arith.constant dense<0.000000e+00> : vector<20x32xf32>
    %217 = tpu.matmul %216, %206, %cst_83 {dimension_numbers = #tpu.dot_dimension_numbers<[1], [0], [0], [1], [0, 0, 1, 1], [], []>} : vector<20x64xbf16>, vector<64x32xbf16>, vector<20x32xf32> -> vector<20x32xf32>
    %218 = arith.addf %203, %217 : vector<20x32xf32>
    %219 = vector.broadcast %207 : vector<1x32xf32> to vector<20x32xf32>
    %220 = arith.addf %218, %219 : vector<20x32xf32>
    %cst_84 = arith.constant dense<0.000000e+00> : vector<20xf32>
    %221 = vector.multi_reduction <add>, %220, %cst_84 [1] : vector<20x32xf32> to vector<20xf32>
    %222 = vector.shape_cast %221 : vector<20xf32> to vector<20x1xf32>
    %cst_85 = arith.constant 3.200000e+01 : f32
    %223 = vector.broadcast %cst_85 : f32 to vector<20x1xf32>
    %224 = arith.divf %222, %223 : vector<20x1xf32>
    %225 = vector.broadcast %224 : vector<20x1xf32> to vector<20x32xf32>
    %226 = arith.subf %220, %225 : vector<20x32xf32>
    %227 = arith.mulf %226, %226 : vector<20x32xf32>
    %cst_86 = arith.constant dense<0.000000e+00> : vector<20xf32>
    %228 = vector.multi_reduction <add>, %227, %cst_86 [1] : vector<20x32xf32> to vector<20xf32>
    %229 = vector.shape_cast %228 : vector<20xf32> to vector<20x1xf32>
    %cst_87 = arith.constant 3.200000e+01 : f32
    %230 = vector.broadcast %cst_87 : f32 to vector<20x1xf32>
    %231 = arith.divf %229, %230 : vector<20x1xf32>
    %232 = vector.broadcast %224 : vector<20x1xf32> to vector<20x32xf32>
    %233 = arith.subf %220, %232 : vector<20x32xf32>
    %cst_88 = arith.constant 9.99999974E-6 : f32
    %234 = vector.broadcast %cst_88 : f32 to vector<20x1xf32>
    %235 = arith.addf %231, %234 : vector<20x1xf32>
    %236 = math.rsqrt %235 : vector<20x1xf32>
    %237 = vector.broadcast %236 : vector<20x1xf32> to vector<20x32xf32>
    %238 = arith.mulf %233, %237 : vector<20x32xf32>
    %239 = vector.broadcast %208 : vector<1x32xf32> to vector<20x32xf32>
    %240 = arith.mulf %238, %239 : vector<20x32xf32>
    %241 = vector.broadcast %209 : vector<1x32xf32> to vector<20x32xf32>
    %242 = arith.addf %240, %241 : vector<20x32xf32>
    %c0_89 = arith.constant 0 : index
    %c0_90 = arith.constant 0 : index
    %243 = vector.load %arg17[%c0_89, %c0_90] : memref<1x32xf32, #tpu.memory_space<vmem>>, vector<1x32xf32>
    %c0_91 = arith.constant 0 : index
    %c0_92 = arith.constant 0 : index
    %244 = vector.load %arg18[%c0_91, %c0_92] : memref<1x32xf32, #tpu.memory_space<vmem>>, vector<1x32xf32>
    %cst_93 = arith.constant dense<0.000000e+00> : vector<20xf32>
    %245 = vector.multi_reduction <add>, %242, %cst_93 [1] : vector<20x32xf32> to vector<20xf32>
    %246 = vector.shape_cast %245 : vector<20xf32> to vector<20x1xf32>
    %cst_94 = arith.constant 3.200000e+01 : f32
    %247 = vector.broadcast %cst_94 : f32 to vector<20x1xf32>
    %248 = arith.divf %246, %247 : vector<20x1xf32>
    %249 = vector.broadcast %248 : vector<20x1xf32> to vector<20x32xf32>
    %250 = arith.subf %242, %249 : vector<20x32xf32>
    %251 = arith.mulf %250, %250 : vector<20x32xf32>
    %cst_95 = arith.constant dense<0.000000e+00> : vector<20xf32>
    %252 = vector.multi_reduction <add>, %251, %cst_95 [1] : vector<20x32xf32> to vector<20xf32>
    %253 = vector.shape_cast %252 : vector<20xf32> to vector<20x1xf32>
    %cst_96 = arith.constant 3.200000e+01 : f32
    %254 = vector.broadcast %cst_96 : f32 to vector<20x1xf32>
    %255 = arith.divf %253, %254 : vector<20x1xf32>
    %256 = vector.broadcast %248 : vector<20x1xf32> to vector<20x32xf32>
    %257 = arith.subf %242, %256 : vector<20x32xf32>
    %cst_97 = arith.constant 9.99999974E-6 : f32
    %258 = vector.broadcast %cst_97 : f32 to vector<20x1xf32>
    %259 = arith.addf %255, %258 : vector<20x1xf32>
    %260 = math.rsqrt %259 : vector<20x1xf32>
    %261 = vector.broadcast %260 : vector<20x1xf32> to vector<20x32xf32>
    %262 = arith.mulf %257, %261 : vector<20x32xf32>
    %263 = vector.broadcast %243 : vector<1x32xf32> to vector<20x32xf32>
    %264 = arith.mulf %262, %263 : vector<20x32xf32>
    %265 = vector.broadcast %244 : vector<1x32xf32> to vector<20x32xf32>
    %266 = arith.addf %264, %265 : vector<20x32xf32>
    %267 = arith.truncf %266 : vector<20x32xf32> to vector<20x32xbf16>
    %c0_98 = arith.constant 0 : index
    %c0_99 = arith.constant 0 : index
    %268 = vector.load %arg19[%c0_98, %c0_99] : memref<20x32xbf16, #tpu.memory_space<vmem>>, vector<20x32xbf16>
    tpu.vector_store %arg19[%c0_98, %c0_99], %267 {strides = array<i32>} : memref<20x32xbf16, #tpu.memory_space<vmem>>, vector<20x32xbf16>,
    return
  }
}

module attributes {stable_mosaic.version = 11 : i64} {
  func.func @_encoder_layer_kernel(%arg0: memref<20x32xbf16, #tpu.memory_space<vmem>>, %arg1: memref<32x32xbf16, #tpu.memory_space<vmem>>, %arg2: memref<1x32xf32, #tpu.memory_space<vmem>>, %arg3: memref<32x32xbf16, #tpu.memory_space<vmem>>, %arg4: memref<1x32xf32, #tpu.memory_space<vmem>>, %arg5: memref<32x32xbf16, #tpu.memory_space<vmem>>, %arg6: memref<1x32xf32, #tpu.memory_space<vmem>>, %arg7: memref<32x32xbf16, #tpu.memory_space<vmem>>, %arg8: memref<1x32xf32, #tpu.memory_space<vmem>>, %arg9: memref<1x32xf32, #tpu.memory_space<vmem>>, %arg10: memref<1x32xf32, #tpu.memory_space<vmem>>, %arg11: memref<32x64xbf16, #tpu.memory_space<vmem>>, %arg12: memref<1x64xf32, #tpu.memory_space<vmem>>, %arg13: memref<64x32xbf16, #tpu.memory_space<vmem>>, %arg14: memref<1x32xf32, #tpu.memory_space<vmem>>, %arg15: memref<1x32xf32, #tpu.memory_space<vmem>>, %arg16: memref<1x32xf32, #tpu.memory_space<vmem>>, %arg17: memref<20x32xbf16, #tpu.memory_space<vmem>>) attributes {dimension_semantics = [], scalar_prefetch = 0 : i64, scratch_operands = 0 : i64, tpu.core_type = #tpu.core_type<tc>} {
    %c0 = arith.constant 0 : index
    %c0_0 = arith.constant 0 : index
    %0 = vector.load %arg0[%c0, %c0_0] : memref<20x32xbf16, #tpu.memory_space<vmem>>, vector<20x32xbf16>
    %1 = arith.extf %0 : vector<20x32xbf16> to vector<20x32xf32>
    %c0_1 = arith.constant 0 : index
    %c0_2 = arith.constant 0 : index
    %2 = vector.load %arg1[%c0_1, %c0_2] : memref<32x32xbf16, #tpu.memory_space<vmem>>, vector<32x32xbf16>
    %c0_3 = arith.constant 0 : index
    %c0_4 = arith.constant 0 : index
    %3 = vector.load %arg2[%c0_3, %c0_4] : memref<1x32xf32, #tpu.memory_space<vmem>>, vector<1x32xf32>
    %c0_5 = arith.constant 0 : index
    %c0_6 = arith.constant 0 : index
    %4 = vector.load %arg3[%c0_5, %c0_6] : memref<32x32xbf16, #tpu.memory_space<vmem>>, vector<32x32xbf16>
    %c0_7 = arith.constant 0 : index
    %c0_8 = arith.constant 0 : index
    %5 = vector.load %arg4[%c0_7, %c0_8] : memref<1x32xf32, #tpu.memory_space<vmem>>, vector<1x32xf32>
    %c0_9 = arith.constant 0 : index
    %c0_10 = arith.constant 0 : index
    %6 = vector.load %arg5[%c0_9, %c0_10] : memref<32x32xbf16, #tpu.memory_space<vmem>>, vector<32x32xbf16>
    %c0_11 = arith.constant 0 : index
    %c0_12 = arith.constant 0 : index
    %7 = vector.load %arg6[%c0_11, %c0_12] : memref<1x32xf32, #tpu.memory_space<vmem>>, vector<1x32xf32>
    %c0_13 = arith.constant 0 : index
    %c0_14 = arith.constant 0 : index
    %8 = vector.load %arg7[%c0_13, %c0_14] : memref<32x32xbf16, #tpu.memory_space<vmem>>, vector<32x32xbf16>
    %c0_15 = arith.constant 0 : index
    %c0_16 = arith.constant 0 : index
    %9 = vector.load %arg8[%c0_15, %c0_16] : memref<1x32xf32, #tpu.memory_space<vmem>>, vector<1x32xf32>
    %c0_17 = arith.constant 0 : index
    %c0_18 = arith.constant 0 : index
    %10 = vector.load %arg9[%c0_17, %c0_18] : memref<1x32xf32, #tpu.memory_space<vmem>>, vector<1x32xf32>
    %c0_19 = arith.constant 0 : index
    %c0_20 = arith.constant 0 : index
    %11 = vector.load %arg10[%c0_19, %c0_20] : memref<1x32xf32, #tpu.memory_space<vmem>>, vector<1x32xf32>
    %cst = arith.constant dense<0.000000e+00> : vector<20x32xf32>
    %12 = tpu.matmul %0, %2, %cst {dimension_numbers = #tpu.dot_dimension_numbers<[1], [0], [0], [1], [0, 0, 1, 1], [], []>} : vector<20x32xbf16>, vector<32x32xbf16>, vector<20x32xf32> -> vector<20x32xf32>
    %13 = vector.broadcast %3 : vector<1x32xf32> to vector<20x32xf32>
    %14 = arith.addf %12, %13 : vector<20x32xf32>
    %15 = arith.truncf %14 : vector<20x32xf32> to vector<20x32xbf16>
    %cst_21 = arith.constant dense<0.000000e+00> : vector<20x32xf32>
    %16 = tpu.matmul %0, %4, %cst_21 {dimension_numbers = #tpu.dot_dimension_numbers<[1], [0], [0], [1], [0, 0, 1, 1], [], []>} : vector<20x32xbf16>, vector<32x32xbf16>, vector<20x32xf32> -> vector<20x32xf32>
    %17 = vector.broadcast %5 : vector<1x32xf32> to vector<20x32xf32>
    %18 = arith.addf %16, %17 : vector<20x32xf32>
    %19 = arith.truncf %18 : vector<20x32xf32> to vector<20x32xbf16>
    %cst_22 = arith.constant dense<0.000000e+00> : vector<20x32xf32>
    %20 = tpu.matmul %0, %6, %cst_22 {dimension_numbers = #tpu.dot_dimension_numbers<[1], [0], [0], [1], [0, 0, 1, 1], [], []>} : vector<20x32xbf16>, vector<32x32xbf16>, vector<20x32xf32> -> vector<20x32xf32>
    %21 = vector.broadcast %7 : vector<1x32xf32> to vector<20x32xf32>
    %22 = arith.addf %20, %21 : vector<20x32xf32>
    %23 = arith.truncf %22 : vector<20x32xf32> to vector<20x32xbf16>
    %24 = vector.extract_strided_slice %15 {offsets = [0, 0], sizes = [10, 32], strides = [1, 1]} : vector<20x32xbf16> to vector<10x32xbf16>
    %25 = vector.extract_strided_slice %19 {offsets = [0, 0], sizes = [10, 32], strides = [1, 1]} : vector<20x32xbf16> to vector<10x32xbf16>
    %26 = vector.extract_strided_slice %23 {offsets = [0, 0], sizes = [10, 32], strides = [1, 1]} : vector<20x32xbf16> to vector<10x32xbf16>
    %27 = vector.extract_strided_slice %24 {offsets = [0, 0], sizes = [10, 8], strides = [1, 1]} : vector<10x32xbf16> to vector<10x8xbf16>
    %28 = vector.extract_strided_slice %25 {offsets = [0, 0], sizes = [10, 8], strides = [1, 1]} : vector<10x32xbf16> to vector<10x8xbf16>
    %29 = vector.extract_strided_slice %26 {offsets = [0, 0], sizes = [10, 8], strides = [1, 1]} : vector<10x32xbf16> to vector<10x8xbf16>
    %cst_23 = arith.constant dense<0.000000e+00> : vector<10x10xf32>
    %30 = tpu.matmul %27, %28, %cst_23 {dimension_numbers = #tpu.dot_dimension_numbers<[1], [1], [0], [0], [0, 0, 1, 0], [], []>} : vector<10x8xbf16>, vector<10x8xbf16>, vector<10x10xf32> -> vector<10x10xf32>
    %cst_24 = arith.constant 0.353553385 : f32
    %31 = vector.broadcast %cst_24 : f32 to vector<10x10xf32>
    %32 = arith.mulf %30, %31 : vector<10x10xf32>
    %cst_25 = arith.constant dense<0xFF800000> : vector<10xf32>
    %33 = vector.multi_reduction <maximumf>, %32, %cst_25 [1] : vector<10x10xf32> to vector<10xf32>
    %34 = vector.shape_cast %33 : vector<10xf32> to vector<10x1xf32>
    %35 = vector.broadcast %34 : vector<10x1xf32> to vector<10x10xf32>
    %36 = arith.subf %32, %35 : vector<10x10xf32>
    %37 = math.exp %36 : vector<10x10xf32>
    %cst_26 = arith.constant dense<0.000000e+00> : vector<10xf32>
    %38 = vector.multi_reduction <add>, %37, %cst_26 [1] : vector<10x10xf32> to vector<10xf32>
    %39 = vector.shape_cast %38 : vector<10xf32> to vector<10x1xf32>
    %40 = tpu.reciprocal %39 {approx = true} : vector<10x1xf32> -> vector<10x1xf32>
    %41 = vector.broadcast %40 : vector<10x1xf32> to vector<10x10xf32>
    %42 = arith.mulf %37, %41 : vector<10x10xf32>
    %43 = arith.truncf %42 : vector<10x10xf32> to vector<10x10xbf16>
    %cst_27 = arith.constant dense<0.000000e+00> : vector<10x8xf32>
    %44 = tpu.matmul %43, %29, %cst_27 {dimension_numbers = #tpu.dot_dimension_numbers<[1], [0], [0], [1], [0, 0, 1, 1], [], []>} : vector<10x10xbf16>, vector<10x8xbf16>, vector<10x8xf32> -> vector<10x8xf32>
    %45 = vector.extract_strided_slice %24 {offsets = [0, 8], sizes = [10, 8], strides = [1, 1]} : vector<10x32xbf16> to vector<10x8xbf16>
    %46 = vector.extract_strided_slice %25 {offsets = [0, 8], sizes = [10, 8], strides = [1, 1]} : vector<10x32xbf16> to vector<10x8xbf16>
    %47 = vector.extract_strided_slice %26 {offsets = [0, 8], sizes = [10, 8], strides = [1, 1]} : vector<10x32xbf16> to vector<10x8xbf16>
    %cst_28 = arith.constant dense<0.000000e+00> : vector<10x10xf32>
    %48 = tpu.matmul %45, %46, %cst_28 {dimension_numbers = #tpu.dot_dimension_numbers<[1], [1], [0], [0], [0, 0, 1, 0], [], []>} : vector<10x8xbf16>, vector<10x8xbf16>, vector<10x10xf32> -> vector<10x10xf32>
    %cst_29 = arith.constant 0.353553385 : f32
    %49 = vector.broadcast %cst_29 : f32 to vector<10x10xf32>
    %50 = arith.mulf %48, %49 : vector<10x10xf32>
    %cst_30 = arith.constant dense<0xFF800000> : vector<10xf32>
    %51 = vector.multi_reduction <maximumf>, %50, %cst_30 [1] : vector<10x10xf32> to vector<10xf32>
    %52 = vector.shape_cast %51 : vector<10xf32> to vector<10x1xf32>
    %53 = vector.broadcast %52 : vector<10x1xf32> to vector<10x10xf32>
    %54 = arith.subf %50, %53 : vector<10x10xf32>
    %55 = math.exp %54 : vector<10x10xf32>
    %cst_31 = arith.constant dense<0.000000e+00> : vector<10xf32>
    %56 = vector.multi_reduction <add>, %55, %cst_31 [1] : vector<10x10xf32> to vector<10xf32>
    %57 = vector.shape_cast %56 : vector<10xf32> to vector<10x1xf32>
    %58 = tpu.reciprocal %57 {approx = true} : vector<10x1xf32> -> vector<10x1xf32>
    %59 = vector.broadcast %58 : vector<10x1xf32> to vector<10x10xf32>
    %60 = arith.mulf %55, %59 : vector<10x10xf32>
    %61 = arith.truncf %60 : vector<10x10xf32> to vector<10x10xbf16>
    %cst_32 = arith.constant dense<0.000000e+00> : vector<10x8xf32>
    %62 = tpu.matmul %61, %47, %cst_32 {dimension_numbers = #tpu.dot_dimension_numbers<[1], [0], [0], [1], [0, 0, 1, 1], [], []>} : vector<10x10xbf16>, vector<10x8xbf16>, vector<10x8xf32> -> vector<10x8xf32>
    %63 = vector.extract_strided_slice %24 {offsets = [0, 16], sizes = [10, 8], strides = [1, 1]} : vector<10x32xbf16> to vector<10x8xbf16>
    %64 = vector.extract_strided_slice %25 {offsets = [0, 16], sizes = [10, 8], strides = [1, 1]} : vector<10x32xbf16> to vector<10x8xbf16>
    %65 = vector.extract_strided_slice %26 {offsets = [0, 16], sizes = [10, 8], strides = [1, 1]} : vector<10x32xbf16> to vector<10x8xbf16>
    %cst_33 = arith.constant dense<0.000000e+00> : vector<10x10xf32>
    %66 = tpu.matmul %63, %64, %cst_33 {dimension_numbers = #tpu.dot_dimension_numbers<[1], [1], [0], [0], [0, 0, 1, 0], [], []>} : vector<10x8xbf16>, vector<10x8xbf16>, vector<10x10xf32> -> vector<10x10xf32>
    %cst_34 = arith.constant 0.353553385 : f32
    %67 = vector.broadcast %cst_34 : f32 to vector<10x10xf32>
    %68 = arith.mulf %66, %67 : vector<10x10xf32>
    %cst_35 = arith.constant dense<0xFF800000> : vector<10xf32>
    %69 = vector.multi_reduction <maximumf>, %68, %cst_35 [1] : vector<10x10xf32> to vector<10xf32>
    %70 = vector.shape_cast %69 : vector<10xf32> to vector<10x1xf32>
    %71 = vector.broadcast %70 : vector<10x1xf32> to vector<10x10xf32>
    %72 = arith.subf %68, %71 : vector<10x10xf32>
    %73 = math.exp %72 : vector<10x10xf32>
    %cst_36 = arith.constant dense<0.000000e+00> : vector<10xf32>
    %74 = vector.multi_reduction <add>, %73, %cst_36 [1] : vector<10x10xf32> to vector<10xf32>
    %75 = vector.shape_cast %74 : vector<10xf32> to vector<10x1xf32>
    %76 = tpu.reciprocal %75 {approx = true} : vector<10x1xf32> -> vector<10x1xf32>
    %77 = vector.broadcast %76 : vector<10x1xf32> to vector<10x10xf32>
    %78 = arith.mulf %73, %77 : vector<10x10xf32>
    %79 = arith.truncf %78 : vector<10x10xf32> to vector<10x10xbf16>
    %cst_37 = arith.constant dense<0.000000e+00> : vector<10x8xf32>
    %80 = tpu.matmul %79, %65, %cst_37 {dimension_numbers = #tpu.dot_dimension_numbers<[1], [0], [0], [1], [0, 0, 1, 1], [], []>} : vector<10x10xbf16>, vector<10x8xbf16>, vector<10x8xf32> -> vector<10x8xf32>
    %81 = vector.extract_strided_slice %24 {offsets = [0, 24], sizes = [10, 8], strides = [1, 1]} : vector<10x32xbf16> to vector<10x8xbf16>
    %82 = vector.extract_strided_slice %25 {offsets = [0, 24], sizes = [10, 8], strides = [1, 1]} : vector<10x32xbf16> to vector<10x8xbf16>
    %83 = vector.extract_strided_slice %26 {offsets = [0, 24], sizes = [10, 8], strides = [1, 1]} : vector<10x32xbf16> to vector<10x8xbf16>
    %cst_38 = arith.constant dense<0.000000e+00> : vector<10x10xf32>
    %84 = tpu.matmul %81, %82, %cst_38 {dimension_numbers = #tpu.dot_dimension_numbers<[1], [1], [0], [0], [0, 0, 1, 0], [], []>} : vector<10x8xbf16>, vector<10x8xbf16>, vector<10x10xf32> -> vector<10x10xf32>
    %cst_39 = arith.constant 0.353553385 : f32
    %85 = vector.broadcast %cst_39 : f32 to vector<10x10xf32>
    %86 = arith.mulf %84, %85 : vector<10x10xf32>
    %cst_40 = arith.constant dense<0xFF800000> : vector<10xf32>
    %87 = vector.multi_reduction <maximumf>, %86, %cst_40 [1] : vector<10x10xf32> to vector<10xf32>
    %88 = vector.shape_cast %87 : vector<10xf32> to vector<10x1xf32>
    %89 = vector.broadcast %88 : vector<10x1xf32> to vector<10x10xf32>
    %90 = arith.subf %86, %89 : vector<10x10xf32>
    %91 = math.exp %90 : vector<10x10xf32>
    %cst_41 = arith.constant dense<0.000000e+00> : vector<10xf32>
    %92 = vector.multi_reduction <add>, %91, %cst_41 [1] : vector<10x10xf32> to vector<10xf32>
    %93 = vector.shape_cast %92 : vector<10xf32> to vector<10x1xf32>
    %94 = tpu.reciprocal %93 {approx = true} : vector<10x1xf32> -> vector<10x1xf32>
    %95 = vector.broadcast %94 : vector<10x1xf32> to vector<10x10xf32>
    %96 = arith.mulf %91, %95 : vector<10x10xf32>
    %97 = arith.truncf %96 : vector<10x10xf32> to vector<10x10xbf16>
    %cst_42 = arith.constant dense<0.000000e+00> : vector<10x8xf32>
    %98 = tpu.matmul %97, %83, %cst_42 {dimension_numbers = #tpu.dot_dimension_numbers<[1], [0], [0], [1], [0, 0, 1, 1], [], []>} : vector<10x10xbf16>, vector<10x8xbf16>, vector<10x8xf32> -> vector<10x8xf32>
    %99 = tpu.concatenate %44, %62, %80, %98 in 1 : vector<10x8xf32>, vector<10x8xf32>, vector<10x8xf32>, vector<10x8xf32> -> vector<10x32xf32>
    %100 = vector.extract_strided_slice %15 {offsets = [10, 0], sizes = [10, 32], strides = [1, 1]} : vector<20x32xbf16> to vector<10x32xbf16>
    %101 = vector.extract_strided_slice %19 {offsets = [10, 0], sizes = [10, 32], strides = [1, 1]} : vector<20x32xbf16> to vector<10x32xbf16>
    %102 = vector.extract_strided_slice %23 {offsets = [10, 0], sizes = [10, 32], strides = [1, 1]} : vector<20x32xbf16> to vector<10x32xbf16>
    %103 = vector.extract_strided_slice %100 {offsets = [0, 0], sizes = [10, 8], strides = [1, 1]} : vector<10x32xbf16> to vector<10x8xbf16>
    %104 = vector.extract_strided_slice %101 {offsets = [0, 0], sizes = [10, 8], strides = [1, 1]} : vector<10x32xbf16> to vector<10x8xbf16>
    %105 = vector.extract_strided_slice %102 {offsets = [0, 0], sizes = [10, 8], strides = [1, 1]} : vector<10x32xbf16> to vector<10x8xbf16>
    %cst_43 = arith.constant dense<0.000000e+00> : vector<10x10xf32>
    %106 = tpu.matmul %103, %104, %cst_43 {dimension_numbers = #tpu.dot_dimension_numbers<[1], [1], [0], [0], [0, 0, 1, 0], [], []>} : vector<10x8xbf16>, vector<10x8xbf16>, vector<10x10xf32> -> vector<10x10xf32>
    %cst_44 = arith.constant 0.353553385 : f32
    %107 = vector.broadcast %cst_44 : f32 to vector<10x10xf32>
    %108 = arith.mulf %106, %107 : vector<10x10xf32>
    %cst_45 = arith.constant dense<0xFF800000> : vector<10xf32>
    %109 = vector.multi_reduction <maximumf>, %108, %cst_45 [1] : vector<10x10xf32> to vector<10xf32>
    %110 = vector.shape_cast %109 : vector<10xf32> to vector<10x1xf32>
    %111 = vector.broadcast %110 : vector<10x1xf32> to vector<10x10xf32>
    %112 = arith.subf %108, %111 : vector<10x10xf32>
    %113 = math.exp %112 : vector<10x10xf32>
    %cst_46 = arith.constant dense<0.000000e+00> : vector<10xf32>
    %114 = vector.multi_reduction <add>, %113, %cst_46 [1] : vector<10x10xf32> to vector<10xf32>
    %115 = vector.shape_cast %114 : vector<10xf32> to vector<10x1xf32>
    %116 = tpu.reciprocal %115 {approx = true} : vector<10x1xf32> -> vector<10x1xf32>
    %117 = vector.broadcast %116 : vector<10x1xf32> to vector<10x10xf32>
    %118 = arith.mulf %113, %117 : vector<10x10xf32>
    %119 = arith.truncf %118 : vector<10x10xf32> to vector<10x10xbf16>
    %cst_47 = arith.constant dense<0.000000e+00> : vector<10x8xf32>
    %120 = tpu.matmul %119, %105, %cst_47 {dimension_numbers = #tpu.dot_dimension_numbers<[1], [0], [0], [1], [0, 0, 1, 1], [], []>} : vector<10x10xbf16>, vector<10x8xbf16>, vector<10x8xf32> -> vector<10x8xf32>
    %121 = vector.extract_strided_slice %100 {offsets = [0, 8], sizes = [10, 8], strides = [1, 1]} : vector<10x32xbf16> to vector<10x8xbf16>
    %122 = vector.extract_strided_slice %101 {offsets = [0, 8], sizes = [10, 8], strides = [1, 1]} : vector<10x32xbf16> to vector<10x8xbf16>
    %123 = vector.extract_strided_slice %102 {offsets = [0, 8], sizes = [10, 8], strides = [1, 1]} : vector<10x32xbf16> to vector<10x8xbf16>
    %cst_48 = arith.constant dense<0.000000e+00> : vector<10x10xf32>
    %124 = tpu.matmul %121, %122, %cst_48 {dimension_numbers = #tpu.dot_dimension_numbers<[1], [1], [0], [0], [0, 0, 1, 0], [], []>} : vector<10x8xbf16>, vector<10x8xbf16>, vector<10x10xf32> -> vector<10x10xf32>
    %cst_49 = arith.constant 0.353553385 : f32
    %125 = vector.broadcast %cst_49 : f32 to vector<10x10xf32>
    %126 = arith.mulf %124, %125 : vector<10x10xf32>
    %cst_50 = arith.constant dense<0xFF800000> : vector<10xf32>
    %127 = vector.multi_reduction <maximumf>, %126, %cst_50 [1] : vector<10x10xf32> to vector<10xf32>
    %128 = vector.shape_cast %127 : vector<10xf32> to vector<10x1xf32>
    %129 = vector.broadcast %128 : vector<10x1xf32> to vector<10x10xf32>
    %130 = arith.subf %126, %129 : vector<10x10xf32>
    %131 = math.exp %130 : vector<10x10xf32>
    %cst_51 = arith.constant dense<0.000000e+00> : vector<10xf32>
    %132 = vector.multi_reduction <add>, %131, %cst_51 [1] : vector<10x10xf32> to vector<10xf32>
    %133 = vector.shape_cast %132 : vector<10xf32> to vector<10x1xf32>
    %134 = tpu.reciprocal %133 {approx = true} : vector<10x1xf32> -> vector<10x1xf32>
    %135 = vector.broadcast %134 : vector<10x1xf32> to vector<10x10xf32>
    %136 = arith.mulf %131, %135 : vector<10x10xf32>
    %137 = arith.truncf %136 : vector<10x10xf32> to vector<10x10xbf16>
    %cst_52 = arith.constant dense<0.000000e+00> : vector<10x8xf32>
    %138 = tpu.matmul %137, %123, %cst_52 {dimension_numbers = #tpu.dot_dimension_numbers<[1], [0], [0], [1], [0, 0, 1, 1], [], []>} : vector<10x10xbf16>, vector<10x8xbf16>, vector<10x8xf32> -> vector<10x8xf32>
    %139 = vector.extract_strided_slice %100 {offsets = [0, 16], sizes = [10, 8], strides = [1, 1]} : vector<10x32xbf16> to vector<10x8xbf16>
    %140 = vector.extract_strided_slice %101 {offsets = [0, 16], sizes = [10, 8], strides = [1, 1]} : vector<10x32xbf16> to vector<10x8xbf16>
    %141 = vector.extract_strided_slice %102 {offsets = [0, 16], sizes = [10, 8], strides = [1, 1]} : vector<10x32xbf16> to vector<10x8xbf16>
    %cst_53 = arith.constant dense<0.000000e+00> : vector<10x10xf32>
    %142 = tpu.matmul %139, %140, %cst_53 {dimension_numbers = #tpu.dot_dimension_numbers<[1], [1], [0], [0], [0, 0, 1, 0], [], []>} : vector<10x8xbf16>, vector<10x8xbf16>, vector<10x10xf32> -> vector<10x10xf32>
    %cst_54 = arith.constant 0.353553385 : f32
    %143 = vector.broadcast %cst_54 : f32 to vector<10x10xf32>
    %144 = arith.mulf %142, %143 : vector<10x10xf32>
    %cst_55 = arith.constant dense<0xFF800000> : vector<10xf32>
    %145 = vector.multi_reduction <maximumf>, %144, %cst_55 [1] : vector<10x10xf32> to vector<10xf32>
    %146 = vector.shape_cast %145 : vector<10xf32> to vector<10x1xf32>
    %147 = vector.broadcast %146 : vector<10x1xf32> to vector<10x10xf32>
    %148 = arith.subf %144, %147 : vector<10x10xf32>
    %149 = math.exp %148 : vector<10x10xf32>
    %cst_56 = arith.constant dense<0.000000e+00> : vector<10xf32>
    %150 = vector.multi_reduction <add>, %149, %cst_56 [1] : vector<10x10xf32> to vector<10xf32>
    %151 = vector.shape_cast %150 : vector<10xf32> to vector<10x1xf32>
    %152 = tpu.reciprocal %151 {approx = true} : vector<10x1xf32> -> vector<10x1xf32>
    %153 = vector.broadcast %152 : vector<10x1xf32> to vector<10x10xf32>
    %154 = arith.mulf %149, %153 : vector<10x10xf32>
    %155 = arith.truncf %154 : vector<10x10xf32> to vector<10x10xbf16>
    %cst_57 = arith.constant dense<0.000000e+00> : vector<10x8xf32>
    %156 = tpu.matmul %155, %141, %cst_57 {dimension_numbers = #tpu.dot_dimension_numbers<[1], [0], [0], [1], [0, 0, 1, 1], [], []>} : vector<10x10xbf16>, vector<10x8xbf16>, vector<10x8xf32> -> vector<10x8xf32>
    %157 = vector.extract_strided_slice %100 {offsets = [0, 24], sizes = [10, 8], strides = [1, 1]} : vector<10x32xbf16> to vector<10x8xbf16>
    %158 = vector.extract_strided_slice %101 {offsets = [0, 24], sizes = [10, 8], strides = [1, 1]} : vector<10x32xbf16> to vector<10x8xbf16>
    %159 = vector.extract_strided_slice %102 {offsets = [0, 24], sizes = [10, 8], strides = [1, 1]} : vector<10x32xbf16> to vector<10x8xbf16>
    %cst_58 = arith.constant dense<0.000000e+00> : vector<10x10xf32>
    %160 = tpu.matmul %157, %158, %cst_58 {dimension_numbers = #tpu.dot_dimension_numbers<[1], [1], [0], [0], [0, 0, 1, 0], [], []>} : vector<10x8xbf16>, vector<10x8xbf16>, vector<10x10xf32> -> vector<10x10xf32>
    %cst_59 = arith.constant 0.353553385 : f32
    %161 = vector.broadcast %cst_59 : f32 to vector<10x10xf32>
    %162 = arith.mulf %160, %161 : vector<10x10xf32>
    %cst_60 = arith.constant dense<0xFF800000> : vector<10xf32>
    %163 = vector.multi_reduction <maximumf>, %162, %cst_60 [1] : vector<10x10xf32> to vector<10xf32>
    %164 = vector.shape_cast %163 : vector<10xf32> to vector<10x1xf32>
    %165 = vector.broadcast %164 : vector<10x1xf32> to vector<10x10xf32>
    %166 = arith.subf %162, %165 : vector<10x10xf32>
    %167 = math.exp %166 : vector<10x10xf32>
    %cst_61 = arith.constant dense<0.000000e+00> : vector<10xf32>
    %168 = vector.multi_reduction <add>, %167, %cst_61 [1] : vector<10x10xf32> to vector<10xf32>
    %169 = vector.shape_cast %168 : vector<10xf32> to vector<10x1xf32>
    %170 = tpu.reciprocal %169 {approx = true} : vector<10x1xf32> -> vector<10x1xf32>
    %171 = vector.broadcast %170 : vector<10x1xf32> to vector<10x10xf32>
    %172 = arith.mulf %167, %171 : vector<10x10xf32>
    %173 = arith.truncf %172 : vector<10x10xf32> to vector<10x10xbf16>
    %cst_62 = arith.constant dense<0.000000e+00> : vector<10x8xf32>
    %174 = tpu.matmul %173, %159, %cst_62 {dimension_numbers = #tpu.dot_dimension_numbers<[1], [0], [0], [1], [0, 0, 1, 1], [], []>} : vector<10x10xbf16>, vector<10x8xbf16>, vector<10x8xf32> -> vector<10x8xf32>
    %175 = tpu.concatenate %120, %138, %156, %174 in 1 : vector<10x8xf32>, vector<10x8xf32>, vector<10x8xf32>, vector<10x8xf32> -> vector<10x32xf32>
    %176 = tpu.concatenate %99, %175 in 0 : vector<10x32xf32>, vector<10x32xf32> -> vector<20x32xf32>
    %177 = arith.truncf %176 : vector<20x32xf32> to vector<20x32xbf16>
    %cst_63 = arith.constant dense<0.000000e+00> : vector<20x32xf32>
    %178 = tpu.matmul %177, %8, %cst_63 {dimension_numbers = #tpu.dot_dimension_numbers<[1], [0], [0], [1], [0, 0, 1, 1], [], []>} : vector<20x32xbf16>, vector<32x32xbf16>, vector<20x32xf32> -> vector<20x32xf32>
    %179 = vector.broadcast %9 : vector<1x32xf32> to vector<20x32xf32>
    %180 = arith.addf %178, %179 : vector<20x32xf32>
    %181 = arith.addf %1, %180 : vector<20x32xf32>
    %cst_64 = arith.constant dense<0.000000e+00> : vector<20xf32>
    %182 = vector.multi_reduction <add>, %181, %cst_64 [1] : vector<20x32xf32> to vector<20xf32>
    %183 = vector.shape_cast %182 : vector<20xf32> to vector<20x1xf32>
    %cst_65 = arith.constant 3.200000e+01 : f32
    %184 = vector.broadcast %cst_65 : f32 to vector<20x1xf32>
    %185 = arith.divf %183, %184 : vector<20x1xf32>
    %186 = vector.broadcast %185 : vector<20x1xf32> to vector<20x32xf32>
    %187 = arith.subf %181, %186 : vector<20x32xf32>
    %188 = arith.mulf %187, %187 : vector<20x32xf32>
    %cst_66 = arith.constant dense<0.000000e+00> : vector<20xf32>
    %189 = vector.multi_reduction <add>, %188, %cst_66 [1] : vector<20x32xf32> to vector<20xf32>
    %190 = vector.shape_cast %189 : vector<20xf32> to vector<20x1xf32>
    %cst_67 = arith.constant 3.200000e+01 : f32
    %191 = vector.broadcast %cst_67 : f32 to vector<20x1xf32>
    %192 = arith.divf %190, %191 : vector<20x1xf32>
    %193 = vector.broadcast %185 : vector<20x1xf32> to vector<20x32xf32>
    %194 = arith.subf %181, %193 : vector<20x32xf32>
    %cst_68 = arith.constant 9.99999974E-6 : f32
    %195 = vector.broadcast %cst_68 : f32 to vector<20x1xf32>
    %196 = arith.addf %192, %195 : vector<20x1xf32>
    %197 = math.rsqrt %196 : vector<20x1xf32>
    %198 = vector.broadcast %197 : vector<20x1xf32> to vector<20x32xf32>
    %199 = arith.mulf %194, %198 : vector<20x32xf32>
    %200 = vector.broadcast %10 : vector<1x32xf32> to vector<20x32xf32>
    %201 = arith.mulf %199, %200 : vector<20x32xf32>
    %202 = vector.broadcast %11 : vector<1x32xf32> to vector<20x32xf32>
    %203 = arith.addf %201, %202 : vector<20x32xf32>
    %c0_69 = arith.constant 0 : index
    %c0_70 = arith.constant 0 : index
    %204 = vector.load %arg11[%c0_69, %c0_70] : memref<32x64xbf16, #tpu.memory_space<vmem>>, vector<32x64xbf16>
    %c0_71 = arith.constant 0 : index
    %c0_72 = arith.constant 0 : index
    %205 = vector.load %arg12[%c0_71, %c0_72] : memref<1x64xf32, #tpu.memory_space<vmem>>, vector<1x64xf32>
    %c0_73 = arith.constant 0 : index
    %c0_74 = arith.constant 0 : index
    %206 = vector.load %arg13[%c0_73, %c0_74] : memref<64x32xbf16, #tpu.memory_space<vmem>>, vector<64x32xbf16>
    %c0_75 = arith.constant 0 : index
    %c0_76 = arith.constant 0 : index
    %207 = vector.load %arg14[%c0_75, %c0_76] : memref<1x32xf32, #tpu.memory_space<vmem>>, vector<1x32xf32>
    %c0_77 = arith.constant 0 : index
    %c0_78 = arith.constant 0 : index
    %208 = vector.load %arg15[%c0_77, %c0_78] : memref<1x32xf32, #tpu.memory_space<vmem>>, vector<1x32xf32>
    %c0_79 = arith.constant 0 : index
    %c0_80 = arith.constant 0 : index
    %209 = vector.load %arg16[%c0_79, %c0_80] : memref<1x32xf32, #tpu.memory_space<vmem>>, vector<1x32xf32>
    %210 = arith.truncf %203 : vector<20x32xf32> to vector<20x32xbf16>
    %cst_81 = arith.constant dense<0.000000e+00> : vector<20x64xf32>
    %211 = tpu.matmul %210, %204, %cst_81 {dimension_numbers = #tpu.dot_dimension_numbers<[1], [0], [0], [1], [0, 0, 1, 1], [], []>} : vector<20x32xbf16>, vector<32x64xbf16>, vector<20x64xf32> -> vector<20x64xf32>
    %212 = vector.broadcast %205 : vector<1x64xf32> to vector<20x64xf32>
    %213 = arith.addf %211, %212 : vector<20x64xf32>
    %cst_82 = arith.constant 0.000000e+00 : f32
    %214 = vector.broadcast %cst_82 : f32 to vector<20x64xf32>
    %215 = arith.maximumf %213, %214 : vector<20x64xf32>
    %216 = arith.truncf %215 : vector<20x64xf32> to vector<20x64xbf16>
    %cst_83 = arith.constant dense<0.000000e+00> : vector<20x32xf32>
    %217 = tpu.matmul %216, %206, %cst_83 {dimension_numbers = #tpu.dot_dimension_numbers<[1], [0], [0], [1], [0, 0, 1, 1], [], []>} : vector<20x64xbf16>, vector<64x32xbf16>, vector<20x32xf32> -> vector<20x32xf32>
    %218 = arith.addf %203, %217 : vector<20x32xf32>
    %219 = vector.broadcast %207 : vector<1x32xf32> to vector<20x32xf32>
    %220 = arith.addf %218, %219 : vector<20x32xf32>
    %cst_84 = arith.constant dense<0.000000e+00> : vector<20xf32>
    %221 = vector.multi_reduction <add>, %220, %cst_84 [1] : vector<20x32xf32> to vector<20xf32>
    %222 = vector.shape_cast %221 : vector<20xf32> to vector<20x1xf32>
    %cst_85 = arith.constant 3.200000e+01 : f32
    %223 = vector.broadcast %cst_85 : f32 to vector<20x1xf32>
    %224 = arith.divf %222, %223 : vector<20x1xf32>
    %225 = vector.broadcast %224 : vector<20x1xf32> to vector<20x32xf32>
    %226 = arith.subf %220, %225 : vector<20x32xf32>
    %227 = arith.mulf %226, %226 : vector<20x32xf32>
    %cst_86 = arith.constant dense<0.000000e+00> : vector<20xf32>
    %228 = vector.multi_reduction <add>, %227, %cst_86 [1] : vector<20x32xf32> to vector<20xf32>
    %229 = vector.shape_cast %228 : vector<20xf32> to vector<20x1xf32>
    %cst_87 = arith.constant 3.200000e+01 : f32
    %230 = vector.broadcast %cst_87 : f32 to vector<20x1xf32>
    %231 = arith.divf %229, %230 : vector<20x1xf32>
    %232 = vector.broadcast %224 : vector<20x1xf32> to vector<20x32xf32>
    %233 = arith.subf %220, %232 : vector<20x32xf32>
    %cst_88 = arith.constant 9.99999974E-6 : f32
    %234 = vector.broadcast %cst_88 : f32 to vector<20x1xf32>
    %235 = arith.addf %231, %234 : vector<20x1xf32>
    %236 = math.rsqrt %235 : vector<20x1xf32>
    %237 = vector.broadcast %236 : vector<20x1xf32> to vector<20x32xf32>
    %238 = arith.mulf %233, %237 : vector<20x32xf32>
    %239 = vector.broadcast %208 : vector<1x32xf32> to vector<20x32xf32>
    %240 = arith.mulf %238, %239 : vector<20x32xf32>
    %241 = vector.broadcast %209 : vector<1x32xf32> to vector<20x32xf32>
    %242 = arith.addf %240, %241 : vector<20x32xf32>
    %243 = arith.truncf %242 : vector<20x32xf32> to vector<20x32xbf16>
    %c0_89 = arith.constant 0 : index
    %c0_90 = arith.constant 0 : index
    %244 = vector.load %arg17[%c0_89, %c0_90] : memref<20x32xbf16, #tpu.memory_space<vmem>>, vector<20x32xbf16>
    tpu.vector_store %arg17[%c0_89, %c0_90], %243 {strides = array<i32>} : memref<20x32xbf16, #tpu.memory_space<vmem>>, vector<20x32xbf16>,
    return
  }
}

module attributes {stable_mosaic.version = 11 : i64} {
  func.func @_decoder_layer_kernel(%arg0: memref<16x32xbf16, #tpu.memory_space<vmem>>, %arg1: memref<20x32xbf16, #tpu.memory_space<vmem>>, %arg2: memref<32x32xbf16, #tpu.memory_space<vmem>>, %arg3: memref<1x32xf32, #tpu.memory_space<vmem>>, %arg4: memref<32x32xbf16, #tpu.memory_space<vmem>>, %arg5: memref<1x32xf32, #tpu.memory_space<vmem>>, %arg6: memref<32x32xbf16, #tpu.memory_space<vmem>>, %arg7: memref<1x32xf32, #tpu.memory_space<vmem>>, %arg8: memref<32x32xbf16, #tpu.memory_space<vmem>>, %arg9: memref<1x32xf32, #tpu.memory_space<vmem>>, %arg10: memref<1x32xf32, #tpu.memory_space<vmem>>, %arg11: memref<1x32xf32, #tpu.memory_space<vmem>>, %arg12: memref<32x32xbf16, #tpu.memory_space<vmem>>, %arg13: memref<1x32xf32, #tpu.memory_space<vmem>>, %arg14: memref<32x32xbf16, #tpu.memory_space<vmem>>, %arg15: memref<1x32xf32, #tpu.memory_space<vmem>>, %arg16: memref<32x32xbf16, #tpu.memory_space<vmem>>, %arg17: memref<1x32xf32, #tpu.memory_space<vmem>>, %arg18: memref<32x32xbf16, #tpu.memory_space<vmem>>, %arg19: memref<1x32xf32, #tpu.memory_space<vmem>>, %arg20: memref<1x32xf32, #tpu.memory_space<vmem>>, %arg21: memref<1x32xf32, #tpu.memory_space<vmem>>, %arg22: memref<32x64xbf16, #tpu.memory_space<vmem>>, %arg23: memref<1x64xf32, #tpu.memory_space<vmem>>, %arg24: memref<64x32xbf16, #tpu.memory_space<vmem>>, %arg25: memref<1x32xf32, #tpu.memory_space<vmem>>, %arg26: memref<1x32xf32, #tpu.memory_space<vmem>>, %arg27: memref<1x32xf32, #tpu.memory_space<vmem>>, %arg28: memref<16x32xbf16, #tpu.memory_space<vmem>>) attributes {dimension_semantics = [], scalar_prefetch = 0 : i64, scratch_operands = 0 : i64, tpu.core_type = #tpu.core_type<tc>} {
    %c0 = arith.constant 0 : index
    %c0_0 = arith.constant 0 : index
    %0 = vector.load %arg0[%c0, %c0_0] : memref<16x32xbf16, #tpu.memory_space<vmem>>, vector<16x32xbf16>
    %1 = arith.extf %0 : vector<16x32xbf16> to vector<16x32xf32>
    %c0_1 = arith.constant 0 : index
    %c0_2 = arith.constant 0 : index
    %2 = vector.load %arg1[%c0_1, %c0_2] : memref<20x32xbf16, #tpu.memory_space<vmem>>, vector<20x32xbf16>
    %c0_3 = arith.constant 0 : index
    %c0_4 = arith.constant 0 : index
    %3 = vector.load %arg2[%c0_3, %c0_4] : memref<32x32xbf16, #tpu.memory_space<vmem>>, vector<32x32xbf16>
    %c0_5 = arith.constant 0 : index
    %c0_6 = arith.constant 0 : index
    %4 = vector.load %arg3[%c0_5, %c0_6] : memref<1x32xf32, #tpu.memory_space<vmem>>, vector<1x32xf32>
    %c0_7 = arith.constant 0 : index
    %c0_8 = arith.constant 0 : index
    %5 = vector.load %arg4[%c0_7, %c0_8] : memref<32x32xbf16, #tpu.memory_space<vmem>>, vector<32x32xbf16>
    %c0_9 = arith.constant 0 : index
    %c0_10 = arith.constant 0 : index
    %6 = vector.load %arg5[%c0_9, %c0_10] : memref<1x32xf32, #tpu.memory_space<vmem>>, vector<1x32xf32>
    %c0_11 = arith.constant 0 : index
    %c0_12 = arith.constant 0 : index
    %7 = vector.load %arg6[%c0_11, %c0_12] : memref<32x32xbf16, #tpu.memory_space<vmem>>, vector<32x32xbf16>
    %c0_13 = arith.constant 0 : index
    %c0_14 = arith.constant 0 : index
    %8 = vector.load %arg7[%c0_13, %c0_14] : memref<1x32xf32, #tpu.memory_space<vmem>>, vector<1x32xf32>
    %c0_15 = arith.constant 0 : index
    %c0_16 = arith.constant 0 : index
    %9 = vector.load %arg8[%c0_15, %c0_16] : memref<32x32xbf16, #tpu.memory_space<vmem>>, vector<32x32xbf16>
    %c0_17 = arith.constant 0 : index
    %c0_18 = arith.constant 0 : index
    %10 = vector.load %arg9[%c0_17, %c0_18] : memref<1x32xf32, #tpu.memory_space<vmem>>, vector<1x32xf32>
    %c0_19 = arith.constant 0 : index
    %c0_20 = arith.constant 0 : index
    %11 = vector.load %arg10[%c0_19, %c0_20] : memref<1x32xf32, #tpu.memory_space<vmem>>, vector<1x32xf32>
    %c0_21 = arith.constant 0 : index
    %c0_22 = arith.constant 0 : index
    %12 = vector.load %arg11[%c0_21, %c0_22] : memref<1x32xf32, #tpu.memory_space<vmem>>, vector<1x32xf32>
    %cst = arith.constant dense<0.000000e+00> : vector<16x32xf32>
    %13 = tpu.matmul %0, %3, %cst {dimension_numbers = #tpu.dot_dimension_numbers<[1], [0], [0], [1], [0, 0, 1, 1], [], []>} : vector<16x32xbf16>, vector<32x32xbf16>, vector<16x32xf32> -> vector<16x32xf32>
    %14 = vector.broadcast %4 : vector<1x32xf32> to vector<16x32xf32>
    %15 = arith.addf %13, %14 : vector<16x32xf32>
    %16 = arith.truncf %15 : vector<16x32xf32> to vector<16x32xbf16>
    %cst_23 = arith.constant dense<0.000000e+00> : vector<16x32xf32>
    %17 = tpu.matmul %0, %5, %cst_23 {dimension_numbers = #tpu.dot_dimension_numbers<[1], [0], [0], [1], [0, 0, 1, 1], [], []>} : vector<16x32xbf16>, vector<32x32xbf16>, vector<16x32xf32> -> vector<16x32xf32>
    %18 = vector.broadcast %6 : vector<1x32xf32> to vector<16x32xf32>
    %19 = arith.addf %17, %18 : vector<16x32xf32>
    %20 = arith.truncf %19 : vector<16x32xf32> to vector<16x32xbf16>
    %cst_24 = arith.constant dense<0.000000e+00> : vector<16x32xf32>
    %21 = tpu.matmul %0, %7, %cst_24 {dimension_numbers = #tpu.dot_dimension_numbers<[1], [0], [0], [1], [0, 0, 1, 1], [], []>} : vector<16x32xbf16>, vector<32x32xbf16>, vector<16x32xf32> -> vector<16x32xf32>
    %22 = vector.broadcast %8 : vector<1x32xf32> to vector<16x32xf32>
    %23 = arith.addf %21, %22 : vector<16x32xf32>
    %24 = arith.truncf %23 : vector<16x32xf32> to vector<16x32xbf16>
    %25 = tpu.iota {dimensions = array<i32: 0>} : vector<8x8xi32>
    %26 = tpu.iota {dimensions = array<i32: 1>} : vector<8x8xi32>
    %27 = arith.cmpi sgt, %26, %25 : vector<8x8xi32>
    %cst_25 = arith.constant -1.000000e+09 : f32
    %cst_26 = arith.constant 0.000000e+00 : f32
    %28 = vector.broadcast %cst_25 : f32 to vector<8x8xf32>
    %29 = vector.broadcast %cst_26 : f32 to vector<8x8xf32>
    %30 = arith.select %27, %28, %29 : vector<8x8xi1>, vector<8x8xf32>
    %31 = vector.extract_strided_slice %16 {offsets = [0, 0], sizes = [8, 32], strides = [1, 1]} : vector<16x32xbf16> to vector<8x32xbf16>
    %32 = vector.extract_strided_slice %20 {offsets = [0, 0], sizes = [8, 32], strides = [1, 1]} : vector<16x32xbf16> to vector<8x32xbf16>
    %33 = vector.extract_strided_slice %24 {offsets = [0, 0], sizes = [8, 32], strides = [1, 1]} : vector<16x32xbf16> to vector<8x32xbf16>
    %34 = vector.extract_strided_slice %31 {offsets = [0, 0], sizes = [8, 8], strides = [1, 1]} : vector<8x32xbf16> to vector<8x8xbf16>
    %35 = vector.extract_strided_slice %32 {offsets = [0, 0], sizes = [8, 8], strides = [1, 1]} : vector<8x32xbf16> to vector<8x8xbf16>
    %36 = vector.extract_strided_slice %33 {offsets = [0, 0], sizes = [8, 8], strides = [1, 1]} : vector<8x32xbf16> to vector<8x8xbf16>
    %cst_27 = arith.constant dense<0.000000e+00> : vector<8x8xf32>
    %37 = tpu.matmul %34, %35, %cst_27 {dimension_numbers = #tpu.dot_dimension_numbers<[1], [1], [0], [0], [0, 0, 1, 0], [], []>} : vector<8x8xbf16>, vector<8x8xbf16>, vector<8x8xf32> -> vector<8x8xf32>
    %cst_28 = arith.constant 0.353553385 : f32
    %38 = vector.broadcast %cst_28 : f32 to vector<8x8xf32>
    %39 = arith.mulf %37, %38 : vector<8x8xf32>
    %40 = arith.addf %39, %30 : vector<8x8xf32>
    %cst_29 = arith.constant dense<0xFF800000> : vector<8xf32>
    %41 = vector.multi_reduction <maximumf>, %40, %cst_29 [1] : vector<8x8xf32> to vector<8xf32>
    %42 = vector.shape_cast %41 : vector<8xf32> to vector<8x1xf32>
    %43 = vector.broadcast %42 : vector<8x1xf32> to vector<8x8xf32>
    %44 = arith.subf %40, %43 : vector<8x8xf32>
    %45 = math.exp %44 : vector<8x8xf32>
    %cst_30 = arith.constant dense<0.000000e+00> : vector<8xf32>
    %46 = vector.multi_reduction <add>, %45, %cst_30 [1] : vector<8x8xf32> to vector<8xf32>
    %47 = vector.shape_cast %46 : vector<8xf32> to vector<8x1xf32>
    %48 = tpu.reciprocal %47 {approx = true} : vector<8x1xf32> -> vector<8x1xf32>
    %49 = vector.broadcast %48 : vector<8x1xf32> to vector<8x8xf32>
    %50 = arith.mulf %45, %49 : vector<8x8xf32>
    %51 = arith.truncf %50 : vector<8x8xf32> to vector<8x8xbf16>
    %cst_31 = arith.constant dense<0.000000e+00> : vector<8x8xf32>
    %52 = tpu.matmul %51, %36, %cst_31 {dimension_numbers = #tpu.dot_dimension_numbers<[1], [0], [0], [1], [0, 0, 1, 1], [], []>} : vector<8x8xbf16>, vector<8x8xbf16>, vector<8x8xf32> -> vector<8x8xf32>
    %53 = vector.extract_strided_slice %31 {offsets = [0, 8], sizes = [8, 8], strides = [1, 1]} : vector<8x32xbf16> to vector<8x8xbf16>
    %54 = vector.extract_strided_slice %32 {offsets = [0, 8], sizes = [8, 8], strides = [1, 1]} : vector<8x32xbf16> to vector<8x8xbf16>
    %55 = vector.extract_strided_slice %33 {offsets = [0, 8], sizes = [8, 8], strides = [1, 1]} : vector<8x32xbf16> to vector<8x8xbf16>
    %cst_32 = arith.constant dense<0.000000e+00> : vector<8x8xf32>
    %56 = tpu.matmul %53, %54, %cst_32 {dimension_numbers = #tpu.dot_dimension_numbers<[1], [1], [0], [0], [0, 0, 1, 0], [], []>} : vector<8x8xbf16>, vector<8x8xbf16>, vector<8x8xf32> -> vector<8x8xf32>
    %cst_33 = arith.constant 0.353553385 : f32
    %57 = vector.broadcast %cst_33 : f32 to vector<8x8xf32>
    %58 = arith.mulf %56, %57 : vector<8x8xf32>
    %59 = arith.addf %58, %30 : vector<8x8xf32>
    %cst_34 = arith.constant dense<0xFF800000> : vector<8xf32>
    %60 = vector.multi_reduction <maximumf>, %59, %cst_34 [1] : vector<8x8xf32> to vector<8xf32>
    %61 = vector.shape_cast %60 : vector<8xf32> to vector<8x1xf32>
    %62 = vector.broadcast %61 : vector<8x1xf32> to vector<8x8xf32>
    %63 = arith.subf %59, %62 : vector<8x8xf32>
    %64 = math.exp %63 : vector<8x8xf32>
    %cst_35 = arith.constant dense<0.000000e+00> : vector<8xf32>
    %65 = vector.multi_reduction <add>, %64, %cst_35 [1] : vector<8x8xf32> to vector<8xf32>
    %66 = vector.shape_cast %65 : vector<8xf32> to vector<8x1xf32>
    %67 = tpu.reciprocal %66 {approx = true} : vector<8x1xf32> -> vector<8x1xf32>
    %68 = vector.broadcast %67 : vector<8x1xf32> to vector<8x8xf32>
    %69 = arith.mulf %64, %68 : vector<8x8xf32>
    %70 = arith.truncf %69 : vector<8x8xf32> to vector<8x8xbf16>
    %cst_36 = arith.constant dense<0.000000e+00> : vector<8x8xf32>
    %71 = tpu.matmul %70, %55, %cst_36 {dimension_numbers = #tpu.dot_dimension_numbers<[1], [0], [0], [1], [0, 0, 1, 1], [], []>} : vector<8x8xbf16>, vector<8x8xbf16>, vector<8x8xf32> -> vector<8x8xf32>
    %72 = vector.extract_strided_slice %31 {offsets = [0, 16], sizes = [8, 8], strides = [1, 1]} : vector<8x32xbf16> to vector<8x8xbf16>
    %73 = vector.extract_strided_slice %32 {offsets = [0, 16], sizes = [8, 8], strides = [1, 1]} : vector<8x32xbf16> to vector<8x8xbf16>
    %74 = vector.extract_strided_slice %33 {offsets = [0, 16], sizes = [8, 8], strides = [1, 1]} : vector<8x32xbf16> to vector<8x8xbf16>
    %cst_37 = arith.constant dense<0.000000e+00> : vector<8x8xf32>
    %75 = tpu.matmul %72, %73, %cst_37 {dimension_numbers = #tpu.dot_dimension_numbers<[1], [1], [0], [0], [0, 0, 1, 0], [], []>} : vector<8x8xbf16>, vector<8x8xbf16>, vector<8x8xf32> -> vector<8x8xf32>
    %cst_38 = arith.constant 0.353553385 : f32
    %76 = vector.broadcast %cst_38 : f32 to vector<8x8xf32>
    %77 = arith.mulf %75, %76 : vector<8x8xf32>
    %78 = arith.addf %77, %30 : vector<8x8xf32>
    %cst_39 = arith.constant dense<0xFF800000> : vector<8xf32>
    %79 = vector.multi_reduction <maximumf>, %78, %cst_39 [1] : vector<8x8xf32> to vector<8xf32>
    %80 = vector.shape_cast %79 : vector<8xf32> to vector<8x1xf32>
    %81 = vector.broadcast %80 : vector<8x1xf32> to vector<8x8xf32>
    %82 = arith.subf %78, %81 : vector<8x8xf32>
    %83 = math.exp %82 : vector<8x8xf32>
    %cst_40 = arith.constant dense<0.000000e+00> : vector<8xf32>
    %84 = vector.multi_reduction <add>, %83, %cst_40 [1] : vector<8x8xf32> to vector<8xf32>
    %85 = vector.shape_cast %84 : vector<8xf32> to vector<8x1xf32>
    %86 = tpu.reciprocal %85 {approx = true} : vector<8x1xf32> -> vector<8x1xf32>
    %87 = vector.broadcast %86 : vector<8x1xf32> to vector<8x8xf32>
    %88 = arith.mulf %83, %87 : vector<8x8xf32>
    %89 = arith.truncf %88 : vector<8x8xf32> to vector<8x8xbf16>
    %cst_41 = arith.constant dense<0.000000e+00> : vector<8x8xf32>
    %90 = tpu.matmul %89, %74, %cst_41 {dimension_numbers = #tpu.dot_dimension_numbers<[1], [0], [0], [1], [0, 0, 1, 1], [], []>} : vector<8x8xbf16>, vector<8x8xbf16>, vector<8x8xf32> -> vector<8x8xf32>
    %91 = vector.extract_strided_slice %31 {offsets = [0, 24], sizes = [8, 8], strides = [1, 1]} : vector<8x32xbf16> to vector<8x8xbf16>
    %92 = vector.extract_strided_slice %32 {offsets = [0, 24], sizes = [8, 8], strides = [1, 1]} : vector<8x32xbf16> to vector<8x8xbf16>
    %93 = vector.extract_strided_slice %33 {offsets = [0, 24], sizes = [8, 8], strides = [1, 1]} : vector<8x32xbf16> to vector<8x8xbf16>
    %cst_42 = arith.constant dense<0.000000e+00> : vector<8x8xf32>
    %94 = tpu.matmul %91, %92, %cst_42 {dimension_numbers = #tpu.dot_dimension_numbers<[1], [1], [0], [0], [0, 0, 1, 0], [], []>} : vector<8x8xbf16>, vector<8x8xbf16>, vector<8x8xf32> -> vector<8x8xf32>
    %cst_43 = arith.constant 0.353553385 : f32
    %95 = vector.broadcast %cst_43 : f32 to vector<8x8xf32>
    %96 = arith.mulf %94, %95 : vector<8x8xf32>
    %97 = arith.addf %96, %30 : vector<8x8xf32>
    %cst_44 = arith.constant dense<0xFF800000> : vector<8xf32>
    %98 = vector.multi_reduction <maximumf>, %97, %cst_44 [1] : vector<8x8xf32> to vector<8xf32>
    %99 = vector.shape_cast %98 : vector<8xf32> to vector<8x1xf32>
    %100 = vector.broadcast %99 : vector<8x1xf32> to vector<8x8xf32>
    %101 = arith.subf %97, %100 : vector<8x8xf32>
    %102 = math.exp %101 : vector<8x8xf32>
    %cst_45 = arith.constant dense<0.000000e+00> : vector<8xf32>
    %103 = vector.multi_reduction <add>, %102, %cst_45 [1] : vector<8x8xf32> to vector<8xf32>
    %104 = vector.shape_cast %103 : vector<8xf32> to vector<8x1xf32>
    %105 = tpu.reciprocal %104 {approx = true} : vector<8x1xf32> -> vector<8x1xf32>
    %106 = vector.broadcast %105 : vector<8x1xf32> to vector<8x8xf32>
    %107 = arith.mulf %102, %106 : vector<8x8xf32>
    %108 = arith.truncf %107 : vector<8x8xf32> to vector<8x8xbf16>
    %cst_46 = arith.constant dense<0.000000e+00> : vector<8x8xf32>
    %109 = tpu.matmul %108, %93, %cst_46 {dimension_numbers = #tpu.dot_dimension_numbers<[1], [0], [0], [1], [0, 0, 1, 1], [], []>} : vector<8x8xbf16>, vector<8x8xbf16>, vector<8x8xf32> -> vector<8x8xf32>
    %110 = tpu.concatenate %52, %71, %90, %109 in 1 : vector<8x8xf32>, vector<8x8xf32>, vector<8x8xf32>, vector<8x8xf32> -> vector<8x32xf32>
    %111 = vector.extract_strided_slice %16 {offsets = [8, 0], sizes = [8, 32], strides = [1, 1]} : vector<16x32xbf16> to vector<8x32xbf16>
    %112 = vector.extract_strided_slice %20 {offsets = [8, 0], sizes = [8, 32], strides = [1, 1]} : vector<16x32xbf16> to vector<8x32xbf16>
    %113 = vector.extract_strided_slice %24 {offsets = [8, 0], sizes = [8, 32], strides = [1, 1]} : vector<16x32xbf16> to vector<8x32xbf16>
    %114 = vector.extract_strided_slice %111 {offsets = [0, 0], sizes = [8, 8], strides = [1, 1]} : vector<8x32xbf16> to vector<8x8xbf16>
    %115 = vector.extract_strided_slice %112 {offsets = [0, 0], sizes = [8, 8], strides = [1, 1]} : vector<8x32xbf16> to vector<8x8xbf16>
    %116 = vector.extract_strided_slice %113 {offsets = [0, 0], sizes = [8, 8], strides = [1, 1]} : vector<8x32xbf16> to vector<8x8xbf16>
    %cst_47 = arith.constant dense<0.000000e+00> : vector<8x8xf32>
    %117 = tpu.matmul %114, %115, %cst_47 {dimension_numbers = #tpu.dot_dimension_numbers<[1], [1], [0], [0], [0, 0, 1, 0], [], []>} : vector<8x8xbf16>, vector<8x8xbf16>, vector<8x8xf32> -> vector<8x8xf32>
    %cst_48 = arith.constant 0.353553385 : f32
    %118 = vector.broadcast %cst_48 : f32 to vector<8x8xf32>
    %119 = arith.mulf %117, %118 : vector<8x8xf32>
    %120 = arith.addf %119, %30 : vector<8x8xf32>
    %cst_49 = arith.constant dense<0xFF800000> : vector<8xf32>
    %121 = vector.multi_reduction <maximumf>, %120, %cst_49 [1] : vector<8x8xf32> to vector<8xf32>
    %122 = vector.shape_cast %121 : vector<8xf32> to vector<8x1xf32>
    %123 = vector.broadcast %122 : vector<8x1xf32> to vector<8x8xf32>
    %124 = arith.subf %120, %123 : vector<8x8xf32>
    %125 = math.exp %124 : vector<8x8xf32>
    %cst_50 = arith.constant dense<0.000000e+00> : vector<8xf32>
    %126 = vector.multi_reduction <add>, %125, %cst_50 [1] : vector<8x8xf32> to vector<8xf32>
    %127 = vector.shape_cast %126 : vector<8xf32> to vector<8x1xf32>
    %128 = tpu.reciprocal %127 {approx = true} : vector<8x1xf32> -> vector<8x1xf32>
    %129 = vector.broadcast %128 : vector<8x1xf32> to vector<8x8xf32>
    %130 = arith.mulf %125, %129 : vector<8x8xf32>
    %131 = arith.truncf %130 : vector<8x8xf32> to vector<8x8xbf16>
    %cst_51 = arith.constant dense<0.000000e+00> : vector<8x8xf32>
    %132 = tpu.matmul %131, %116, %cst_51 {dimension_numbers = #tpu.dot_dimension_numbers<[1], [0], [0], [1], [0, 0, 1, 1], [], []>} : vector<8x8xbf16>, vector<8x8xbf16>, vector<8x8xf32> -> vector<8x8xf32>
    %133 = vector.extract_strided_slice %111 {offsets = [0, 8], sizes = [8, 8], strides = [1, 1]} : vector<8x32xbf16> to vector<8x8xbf16>
    %134 = vector.extract_strided_slice %112 {offsets = [0, 8], sizes = [8, 8], strides = [1, 1]} : vector<8x32xbf16> to vector<8x8xbf16>
    %135 = vector.extract_strided_slice %113 {offsets = [0, 8], sizes = [8, 8], strides = [1, 1]} : vector<8x32xbf16> to vector<8x8xbf16>
    %cst_52 = arith.constant dense<0.000000e+00> : vector<8x8xf32>
    %136 = tpu.matmul %133, %134, %cst_52 {dimension_numbers = #tpu.dot_dimension_numbers<[1], [1], [0], [0], [0, 0, 1, 0], [], []>} : vector<8x8xbf16>, vector<8x8xbf16>, vector<8x8xf32> -> vector<8x8xf32>
    %cst_53 = arith.constant 0.353553385 : f32
    %137 = vector.broadcast %cst_53 : f32 to vector<8x8xf32>
    %138 = arith.mulf %136, %137 : vector<8x8xf32>
    %139 = arith.addf %138, %30 : vector<8x8xf32>
    %cst_54 = arith.constant dense<0xFF800000> : vector<8xf32>
    %140 = vector.multi_reduction <maximumf>, %139, %cst_54 [1] : vector<8x8xf32> to vector<8xf32>
    %141 = vector.shape_cast %140 : vector<8xf32> to vector<8x1xf32>
    %142 = vector.broadcast %141 : vector<8x1xf32> to vector<8x8xf32>
    %143 = arith.subf %139, %142 : vector<8x8xf32>
    %144 = math.exp %143 : vector<8x8xf32>
    %cst_55 = arith.constant dense<0.000000e+00> : vector<8xf32>
    %145 = vector.multi_reduction <add>, %144, %cst_55 [1] : vector<8x8xf32> to vector<8xf32>
    %146 = vector.shape_cast %145 : vector<8xf32> to vector<8x1xf32>
    %147 = tpu.reciprocal %146 {approx = true} : vector<8x1xf32> -> vector<8x1xf32>
    %148 = vector.broadcast %147 : vector<8x1xf32> to vector<8x8xf32>
    %149 = arith.mulf %144, %148 : vector<8x8xf32>
    %150 = arith.truncf %149 : vector<8x8xf32> to vector<8x8xbf16>
    %cst_56 = arith.constant dense<0.000000e+00> : vector<8x8xf32>
    %151 = tpu.matmul %150, %135, %cst_56 {dimension_numbers = #tpu.dot_dimension_numbers<[1], [0], [0], [1], [0, 0, 1, 1], [], []>} : vector<8x8xbf16>, vector<8x8xbf16>, vector<8x8xf32> -> vector<8x8xf32>
    %152 = vector.extract_strided_slice %111 {offsets = [0, 16], sizes = [8, 8], strides = [1, 1]} : vector<8x32xbf16> to vector<8x8xbf16>
    %153 = vector.extract_strided_slice %112 {offsets = [0, 16], sizes = [8, 8], strides = [1, 1]} : vector<8x32xbf16> to vector<8x8xbf16>
    %154 = vector.extract_strided_slice %113 {offsets = [0, 16], sizes = [8, 8], strides = [1, 1]} : vector<8x32xbf16> to vector<8x8xbf16>
    %cst_57 = arith.constant dense<0.000000e+00> : vector<8x8xf32>
    %155 = tpu.matmul %152, %153, %cst_57 {dimension_numbers = #tpu.dot_dimension_numbers<[1], [1], [0], [0], [0, 0, 1, 0], [], []>} : vector<8x8xbf16>, vector<8x8xbf16>, vector<8x8xf32> -> vector<8x8xf32>
    %cst_58 = arith.constant 0.353553385 : f32
    %156 = vector.broadcast %cst_58 : f32 to vector<8x8xf32>
    %157 = arith.mulf %155, %156 : vector<8x8xf32>
    %158 = arith.addf %157, %30 : vector<8x8xf32>
    %cst_59 = arith.constant dense<0xFF800000> : vector<8xf32>
    %159 = vector.multi_reduction <maximumf>, %158, %cst_59 [1] : vector<8x8xf32> to vector<8xf32>
    %160 = vector.shape_cast %159 : vector<8xf32> to vector<8x1xf32>
    %161 = vector.broadcast %160 : vector<8x1xf32> to vector<8x8xf32>
    %162 = arith.subf %158, %161 : vector<8x8xf32>
    %163 = math.exp %162 : vector<8x8xf32>
    %cst_60 = arith.constant dense<0.000000e+00> : vector<8xf32>
    %164 = vector.multi_reduction <add>, %163, %cst_60 [1] : vector<8x8xf32> to vector<8xf32>
    %165 = vector.shape_cast %164 : vector<8xf32> to vector<8x1xf32>
    %166 = tpu.reciprocal %165 {approx = true} : vector<8x1xf32> -> vector<8x1xf32>
    %167 = vector.broadcast %166 : vector<8x1xf32> to vector<8x8xf32>
    %168 = arith.mulf %163, %167 : vector<8x8xf32>
    %169 = arith.truncf %168 : vector<8x8xf32> to vector<8x8xbf16>
    %cst_61 = arith.constant dense<0.000000e+00> : vector<8x8xf32>
    %170 = tpu.matmul %169, %154, %cst_61 {dimension_numbers = #tpu.dot_dimension_numbers<[1], [0], [0], [1], [0, 0, 1, 1], [], []>} : vector<8x8xbf16>, vector<8x8xbf16>, vector<8x8xf32> -> vector<8x8xf32>
    %171 = vector.extract_strided_slice %111 {offsets = [0, 24], sizes = [8, 8], strides = [1, 1]} : vector<8x32xbf16> to vector<8x8xbf16>
    %172 = vector.extract_strided_slice %112 {offsets = [0, 24], sizes = [8, 8], strides = [1, 1]} : vector<8x32xbf16> to vector<8x8xbf16>
    %173 = vector.extract_strided_slice %113 {offsets = [0, 24], sizes = [8, 8], strides = [1, 1]} : vector<8x32xbf16> to vector<8x8xbf16>
    %cst_62 = arith.constant dense<0.000000e+00> : vector<8x8xf32>
    %174 = tpu.matmul %171, %172, %cst_62 {dimension_numbers = #tpu.dot_dimension_numbers<[1], [1], [0], [0], [0, 0, 1, 0], [], []>} : vector<8x8xbf16>, vector<8x8xbf16>, vector<8x8xf32> -> vector<8x8xf32>
    %cst_63 = arith.constant 0.353553385 : f32
    %175 = vector.broadcast %cst_63 : f32 to vector<8x8xf32>
    %176 = arith.mulf %174, %175 : vector<8x8xf32>
    %177 = arith.addf %176, %30 : vector<8x8xf32>
    %cst_64 = arith.constant dense<0xFF800000> : vector<8xf32>
    %178 = vector.multi_reduction <maximumf>, %177, %cst_64 [1] : vector<8x8xf32> to vector<8xf32>
    %179 = vector.shape_cast %178 : vector<8xf32> to vector<8x1xf32>
    %180 = vector.broadcast %179 : vector<8x1xf32> to vector<8x8xf32>
    %181 = arith.subf %177, %180 : vector<8x8xf32>
    %182 = math.exp %181 : vector<8x8xf32>
    %cst_65 = arith.constant dense<0.000000e+00> : vector<8xf32>
    %183 = vector.multi_reduction <add>, %182, %cst_65 [1] : vector<8x8xf32> to vector<8xf32>
    %184 = vector.shape_cast %183 : vector<8xf32> to vector<8x1xf32>
    %185 = tpu.reciprocal %184 {approx = true} : vector<8x1xf32> -> vector<8x1xf32>
    %186 = vector.broadcast %185 : vector<8x1xf32> to vector<8x8xf32>
    %187 = arith.mulf %182, %186 : vector<8x8xf32>
    %188 = arith.truncf %187 : vector<8x8xf32> to vector<8x8xbf16>
    %cst_66 = arith.constant dense<0.000000e+00> : vector<8x8xf32>
    %189 = tpu.matmul %188, %173, %cst_66 {dimension_numbers = #tpu.dot_dimension_numbers<[1], [0], [0], [1], [0, 0, 1, 1], [], []>} : vector<8x8xbf16>, vector<8x8xbf16>, vector<8x8xf32> -> vector<8x8xf32>
    %190 = tpu.concatenate %132, %151, %170, %189 in 1 : vector<8x8xf32>, vector<8x8xf32>, vector<8x8xf32>, vector<8x8xf32> -> vector<8x32xf32>
    %191 = tpu.concatenate %110, %190 in 0 : vector<8x32xf32>, vector<8x32xf32> -> vector<16x32xf32>
    %192 = arith.truncf %191 : vector<16x32xf32> to vector<16x32xbf16>
    %cst_67 = arith.constant dense<0.000000e+00> : vector<16x32xf32>
    %193 = tpu.matmul %192, %9, %cst_67 {dimension_numbers = #tpu.dot_dimension_numbers<[1], [0], [0], [1], [0, 0, 1, 1], [], []>} : vector<16x32xbf16>, vector<32x32xbf16>, vector<16x32xf32> -> vector<16x32xf32>
    %194 = vector.broadcast %10 : vector<1x32xf32> to vector<16x32xf32>
    %195 = arith.addf %193, %194 : vector<16x32xf32>
    %196 = arith.addf %1, %195 : vector<16x32xf32>
    %cst_68 = arith.constant dense<0.000000e+00> : vector<16xf32>
    %197 = vector.multi_reduction <add>, %196, %cst_68 [1] : vector<16x32xf32> to vector<16xf32>
    %198 = vector.shape_cast %197 : vector<16xf32> to vector<16x1xf32>
    %cst_69 = arith.constant 3.200000e+01 : f32
    %199 = vector.broadcast %cst_69 : f32 to vector<16x1xf32>
    %200 = arith.divf %198, %199 : vector<16x1xf32>
    %201 = vector.broadcast %200 : vector<16x1xf32> to vector<16x32xf32>
    %202 = arith.subf %196, %201 : vector<16x32xf32>
    %203 = arith.mulf %202, %202 : vector<16x32xf32>
    %cst_70 = arith.constant dense<0.000000e+00> : vector<16xf32>
    %204 = vector.multi_reduction <add>, %203, %cst_70 [1] : vector<16x32xf32> to vector<16xf32>
    %205 = vector.shape_cast %204 : vector<16xf32> to vector<16x1xf32>
    %cst_71 = arith.constant 3.200000e+01 : f32
    %206 = vector.broadcast %cst_71 : f32 to vector<16x1xf32>
    %207 = arith.divf %205, %206 : vector<16x1xf32>
    %208 = vector.broadcast %200 : vector<16x1xf32> to vector<16x32xf32>
    %209 = arith.subf %196, %208 : vector<16x32xf32>
    %cst_72 = arith.constant 9.99999974E-6 : f32
    %210 = vector.broadcast %cst_72 : f32 to vector<16x1xf32>
    %211 = arith.addf %207, %210 : vector<16x1xf32>
    %212 = math.rsqrt %211 : vector<16x1xf32>
    %213 = vector.broadcast %212 : vector<16x1xf32> to vector<16x32xf32>
    %214 = arith.mulf %209, %213 : vector<16x32xf32>
    %215 = vector.broadcast %11 : vector<1x32xf32> to vector<16x32xf32>
    %216 = arith.mulf %214, %215 : vector<16x32xf32>
    %217 = vector.broadcast %12 : vector<1x32xf32> to vector<16x32xf32>
    %218 = arith.addf %216, %217 : vector<16x32xf32>
    %219 = arith.truncf %218 : vector<16x32xf32> to vector<16x32xbf16>
    %c0_73 = arith.constant 0 : index
    %c0_74 = arith.constant 0 : index
    %220 = vector.load %arg12[%c0_73, %c0_74] : memref<32x32xbf16, #tpu.memory_space<vmem>>, vector<32x32xbf16>
    %c0_75 = arith.constant 0 : index
    %c0_76 = arith.constant 0 : index
    %221 = vector.load %arg13[%c0_75, %c0_76] : memref<1x32xf32, #tpu.memory_space<vmem>>, vector<1x32xf32>
    %c0_77 = arith.constant 0 : index
    %c0_78 = arith.constant 0 : index
    %222 = vector.load %arg14[%c0_77, %c0_78] : memref<32x32xbf16, #tpu.memory_space<vmem>>, vector<32x32xbf16>
    %c0_79 = arith.constant 0 : index
    %c0_80 = arith.constant 0 : index
    %223 = vector.load %arg15[%c0_79, %c0_80] : memref<1x32xf32, #tpu.memory_space<vmem>>, vector<1x32xf32>
    %c0_81 = arith.constant 0 : index
    %c0_82 = arith.constant 0 : index
    %224 = vector.load %arg16[%c0_81, %c0_82] : memref<32x32xbf16, #tpu.memory_space<vmem>>, vector<32x32xbf16>
    %c0_83 = arith.constant 0 : index
    %c0_84 = arith.constant 0 : index
    %225 = vector.load %arg17[%c0_83, %c0_84] : memref<1x32xf32, #tpu.memory_space<vmem>>, vector<1x32xf32>
    %c0_85 = arith.constant 0 : index
    %c0_86 = arith.constant 0 : index
    %226 = vector.load %arg18[%c0_85, %c0_86] : memref<32x32xbf16, #tpu.memory_space<vmem>>, vector<32x32xbf16>
    %c0_87 = arith.constant 0 : index
    %c0_88 = arith.constant 0 : index
    %227 = vector.load %arg19[%c0_87, %c0_88] : memref<1x32xf32, #tpu.memory_space<vmem>>, vector<1x32xf32>
    %c0_89 = arith.constant 0 : index
    %c0_90 = arith.constant 0 : index
    %228 = vector.load %arg20[%c0_89, %c0_90] : memref<1x32xf32, #tpu.memory_space<vmem>>, vector<1x32xf32>
    %c0_91 = arith.constant 0 : index
    %c0_92 = arith.constant 0 : index
    %229 = vector.load %arg21[%c0_91, %c0_92] : memref<1x32xf32, #tpu.memory_space<vmem>>, vector<1x32xf32>
    %cst_93 = arith.constant dense<0.000000e+00> : vector<16x32xf32>
    %230 = tpu.matmul %219, %220, %cst_93 {dimension_numbers = #tpu.dot_dimension_numbers<[1], [0], [0], [1], [0, 0, 1, 1], [], []>} : vector<16x32xbf16>, vector<32x32xbf16>, vector<16x32xf32> -> vector<16x32xf32>
    %231 = vector.broadcast %221 : vector<1x32xf32> to vector<16x32xf32>
    %232 = arith.addf %230, %231 : vector<16x32xf32>
    %233 = arith.truncf %232 : vector<16x32xf32> to vector<16x32xbf16>
    %cst_94 = arith.constant dense<0.000000e+00> : vector<20x32xf32>
    %234 = tpu.matmul %2, %222, %cst_94 {dimension_numbers = #tpu.dot_dimension_numbers<[1], [0], [0], [1], [0, 0, 1, 1], [], []>} : vector<20x32xbf16>, vector<32x32xbf16>, vector<20x32xf32> -> vector<20x32xf32>
    %235 = vector.broadcast %223 : vector<1x32xf32> to vector<20x32xf32>
    %236 = arith.addf %234, %235 : vector<20x32xf32>
    %237 = arith.truncf %236 : vector<20x32xf32> to vector<20x32xbf16>
    %cst_95 = arith.constant dense<0.000000e+00> : vector<20x32xf32>
    %238 = tpu.matmul %2, %224, %cst_95 {dimension_numbers = #tpu.dot_dimension_numbers<[1], [0], [0], [1], [0, 0, 1, 1], [], []>} : vector<20x32xbf16>, vector<32x32xbf16>, vector<20x32xf32> -> vector<20x32xf32>
    %239 = vector.broadcast %225 : vector<1x32xf32> to vector<20x32xf32>
    %240 = arith.addf %238, %239 : vector<20x32xf32>
    %241 = arith.truncf %240 : vector<20x32xf32> to vector<20x32xbf16>
    %242 = vector.extract_strided_slice %233 {offsets = [0, 0], sizes = [8, 32], strides = [1, 1]} : vector<16x32xbf16> to vector<8x32xbf16>
    %243 = vector.extract_strided_slice %237 {offsets = [0, 0], sizes = [10, 32], strides = [1, 1]} : vector<20x32xbf16> to vector<10x32xbf16>
    %244 = vector.extract_strided_slice %241 {offsets = [0, 0], sizes = [10, 32], strides = [1, 1]} : vector<20x32xbf16> to vector<10x32xbf16>
    %245 = vector.extract_strided_slice %242 {offsets = [0, 0], sizes = [8, 8], strides = [1, 1]} : vector<8x32xbf16> to vector<8x8xbf16>
    %246 = vector.extract_strided_slice %243 {offsets = [0, 0], sizes = [10, 8], strides = [1, 1]} : vector<10x32xbf16> to vector<10x8xbf16>
    %247 = vector.extract_strided_slice %244 {offsets = [0, 0], sizes = [10, 8], strides = [1, 1]} : vector<10x32xbf16> to vector<10x8xbf16>
    %cst_96 = arith.constant dense<0.000000e+00> : vector<8x10xf32>
    %248 = tpu.matmul %245, %246, %cst_96 {dimension_numbers = #tpu.dot_dimension_numbers<[1], [1], [0], [0], [0, 0, 1, 0], [], []>} : vector<8x8xbf16>, vector<10x8xbf16>, vector<8x10xf32> -> vector<8x10xf32>
    %cst_97 = arith.constant 0.353553385 : f32
    %249 = vector.broadcast %cst_97 : f32 to vector<8x10xf32>
    %250 = arith.mulf %248, %249 : vector<8x10xf32>
    %cst_98 = arith.constant dense<0xFF800000> : vector<8xf32>
    %251 = vector.multi_reduction <maximumf>, %250, %cst_98 [1] : vector<8x10xf32> to vector<8xf32>
    %252 = vector.shape_cast %251 : vector<8xf32> to vector<8x1xf32>
    %253 = vector.broadcast %252 : vector<8x1xf32> to vector<8x10xf32>
    %254 = arith.subf %250, %253 : vector<8x10xf32>
    %255 = math.exp %254 : vector<8x10xf32>
    %cst_99 = arith.constant dense<0.000000e+00> : vector<8xf32>
    %256 = vector.multi_reduction <add>, %255, %cst_99 [1] : vector<8x10xf32> to vector<8xf32>
    %257 = vector.shape_cast %256 : vector<8xf32> to vector<8x1xf32>
    %258 = tpu.reciprocal %257 {approx = true} : vector<8x1xf32> -> vector<8x1xf32>
    %259 = vector.broadcast %258 : vector<8x1xf32> to vector<8x10xf32>
    %260 = arith.mulf %255, %259 : vector<8x10xf32>
    %261 = arith.truncf %260 : vector<8x10xf32> to vector<8x10xbf16>
    %cst_100 = arith.constant dense<0.000000e+00> : vector<8x8xf32>
    %262 = tpu.matmul %261, %247, %cst_100 {dimension_numbers = #tpu.dot_dimension_numbers<[1], [0], [0], [1], [0, 0, 1, 1], [], []>} : vector<8x10xbf16>, vector<10x8xbf16>, vector<8x8xf32> -> vector<8x8xf32>
    %263 = vector.extract_strided_slice %242 {offsets = [0, 8], sizes = [8, 8], strides = [1, 1]} : vector<8x32xbf16> to vector<8x8xbf16>
    %264 = vector.extract_strided_slice %243 {offsets = [0, 8], sizes = [10, 8], strides = [1, 1]} : vector<10x32xbf16> to vector<10x8xbf16>
    %265 = vector.extract_strided_slice %244 {offsets = [0, 8], sizes = [10, 8], strides = [1, 1]} : vector<10x32xbf16> to vector<10x8xbf16>
    %cst_101 = arith.constant dense<0.000000e+00> : vector<8x10xf32>
    %266 = tpu.matmul %263, %264, %cst_101 {dimension_numbers = #tpu.dot_dimension_numbers<[1], [1], [0], [0], [0, 0, 1, 0], [], []>} : vector<8x8xbf16>, vector<10x8xbf16>, vector<8x10xf32> -> vector<8x10xf32>
    %cst_102 = arith.constant 0.353553385 : f32
    %267 = vector.broadcast %cst_102 : f32 to vector<8x10xf32>
    %268 = arith.mulf %266, %267 : vector<8x10xf32>
    %cst_103 = arith.constant dense<0xFF800000> : vector<8xf32>
    %269 = vector.multi_reduction <maximumf>, %268, %cst_103 [1] : vector<8x10xf32> to vector<8xf32>
    %270 = vector.shape_cast %269 : vector<8xf32> to vector<8x1xf32>
    %271 = vector.broadcast %270 : vector<8x1xf32> to vector<8x10xf32>
    %272 = arith.subf %268, %271 : vector<8x10xf32>
    %273 = math.exp %272 : vector<8x10xf32>
    %cst_104 = arith.constant dense<0.000000e+00> : vector<8xf32>
    %274 = vector.multi_reduction <add>, %273, %cst_104 [1] : vector<8x10xf32> to vector<8xf32>
    %275 = vector.shape_cast %274 : vector<8xf32> to vector<8x1xf32>
    %276 = tpu.reciprocal %275 {approx = true} : vector<8x1xf32> -> vector<8x1xf32>
    %277 = vector.broadcast %276 : vector<8x1xf32> to vector<8x10xf32>
    %278 = arith.mulf %273, %277 : vector<8x10xf32>
    %279 = arith.truncf %278 : vector<8x10xf32> to vector<8x10xbf16>
    %cst_105 = arith.constant dense<0.000000e+00> : vector<8x8xf32>
    %280 = tpu.matmul %279, %265, %cst_105 {dimension_numbers = #tpu.dot_dimension_numbers<[1], [0], [0], [1], [0, 0, 1, 1], [], []>} : vector<8x10xbf16>, vector<10x8xbf16>, vector<8x8xf32> -> vector<8x8xf32>
    %281 = vector.extract_strided_slice %242 {offsets = [0, 16], sizes = [8, 8], strides = [1, 1]} : vector<8x32xbf16> to vector<8x8xbf16>
    %282 = vector.extract_strided_slice %243 {offsets = [0, 16], sizes = [10, 8], strides = [1, 1]} : vector<10x32xbf16> to vector<10x8xbf16>
    %283 = vector.extract_strided_slice %244 {offsets = [0, 16], sizes = [10, 8], strides = [1, 1]} : vector<10x32xbf16> to vector<10x8xbf16>
    %cst_106 = arith.constant dense<0.000000e+00> : vector<8x10xf32>
    %284 = tpu.matmul %281, %282, %cst_106 {dimension_numbers = #tpu.dot_dimension_numbers<[1], [1], [0], [0], [0, 0, 1, 0], [], []>} : vector<8x8xbf16>, vector<10x8xbf16>, vector<8x10xf32> -> vector<8x10xf32>
    %cst_107 = arith.constant 0.353553385 : f32
    %285 = vector.broadcast %cst_107 : f32 to vector<8x10xf32>
    %286 = arith.mulf %284, %285 : vector<8x10xf32>
    %cst_108 = arith.constant dense<0xFF800000> : vector<8xf32>
    %287 = vector.multi_reduction <maximumf>, %286, %cst_108 [1] : vector<8x10xf32> to vector<8xf32>
    %288 = vector.shape_cast %287 : vector<8xf32> to vector<8x1xf32>
    %289 = vector.broadcast %288 : vector<8x1xf32> to vector<8x10xf32>
    %290 = arith.subf %286, %289 : vector<8x10xf32>
    %291 = math.exp %290 : vector<8x10xf32>
    %cst_109 = arith.constant dense<0.000000e+00> : vector<8xf32>
    %292 = vector.multi_reduction <add>, %291, %cst_109 [1] : vector<8x10xf32> to vector<8xf32>
    %293 = vector.shape_cast %292 : vector<8xf32> to vector<8x1xf32>
    %294 = tpu.reciprocal %293 {approx = true} : vector<8x1xf32> -> vector<8x1xf32>
    %295 = vector.broadcast %294 : vector<8x1xf32> to vector<8x10xf32>
    %296 = arith.mulf %291, %295 : vector<8x10xf32>
    %297 = arith.truncf %296 : vector<8x10xf32> to vector<8x10xbf16>
    %cst_110 = arith.constant dense<0.000000e+00> : vector<8x8xf32>
    %298 = tpu.matmul %297, %283, %cst_110 {dimension_numbers = #tpu.dot_dimension_numbers<[1], [0], [0], [1], [0, 0, 1, 1], [], []>} : vector<8x10xbf16>, vector<10x8xbf16>, vector<8x8xf32> -> vector<8x8xf32>
    %299 = vector.extract_strided_slice %242 {offsets = [0, 24], sizes = [8, 8], strides = [1, 1]} : vector<8x32xbf16> to vector<8x8xbf16>
    %300 = vector.extract_strided_slice %243 {offsets = [0, 24], sizes = [10, 8], strides = [1, 1]} : vector<10x32xbf16> to vector<10x8xbf16>
    %301 = vector.extract_strided_slice %244 {offsets = [0, 24], sizes = [10, 8], strides = [1, 1]} : vector<10x32xbf16> to vector<10x8xbf16>
    %cst_111 = arith.constant dense<0.000000e+00> : vector<8x10xf32>
    %302 = tpu.matmul %299, %300, %cst_111 {dimension_numbers = #tpu.dot_dimension_numbers<[1], [1], [0], [0], [0, 0, 1, 0], [], []>} : vector<8x8xbf16>, vector<10x8xbf16>, vector<8x10xf32> -> vector<8x10xf32>
    %cst_112 = arith.constant 0.353553385 : f32
    %303 = vector.broadcast %cst_112 : f32 to vector<8x10xf32>
    %304 = arith.mulf %302, %303 : vector<8x10xf32>
    %cst_113 = arith.constant dense<0xFF800000> : vector<8xf32>
    %305 = vector.multi_reduction <maximumf>, %304, %cst_113 [1] : vector<8x10xf32> to vector<8xf32>
    %306 = vector.shape_cast %305 : vector<8xf32> to vector<8x1xf32>
    %307 = vector.broadcast %306 : vector<8x1xf32> to vector<8x10xf32>
    %308 = arith.subf %304, %307 : vector<8x10xf32>
    %309 = math.exp %308 : vector<8x10xf32>
    %cst_114 = arith.constant dense<0.000000e+00> : vector<8xf32>
    %310 = vector.multi_reduction <add>, %309, %cst_114 [1] : vector<8x10xf32> to vector<8xf32>
    %311 = vector.shape_cast %310 : vector<8xf32> to vector<8x1xf32>
    %312 = tpu.reciprocal %311 {approx = true} : vector<8x1xf32> -> vector<8x1xf32>
    %313 = vector.broadcast %312 : vector<8x1xf32> to vector<8x10xf32>
    %314 = arith.mulf %309, %313 : vector<8x10xf32>
    %315 = arith.truncf %314 : vector<8x10xf32> to vector<8x10xbf16>
    %cst_115 = arith.constant dense<0.000000e+00> : vector<8x8xf32>
    %316 = tpu.matmul %315, %301, %cst_115 {dimension_numbers = #tpu.dot_dimension_numbers<[1], [0], [0], [1], [0, 0, 1, 1], [], []>} : vector<8x10xbf16>, vector<10x8xbf16>, vector<8x8xf32> -> vector<8x8xf32>
    %317 = tpu.concatenate %262, %280, %298, %316 in 1 : vector<8x8xf32>, vector<8x8xf32>, vector<8x8xf32>, vector<8x8xf32> -> vector<8x32xf32>
    %318 = vector.extract_strided_slice %233 {offsets = [8, 0], sizes = [8, 32], strides = [1, 1]} : vector<16x32xbf16> to vector<8x32xbf16>
    %319 = vector.extract_strided_slice %237 {offsets = [10, 0], sizes = [10, 32], strides = [1, 1]} : vector<20x32xbf16> to vector<10x32xbf16>
    %320 = vector.extract_strided_slice %241 {offsets = [10, 0], sizes = [10, 32], strides = [1, 1]} : vector<20x32xbf16> to vector<10x32xbf16>
    %321 = vector.extract_strided_slice %318 {offsets = [0, 0], sizes = [8, 8], strides = [1, 1]} : vector<8x32xbf16> to vector<8x8xbf16>
    %322 = vector.extract_strided_slice %319 {offsets = [0, 0], sizes = [10, 8], strides = [1, 1]} : vector<10x32xbf16> to vector<10x8xbf16>
    %323 = vector.extract_strided_slice %320 {offsets = [0, 0], sizes = [10, 8], strides = [1, 1]} : vector<10x32xbf16> to vector<10x8xbf16>
    %cst_116 = arith.constant dense<0.000000e+00> : vector<8x10xf32>
    %324 = tpu.matmul %321, %322, %cst_116 {dimension_numbers = #tpu.dot_dimension_numbers<[1], [1], [0], [0], [0, 0, 1, 0], [], []>} : vector<8x8xbf16>, vector<10x8xbf16>, vector<8x10xf32> -> vector<8x10xf32>
    %cst_117 = arith.constant 0.353553385 : f32
    %325 = vector.broadcast %cst_117 : f32 to vector<8x10xf32>
    %326 = arith.mulf %324, %325 : vector<8x10xf32>
    %cst_118 = arith.constant dense<0xFF800000> : vector<8xf32>
    %327 = vector.multi_reduction <maximumf>, %326, %cst_118 [1] : vector<8x10xf32> to vector<8xf32>
    %328 = vector.shape_cast %327 : vector<8xf32> to vector<8x1xf32>
    %329 = vector.broadcast %328 : vector<8x1xf32> to vector<8x10xf32>
    %330 = arith.subf %326, %329 : vector<8x10xf32>
    %331 = math.exp %330 : vector<8x10xf32>
    %cst_119 = arith.constant dense<0.000000e+00> : vector<8xf32>
    %332 = vector.multi_reduction <add>, %331, %cst_119 [1] : vector<8x10xf32> to vector<8xf32>
    %333 = vector.shape_cast %332 : vector<8xf32> to vector<8x1xf32>
    %334 = tpu.reciprocal %333 {approx = true} : vector<8x1xf32> -> vector<8x1xf32>
    %335 = vector.broadcast %334 : vector<8x1xf32> to vector<8x10xf32>
    %336 = arith.mulf %331, %335 : vector<8x10xf32>
    %337 = arith.truncf %336 : vector<8x10xf32> to vector<8x10xbf16>
    %cst_120 = arith.constant dense<0.000000e+00> : vector<8x8xf32>
    %338 = tpu.matmul %337, %323, %cst_120 {dimension_numbers = #tpu.dot_dimension_numbers<[1], [0], [0], [1], [0, 0, 1, 1], [], []>} : vector<8x10xbf16>, vector<10x8xbf16>, vector<8x8xf32> -> vector<8x8xf32>
    %339 = vector.extract_strided_slice %318 {offsets = [0, 8], sizes = [8, 8], strides = [1, 1]} : vector<8x32xbf16> to vector<8x8xbf16>
    %340 = vector.extract_strided_slice %319 {offsets = [0, 8], sizes = [10, 8], strides = [1, 1]} : vector<10x32xbf16> to vector<10x8xbf16>
    %341 = vector.extract_strided_slice %320 {offsets = [0, 8], sizes = [10, 8], strides = [1, 1]} : vector<10x32xbf16> to vector<10x8xbf16>
    %cst_121 = arith.constant dense<0.000000e+00> : vector<8x10xf32>
    %342 = tpu.matmul %339, %340, %cst_121 {dimension_numbers = #tpu.dot_dimension_numbers<[1], [1], [0], [0], [0, 0, 1, 0], [], []>} : vector<8x8xbf16>, vector<10x8xbf16>, vector<8x10xf32> -> vector<8x10xf32>
    %cst_122 = arith.constant 0.353553385 : f32
    %343 = vector.broadcast %cst_122 : f32 to vector<8x10xf32>
    %344 = arith.mulf %342, %343 : vector<8x10xf32>
    %cst_123 = arith.constant dense<0xFF800000> : vector<8xf32>
    %345 = vector.multi_reduction <maximumf>, %344, %cst_123 [1] : vector<8x10xf32> to vector<8xf32>
    %346 = vector.shape_cast %345 : vector<8xf32> to vector<8x1xf32>
    %347 = vector.broadcast %346 : vector<8x1xf32> to vector<8x10xf32>
    %348 = arith.subf %344, %347 : vector<8x10xf32>
    %349 = math.exp %348 : vector<8x10xf32>
    %cst_124 = arith.constant dense<0.000000e+00> : vector<8xf32>
    %350 = vector.multi_reduction <add>, %349, %cst_124 [1] : vector<8x10xf32> to vector<8xf32>
    %351 = vector.shape_cast %350 : vector<8xf32> to vector<8x1xf32>
    %352 = tpu.reciprocal %351 {approx = true} : vector<8x1xf32> -> vector<8x1xf32>
    %353 = vector.broadcast %352 : vector<8x1xf32> to vector<8x10xf32>
    %354 = arith.mulf %349, %353 : vector<8x10xf32>
    %355 = arith.truncf %354 : vector<8x10xf32> to vector<8x10xbf16>
    %cst_125 = arith.constant dense<0.000000e+00> : vector<8x8xf32>
    %356 = tpu.matmul %355, %341, %cst_125 {dimension_numbers = #tpu.dot_dimension_numbers<[1], [0], [0], [1], [0, 0, 1, 1], [], []>} : vector<8x10xbf16>, vector<10x8xbf16>, vector<8x8xf32> -> vector<8x8xf32>
    %357 = vector.extract_strided_slice %318 {offsets = [0, 16], sizes = [8, 8], strides = [1, 1]} : vector<8x32xbf16> to vector<8x8xbf16>
    %358 = vector.extract_strided_slice %319 {offsets = [0, 16], sizes = [10, 8], strides = [1, 1]} : vector<10x32xbf16> to vector<10x8xbf16>
    %359 = vector.extract_strided_slice %320 {offsets = [0, 16], sizes = [10, 8], strides = [1, 1]} : vector<10x32xbf16> to vector<10x8xbf16>
    %cst_126 = arith.constant dense<0.000000e+00> : vector<8x10xf32>
    %360 = tpu.matmul %357, %358, %cst_126 {dimension_numbers = #tpu.dot_dimension_numbers<[1], [1], [0], [0], [0, 0, 1, 0], [], []>} : vector<8x8xbf16>, vector<10x8xbf16>, vector<8x10xf32> -> vector<8x10xf32>
    %cst_127 = arith.constant 0.353553385 : f32
    %361 = vector.broadcast %cst_127 : f32 to vector<8x10xf32>
    %362 = arith.mulf %360, %361 : vector<8x10xf32>
    %cst_128 = arith.constant dense<0xFF800000> : vector<8xf32>
    %363 = vector.multi_reduction <maximumf>, %362, %cst_128 [1] : vector<8x10xf32> to vector<8xf32>
    %364 = vector.shape_cast %363 : vector<8xf32> to vector<8x1xf32>
    %365 = vector.broadcast %364 : vector<8x1xf32> to vector<8x10xf32>
    %366 = arith.subf %362, %365 : vector<8x10xf32>
    %367 = math.exp %366 : vector<8x10xf32>
    %cst_129 = arith.constant dense<0.000000e+00> : vector<8xf32>
    %368 = vector.multi_reduction <add>, %367, %cst_129 [1] : vector<8x10xf32> to vector<8xf32>
    %369 = vector.shape_cast %368 : vector<8xf32> to vector<8x1xf32>
    %370 = tpu.reciprocal %369 {approx = true} : vector<8x1xf32> -> vector<8x1xf32>
    %371 = vector.broadcast %370 : vector<8x1xf32> to vector<8x10xf32>
    %372 = arith.mulf %367, %371 : vector<8x10xf32>
    %373 = arith.truncf %372 : vector<8x10xf32> to vector<8x10xbf16>
    %cst_130 = arith.constant dense<0.000000e+00> : vector<8x8xf32>
    %374 = tpu.matmul %373, %359, %cst_130 {dimension_numbers = #tpu.dot_dimension_numbers<[1], [0], [0], [1], [0, 0, 1, 1], [], []>} : vector<8x10xbf16>, vector<10x8xbf16>, vector<8x8xf32> -> vector<8x8xf32>
    %375 = vector.extract_strided_slice %318 {offsets = [0, 24], sizes = [8, 8], strides = [1, 1]} : vector<8x32xbf16> to vector<8x8xbf16>
    %376 = vector.extract_strided_slice %319 {offsets = [0, 24], sizes = [10, 8], strides = [1, 1]} : vector<10x32xbf16> to vector<10x8xbf16>
    %377 = vector.extract_strided_slice %320 {offsets = [0, 24], sizes = [10, 8], strides = [1, 1]} : vector<10x32xbf16> to vector<10x8xbf16>
    %cst_131 = arith.constant dense<0.000000e+00> : vector<8x10xf32>
    %378 = tpu.matmul %375, %376, %cst_131 {dimension_numbers = #tpu.dot_dimension_numbers<[1], [1], [0], [0], [0, 0, 1, 0], [], []>} : vector<8x8xbf16>, vector<10x8xbf16>, vector<8x10xf32> -> vector<8x10xf32>
    %cst_132 = arith.constant 0.353553385 : f32
    %379 = vector.broadcast %cst_132 : f32 to vector<8x10xf32>
    %380 = arith.mulf %378, %379 : vector<8x10xf32>
    %cst_133 = arith.constant dense<0xFF800000> : vector<8xf32>
    %381 = vector.multi_reduction <maximumf>, %380, %cst_133 [1] : vector<8x10xf32> to vector<8xf32>
    %382 = vector.shape_cast %381 : vector<8xf32> to vector<8x1xf32>
    %383 = vector.broadcast %382 : vector<8x1xf32> to vector<8x10xf32>
    %384 = arith.subf %380, %383 : vector<8x10xf32>
    %385 = math.exp %384 : vector<8x10xf32>
    %cst_134 = arith.constant dense<0.000000e+00> : vector<8xf32>
    %386 = vector.multi_reduction <add>, %385, %cst_134 [1] : vector<8x10xf32> to vector<8xf32>
    %387 = vector.shape_cast %386 : vector<8xf32> to vector<8x1xf32>
    %388 = tpu.reciprocal %387 {approx = true} : vector<8x1xf32> -> vector<8x1xf32>
    %389 = vector.broadcast %388 : vector<8x1xf32> to vector<8x10xf32>
    %390 = arith.mulf %385, %389 : vector<8x10xf32>
    %391 = arith.truncf %390 : vector<8x10xf32> to vector<8x10xbf16>
    %cst_135 = arith.constant dense<0.000000e+00> : vector<8x8xf32>
    %392 = tpu.matmul %391, %377, %cst_135 {dimension_numbers = #tpu.dot_dimension_numbers<[1], [0], [0], [1], [0, 0, 1, 1], [], []>} : vector<8x10xbf16>, vector<10x8xbf16>, vector<8x8xf32> -> vector<8x8xf32>
    %393 = tpu.concatenate %338, %356, %374, %392 in 1 : vector<8x8xf32>, vector<8x8xf32>, vector<8x8xf32>, vector<8x8xf32> -> vector<8x32xf32>
    %394 = tpu.concatenate %317, %393 in 0 : vector<8x32xf32>, vector<8x32xf32> -> vector<16x32xf32>
    %395 = arith.truncf %394 : vector<16x32xf32> to vector<16x32xbf16>
    %cst_136 = arith.constant dense<0.000000e+00> : vector<16x32xf32>
    %396 = tpu.matmul %395, %226, %cst_136 {dimension_numbers = #tpu.dot_dimension_numbers<[1], [0], [0], [1], [0, 0, 1, 1], [], []>} : vector<16x32xbf16>, vector<32x32xbf16>, vector<16x32xf32> -> vector<16x32xf32>
    %397 = vector.broadcast %227 : vector<1x32xf32> to vector<16x32xf32>
    %398 = arith.addf %396, %397 : vector<16x32xf32>
    %399 = arith.addf %218, %398 : vector<16x32xf32>
    %cst_137 = arith.constant dense<0.000000e+00> : vector<16xf32>
    %400 = vector.multi_reduction <add>, %399, %cst_137 [1] : vector<16x32xf32> to vector<16xf32>
    %401 = vector.shape_cast %400 : vector<16xf32> to vector<16x1xf32>
    %cst_138 = arith.constant 3.200000e+01 : f32
    %402 = vector.broadcast %cst_138 : f32 to vector<16x1xf32>
    %403 = arith.divf %401, %402 : vector<16x1xf32>
    %404 = vector.broadcast %403 : vector<16x1xf32> to vector<16x32xf32>
    %405 = arith.subf %399, %404 : vector<16x32xf32>
    %406 = arith.mulf %405, %405 : vector<16x32xf32>
    %cst_139 = arith.constant dense<0.000000e+00> : vector<16xf32>
    %407 = vector.multi_reduction <add>, %406, %cst_139 [1] : vector<16x32xf32> to vector<16xf32>
    %408 = vector.shape_cast %407 : vector<16xf32> to vector<16x1xf32>
    %cst_140 = arith.constant 3.200000e+01 : f32
    %409 = vector.broadcast %cst_140 : f32 to vector<16x1xf32>
    %410 = arith.divf %408, %409 : vector<16x1xf32>
    %411 = vector.broadcast %403 : vector<16x1xf32> to vector<16x32xf32>
    %412 = arith.subf %399, %411 : vector<16x32xf32>
    %cst_141 = arith.constant 9.99999974E-6 : f32
    %413 = vector.broadcast %cst_141 : f32 to vector<16x1xf32>
    %414 = arith.addf %410, %413 : vector<16x1xf32>
    %415 = math.rsqrt %414 : vector<16x1xf32>
    %416 = vector.broadcast %415 : vector<16x1xf32> to vector<16x32xf32>
    %417 = arith.mulf %412, %416 : vector<16x32xf32>
    %418 = vector.broadcast %228 : vector<1x32xf32> to vector<16x32xf32>
    %419 = arith.mulf %417, %418 : vector<16x32xf32>
    %420 = vector.broadcast %229 : vector<1x32xf32> to vector<16x32xf32>
    %421 = arith.addf %419, %420 : vector<16x32xf32>
    %c0_142 = arith.constant 0 : index
    %c0_143 = arith.constant 0 : index
    %422 = vector.load %arg22[%c0_142, %c0_143] : memref<32x64xbf16, #tpu.memory_space<vmem>>, vector<32x64xbf16>
    %c0_144 = arith.constant 0 : index
    %c0_145 = arith.constant 0 : index
    %423 = vector.load %arg23[%c0_144, %c0_145] : memref<1x64xf32, #tpu.memory_space<vmem>>, vector<1x64xf32>
    %c0_146 = arith.constant 0 : index
    %c0_147 = arith.constant 0 : index
    %424 = vector.load %arg24[%c0_146, %c0_147] : memref<64x32xbf16, #tpu.memory_space<vmem>>, vector<64x32xbf16>
    %c0_148 = arith.constant 0 : index
    %c0_149 = arith.constant 0 : index
    %425 = vector.load %arg25[%c0_148, %c0_149] : memref<1x32xf32, #tpu.memory_space<vmem>>, vector<1x32xf32>
    %c0_150 = arith.constant 0 : index
    %c0_151 = arith.constant 0 : index
    %426 = vector.load %arg26[%c0_150, %c0_151] : memref<1x32xf32, #tpu.memory_space<vmem>>, vector<1x32xf32>
    %c0_152 = arith.constant 0 : index
    %c0_153 = arith.constant 0 : index
    %427 = vector.load %arg27[%c0_152, %c0_153] : memref<1x32xf32, #tpu.memory_space<vmem>>, vector<1x32xf32>
    %428 = arith.truncf %421 : vector<16x32xf32> to vector<16x32xbf16>
    %cst_154 = arith.constant dense<0.000000e+00> : vector<16x64xf32>
    %429 = tpu.matmul %428, %422, %cst_154 {dimension_numbers = #tpu.dot_dimension_numbers<[1], [0], [0], [1], [0, 0, 1, 1], [], []>} : vector<16x32xbf16>, vector<32x64xbf16>, vector<16x64xf32> -> vector<16x64xf32>
    %430 = vector.broadcast %423 : vector<1x64xf32> to vector<16x64xf32>
    %431 = arith.addf %429, %430 : vector<16x64xf32>
    %cst_155 = arith.constant 0.000000e+00 : f32
    %432 = vector.broadcast %cst_155 : f32 to vector<16x64xf32>
    %433 = arith.maximumf %431, %432 : vector<16x64xf32>
    %434 = arith.truncf %433 : vector<16x64xf32> to vector<16x64xbf16>
    %cst_156 = arith.constant dense<0.000000e+00> : vector<16x32xf32>
    %435 = tpu.matmul %434, %424, %cst_156 {dimension_numbers = #tpu.dot_dimension_numbers<[1], [0], [0], [1], [0, 0, 1, 1], [], []>} : vector<16x64xbf16>, vector<64x32xbf16>, vector<16x32xf32> -> vector<16x32xf32>
    %436 = arith.addf %421, %435 : vector<16x32xf32>
    %437 = vector.broadcast %425 : vector<1x32xf32> to vector<16x32xf32>
    %438 = arith.addf %436, %437 : vector<16x32xf32>
    %cst_157 = arith.constant dense<0.000000e+00> : vector<16xf32>
    %439 = vector.multi_reduction <add>, %438, %cst_157 [1] : vector<16x32xf32> to vector<16xf32>
    %440 = vector.shape_cast %439 : vector<16xf32> to vector<16x1xf32>
    %cst_158 = arith.constant 3.200000e+01 : f32
    %441 = vector.broadcast %cst_158 : f32 to vector<16x1xf32>
    %442 = arith.divf %440, %441 : vector<16x1xf32>
    %443 = vector.broadcast %442 : vector<16x1xf32> to vector<16x32xf32>
    %444 = arith.subf %438, %443 : vector<16x32xf32>
    %445 = arith.mulf %444, %444 : vector<16x32xf32>
    %cst_159 = arith.constant dense<0.000000e+00> : vector<16xf32>
    %446 = vector.multi_reduction <add>, %445, %cst_159 [1] : vector<16x32xf32> to vector<16xf32>
    %447 = vector.shape_cast %446 : vector<16xf32> to vector<16x1xf32>
    %cst_160 = arith.constant 3.200000e+01 : f32
    %448 = vector.broadcast %cst_160 : f32 to vector<16x1xf32>
    %449 = arith.divf %447, %448 : vector<16x1xf32>
    %450 = vector.broadcast %442 : vector<16x1xf32> to vector<16x32xf32>
    %451 = arith.subf %438, %450 : vector<16x32xf32>
    %cst_161 = arith.constant 9.99999974E-6 : f32
    %452 = vector.broadcast %cst_161 : f32 to vector<16x1xf32>
    %453 = arith.addf %449, %452 : vector<16x1xf32>
    %454 = math.rsqrt %453 : vector<16x1xf32>
    %455 = vector.broadcast %454 : vector<16x1xf32> to vector<16x32xf32>
    %456 = arith.mulf %451, %455 : vector<16x32xf32>
    %457 = vector.broadcast %426 : vector<1x32xf32> to vector<16x32xf32>
    %458 = arith.mulf %456, %457 : vector<16x32xf32>
    %459 = vector.broadcast %427 : vector<1x32xf32> to vector<16x32xf32>
    %460 = arith.addf %458, %459 : vector<16x32xf32>
    %461 = arith.truncf %460 : vector<16x32xf32> to vector<16x32xbf16>
    %c0_162 = arith.constant 0 : index
    %c0_163 = arith.constant 0 : index
    %462 = vector.load %arg28[%c0_162, %c0_163] : memref<16x32xbf16, #tpu.memory_space<vmem>>, vector<16x32xbf16>
    tpu.vector_store %arg28[%c0_162, %c0_163], %461 {strides = array<i32>} : memref<16x32xbf16, #tpu.memory_space<vmem>>, vector<16x32xbf16>,
    return
  }
}

module attributes {stable_mosaic.version = 11 : i64} {
  func.func @_decoder_layer_kernel(%arg0: memref<16x32xbf16, #tpu.memory_space<vmem>>, %arg1: memref<20x32xbf16, #tpu.memory_space<vmem>>, %arg2: memref<32x32xbf16, #tpu.memory_space<vmem>>, %arg3: memref<1x32xf32, #tpu.memory_space<vmem>>, %arg4: memref<32x32xbf16, #tpu.memory_space<vmem>>, %arg5: memref<1x32xf32, #tpu.memory_space<vmem>>, %arg6: memref<32x32xbf16, #tpu.memory_space<vmem>>, %arg7: memref<1x32xf32, #tpu.memory_space<vmem>>, %arg8: memref<32x32xbf16, #tpu.memory_space<vmem>>, %arg9: memref<1x32xf32, #tpu.memory_space<vmem>>, %arg10: memref<1x32xf32, #tpu.memory_space<vmem>>, %arg11: memref<1x32xf32, #tpu.memory_space<vmem>>, %arg12: memref<32x32xbf16, #tpu.memory_space<vmem>>, %arg13: memref<1x32xf32, #tpu.memory_space<vmem>>, %arg14: memref<32x32xbf16, #tpu.memory_space<vmem>>, %arg15: memref<1x32xf32, #tpu.memory_space<vmem>>, %arg16: memref<32x32xbf16, #tpu.memory_space<vmem>>, %arg17: memref<1x32xf32, #tpu.memory_space<vmem>>, %arg18: memref<32x32xbf16, #tpu.memory_space<vmem>>, %arg19: memref<1x32xf32, #tpu.memory_space<vmem>>, %arg20: memref<1x32xf32, #tpu.memory_space<vmem>>, %arg21: memref<1x32xf32, #tpu.memory_space<vmem>>, %arg22: memref<32x64xbf16, #tpu.memory_space<vmem>>, %arg23: memref<1x64xf32, #tpu.memory_space<vmem>>, %arg24: memref<64x32xbf16, #tpu.memory_space<vmem>>, %arg25: memref<1x32xf32, #tpu.memory_space<vmem>>, %arg26: memref<1x32xf32, #tpu.memory_space<vmem>>, %arg27: memref<1x32xf32, #tpu.memory_space<vmem>>, %arg28: memref<16x32xbf16, #tpu.memory_space<vmem>>) attributes {dimension_semantics = [], scalar_prefetch = 0 : i64, scratch_operands = 0 : i64, tpu.core_type = #tpu.core_type<tc>} {
    %c0 = arith.constant 0 : index
    %c0_0 = arith.constant 0 : index
    %0 = vector.load %arg0[%c0, %c0_0] : memref<16x32xbf16, #tpu.memory_space<vmem>>, vector<16x32xbf16>
    %1 = arith.extf %0 : vector<16x32xbf16> to vector<16x32xf32>
    %c0_1 = arith.constant 0 : index
    %c0_2 = arith.constant 0 : index
    %2 = vector.load %arg1[%c0_1, %c0_2] : memref<20x32xbf16, #tpu.memory_space<vmem>>, vector<20x32xbf16>
    %c0_3 = arith.constant 0 : index
    %c0_4 = arith.constant 0 : index
    %3 = vector.load %arg2[%c0_3, %c0_4] : memref<32x32xbf16, #tpu.memory_space<vmem>>, vector<32x32xbf16>
    %c0_5 = arith.constant 0 : index
    %c0_6 = arith.constant 0 : index
    %4 = vector.load %arg3[%c0_5, %c0_6] : memref<1x32xf32, #tpu.memory_space<vmem>>, vector<1x32xf32>
    %c0_7 = arith.constant 0 : index
    %c0_8 = arith.constant 0 : index
    %5 = vector.load %arg4[%c0_7, %c0_8] : memref<32x32xbf16, #tpu.memory_space<vmem>>, vector<32x32xbf16>
    %c0_9 = arith.constant 0 : index
    %c0_10 = arith.constant 0 : index
    %6 = vector.load %arg5[%c0_9, %c0_10] : memref<1x32xf32, #tpu.memory_space<vmem>>, vector<1x32xf32>
    %c0_11 = arith.constant 0 : index
    %c0_12 = arith.constant 0 : index
    %7 = vector.load %arg6[%c0_11, %c0_12] : memref<32x32xbf16, #tpu.memory_space<vmem>>, vector<32x32xbf16>
    %c0_13 = arith.constant 0 : index
    %c0_14 = arith.constant 0 : index
    %8 = vector.load %arg7[%c0_13, %c0_14] : memref<1x32xf32, #tpu.memory_space<vmem>>, vector<1x32xf32>
    %c0_15 = arith.constant 0 : index
    %c0_16 = arith.constant 0 : index
    %9 = vector.load %arg8[%c0_15, %c0_16] : memref<32x32xbf16, #tpu.memory_space<vmem>>, vector<32x32xbf16>
    %c0_17 = arith.constant 0 : index
    %c0_18 = arith.constant 0 : index
    %10 = vector.load %arg9[%c0_17, %c0_18] : memref<1x32xf32, #tpu.memory_space<vmem>>, vector<1x32xf32>
    %c0_19 = arith.constant 0 : index
    %c0_20 = arith.constant 0 : index
    %11 = vector.load %arg10[%c0_19, %c0_20] : memref<1x32xf32, #tpu.memory_space<vmem>>, vector<1x32xf32>
    %c0_21 = arith.constant 0 : index
    %c0_22 = arith.constant 0 : index
    %12 = vector.load %arg11[%c0_21, %c0_22] : memref<1x32xf32, #tpu.memory_space<vmem>>, vector<1x32xf32>
    %cst = arith.constant dense<0.000000e+00> : vector<16x32xf32>
    %13 = tpu.matmul %0, %3, %cst {dimension_numbers = #tpu.dot_dimension_numbers<[1], [0], [0], [1], [0, 0, 1, 1], [], []>} : vector<16x32xbf16>, vector<32x32xbf16>, vector<16x32xf32> -> vector<16x32xf32>
    %14 = vector.broadcast %4 : vector<1x32xf32> to vector<16x32xf32>
    %15 = arith.addf %13, %14 : vector<16x32xf32>
    %16 = arith.truncf %15 : vector<16x32xf32> to vector<16x32xbf16>
    %cst_23 = arith.constant dense<0.000000e+00> : vector<16x32xf32>
    %17 = tpu.matmul %0, %5, %cst_23 {dimension_numbers = #tpu.dot_dimension_numbers<[1], [0], [0], [1], [0, 0, 1, 1], [], []>} : vector<16x32xbf16>, vector<32x32xbf16>, vector<16x32xf32> -> vector<16x32xf32>
    %18 = vector.broadcast %6 : vector<1x32xf32> to vector<16x32xf32>
    %19 = arith.addf %17, %18 : vector<16x32xf32>
    %20 = arith.truncf %19 : vector<16x32xf32> to vector<16x32xbf16>
    %cst_24 = arith.constant dense<0.000000e+00> : vector<16x32xf32>
    %21 = tpu.matmul %0, %7, %cst_24 {dimension_numbers = #tpu.dot_dimension_numbers<[1], [0], [0], [1], [0, 0, 1, 1], [], []>} : vector<16x32xbf16>, vector<32x32xbf16>, vector<16x32xf32> -> vector<16x32xf32>
    %22 = vector.broadcast %8 : vector<1x32xf32> to vector<16x32xf32>
    %23 = arith.addf %21, %22 : vector<16x32xf32>
    %24 = arith.truncf %23 : vector<16x32xf32> to vector<16x32xbf16>
    %25 = tpu.iota {dimensions = array<i32: 0>} : vector<8x8xi32>
    %26 = tpu.iota {dimensions = array<i32: 1>} : vector<8x8xi32>
    %27 = arith.cmpi sgt, %26, %25 : vector<8x8xi32>
    %cst_25 = arith.constant -1.000000e+09 : f32
    %cst_26 = arith.constant 0.000000e+00 : f32
    %28 = vector.broadcast %cst_25 : f32 to vector<8x8xf32>
    %29 = vector.broadcast %cst_26 : f32 to vector<8x8xf32>
    %30 = arith.select %27, %28, %29 : vector<8x8xi1>, vector<8x8xf32>
    %31 = vector.extract_strided_slice %16 {offsets = [0, 0], sizes = [8, 32], strides = [1, 1]} : vector<16x32xbf16> to vector<8x32xbf16>
    %32 = vector.extract_strided_slice %20 {offsets = [0, 0], sizes = [8, 32], strides = [1, 1]} : vector<16x32xbf16> to vector<8x32xbf16>
    %33 = vector.extract_strided_slice %24 {offsets = [0, 0], sizes = [8, 32], strides = [1, 1]} : vector<16x32xbf16> to vector<8x32xbf16>
    %34 = vector.extract_strided_slice %31 {offsets = [0, 0], sizes = [8, 8], strides = [1, 1]} : vector<8x32xbf16> to vector<8x8xbf16>
    %35 = vector.extract_strided_slice %32 {offsets = [0, 0], sizes = [8, 8], strides = [1, 1]} : vector<8x32xbf16> to vector<8x8xbf16>
    %36 = vector.extract_strided_slice %33 {offsets = [0, 0], sizes = [8, 8], strides = [1, 1]} : vector<8x32xbf16> to vector<8x8xbf16>
    %cst_27 = arith.constant dense<0.000000e+00> : vector<8x8xf32>
    %37 = tpu.matmul %34, %35, %cst_27 {dimension_numbers = #tpu.dot_dimension_numbers<[1], [1], [0], [0], [0, 0, 1, 0], [], []>} : vector<8x8xbf16>, vector<8x8xbf16>, vector<8x8xf32> -> vector<8x8xf32>
    %cst_28 = arith.constant 0.353553385 : f32
    %38 = vector.broadcast %cst_28 : f32 to vector<8x8xf32>
    %39 = arith.mulf %37, %38 : vector<8x8xf32>
    %40 = arith.addf %39, %30 : vector<8x8xf32>
    %cst_29 = arith.constant dense<0xFF800000> : vector<8xf32>
    %41 = vector.multi_reduction <maximumf>, %40, %cst_29 [1] : vector<8x8xf32> to vector<8xf32>
    %42 = vector.shape_cast %41 : vector<8xf32> to vector<8x1xf32>
    %43 = vector.broadcast %42 : vector<8x1xf32> to vector<8x8xf32>
    %44 = arith.subf %40, %43 : vector<8x8xf32>
    %45 = math.exp %44 : vector<8x8xf32>
    %cst_30 = arith.constant dense<0.000000e+00> : vector<8xf32>
    %46 = vector.multi_reduction <add>, %45, %cst_30 [1] : vector<8x8xf32> to vector<8xf32>
    %47 = vector.shape_cast %46 : vector<8xf32> to vector<8x1xf32>
    %48 = tpu.reciprocal %47 {approx = true} : vector<8x1xf32> -> vector<8x1xf32>
    %49 = vector.broadcast %48 : vector<8x1xf32> to vector<8x8xf32>
    %50 = arith.mulf %45, %49 : vector<8x8xf32>
    %51 = arith.truncf %50 : vector<8x8xf32> to vector<8x8xbf16>
    %cst_31 = arith.constant dense<0.000000e+00> : vector<8x8xf32>
    %52 = tpu.matmul %51, %36, %cst_31 {dimension_numbers = #tpu.dot_dimension_numbers<[1], [0], [0], [1], [0, 0, 1, 1], [], []>} : vector<8x8xbf16>, vector<8x8xbf16>, vector<8x8xf32> -> vector<8x8xf32>
    %53 = vector.extract_strided_slice %31 {offsets = [0, 8], sizes = [8, 8], strides = [1, 1]} : vector<8x32xbf16> to vector<8x8xbf16>
    %54 = vector.extract_strided_slice %32 {offsets = [0, 8], sizes = [8, 8], strides = [1, 1]} : vector<8x32xbf16> to vector<8x8xbf16>
    %55 = vector.extract_strided_slice %33 {offsets = [0, 8], sizes = [8, 8], strides = [1, 1]} : vector<8x32xbf16> to vector<8x8xbf16>
    %cst_32 = arith.constant dense<0.000000e+00> : vector<8x8xf32>
    %56 = tpu.matmul %53, %54, %cst_32 {dimension_numbers = #tpu.dot_dimension_numbers<[1], [1], [0], [0], [0, 0, 1, 0], [], []>} : vector<8x8xbf16>, vector<8x8xbf16>, vector<8x8xf32> -> vector<8x8xf32>
    %cst_33 = arith.constant 0.353553385 : f32
    %57 = vector.broadcast %cst_33 : f32 to vector<8x8xf32>
    %58 = arith.mulf %56, %57 : vector<8x8xf32>
    %59 = arith.addf %58, %30 : vector<8x8xf32>
    %cst_34 = arith.constant dense<0xFF800000> : vector<8xf32>
    %60 = vector.multi_reduction <maximumf>, %59, %cst_34 [1] : vector<8x8xf32> to vector<8xf32>
    %61 = vector.shape_cast %60 : vector<8xf32> to vector<8x1xf32>
    %62 = vector.broadcast %61 : vector<8x1xf32> to vector<8x8xf32>
    %63 = arith.subf %59, %62 : vector<8x8xf32>
    %64 = math.exp %63 : vector<8x8xf32>
    %cst_35 = arith.constant dense<0.000000e+00> : vector<8xf32>
    %65 = vector.multi_reduction <add>, %64, %cst_35 [1] : vector<8x8xf32> to vector<8xf32>
    %66 = vector.shape_cast %65 : vector<8xf32> to vector<8x1xf32>
    %67 = tpu.reciprocal %66 {approx = true} : vector<8x1xf32> -> vector<8x1xf32>
    %68 = vector.broadcast %67 : vector<8x1xf32> to vector<8x8xf32>
    %69 = arith.mulf %64, %68 : vector<8x8xf32>
    %70 = arith.truncf %69 : vector<8x8xf32> to vector<8x8xbf16>
    %cst_36 = arith.constant dense<0.000000e+00> : vector<8x8xf32>
    %71 = tpu.matmul %70, %55, %cst_36 {dimension_numbers = #tpu.dot_dimension_numbers<[1], [0], [0], [1], [0, 0, 1, 1], [], []>} : vector<8x8xbf16>, vector<8x8xbf16>, vector<8x8xf32> -> vector<8x8xf32>
    %72 = vector.extract_strided_slice %31 {offsets = [0, 16], sizes = [8, 8], strides = [1, 1]} : vector<8x32xbf16> to vector<8x8xbf16>
    %73 = vector.extract_strided_slice %32 {offsets = [0, 16], sizes = [8, 8], strides = [1, 1]} : vector<8x32xbf16> to vector<8x8xbf16>
    %74 = vector.extract_strided_slice %33 {offsets = [0, 16], sizes = [8, 8], strides = [1, 1]} : vector<8x32xbf16> to vector<8x8xbf16>
    %cst_37 = arith.constant dense<0.000000e+00> : vector<8x8xf32>
    %75 = tpu.matmul %72, %73, %cst_37 {dimension_numbers = #tpu.dot_dimension_numbers<[1], [1], [0], [0], [0, 0, 1, 0], [], []>} : vector<8x8xbf16>, vector<8x8xbf16>, vector<8x8xf32> -> vector<8x8xf32>
    %cst_38 = arith.constant 0.353553385 : f32
    %76 = vector.broadcast %cst_38 : f32 to vector<8x8xf32>
    %77 = arith.mulf %75, %76 : vector<8x8xf32>
    %78 = arith.addf %77, %30 : vector<8x8xf32>
    %cst_39 = arith.constant dense<0xFF800000> : vector<8xf32>
    %79 = vector.multi_reduction <maximumf>, %78, %cst_39 [1] : vector<8x8xf32> to vector<8xf32>
    %80 = vector.shape_cast %79 : vector<8xf32> to vector<8x1xf32>
    %81 = vector.broadcast %80 : vector<8x1xf32> to vector<8x8xf32>
    %82 = arith.subf %78, %81 : vector<8x8xf32>
    %83 = math.exp %82 : vector<8x8xf32>
    %cst_40 = arith.constant dense<0.000000e+00> : vector<8xf32>
    %84 = vector.multi_reduction <add>, %83, %cst_40 [1] : vector<8x8xf32> to vector<8xf32>
    %85 = vector.shape_cast %84 : vector<8xf32> to vector<8x1xf32>
    %86 = tpu.reciprocal %85 {approx = true} : vector<8x1xf32> -> vector<8x1xf32>
    %87 = vector.broadcast %86 : vector<8x1xf32> to vector<8x8xf32>
    %88 = arith.mulf %83, %87 : vector<8x8xf32>
    %89 = arith.truncf %88 : vector<8x8xf32> to vector<8x8xbf16>
    %cst_41 = arith.constant dense<0.000000e+00> : vector<8x8xf32>
    %90 = tpu.matmul %89, %74, %cst_41 {dimension_numbers = #tpu.dot_dimension_numbers<[1], [0], [0], [1], [0, 0, 1, 1], [], []>} : vector<8x8xbf16>, vector<8x8xbf16>, vector<8x8xf32> -> vector<8x8xf32>
    %91 = vector.extract_strided_slice %31 {offsets = [0, 24], sizes = [8, 8], strides = [1, 1]} : vector<8x32xbf16> to vector<8x8xbf16>
    %92 = vector.extract_strided_slice %32 {offsets = [0, 24], sizes = [8, 8], strides = [1, 1]} : vector<8x32xbf16> to vector<8x8xbf16>
    %93 = vector.extract_strided_slice %33 {offsets = [0, 24], sizes = [8, 8], strides = [1, 1]} : vector<8x32xbf16> to vector<8x8xbf16>
    %cst_42 = arith.constant dense<0.000000e+00> : vector<8x8xf32>
    %94 = tpu.matmul %91, %92, %cst_42 {dimension_numbers = #tpu.dot_dimension_numbers<[1], [1], [0], [0], [0, 0, 1, 0], [], []>} : vector<8x8xbf16>, vector<8x8xbf16>, vector<8x8xf32> -> vector<8x8xf32>
    %cst_43 = arith.constant 0.353553385 : f32
    %95 = vector.broadcast %cst_43 : f32 to vector<8x8xf32>
    %96 = arith.mulf %94, %95 : vector<8x8xf32>
    %97 = arith.addf %96, %30 : vector<8x8xf32>
    %cst_44 = arith.constant dense<0xFF800000> : vector<8xf32>
    %98 = vector.multi_reduction <maximumf>, %97, %cst_44 [1] : vector<8x8xf32> to vector<8xf32>
    %99 = vector.shape_cast %98 : vector<8xf32> to vector<8x1xf32>
    %100 = vector.broadcast %99 : vector<8x1xf32> to vector<8x8xf32>
    %101 = arith.subf %97, %100 : vector<8x8xf32>
    %102 = math.exp %101 : vector<8x8xf32>
    %cst_45 = arith.constant dense<0.000000e+00> : vector<8xf32>
    %103 = vector.multi_reduction <add>, %102, %cst_45 [1] : vector<8x8xf32> to vector<8xf32>
    %104 = vector.shape_cast %103 : vector<8xf32> to vector<8x1xf32>
    %105 = tpu.reciprocal %104 {approx = true} : vector<8x1xf32> -> vector<8x1xf32>
    %106 = vector.broadcast %105 : vector<8x1xf32> to vector<8x8xf32>
    %107 = arith.mulf %102, %106 : vector<8x8xf32>
    %108 = arith.truncf %107 : vector<8x8xf32> to vector<8x8xbf16>
    %cst_46 = arith.constant dense<0.000000e+00> : vector<8x8xf32>
    %109 = tpu.matmul %108, %93, %cst_46 {dimension_numbers = #tpu.dot_dimension_numbers<[1], [0], [0], [1], [0, 0, 1, 1], [], []>} : vector<8x8xbf16>, vector<8x8xbf16>, vector<8x8xf32> -> vector<8x8xf32>
    %110 = tpu.concatenate %52, %71, %90, %109 in 1 : vector<8x8xf32>, vector<8x8xf32>, vector<8x8xf32>, vector<8x8xf32> -> vector<8x32xf32>
    %111 = vector.extract_strided_slice %16 {offsets = [8, 0], sizes = [8, 32], strides = [1, 1]} : vector<16x32xbf16> to vector<8x32xbf16>
    %112 = vector.extract_strided_slice %20 {offsets = [8, 0], sizes = [8, 32], strides = [1, 1]} : vector<16x32xbf16> to vector<8x32xbf16>
    %113 = vector.extract_strided_slice %24 {offsets = [8, 0], sizes = [8, 32], strides = [1, 1]} : vector<16x32xbf16> to vector<8x32xbf16>
    %114 = vector.extract_strided_slice %111 {offsets = [0, 0], sizes = [8, 8], strides = [1, 1]} : vector<8x32xbf16> to vector<8x8xbf16>
    %115 = vector.extract_strided_slice %112 {offsets = [0, 0], sizes = [8, 8], strides = [1, 1]} : vector<8x32xbf16> to vector<8x8xbf16>
    %116 = vector.extract_strided_slice %113 {offsets = [0, 0], sizes = [8, 8], strides = [1, 1]} : vector<8x32xbf16> to vector<8x8xbf16>
    %cst_47 = arith.constant dense<0.000000e+00> : vector<8x8xf32>
    %117 = tpu.matmul %114, %115, %cst_47 {dimension_numbers = #tpu.dot_dimension_numbers<[1], [1], [0], [0], [0, 0, 1, 0], [], []>} : vector<8x8xbf16>, vector<8x8xbf16>, vector<8x8xf32> -> vector<8x8xf32>
    %cst_48 = arith.constant 0.353553385 : f32
    %118 = vector.broadcast %cst_48 : f32 to vector<8x8xf32>
    %119 = arith.mulf %117, %118 : vector<8x8xf32>
    %120 = arith.addf %119, %30 : vector<8x8xf32>
    %cst_49 = arith.constant dense<0xFF800000> : vector<8xf32>
    %121 = vector.multi_reduction <maximumf>, %120, %cst_49 [1] : vector<8x8xf32> to vector<8xf32>
    %122 = vector.shape_cast %121 : vector<8xf32> to vector<8x1xf32>
    %123 = vector.broadcast %122 : vector<8x1xf32> to vector<8x8xf32>
    %124 = arith.subf %120, %123 : vector<8x8xf32>
    %125 = math.exp %124 : vector<8x8xf32>
    %cst_50 = arith.constant dense<0.000000e+00> : vector<8xf32>
    %126 = vector.multi_reduction <add>, %125, %cst_50 [1] : vector<8x8xf32> to vector<8xf32>
    %127 = vector.shape_cast %126 : vector<8xf32> to vector<8x1xf32>
    %128 = tpu.reciprocal %127 {approx = true} : vector<8x1xf32> -> vector<8x1xf32>
    %129 = vector.broadcast %128 : vector<8x1xf32> to vector<8x8xf32>
    %130 = arith.mulf %125, %129 : vector<8x8xf32>
    %131 = arith.truncf %130 : vector<8x8xf32> to vector<8x8xbf16>
    %cst_51 = arith.constant dense<0.000000e+00> : vector<8x8xf32>
    %132 = tpu.matmul %131, %116, %cst_51 {dimension_numbers = #tpu.dot_dimension_numbers<[1], [0], [0], [1], [0, 0, 1, 1], [], []>} : vector<8x8xbf16>, vector<8x8xbf16>, vector<8x8xf32> -> vector<8x8xf32>
    %133 = vector.extract_strided_slice %111 {offsets = [0, 8], sizes = [8, 8], strides = [1, 1]} : vector<8x32xbf16> to vector<8x8xbf16>
    %134 = vector.extract_strided_slice %112 {offsets = [0, 8], sizes = [8, 8], strides = [1, 1]} : vector<8x32xbf16> to vector<8x8xbf16>
    %135 = vector.extract_strided_slice %113 {offsets = [0, 8], sizes = [8, 8], strides = [1, 1]} : vector<8x32xbf16> to vector<8x8xbf16>
    %cst_52 = arith.constant dense<0.000000e+00> : vector<8x8xf32>
    %136 = tpu.matmul %133, %134, %cst_52 {dimension_numbers = #tpu.dot_dimension_numbers<[1], [1], [0], [0], [0, 0, 1, 0], [], []>} : vector<8x8xbf16>, vector<8x8xbf16>, vector<8x8xf32> -> vector<8x8xf32>
    %cst_53 = arith.constant 0.353553385 : f32
    %137 = vector.broadcast %cst_53 : f32 to vector<8x8xf32>
    %138 = arith.mulf %136, %137 : vector<8x8xf32>
    %139 = arith.addf %138, %30 : vector<8x8xf32>
    %cst_54 = arith.constant dense<0xFF800000> : vector<8xf32>
    %140 = vector.multi_reduction <maximumf>, %139, %cst_54 [1] : vector<8x8xf32> to vector<8xf32>
    %141 = vector.shape_cast %140 : vector<8xf32> to vector<8x1xf32>
    %142 = vector.broadcast %141 : vector<8x1xf32> to vector<8x8xf32>
    %143 = arith.subf %139, %142 : vector<8x8xf32>
    %144 = math.exp %143 : vector<8x8xf32>
    %cst_55 = arith.constant dense<0.000000e+00> : vector<8xf32>
    %145 = vector.multi_reduction <add>, %144, %cst_55 [1] : vector<8x8xf32> to vector<8xf32>
    %146 = vector.shape_cast %145 : vector<8xf32> to vector<8x1xf32>
    %147 = tpu.reciprocal %146 {approx = true} : vector<8x1xf32> -> vector<8x1xf32>
    %148 = vector.broadcast %147 : vector<8x1xf32> to vector<8x8xf32>
    %149 = arith.mulf %144, %148 : vector<8x8xf32>
    %150 = arith.truncf %149 : vector<8x8xf32> to vector<8x8xbf16>
    %cst_56 = arith.constant dense<0.000000e+00> : vector<8x8xf32>
    %151 = tpu.matmul %150, %135, %cst_56 {dimension_numbers = #tpu.dot_dimension_numbers<[1], [0], [0], [1], [0, 0, 1, 1], [], []>} : vector<8x8xbf16>, vector<8x8xbf16>, vector<8x8xf32> -> vector<8x8xf32>
    %152 = vector.extract_strided_slice %111 {offsets = [0, 16], sizes = [8, 8], strides = [1, 1]} : vector<8x32xbf16> to vector<8x8xbf16>
    %153 = vector.extract_strided_slice %112 {offsets = [0, 16], sizes = [8, 8], strides = [1, 1]} : vector<8x32xbf16> to vector<8x8xbf16>
    %154 = vector.extract_strided_slice %113 {offsets = [0, 16], sizes = [8, 8], strides = [1, 1]} : vector<8x32xbf16> to vector<8x8xbf16>
    %cst_57 = arith.constant dense<0.000000e+00> : vector<8x8xf32>
    %155 = tpu.matmul %152, %153, %cst_57 {dimension_numbers = #tpu.dot_dimension_numbers<[1], [1], [0], [0], [0, 0, 1, 0], [], []>} : vector<8x8xbf16>, vector<8x8xbf16>, vector<8x8xf32> -> vector<8x8xf32>
    %cst_58 = arith.constant 0.353553385 : f32
    %156 = vector.broadcast %cst_58 : f32 to vector<8x8xf32>
    %157 = arith.mulf %155, %156 : vector<8x8xf32>
    %158 = arith.addf %157, %30 : vector<8x8xf32>
    %cst_59 = arith.constant dense<0xFF800000> : vector<8xf32>
    %159 = vector.multi_reduction <maximumf>, %158, %cst_59 [1] : vector<8x8xf32> to vector<8xf32>
    %160 = vector.shape_cast %159 : vector<8xf32> to vector<8x1xf32>
    %161 = vector.broadcast %160 : vector<8x1xf32> to vector<8x8xf32>
    %162 = arith.subf %158, %161 : vector<8x8xf32>
    %163 = math.exp %162 : vector<8x8xf32>
    %cst_60 = arith.constant dense<0.000000e+00> : vector<8xf32>
    %164 = vector.multi_reduction <add>, %163, %cst_60 [1] : vector<8x8xf32> to vector<8xf32>
    %165 = vector.shape_cast %164 : vector<8xf32> to vector<8x1xf32>
    %166 = tpu.reciprocal %165 {approx = true} : vector<8x1xf32> -> vector<8x1xf32>
    %167 = vector.broadcast %166 : vector<8x1xf32> to vector<8x8xf32>
    %168 = arith.mulf %163, %167 : vector<8x8xf32>
    %169 = arith.truncf %168 : vector<8x8xf32> to vector<8x8xbf16>
    %cst_61 = arith.constant dense<0.000000e+00> : vector<8x8xf32>
    %170 = tpu.matmul %169, %154, %cst_61 {dimension_numbers = #tpu.dot_dimension_numbers<[1], [0], [0], [1], [0, 0, 1, 1], [], []>} : vector<8x8xbf16>, vector<8x8xbf16>, vector<8x8xf32> -> vector<8x8xf32>
    %171 = vector.extract_strided_slice %111 {offsets = [0, 24], sizes = [8, 8], strides = [1, 1]} : vector<8x32xbf16> to vector<8x8xbf16>
    %172 = vector.extract_strided_slice %112 {offsets = [0, 24], sizes = [8, 8], strides = [1, 1]} : vector<8x32xbf16> to vector<8x8xbf16>
    %173 = vector.extract_strided_slice %113 {offsets = [0, 24], sizes = [8, 8], strides = [1, 1]} : vector<8x32xbf16> to vector<8x8xbf16>
    %cst_62 = arith.constant dense<0.000000e+00> : vector<8x8xf32>
    %174 = tpu.matmul %171, %172, %cst_62 {dimension_numbers = #tpu.dot_dimension_numbers<[1], [1], [0], [0], [0, 0, 1, 0], [], []>} : vector<8x8xbf16>, vector<8x8xbf16>, vector<8x8xf32> -> vector<8x8xf32>
    %cst_63 = arith.constant 0.353553385 : f32
    %175 = vector.broadcast %cst_63 : f32 to vector<8x8xf32>
    %176 = arith.mulf %174, %175 : vector<8x8xf32>
    %177 = arith.addf %176, %30 : vector<8x8xf32>
    %cst_64 = arith.constant dense<0xFF800000> : vector<8xf32>
    %178 = vector.multi_reduction <maximumf>, %177, %cst_64 [1] : vector<8x8xf32> to vector<8xf32>
    %179 = vector.shape_cast %178 : vector<8xf32> to vector<8x1xf32>
    %180 = vector.broadcast %179 : vector<8x1xf32> to vector<8x8xf32>
    %181 = arith.subf %177, %180 : vector<8x8xf32>
    %182 = math.exp %181 : vector<8x8xf32>
    %cst_65 = arith.constant dense<0.000000e+00> : vector<8xf32>
    %183 = vector.multi_reduction <add>, %182, %cst_65 [1] : vector<8x8xf32> to vector<8xf32>
    %184 = vector.shape_cast %183 : vector<8xf32> to vector<8x1xf32>
    %185 = tpu.reciprocal %184 {approx = true} : vector<8x1xf32> -> vector<8x1xf32>
    %186 = vector.broadcast %185 : vector<8x1xf32> to vector<8x8xf32>
    %187 = arith.mulf %182, %186 : vector<8x8xf32>
    %188 = arith.truncf %187 : vector<8x8xf32> to vector<8x8xbf16>
    %cst_66 = arith.constant dense<0.000000e+00> : vector<8x8xf32>
    %189 = tpu.matmul %188, %173, %cst_66 {dimension_numbers = #tpu.dot_dimension_numbers<[1], [0], [0], [1], [0, 0, 1, 1], [], []>} : vector<8x8xbf16>, vector<8x8xbf16>, vector<8x8xf32> -> vector<8x8xf32>
    %190 = tpu.concatenate %132, %151, %170, %189 in 1 : vector<8x8xf32>, vector<8x8xf32>, vector<8x8xf32>, vector<8x8xf32> -> vector<8x32xf32>
    %191 = tpu.concatenate %110, %190 in 0 : vector<8x32xf32>, vector<8x32xf32> -> vector<16x32xf32>
    %192 = arith.truncf %191 : vector<16x32xf32> to vector<16x32xbf16>
    %cst_67 = arith.constant dense<0.000000e+00> : vector<16x32xf32>
    %193 = tpu.matmul %192, %9, %cst_67 {dimension_numbers = #tpu.dot_dimension_numbers<[1], [0], [0], [1], [0, 0, 1, 1], [], []>} : vector<16x32xbf16>, vector<32x32xbf16>, vector<16x32xf32> -> vector<16x32xf32>
    %194 = vector.broadcast %10 : vector<1x32xf32> to vector<16x32xf32>
    %195 = arith.addf %193, %194 : vector<16x32xf32>
    %196 = arith.addf %1, %195 : vector<16x32xf32>
    %cst_68 = arith.constant dense<0.000000e+00> : vector<16xf32>
    %197 = vector.multi_reduction <add>, %196, %cst_68 [1] : vector<16x32xf32> to vector<16xf32>
    %198 = vector.shape_cast %197 : vector<16xf32> to vector<16x1xf32>
    %cst_69 = arith.constant 3.200000e+01 : f32
    %199 = vector.broadcast %cst_69 : f32 to vector<16x1xf32>
    %200 = arith.divf %198, %199 : vector<16x1xf32>
    %201 = vector.broadcast %200 : vector<16x1xf32> to vector<16x32xf32>
    %202 = arith.subf %196, %201 : vector<16x32xf32>
    %203 = arith.mulf %202, %202 : vector<16x32xf32>
    %cst_70 = arith.constant dense<0.000000e+00> : vector<16xf32>
    %204 = vector.multi_reduction <add>, %203, %cst_70 [1] : vector<16x32xf32> to vector<16xf32>
    %205 = vector.shape_cast %204 : vector<16xf32> to vector<16x1xf32>
    %cst_71 = arith.constant 3.200000e+01 : f32
    %206 = vector.broadcast %cst_71 : f32 to vector<16x1xf32>
    %207 = arith.divf %205, %206 : vector<16x1xf32>
    %208 = vector.broadcast %200 : vector<16x1xf32> to vector<16x32xf32>
    %209 = arith.subf %196, %208 : vector<16x32xf32>
    %cst_72 = arith.constant 9.99999974E-6 : f32
    %210 = vector.broadcast %cst_72 : f32 to vector<16x1xf32>
    %211 = arith.addf %207, %210 : vector<16x1xf32>
    %212 = math.rsqrt %211 : vector<16x1xf32>
    %213 = vector.broadcast %212 : vector<16x1xf32> to vector<16x32xf32>
    %214 = arith.mulf %209, %213 : vector<16x32xf32>
    %215 = vector.broadcast %11 : vector<1x32xf32> to vector<16x32xf32>
    %216 = arith.mulf %214, %215 : vector<16x32xf32>
    %217 = vector.broadcast %12 : vector<1x32xf32> to vector<16x32xf32>
    %218 = arith.addf %216, %217 : vector<16x32xf32>
    %219 = arith.truncf %218 : vector<16x32xf32> to vector<16x32xbf16>
    %c0_73 = arith.constant 0 : index
    %c0_74 = arith.constant 0 : index
    %220 = vector.load %arg12[%c0_73, %c0_74] : memref<32x32xbf16, #tpu.memory_space<vmem>>, vector<32x32xbf16>
    %c0_75 = arith.constant 0 : index
    %c0_76 = arith.constant 0 : index
    %221 = vector.load %arg13[%c0_75, %c0_76] : memref<1x32xf32, #tpu.memory_space<vmem>>, vector<1x32xf32>
    %c0_77 = arith.constant 0 : index
    %c0_78 = arith.constant 0 : index
    %222 = vector.load %arg14[%c0_77, %c0_78] : memref<32x32xbf16, #tpu.memory_space<vmem>>, vector<32x32xbf16>
    %c0_79 = arith.constant 0 : index
    %c0_80 = arith.constant 0 : index
    %223 = vector.load %arg15[%c0_79, %c0_80] : memref<1x32xf32, #tpu.memory_space<vmem>>, vector<1x32xf32>
    %c0_81 = arith.constant 0 : index
    %c0_82 = arith.constant 0 : index
    %224 = vector.load %arg16[%c0_81, %c0_82] : memref<32x32xbf16, #tpu.memory_space<vmem>>, vector<32x32xbf16>
    %c0_83 = arith.constant 0 : index
    %c0_84 = arith.constant 0 : index
    %225 = vector.load %arg17[%c0_83, %c0_84] : memref<1x32xf32, #tpu.memory_space<vmem>>, vector<1x32xf32>
    %c0_85 = arith.constant 0 : index
    %c0_86 = arith.constant 0 : index
    %226 = vector.load %arg18[%c0_85, %c0_86] : memref<32x32xbf16, #tpu.memory_space<vmem>>, vector<32x32xbf16>
    %c0_87 = arith.constant 0 : index
    %c0_88 = arith.constant 0 : index
    %227 = vector.load %arg19[%c0_87, %c0_88] : memref<1x32xf32, #tpu.memory_space<vmem>>, vector<1x32xf32>
    %c0_89 = arith.constant 0 : index
    %c0_90 = arith.constant 0 : index
    %228 = vector.load %arg20[%c0_89, %c0_90] : memref<1x32xf32, #tpu.memory_space<vmem>>, vector<1x32xf32>
    %c0_91 = arith.constant 0 : index
    %c0_92 = arith.constant 0 : index
    %229 = vector.load %arg21[%c0_91, %c0_92] : memref<1x32xf32, #tpu.memory_space<vmem>>, vector<1x32xf32>
    %cst_93 = arith.constant dense<0.000000e+00> : vector<16x32xf32>
    %230 = tpu.matmul %219, %220, %cst_93 {dimension_numbers = #tpu.dot_dimension_numbers<[1], [0], [0], [1], [0, 0, 1, 1], [], []>} : vector<16x32xbf16>, vector<32x32xbf16>, vector<16x32xf32> -> vector<16x32xf32>
    %231 = vector.broadcast %221 : vector<1x32xf32> to vector<16x32xf32>
    %232 = arith.addf %230, %231 : vector<16x32xf32>
    %233 = arith.truncf %232 : vector<16x32xf32> to vector<16x32xbf16>
    %cst_94 = arith.constant dense<0.000000e+00> : vector<20x32xf32>
    %234 = tpu.matmul %2, %222, %cst_94 {dimension_numbers = #tpu.dot_dimension_numbers<[1], [0], [0], [1], [0, 0, 1, 1], [], []>} : vector<20x32xbf16>, vector<32x32xbf16>, vector<20x32xf32> -> vector<20x32xf32>
    %235 = vector.broadcast %223 : vector<1x32xf32> to vector<20x32xf32>
    %236 = arith.addf %234, %235 : vector<20x32xf32>
    %237 = arith.truncf %236 : vector<20x32xf32> to vector<20x32xbf16>
    %cst_95 = arith.constant dense<0.000000e+00> : vector<20x32xf32>
    %238 = tpu.matmul %2, %224, %cst_95 {dimension_numbers = #tpu.dot_dimension_numbers<[1], [0], [0], [1], [0, 0, 1, 1], [], []>} : vector<20x32xbf16>, vector<32x32xbf16>, vector<20x32xf32> -> vector<20x32xf32>
    %239 = vector.broadcast %225 : vector<1x32xf32> to vector<20x32xf32>
    %240 = arith.addf %238, %239 : vector<20x32xf32>
    %241 = arith.truncf %240 : vector<20x32xf32> to vector<20x32xbf16>
    %242 = vector.extract_strided_slice %233 {offsets = [0, 0], sizes = [8, 32], strides = [1, 1]} : vector<16x32xbf16> to vector<8x32xbf16>
    %243 = vector.extract_strided_slice %237 {offsets = [0, 0], sizes = [10, 32], strides = [1, 1]} : vector<20x32xbf16> to vector<10x32xbf16>
    %244 = vector.extract_strided_slice %241 {offsets = [0, 0], sizes = [10, 32], strides = [1, 1]} : vector<20x32xbf16> to vector<10x32xbf16>
    %245 = vector.extract_strided_slice %242 {offsets = [0, 0], sizes = [8, 8], strides = [1, 1]} : vector<8x32xbf16> to vector<8x8xbf16>
    %246 = vector.extract_strided_slice %243 {offsets = [0, 0], sizes = [10, 8], strides = [1, 1]} : vector<10x32xbf16> to vector<10x8xbf16>
    %247 = vector.extract_strided_slice %244 {offsets = [0, 0], sizes = [10, 8], strides = [1, 1]} : vector<10x32xbf16> to vector<10x8xbf16>
    %cst_96 = arith.constant dense<0.000000e+00> : vector<8x10xf32>
    %248 = tpu.matmul %245, %246, %cst_96 {dimension_numbers = #tpu.dot_dimension_numbers<[1], [1], [0], [0], [0, 0, 1, 0], [], []>} : vector<8x8xbf16>, vector<10x8xbf16>, vector<8x10xf32> -> vector<8x10xf32>
    %cst_97 = arith.constant 0.353553385 : f32
    %249 = vector.broadcast %cst_97 : f32 to vector<8x10xf32>
    %250 = arith.mulf %248, %249 : vector<8x10xf32>
    %cst_98 = arith.constant dense<0xFF800000> : vector<8xf32>
    %251 = vector.multi_reduction <maximumf>, %250, %cst_98 [1] : vector<8x10xf32> to vector<8xf32>
    %252 = vector.shape_cast %251 : vector<8xf32> to vector<8x1xf32>
    %253 = vector.broadcast %252 : vector<8x1xf32> to vector<8x10xf32>
    %254 = arith.subf %250, %253 : vector<8x10xf32>
    %255 = math.exp %254 : vector<8x10xf32>
    %cst_99 = arith.constant dense<0.000000e+00> : vector<8xf32>
    %256 = vector.multi_reduction <add>, %255, %cst_99 [1] : vector<8x10xf32> to vector<8xf32>
    %257 = vector.shape_cast %256 : vector<8xf32> to vector<8x1xf32>
    %258 = tpu.reciprocal %257 {approx = true} : vector<8x1xf32> -> vector<8x1xf32>
    %259 = vector.broadcast %258 : vector<8x1xf32> to vector<8x10xf32>
    %260 = arith.mulf %255, %259 : vector<8x10xf32>
    %261 = arith.truncf %260 : vector<8x10xf32> to vector<8x10xbf16>
    %cst_100 = arith.constant dense<0.000000e+00> : vector<8x8xf32>
    %262 = tpu.matmul %261, %247, %cst_100 {dimension_numbers = #tpu.dot_dimension_numbers<[1], [0], [0], [1], [0, 0, 1, 1], [], []>} : vector<8x10xbf16>, vector<10x8xbf16>, vector<8x8xf32> -> vector<8x8xf32>
    %263 = vector.extract_strided_slice %242 {offsets = [0, 8], sizes = [8, 8], strides = [1, 1]} : vector<8x32xbf16> to vector<8x8xbf16>
    %264 = vector.extract_strided_slice %243 {offsets = [0, 8], sizes = [10, 8], strides = [1, 1]} : vector<10x32xbf16> to vector<10x8xbf16>
    %265 = vector.extract_strided_slice %244 {offsets = [0, 8], sizes = [10, 8], strides = [1, 1]} : vector<10x32xbf16> to vector<10x8xbf16>
    %cst_101 = arith.constant dense<0.000000e+00> : vector<8x10xf32>
    %266 = tpu.matmul %263, %264, %cst_101 {dimension_numbers = #tpu.dot_dimension_numbers<[1], [1], [0], [0], [0, 0, 1, 0], [], []>} : vector<8x8xbf16>, vector<10x8xbf16>, vector<8x10xf32> -> vector<8x10xf32>
    %cst_102 = arith.constant 0.353553385 : f32
    %267 = vector.broadcast %cst_102 : f32 to vector<8x10xf32>
    %268 = arith.mulf %266, %267 : vector<8x10xf32>
    %cst_103 = arith.constant dense<0xFF800000> : vector<8xf32>
    %269 = vector.multi_reduction <maximumf>, %268, %cst_103 [1] : vector<8x10xf32> to vector<8xf32>
    %270 = vector.shape_cast %269 : vector<8xf32> to vector<8x1xf32>
    %271 = vector.broadcast %270 : vector<8x1xf32> to vector<8x10xf32>
    %272 = arith.subf %268, %271 : vector<8x10xf32>
    %273 = math.exp %272 : vector<8x10xf32>
    %cst_104 = arith.constant dense<0.000000e+00> : vector<8xf32>
    %274 = vector.multi_reduction <add>, %273, %cst_104 [1] : vector<8x10xf32> to vector<8xf32>
    %275 = vector.shape_cast %274 : vector<8xf32> to vector<8x1xf32>
    %276 = tpu.reciprocal %275 {approx = true} : vector<8x1xf32> -> vector<8x1xf32>
    %277 = vector.broadcast %276 : vector<8x1xf32> to vector<8x10xf32>
    %278 = arith.mulf %273, %277 : vector<8x10xf32>
    %279 = arith.truncf %278 : vector<8x10xf32> to vector<8x10xbf16>
    %cst_105 = arith.constant dense<0.000000e+00> : vector<8x8xf32>
    %280 = tpu.matmul %279, %265, %cst_105 {dimension_numbers = #tpu.dot_dimension_numbers<[1], [0], [0], [1], [0, 0, 1, 1], [], []>} : vector<8x10xbf16>, vector<10x8xbf16>, vector<8x8xf32> -> vector<8x8xf32>
    %281 = vector.extract_strided_slice %242 {offsets = [0, 16], sizes = [8, 8], strides = [1, 1]} : vector<8x32xbf16> to vector<8x8xbf16>
    %282 = vector.extract_strided_slice %243 {offsets = [0, 16], sizes = [10, 8], strides = [1, 1]} : vector<10x32xbf16> to vector<10x8xbf16>
    %283 = vector.extract_strided_slice %244 {offsets = [0, 16], sizes = [10, 8], strides = [1, 1]} : vector<10x32xbf16> to vector<10x8xbf16>
    %cst_106 = arith.constant dense<0.000000e+00> : vector<8x10xf32>
    %284 = tpu.matmul %281, %282, %cst_106 {dimension_numbers = #tpu.dot_dimension_numbers<[1], [1], [0], [0], [0, 0, 1, 0], [], []>} : vector<8x8xbf16>, vector<10x8xbf16>, vector<8x10xf32> -> vector<8x10xf32>
    %cst_107 = arith.constant 0.353553385 : f32
    %285 = vector.broadcast %cst_107 : f32 to vector<8x10xf32>
    %286 = arith.mulf %284, %285 : vector<8x10xf32>
    %cst_108 = arith.constant dense<0xFF800000> : vector<8xf32>
    %287 = vector.multi_reduction <maximumf>, %286, %cst_108 [1] : vector<8x10xf32> to vector<8xf32>
    %288 = vector.shape_cast %287 : vector<8xf32> to vector<8x1xf32>
    %289 = vector.broadcast %288 : vector<8x1xf32> to vector<8x10xf32>
    %290 = arith.subf %286, %289 : vector<8x10xf32>
    %291 = math.exp %290 : vector<8x10xf32>
    %cst_109 = arith.constant dense<0.000000e+00> : vector<8xf32>
    %292 = vector.multi_reduction <add>, %291, %cst_109 [1] : vector<8x10xf32> to vector<8xf32>
    %293 = vector.shape_cast %292 : vector<8xf32> to vector<8x1xf32>
    %294 = tpu.reciprocal %293 {approx = true} : vector<8x1xf32> -> vector<8x1xf32>
    %295 = vector.broadcast %294 : vector<8x1xf32> to vector<8x10xf32>
    %296 = arith.mulf %291, %295 : vector<8x10xf32>
    %297 = arith.truncf %296 : vector<8x10xf32> to vector<8x10xbf16>
    %cst_110 = arith.constant dense<0.000000e+00> : vector<8x8xf32>
    %298 = tpu.matmul %297, %283, %cst_110 {dimension_numbers = #tpu.dot_dimension_numbers<[1], [0], [0], [1], [0, 0, 1, 1], [], []>} : vector<8x10xbf16>, vector<10x8xbf16>, vector<8x8xf32> -> vector<8x8xf32>
    %299 = vector.extract_strided_slice %242 {offsets = [0, 24], sizes = [8, 8], strides = [1, 1]} : vector<8x32xbf16> to vector<8x8xbf16>
    %300 = vector.extract_strided_slice %243 {offsets = [0, 24], sizes = [10, 8], strides = [1, 1]} : vector<10x32xbf16> to vector<10x8xbf16>
    %301 = vector.extract_strided_slice %244 {offsets = [0, 24], sizes = [10, 8], strides = [1, 1]} : vector<10x32xbf16> to vector<10x8xbf16>
    %cst_111 = arith.constant dense<0.000000e+00> : vector<8x10xf32>
    %302 = tpu.matmul %299, %300, %cst_111 {dimension_numbers = #tpu.dot_dimension_numbers<[1], [1], [0], [0], [0, 0, 1, 0], [], []>} : vector<8x8xbf16>, vector<10x8xbf16>, vector<8x10xf32> -> vector<8x10xf32>
    %cst_112 = arith.constant 0.353553385 : f32
    %303 = vector.broadcast %cst_112 : f32 to vector<8x10xf32>
    %304 = arith.mulf %302, %303 : vector<8x10xf32>
    %cst_113 = arith.constant dense<0xFF800000> : vector<8xf32>
    %305 = vector.multi_reduction <maximumf>, %304, %cst_113 [1] : vector<8x10xf32> to vector<8xf32>
    %306 = vector.shape_cast %305 : vector<8xf32> to vector<8x1xf32>
    %307 = vector.broadcast %306 : vector<8x1xf32> to vector<8x10xf32>
    %308 = arith.subf %304, %307 : vector<8x10xf32>
    %309 = math.exp %308 : vector<8x10xf32>
    %cst_114 = arith.constant dense<0.000000e+00> : vector<8xf32>
    %310 = vector.multi_reduction <add>, %309, %cst_114 [1] : vector<8x10xf32> to vector<8xf32>
    %311 = vector.shape_cast %310 : vector<8xf32> to vector<8x1xf32>
    %312 = tpu.reciprocal %311 {approx = true} : vector<8x1xf32> -> vector<8x1xf32>
    %313 = vector.broadcast %312 : vector<8x1xf32> to vector<8x10xf32>
    %314 = arith.mulf %309, %313 : vector<8x10xf32>
    %315 = arith.truncf %314 : vector<8x10xf32> to vector<8x10xbf16>
    %cst_115 = arith.constant dense<0.000000e+00> : vector<8x8xf32>
    %316 = tpu.matmul %315, %301, %cst_115 {dimension_numbers = #tpu.dot_dimension_numbers<[1], [0], [0], [1], [0, 0, 1, 1], [], []>} : vector<8x10xbf16>, vector<10x8xbf16>, vector<8x8xf32> -> vector<8x8xf32>
    %317 = tpu.concatenate %262, %280, %298, %316 in 1 : vector<8x8xf32>, vector<8x8xf32>, vector<8x8xf32>, vector<8x8xf32> -> vector<8x32xf32>
    %318 = vector.extract_strided_slice %233 {offsets = [8, 0], sizes = [8, 32], strides = [1, 1]} : vector<16x32xbf16> to vector<8x32xbf16>
    %319 = vector.extract_strided_slice %237 {offsets = [10, 0], sizes = [10, 32], strides = [1, 1]} : vector<20x32xbf16> to vector<10x32xbf16>
    %320 = vector.extract_strided_slice %241 {offsets = [10, 0], sizes = [10, 32], strides = [1, 1]} : vector<20x32xbf16> to vector<10x32xbf16>
    %321 = vector.extract_strided_slice %318 {offsets = [0, 0], sizes = [8, 8], strides = [1, 1]} : vector<8x32xbf16> to vector<8x8xbf16>
    %322 = vector.extract_strided_slice %319 {offsets = [0, 0], sizes = [10, 8], strides = [1, 1]} : vector<10x32xbf16> to vector<10x8xbf16>
    %323 = vector.extract_strided_slice %320 {offsets = [0, 0], sizes = [10, 8], strides = [1, 1]} : vector<10x32xbf16> to vector<10x8xbf16>
    %cst_116 = arith.constant dense<0.000000e+00> : vector<8x10xf32>
    %324 = tpu.matmul %321, %322, %cst_116 {dimension_numbers = #tpu.dot_dimension_numbers<[1], [1], [0], [0], [0, 0, 1, 0], [], []>} : vector<8x8xbf16>, vector<10x8xbf16>, vector<8x10xf32> -> vector<8x10xf32>
    %cst_117 = arith.constant 0.353553385 : f32
    %325 = vector.broadcast %cst_117 : f32 to vector<8x10xf32>
    %326 = arith.mulf %324, %325 : vector<8x10xf32>
    %cst_118 = arith.constant dense<0xFF800000> : vector<8xf32>
    %327 = vector.multi_reduction <maximumf>, %326, %cst_118 [1] : vector<8x10xf32> to vector<8xf32>
    %328 = vector.shape_cast %327 : vector<8xf32> to vector<8x1xf32>
    %329 = vector.broadcast %328 : vector<8x1xf32> to vector<8x10xf32>
    %330 = arith.subf %326, %329 : vector<8x10xf32>
    %331 = math.exp %330 : vector<8x10xf32>
    %cst_119 = arith.constant dense<0.000000e+00> : vector<8xf32>
    %332 = vector.multi_reduction <add>, %331, %cst_119 [1] : vector<8x10xf32> to vector<8xf32>
    %333 = vector.shape_cast %332 : vector<8xf32> to vector<8x1xf32>
    %334 = tpu.reciprocal %333 {approx = true} : vector<8x1xf32> -> vector<8x1xf32>
    %335 = vector.broadcast %334 : vector<8x1xf32> to vector<8x10xf32>
    %336 = arith.mulf %331, %335 : vector<8x10xf32>
    %337 = arith.truncf %336 : vector<8x10xf32> to vector<8x10xbf16>
    %cst_120 = arith.constant dense<0.000000e+00> : vector<8x8xf32>
    %338 = tpu.matmul %337, %323, %cst_120 {dimension_numbers = #tpu.dot_dimension_numbers<[1], [0], [0], [1], [0, 0, 1, 1], [], []>} : vector<8x10xbf16>, vector<10x8xbf16>, vector<8x8xf32> -> vector<8x8xf32>
    %339 = vector.extract_strided_slice %318 {offsets = [0, 8], sizes = [8, 8], strides = [1, 1]} : vector<8x32xbf16> to vector<8x8xbf16>
    %340 = vector.extract_strided_slice %319 {offsets = [0, 8], sizes = [10, 8], strides = [1, 1]} : vector<10x32xbf16> to vector<10x8xbf16>
    %341 = vector.extract_strided_slice %320 {offsets = [0, 8], sizes = [10, 8], strides = [1, 1]} : vector<10x32xbf16> to vector<10x8xbf16>
    %cst_121 = arith.constant dense<0.000000e+00> : vector<8x10xf32>
    %342 = tpu.matmul %339, %340, %cst_121 {dimension_numbers = #tpu.dot_dimension_numbers<[1], [1], [0], [0], [0, 0, 1, 0], [], []>} : vector<8x8xbf16>, vector<10x8xbf16>, vector<8x10xf32> -> vector<8x10xf32>
    %cst_122 = arith.constant 0.353553385 : f32
    %343 = vector.broadcast %cst_122 : f32 to vector<8x10xf32>
    %344 = arith.mulf %342, %343 : vector<8x10xf32>
    %cst_123 = arith.constant dense<0xFF800000> : vector<8xf32>
    %345 = vector.multi_reduction <maximumf>, %344, %cst_123 [1] : vector<8x10xf32> to vector<8xf32>
    %346 = vector.shape_cast %345 : vector<8xf32> to vector<8x1xf32>
    %347 = vector.broadcast %346 : vector<8x1xf32> to vector<8x10xf32>
    %348 = arith.subf %344, %347 : vector<8x10xf32>
    %349 = math.exp %348 : vector<8x10xf32>
    %cst_124 = arith.constant dense<0.000000e+00> : vector<8xf32>
    %350 = vector.multi_reduction <add>, %349, %cst_124 [1] : vector<8x10xf32> to vector<8xf32>
    %351 = vector.shape_cast %350 : vector<8xf32> to vector<8x1xf32>
    %352 = tpu.reciprocal %351 {approx = true} : vector<8x1xf32> -> vector<8x1xf32>
    %353 = vector.broadcast %352 : vector<8x1xf32> to vector<8x10xf32>
    %354 = arith.mulf %349, %353 : vector<8x10xf32>
    %355 = arith.truncf %354 : vector<8x10xf32> to vector<8x10xbf16>
    %cst_125 = arith.constant dense<0.000000e+00> : vector<8x8xf32>
    %356 = tpu.matmul %355, %341, %cst_125 {dimension_numbers = #tpu.dot_dimension_numbers<[1], [0], [0], [1], [0, 0, 1, 1], [], []>} : vector<8x10xbf16>, vector<10x8xbf16>, vector<8x8xf32> -> vector<8x8xf32>
    %357 = vector.extract_strided_slice %318 {offsets = [0, 16], sizes = [8, 8], strides = [1, 1]} : vector<8x32xbf16> to vector<8x8xbf16>
    %358 = vector.extract_strided_slice %319 {offsets = [0, 16], sizes = [10, 8], strides = [1, 1]} : vector<10x32xbf16> to vector<10x8xbf16>
    %359 = vector.extract_strided_slice %320 {offsets = [0, 16], sizes = [10, 8], strides = [1, 1]} : vector<10x32xbf16> to vector<10x8xbf16>
    %cst_126 = arith.constant dense<0.000000e+00> : vector<8x10xf32>
    %360 = tpu.matmul %357, %358, %cst_126 {dimension_numbers = #tpu.dot_dimension_numbers<[1], [1], [0], [0], [0, 0, 1, 0], [], []>} : vector<8x8xbf16>, vector<10x8xbf16>, vector<8x10xf32> -> vector<8x10xf32>
    %cst_127 = arith.constant 0.353553385 : f32
    %361 = vector.broadcast %cst_127 : f32 to vector<8x10xf32>
    %362 = arith.mulf %360, %361 : vector<8x10xf32>
    %cst_128 = arith.constant dense<0xFF800000> : vector<8xf32>
    %363 = vector.multi_reduction <maximumf>, %362, %cst_128 [1] : vector<8x10xf32> to vector<8xf32>
    %364 = vector.shape_cast %363 : vector<8xf32> to vector<8x1xf32>
    %365 = vector.broadcast %364 : vector<8x1xf32> to vector<8x10xf32>
    %366 = arith.subf %362, %365 : vector<8x10xf32>
    %367 = math.exp %366 : vector<8x10xf32>
    %cst_129 = arith.constant dense<0.000000e+00> : vector<8xf32>
    %368 = vector.multi_reduction <add>, %367, %cst_129 [1] : vector<8x10xf32> to vector<8xf32>
    %369 = vector.shape_cast %368 : vector<8xf32> to vector<8x1xf32>
    %370 = tpu.reciprocal %369 {approx = true} : vector<8x1xf32> -> vector<8x1xf32>
    %371 = vector.broadcast %370 : vector<8x1xf32> to vector<8x10xf32>
    %372 = arith.mulf %367, %371 : vector<8x10xf32>
    %373 = arith.truncf %372 : vector<8x10xf32> to vector<8x10xbf16>
    %cst_130 = arith.constant dense<0.000000e+00> : vector<8x8xf32>
    %374 = tpu.matmul %373, %359, %cst_130 {dimension_numbers = #tpu.dot_dimension_numbers<[1], [0], [0], [1], [0, 0, 1, 1], [], []>} : vector<8x10xbf16>, vector<10x8xbf16>, vector<8x8xf32> -> vector<8x8xf32>
    %375 = vector.extract_strided_slice %318 {offsets = [0, 24], sizes = [8, 8], strides = [1, 1]} : vector<8x32xbf16> to vector<8x8xbf16>
    %376 = vector.extract_strided_slice %319 {offsets = [0, 24], sizes = [10, 8], strides = [1, 1]} : vector<10x32xbf16> to vector<10x8xbf16>
    %377 = vector.extract_strided_slice %320 {offsets = [0, 24], sizes = [10, 8], strides = [1, 1]} : vector<10x32xbf16> to vector<10x8xbf16>
    %cst_131 = arith.constant dense<0.000000e+00> : vector<8x10xf32>
    %378 = tpu.matmul %375, %376, %cst_131 {dimension_numbers = #tpu.dot_dimension_numbers<[1], [1], [0], [0], [0, 0, 1, 0], [], []>} : vector<8x8xbf16>, vector<10x8xbf16>, vector<8x10xf32> -> vector<8x10xf32>
    %cst_132 = arith.constant 0.353553385 : f32
    %379 = vector.broadcast %cst_132 : f32 to vector<8x10xf32>
    %380 = arith.mulf %378, %379 : vector<8x10xf32>
    %cst_133 = arith.constant dense<0xFF800000> : vector<8xf32>
    %381 = vector.multi_reduction <maximumf>, %380, %cst_133 [1] : vector<8x10xf32> to vector<8xf32>
    %382 = vector.shape_cast %381 : vector<8xf32> to vector<8x1xf32>
    %383 = vector.broadcast %382 : vector<8x1xf32> to vector<8x10xf32>
    %384 = arith.subf %380, %383 : vector<8x10xf32>
    %385 = math.exp %384 : vector<8x10xf32>
    %cst_134 = arith.constant dense<0.000000e+00> : vector<8xf32>
    %386 = vector.multi_reduction <add>, %385, %cst_134 [1] : vector<8x10xf32> to vector<8xf32>
    %387 = vector.shape_cast %386 : vector<8xf32> to vector<8x1xf32>
    %388 = tpu.reciprocal %387 {approx = true} : vector<8x1xf32> -> vector<8x1xf32>
    %389 = vector.broadcast %388 : vector<8x1xf32> to vector<8x10xf32>
    %390 = arith.mulf %385, %389 : vector<8x10xf32>
    %391 = arith.truncf %390 : vector<8x10xf32> to vector<8x10xbf16>
    %cst_135 = arith.constant dense<0.000000e+00> : vector<8x8xf32>
    %392 = tpu.matmul %391, %377, %cst_135 {dimension_numbers = #tpu.dot_dimension_numbers<[1], [0], [0], [1], [0, 0, 1, 1], [], []>} : vector<8x10xbf16>, vector<10x8xbf16>, vector<8x8xf32> -> vector<8x8xf32>
    %393 = tpu.concatenate %338, %356, %374, %392 in 1 : vector<8x8xf32>, vector<8x8xf32>, vector<8x8xf32>, vector<8x8xf32> -> vector<8x32xf32>
    %394 = tpu.concatenate %317, %393 in 0 : vector<8x32xf32>, vector<8x32xf32> -> vector<16x32xf32>
    %395 = arith.truncf %394 : vector<16x32xf32> to vector<16x32xbf16>
    %cst_136 = arith.constant dense<0.000000e+00> : vector<16x32xf32>
    %396 = tpu.matmul %395, %226, %cst_136 {dimension_numbers = #tpu.dot_dimension_numbers<[1], [0], [0], [1], [0, 0, 1, 1], [], []>} : vector<16x32xbf16>, vector<32x32xbf16>, vector<16x32xf32> -> vector<16x32xf32>
    %397 = vector.broadcast %227 : vector<1x32xf32> to vector<16x32xf32>
    %398 = arith.addf %396, %397 : vector<16x32xf32>
    %399 = arith.addf %218, %398 : vector<16x32xf32>
    %cst_137 = arith.constant dense<0.000000e+00> : vector<16xf32>
    %400 = vector.multi_reduction <add>, %399, %cst_137 [1] : vector<16x32xf32> to vector<16xf32>
    %401 = vector.shape_cast %400 : vector<16xf32> to vector<16x1xf32>
    %cst_138 = arith.constant 3.200000e+01 : f32
    %402 = vector.broadcast %cst_138 : f32 to vector<16x1xf32>
    %403 = arith.divf %401, %402 : vector<16x1xf32>
    %404 = vector.broadcast %403 : vector<16x1xf32> to vector<16x32xf32>
    %405 = arith.subf %399, %404 : vector<16x32xf32>
    %406 = arith.mulf %405, %405 : vector<16x32xf32>
    %cst_139 = arith.constant dense<0.000000e+00> : vector<16xf32>
    %407 = vector.multi_reduction <add>, %406, %cst_139 [1] : vector<16x32xf32> to vector<16xf32>
    %408 = vector.shape_cast %407 : vector<16xf32> to vector<16x1xf32>
    %cst_140 = arith.constant 3.200000e+01 : f32
    %409 = vector.broadcast %cst_140 : f32 to vector<16x1xf32>
    %410 = arith.divf %408, %409 : vector<16x1xf32>
    %411 = vector.broadcast %403 : vector<16x1xf32> to vector<16x32xf32>
    %412 = arith.subf %399, %411 : vector<16x32xf32>
    %cst_141 = arith.constant 9.99999974E-6 : f32
    %413 = vector.broadcast %cst_141 : f32 to vector<16x1xf32>
    %414 = arith.addf %410, %413 : vector<16x1xf32>
    %415 = math.rsqrt %414 : vector<16x1xf32>
    %416 = vector.broadcast %415 : vector<16x1xf32> to vector<16x32xf32>
    %417 = arith.mulf %412, %416 : vector<16x32xf32>
    %418 = vector.broadcast %228 : vector<1x32xf32> to vector<16x32xf32>
    %419 = arith.mulf %417, %418 : vector<16x32xf32>
    %420 = vector.broadcast %229 : vector<1x32xf32> to vector<16x32xf32>
    %421 = arith.addf %419, %420 : vector<16x32xf32>
    %c0_142 = arith.constant 0 : index
    %c0_143 = arith.constant 0 : index
    %422 = vector.load %arg22[%c0_142, %c0_143] : memref<32x64xbf16, #tpu.memory_space<vmem>>, vector<32x64xbf16>
    %c0_144 = arith.constant 0 : index
    %c0_145 = arith.constant 0 : index
    %423 = vector.load %arg23[%c0_144, %c0_145] : memref<1x64xf32, #tpu.memory_space<vmem>>, vector<1x64xf32>
    %c0_146 = arith.constant 0 : index
    %c0_147 = arith.constant 0 : index
    %424 = vector.load %arg24[%c0_146, %c0_147] : memref<64x32xbf16, #tpu.memory_space<vmem>>, vector<64x32xbf16>
    %c0_148 = arith.constant 0 : index
    %c0_149 = arith.constant 0 : index
    %425 = vector.load %arg25[%c0_148, %c0_149] : memref<1x32xf32, #tpu.memory_space<vmem>>, vector<1x32xf32>
    %c0_150 = arith.constant 0 : index
    %c0_151 = arith.constant 0 : index
    %426 = vector.load %arg26[%c0_150, %c0_151] : memref<1x32xf32, #tpu.memory_space<vmem>>, vector<1x32xf32>
    %c0_152 = arith.constant 0 : index
    %c0_153 = arith.constant 0 : index
    %427 = vector.load %arg27[%c0_152, %c0_153] : memref<1x32xf32, #tpu.memory_space<vmem>>, vector<1x32xf32>
    %428 = arith.truncf %421 : vector<16x32xf32> to vector<16x32xbf16>
    %cst_154 = arith.constant dense<0.000000e+00> : vector<16x64xf32>
    %429 = tpu.matmul %428, %422, %cst_154 {dimension_numbers = #tpu.dot_dimension_numbers<[1], [0], [0], [1], [0, 0, 1, 1], [], []>} : vector<16x32xbf16>, vector<32x64xbf16>, vector<16x64xf32> -> vector<16x64xf32>
    %430 = vector.broadcast %423 : vector<1x64xf32> to vector<16x64xf32>
    %431 = arith.addf %429, %430 : vector<16x64xf32>
    %cst_155 = arith.constant 0.000000e+00 : f32
    %432 = vector.broadcast %cst_155 : f32 to vector<16x64xf32>
    %433 = arith.maximumf %431, %432 : vector<16x64xf32>
    %434 = arith.truncf %433 : vector<16x64xf32> to vector<16x64xbf16>
    %cst_156 = arith.constant dense<0.000000e+00> : vector<16x32xf32>
    %435 = tpu.matmul %434, %424, %cst_156 {dimension_numbers = #tpu.dot_dimension_numbers<[1], [0], [0], [1], [0, 0, 1, 1], [], []>} : vector<16x64xbf16>, vector<64x32xbf16>, vector<16x32xf32> -> vector<16x32xf32>
    %436 = arith.addf %421, %435 : vector<16x32xf32>
    %437 = vector.broadcast %425 : vector<1x32xf32> to vector<16x32xf32>
    %438 = arith.addf %436, %437 : vector<16x32xf32>
    %cst_157 = arith.constant dense<0.000000e+00> : vector<16xf32>
    %439 = vector.multi_reduction <add>, %438, %cst_157 [1] : vector<16x32xf32> to vector<16xf32>
    %440 = vector.shape_cast %439 : vector<16xf32> to vector<16x1xf32>
    %cst_158 = arith.constant 3.200000e+01 : f32
    %441 = vector.broadcast %cst_158 : f32 to vector<16x1xf32>
    %442 = arith.divf %440, %441 : vector<16x1xf32>
    %443 = vector.broadcast %442 : vector<16x1xf32> to vector<16x32xf32>
    %444 = arith.subf %438, %443 : vector<16x32xf32>
    %445 = arith.mulf %444, %444 : vector<16x32xf32>
    %cst_159 = arith.constant dense<0.000000e+00> : vector<16xf32>
    %446 = vector.multi_reduction <add>, %445, %cst_159 [1] : vector<16x32xf32> to vector<16xf32>
    %447 = vector.shape_cast %446 : vector<16xf32> to vector<16x1xf32>
    %cst_160 = arith.constant 3.200000e+01 : f32
    %448 = vector.broadcast %cst_160 : f32 to vector<16x1xf32>
    %449 = arith.divf %447, %448 : vector<16x1xf32>
    %450 = vector.broadcast %442 : vector<16x1xf32> to vector<16x32xf32>
    %451 = arith.subf %438, %450 : vector<16x32xf32>
    %cst_161 = arith.constant 9.99999974E-6 : f32
    %452 = vector.broadcast %cst_161 : f32 to vector<16x1xf32>
    %453 = arith.addf %449, %452 : vector<16x1xf32>
    %454 = math.rsqrt %453 : vector<16x1xf32>
    %455 = vector.broadcast %454 : vector<16x1xf32> to vector<16x32xf32>
    %456 = arith.mulf %451, %455 : vector<16x32xf32>
    %457 = vector.broadcast %426 : vector<1x32xf32> to vector<16x32xf32>
    %458 = arith.mulf %456, %457 : vector<16x32xf32>
    %459 = vector.broadcast %427 : vector<1x32xf32> to vector<16x32xf32>
    %460 = arith.addf %458, %459 : vector<16x32xf32>
    %461 = arith.truncf %460 : vector<16x32xf32> to vector<16x32xbf16>
    %c0_162 = arith.constant 0 : index
    %c0_163 = arith.constant 0 : index
    %462 = vector.load %arg28[%c0_162, %c0_163] : memref<16x32xbf16, #tpu.memory_space<vmem>>, vector<16x32xbf16>
    tpu.vector_store %arg28[%c0_162, %c0_163], %461 {strides = array<i32>} : memref<16x32xbf16, #tpu.memory_space<vmem>>, vector<16x32xbf16>,
    return
  }
}

module attributes {stable_mosaic.version = 11 : i64} {
  func.func @_final_proj_kernel(%arg0: i32, %arg1: memref<16x32xbf16, #tpu.memory_space<vmem>>, %arg2: memref<1x32xf32, #tpu.memory_space<vmem>>, %arg3: memref<1x32xf32, #tpu.memory_space<vmem>>, %arg4: memref<32x128xbf16, #tpu.memory_space<vmem>>, %arg5: memref<1x128xf32, #tpu.memory_space<vmem>>, %arg6: memref<16x128xf32, #tpu.memory_space<vmem>>) attributes {dimension_semantics = [#tpu.dimension_semantics<arbitrary>], iteration_bounds = array<i64: 1>, scalar_prefetch = 0 : i64, scratch_operands = 0 : i64, tpu.core_type = #tpu.core_type<tc>, window_params = [{pipeline_mode = #tpu.pipeline_mode<synchronous>, transform_indices = @transform_0, window_bounds = array<i64: 16, 32>}, {pipeline_mode = #tpu.pipeline_mode<synchronous>, transform_indices = @transform_1, window_bounds = array<i64: 1, 32>}, {pipeline_mode = #tpu.pipeline_mode<synchronous>, transform_indices = @transform_2, window_bounds = array<i64: 1, 32>}, {transform_indices = @transform_3, window_bounds = array<i64: 32, 128>}, {transform_indices = @transform_4, window_bounds = array<i64: 1, 128>}, {transform_indices = @transform_5, window_bounds = array<i64: 16, 128>}]} {
    %c0 = arith.constant 0 : index
    %c0_0 = arith.constant 0 : index
    %0 = vector.load %arg1[%c0, %c0_0] : memref<16x32xbf16, #tpu.memory_space<vmem>>, vector<16x32xbf16>
    %1 = arith.extf %0 : vector<16x32xbf16> to vector<16x32xf32>
    %c0_1 = arith.constant 0 : index
    %c0_2 = arith.constant 0 : index
    %2 = vector.load %arg2[%c0_1, %c0_2] : memref<1x32xf32, #tpu.memory_space<vmem>>, vector<1x32xf32>
    %c0_3 = arith.constant 0 : index
    %c0_4 = arith.constant 0 : index
    %3 = vector.load %arg3[%c0_3, %c0_4] : memref<1x32xf32, #tpu.memory_space<vmem>>, vector<1x32xf32>
    %cst = arith.constant dense<0.000000e+00> : vector<16xf32>
    %4 = vector.multi_reduction <add>, %1, %cst [1] : vector<16x32xf32> to vector<16xf32>
    %5 = vector.shape_cast %4 : vector<16xf32> to vector<16x1xf32>
    %cst_5 = arith.constant 3.200000e+01 : f32
    %6 = vector.broadcast %cst_5 : f32 to vector<16x1xf32>
    %7 = arith.divf %5, %6 : vector<16x1xf32>
    %8 = vector.broadcast %7 : vector<16x1xf32> to vector<16x32xf32>
    %9 = arith.subf %1, %8 : vector<16x32xf32>
    %10 = arith.mulf %9, %9 : vector<16x32xf32>
    %cst_6 = arith.constant dense<0.000000e+00> : vector<16xf32>
    %11 = vector.multi_reduction <add>, %10, %cst_6 [1] : vector<16x32xf32> to vector<16xf32>
    %12 = vector.shape_cast %11 : vector<16xf32> to vector<16x1xf32>
    %cst_7 = arith.constant 3.200000e+01 : f32
    %13 = vector.broadcast %cst_7 : f32 to vector<16x1xf32>
    %14 = arith.divf %12, %13 : vector<16x1xf32>
    %15 = vector.broadcast %7 : vector<16x1xf32> to vector<16x32xf32>
    %16 = arith.subf %1, %15 : vector<16x32xf32>
    %cst_8 = arith.constant 9.99999974E-6 : f32
    %17 = vector.broadcast %cst_8 : f32 to vector<16x1xf32>
    %18 = arith.addf %14, %17 : vector<16x1xf32>
    %19 = math.rsqrt %18 : vector<16x1xf32>
    %20 = vector.broadcast %19 : vector<16x1xf32> to vector<16x32xf32>
    %21 = arith.mulf %16, %20 : vector<16x32xf32>
    %22 = vector.broadcast %2 : vector<1x32xf32> to vector<16x32xf32>
    %23 = arith.mulf %21, %22 : vector<16x32xf32>
    %24 = vector.broadcast %3 : vector<1x32xf32> to vector<16x32xf32>
    %25 = arith.addf %23, %24 : vector<16x32xf32>
    %26 = arith.truncf %25 : vector<16x32xf32> to vector<16x32xbf16>
    %c0_9 = arith.constant 0 : index
    %c0_10 = arith.constant 0 : index
    %27 = vector.load %arg4[%c0_9, %c0_10] : memref<32x128xbf16, #tpu.memory_space<vmem>>, vector<32x128xbf16>
    %cst_11 = arith.constant dense<0.000000e+00> : vector<16x128xf32>
    %28 = tpu.matmul %26, %27, %cst_11 {dimension_numbers = #tpu.dot_dimension_numbers<[1], [0], [0], [1], [0, 0, 1, 1], [], []>} : vector<16x32xbf16>, vector<32x128xbf16>, vector<16x128xf32> -> vector<16x128xf32>
    %c0_12 = arith.constant 0 : index
    %c0_13 = arith.constant 0 : index
    %29 = vector.load %arg5[%c0_12, %c0_13] : memref<1x128xf32, #tpu.memory_space<vmem>>, vector<1x128xf32>
    %30 = vector.broadcast %29 : vector<1x128xf32> to vector<16x128xf32>
    %31 = arith.addf %28, %30 : vector<16x128xf32>
    %c0_14 = arith.constant 0 : index
    %c0_15 = arith.constant 0 : index
    %32 = vector.load %arg6[%c0_14, %c0_15] : memref<16x128xf32, #tpu.memory_space<vmem>>, vector<16x128xf32>
    tpu.vector_store %arg6[%c0_14, %c0_15], %31 {strides = array<i32>} : memref<16x128xf32, #tpu.memory_space<vmem>>, vector<16x128xf32>,
    return
  }
  func.func @transform_0(%arg0: i32) -> (i32, i32) {
    %c0_i32 = arith.constant 0 : i32
    %c0_i32_0 = arith.constant 0 : i32
    %c0_i32_1 = arith.constant 0 : i32
    return %c0_i32, %c0_i32_0 : i32, i32
  }
  func.func @transform_1(%arg0: i32) -> (i32, i32) {
    %c0_i32 = arith.constant 0 : i32
    %c0_i32_0 = arith.constant 0 : i32
    %c0_i32_1 = arith.constant 0 : i32
    return %c0_i32, %c0_i32_0 : i32, i32
  }
  func.func @transform_2(%arg0: i32) -> (i32, i32) {
    %c0_i32 = arith.constant 0 : i32
    %c0_i32_0 = arith.constant 0 : i32
    %c0_i32_1 = arith.constant 0 : i32
    return %c0_i32, %c0_i32_0 : i32, i32
  }
  func.func @transform_3(%arg0: i32) -> (i32, i32) {
    %c0_i32 = arith.constant 0 : i32
    %c0_i32_0 = arith.constant 0 : i32
    return %c0_i32, %arg0 : i32, i32
  }
  func.func @transform_4(%arg0: i32) -> (i32, i32) {
    %c0_i32 = arith.constant 0 : i32
    %c0_i32_0 = arith.constant 0 : i32
    return %c0_i32, %arg0 : i32, i32
  }
  func.func @transform_5(%arg0: i32) -> (i32, i32) {
    %c0_i32 = arith.constant 0 : i32
    %c0_i32_0 = arith.constant 0 : i32
    return %c0_i32, %arg0 : i32, i32
  }
}

</mosaic_0001>

<llo_original>
// kernel: transformer_forward.6
$region0: #{transformer_forward.6}
  #allocation0 [shape = 'u32[]', space=smem, size = 0x4, offset = 0x4, fixed_abs, tag = 'smem constant byte address 0x4 - core index']
  #allocation1 [shape = 'u32[72,128]{1,0:T(1,128)}', space=vmem, size = 0x9000, scoped, tag = 'internal scratch']
  %s0 = inlined_call_operand.vmem [shape: bf16[20,32], index: 0, kind: input, shape index: {}]
  %s1 = inlined_call_operand.vmem [shape: bf16[32,32], index: 1, kind: input, shape index: {}]
  %s2 = inlined_call_operand.vmem [shape: f32[1,32], index: 2, kind: input, shape index: {}]
  %s3 = inlined_call_operand.vmem [shape: bf16[32,32], index: 3, kind: input, shape index: {}]
  %s4 = inlined_call_operand.vmem [shape: f32[1,32], index: 4, kind: input, shape index: {}]
  %s5 = inlined_call_operand.vmem [shape: bf16[32,32], index: 5, kind: input, shape index: {}]
  %s6 = inlined_call_operand.vmem [shape: f32[1,32], index: 6, kind: input, shape index: {}]
  %s7 = inlined_call_operand.vmem [shape: bf16[32,32], index: 7, kind: input, shape index: {}]
  %s8 = inlined_call_operand.vmem [shape: f32[1,32], index: 8, kind: input, shape index: {}]
  %s9 = inlined_call_operand.vmem [shape: f32[1,32], index: 9, kind: input, shape index: {}]
  %s10 = inlined_call_operand.vmem [shape: f32[1,32], index: 10, kind: input, shape index: {}]
  %s11 = inlined_call_operand.vmem [shape: bf16[32,64], index: 11, kind: input, shape index: {}]
  %s12 = inlined_call_operand.vmem [shape: f32[1,64], index: 12, kind: input, shape index: {}]
  %s13 = inlined_call_operand.vmem [shape: bf16[64,32], index: 13, kind: input, shape index: {}]
  %s14 = inlined_call_operand.vmem [shape: f32[1,32], index: 14, kind: input, shape index: {}]
  %s15 = inlined_call_operand.vmem [shape: f32[1,32], index: 15, kind: input, shape index: {}]
  %s16 = inlined_call_operand.vmem [shape: f32[1,32], index: 16, kind: input, shape index: {}]
  %s17 = inlined_call_operand.vmem [shape: f32[1,32], index: 17, kind: input, shape index: {}]
  %s18 = inlined_call_operand.vmem [shape: f32[1,32], index: 18, kind: input, shape index: {}]
  %s19 = inlined_call_operand.vmem [shape: bf16[20,32], index: 19, kind: output, shape index: {}]
  %s20 = sld [smem:[#allocation0]]
  $region86: #{transformer_forward.6} parent=0
    _
  %s22 = ssub.s32 1, %s20
  %s23 = scalar_select 0, %s22, %s20
  // Predicated region
  $region2: #{transformer_forward.6} parent=0 // pred_check
    _
  $region3: #{transformer_forward.6} parent=0 // pred_check_branch
    %25 = sbr.rel (0) target = $region5
  $region4: #{transformer_forward.6} parent=0 // pred_region
    _
  $region5: #{transformer_forward.6} parent=0 // pred_fallthru
    _
  // Predicated region
  $region6: #{transformer_forward.6} parent=0 // pred_check
    _
  $region7: #{transformer_forward.6} parent=0 // pred_check_branch
    %27 = sbr.rel (0) target = $region9
  $region8: #{transformer_forward.6} parent=0 // pred_region
    _
  $region9: #{transformer_forward.6} parent=0 // pred_fallthru
    _
  // Predicated region
  $region10: #{transformer_forward.6} parent=0 // pred_check
    _
  $region11: #{transformer_forward.6} parent=0 // pred_check_branch
    %29 = sbr.rel (0) target = $region13
  $region12: #{transformer_forward.6} parent=0 // pred_region
    _
  $region13: #{transformer_forward.6} parent=0 // pred_fallthru
    _
  // Predicated region
  $region14: #{transformer_forward.6} parent=0 // pred_check
    _
  $region15: #{transformer_forward.6} parent=0 // pred_check_branch
    %31 = sbr.rel (0) target = $region17
  $region16: #{transformer_forward.6} parent=0 // pred_region
    _
  $region17: #{transformer_forward.6} parent=0 // pred_fallthru
    _
  // Predicated region
  $region18: #{transformer_forward.6} parent=0 // pred_check
    _
  $region19: #{transformer_forward.6} parent=0 // pred_check_branch
    %33 = sbr.rel (0) target = $region21
  $region20: #{transformer_forward.6} parent=0 // pred_region
    _
  $region21: #{transformer_forward.6} parent=0 // pred_fallthru
    _
  // Predicated region
  $region22: #{transformer_forward.6} parent=0 // pred_check
    _
  $region23: #{transformer_forward.6} parent=0 // pred_check_branch
    %35 = sbr.rel (0) target = $region25
  $region24: #{transformer_forward.6} parent=0 // pred_region
    _
  $region25: #{transformer_forward.6} parent=0 // pred_fallthru
    _
  // Predicated region
  $region26: #{transformer_forward.6} parent=0 // pred_check
    _
  $region27: #{transformer_forward.6} parent=0 // pred_check_branch
    %37 = sbr.rel (0) target = $region29
  $region28: #{transformer_forward.6} parent=0 // pred_region
    _
  $region29: #{transformer_forward.6} parent=0 // pred_fallthru
    _
  // Predicated region
  $region30: #{transformer_forward.6} parent=0 // pred_check
    _
  $region31: #{transformer_forward.6} parent=0 // pred_check_branch
    %39 = sbr.rel (0) target = $region33
  $region32: #{transformer_forward.6} parent=0 // pred_region
    _
  $region33: #{transformer_forward.6} parent=0 // pred_fallthru
    _
  // Predicated region
  $region34: #{transformer_forward.6} parent=0 // pred_check
    _
  $region35: #{transformer_forward.6} parent=0 // pred_check_branch
    %41 = sbr.rel (0) target = $region37
  $region36: #{transformer_forward.6} parent=0 // pred_region
    _
  $region37: #{transformer_forward.6} parent=0 // pred_fallthru
    _
  // Predicated region
  $region38: #{transformer_forward.6} parent=0 // pred_check
    _
  $region39: #{transformer_forward.6} parent=0 // pred_check_branch
    %43 = sbr.rel (0) target = $region41
  $region40: #{transformer_forward.6} parent=0 // pred_region
    _
  $region41: #{transformer_forward.6} parent=0 // pred_fallthru
    _
  // Predicated region
  $region42: #{transformer_forward.6} parent=0 // pred_check
    _
  $region43: #{transformer_forward.6} parent=0 // pred_check_branch
    %45 = sbr.rel (0) target = $region45
  $region44: #{transformer_forward.6} parent=0 // pred_region
    _
  $region45: #{transformer_forward.6} parent=0 // pred_fallthru
    _
  // Predicated region
  $region46: #{transformer_forward.6} parent=0 // pred_check
    _
  $region47: #{transformer_forward.6} parent=0 // pred_check_branch
    %47 = sbr.rel (0) target = $region49
  $region48: #{transformer_forward.6} parent=0 // pred_region
    _
  $region49: #{transformer_forward.6} parent=0 // pred_fallthru
    _
  // Predicated region
  $region50: #{transformer_forward.6} parent=0 // pred_check
    _
  $region51: #{transformer_forward.6} parent=0 // pred_check_branch
    %49 = sbr.rel (0) target = $region53
  $region52: #{transformer_forward.6} parent=0 // pred_region
    _
  $region53: #{transformer_forward.6} parent=0 // pred_fallthru
    _
  // Predicated region
  $region54: #{transformer_forward.6} parent=0 // pred_check
    _
  $region55: #{transformer_forward.6} parent=0 // pred_check_branch
    %51 = sbr.rel (0) target = $region57
  $region56: #{transformer_forward.6} parent=0 // pred_region
    _
  $region57: #{transformer_forward.6} parent=0 // pred_fallthru
    _
  // Predicated region
  $region58: #{transformer_forward.6} parent=0 // pred_check
    _
  $region59: #{transformer_forward.6} parent=0 // pred_check_branch
    %53 = sbr.rel (0) target = $region61
  $region60: #{transformer_forward.6} parent=0 // pred_region
    _
  $region61: #{transformer_forward.6} parent=0 // pred_fallthru
    _
  // Predicated region
  $region62: #{transformer_forward.6} parent=0 // pred_check
    _
  $region63: #{transformer_forward.6} parent=0 // pred_check_branch
    %55 = sbr.rel (0) target = $region65
  $region64: #{transformer_forward.6} parent=0 // pred_region
    _
  $region65: #{transformer_forward.6} parent=0 // pred_fallthru
    _
  // Predicated region
  $region66: #{transformer_forward.6} parent=0 // pred_check
    _
  $region67: #{transformer_forward.6} parent=0 // pred_check_branch
    %57 = sbr.rel (0) target = $region69
  $region68: #{transformer_forward.6} parent=0 // pred_region
    _
  $region69: #{transformer_forward.6} parent=0 // pred_fallthru
    _
  // Predicated region
  $region70: #{transformer_forward.6} parent=0 // pred_check
    _
  $region71: #{transformer_forward.6} parent=0 // pred_check_branch
    %59 = sbr.rel (0) target = $region73
  $region72: #{transformer_forward.6} parent=0 // pred_region
    _
  $region73: #{transformer_forward.6} parent=0 // pred_fallthru
    _
  // Predicated region
  $region74: #{transformer_forward.6} parent=0 // pred_check
    _
  $region75: #{transformer_forward.6} parent=0 // pred_check_branch
    %61 = sbr.rel (0) target = $region77
  $region76: #{transformer_forward.6} parent=0 // pred_region
    _
  $region77: #{transformer_forward.6} parent=0 // pred_fallthru
    _
  %v63 = vld [vmem:[%s0] sm:$0xf]
  %v64 = vld [vmem:[%s0 + $0x4] sm:$0xf]
  %v65 = vld [vmem:[%s0 + $0x8] sm:$0x3]
  %v66 = vunpack.c.l.bf16 %v63
  %v67 = vunpack.c.l.bf16 %v64
  %v68 = vunpack.c.l.bf16 %v65
  %v69 = vld [vmem:[%s1] sm:$0xf]
  %v70 = vld [vmem:[%s1 + $0x4] sm:$0xf]
  %v71 = vld [vmem:[%s1 + $0x8] sm:$0xf]
  %v72 = vld [vmem:[%s1 + $0xc] sm:$0xf]
  %v73 = vld [vmem:[%s2] sm:$0x1]
  %v74 = vld [vmem:[%s3] sm:$0xf]
  %v75 = vld [vmem:[%s3 + $0x4] sm:$0xf]
  %v76 = vld [vmem:[%s3 + $0x8] sm:$0xf]
  %v77 = vld [vmem:[%s3 + $0xc] sm:$0xf]
  %v78 = vld [vmem:[%s4] sm:$0x1]
  %v79 = vld [vmem:[%s5] sm:$0xf]
  %v80 = vld [vmem:[%s5 + $0x4] sm:$0xf]
  %v81 = vld [vmem:[%s5 + $0x8] sm:$0xf]
  %v82 = vld [vmem:[%s5 + $0xc] sm:$0xf]
  %v83 = vld [vmem:[%s6] sm:$0x1]
  %v84 = vld [vmem:[%s7] sm:$0xf]
  %v85 = vld [vmem:[%s7 + $0x4] sm:$0xf]
  %v86 = vld [vmem:[%s7 + $0x8] sm:$0xf]
  %v87 = vld [vmem:[%s7 + $0xc] sm:$0xf]
  %v88 = vld [vmem:[%s8] sm:$0x1]
  %v89 = vld [vmem:[%s9] sm:$0x1]
  %v90 = vld [vmem:[%s10] sm:$0x1]
  %v92 = vperm.slane %v73, 0
  %v97 = vunpack.c.l.b16 %v63
  %v98 = vunpack.c.l.b16 %v64
  %v99 = vunpack.c.l.b16 %v65
  %v100 = vpack.c.b16 %v98, %v97
  %v101 = vpack.c.b16 %v99, %v99
  %v106 = vunpack.c.l.b16 %v69
  %v107 = vunpack.c.l.b16 %v70
  %v108 = vunpack.c.l.b16 %v71
  %v109 = vunpack.c.l.b16 %v72
  %v110 = vpack.c.b16 %v107, %v106
  %v111 = vpack.c.b16 %v109, %v108
  %vm114 = vcmask 261120
  %v116 = vsel %vm114, %v100, 0
  %v119 = vsel %vm114, %v101, 0
  %121 = vmatpush.bf16.msra.mxu0 0
  %122 = vmatpush.bf16.msra.mxu0 0
  %123 = vmatpush.bf16.msra.mxu0 0
  %124 = vmatpush.bf16.msra.mxu0 0
  %125 = vmatpush.bf16.msra.mxu0 0
  %126 = vmatpush.bf16.msra.mxu0 0
  %127 = vmatpush.bf16.msra.mxu0 %v111
  %128 = vmatpush.bf16.msra.mxu0 %v110
  %129 = vmatmul.bf16.gmra.mxu0 %v116
  %v130 = vpop.f32.mrf.mxu0
  %v131 = vadd.f32 %v92, %v130
  %v132 = vpop.f32.mrf.mxu0
  %v133 = vadd.f32 %v92, %v132
  %134 = vmatmul.bf16.gmra.mxu0 %v119
  %v135 = vpop.f32.mrf.mxu0
  %v136 = vadd.f32 %v92, %v135
  %v137 = vpop.f32.mrf.mxu0
  %138 = vdwg.mxu0
  %v139 = vpack.c.bf16 %v131, %v131
  %v140 = vpack.c.bf16 %v133, %v133
  %v141 = vpack.c.bf16 %v136, %v136
  %v143 = vperm.slane %v78, 0
  %v149 = vunpack.c.l.b16 %v74
  %v150 = vunpack.c.l.b16 %v75
  %v151 = vunpack.c.l.b16 %v76
  %v152 = vunpack.c.l.b16 %v77
  %v153 = vpack.c.b16 %v150, %v149
  %v154 = vpack.c.b16 %v152, %v151
  %157 = vmatpush.bf16.msra.mxu0 0
  %158 = vmatpush.bf16.msra.mxu0 0
  %159 = vmatpush.bf16.msra.mxu0 0
  %160 = vmatpush.bf16.msra.mxu0 0
  %161 = vmatpush.bf16.msra.mxu0 0
  %162 = vmatpush.bf16.msra.mxu0 0
  %163 = vmatpush.bf16.msra.mxu0 %v154
  %164 = vmatpush.bf16.msra.mxu0 %v153
  %165 = vmatmul.bf16.gmra.mxu0 %v116
  %v166 = vpop.f32.mrf.mxu0
  %v167 = vadd.f32 %v143, %v166
  %v168 = vpop.f32.mrf.mxu0
  %v169 = vadd.f32 %v143, %v168
  %170 = vmatmul.bf16.gmra.mxu0 %v119
  %v171 = vpop.f32.mrf.mxu0
  %v172 = vadd.f32 %v143, %v171
  %v173 = vpop.f32.mrf.mxu0
  %174 = vdwg.mxu0
  %v175 = vpack.c.bf16 %v167, %v167
  %v176 = vpack.c.bf16 %v169, %v169
  %v177 = vpack.c.bf16 %v172, %v172
  %v179 = vperm.slane %v83, 0
  %v185 = vunpack.c.l.b16 %v79
  %v186 = vunpack.c.l.b16 %v80
  %v187 = vunpack.c.l.b16 %v81
  %v188 = vunpack.c.l.b16 %v82
  %v189 = vpack.c.b16 %v186, %v185
  %v190 = vpack.c.b16 %v188, %v187
  %193 = vmatpush.bf16.msra.mxu0 0
  %194 = vmatpush.bf16.msra.mxu0 0
  %195 = vmatpush.bf16.msra.mxu0 0
  %196 = vmatpush.bf16.msra.mxu0 0
  %197 = vmatpush.bf16.msra.mxu0 0
  %198 = vmatpush.bf16.msra.mxu0 0
  %199 = vmatpush.bf16.msra.mxu0 %v190
  %200 = vmatpush.bf16.msra.mxu0 %v189
  %201 = vmatmul.bf16.gmra.mxu0 %v116
  %v202 = vpop.f32.mrf.mxu0
  %v203 = vadd.f32 %v179, %v202
  %v204 = vpop.f32.mrf.mxu0
  %v205 = vadd.f32 %v179, %v204
  %206 = vmatmul.bf16.gmra.mxu0 %v119
  %v207 = vpop.f32.mrf.mxu0
  %v208 = vadd.f32 %v179, %v207
  %v209 = vpop.f32.mrf.mxu0
  %210 = vdwg.mxu0
  %v211 = vpack.c.bf16 %v203, %v203
  %v212 = vpack.c.bf16 %v205, %v205
  %v213 = vpack.c.bf16 %v208, %v208
  %v216 = vunpack.c.l.b16 %v139
  %v217 = vunpack.c.l.b16 %v140
  %v218 = vpack.c.b16 %v217, %v216
  %v221 = vunpack.c.l.b16 %v175
  %v222 = vunpack.c.l.b16 %v176
  %v223 = vpack.c.b16 %v222, %v221
  %vm224 = vcmask 64512
  %v226 = vsel %vm224, %v218, 0
  %v229 = vsel %vm224, %v223, 0
  %231 = vmatpush.bf16.xpose.msra.mxu0 0
  %232 = vmatpush.bf16.xpose.msra.mxu0 0
  %233 = vmatpush.bf16.xpose.msra.mxu0 0
  %234 = vmatpush.bf16.xpose.msra.mxu0 0
  %235 = vmatpush.bf16.xpose.msra.mxu0 0
  %236 = vmatpush.bf16.xpose.msra.mxu0 0
  %237 = vmatpush.bf16.xpose.msra.mxu0 0
  %238 = vmatpush.bf16.xpose.msra.mxu0 %v229
  %239 = vmatmul.bf16.gmra.mxu0 %v226
  %v240 = vpop.f32.mrf.mxu0
  %v241 = vadd.f32 0.0, %v240
  %v242 = vpop.f32.mrf.mxu0
  %v243 = vadd.f32 0.0, %v242
  %244 = vdwg.mxu0
  %v245 = vmul.f32 %v241, 0.35355338
  %v246 = vmul.f32 %v243, 0.35355338
  %vm247 = vcmask 80896
  %v248 = vsel %vm247, %v245, -inf
  %249 = vmax.xlane.f32.xlu0 %v248
  %v250 = vpop.xlane.xlu0 %249
  %vm251 = vcmask 74752
  %v252 = vsel %vm251, %v246, -inf
  %253 = vmax.xlane.f32.xlu0 %v252
  %v254 = vpop.xlane.xlu0 %253
  %v255 = vsub.f32 %v245, %v250
  %v256 = vsub.f32 %v246, %v254
  %v257 = vmul.f32 %v255, 1.442695
  %v258 = vpow.pop %v257
  %v259 = vmul.f32 %v256, 1.442695
  %v260 = vpow.pop %v259
  %v261 = vsel %vm247, %v258, 0.0
  %262 = vadd.xlane.f32.xlu0 %v261
  %v263 = vpop.xlane.xlu0 %262
  %v264 = vsel %vm251, %v260, 0.0
  %265 = vadd.xlane.f32.xlu0 %v264
  %v266 = vpop.xlane.xlu0 %265
  %v267 = vrcp.pop %v263
  %v268 = vrcp.pop %v266
  %v269 = vmul.f32 %v258, %v267
  %v270 = vmul.f32 %v260, %v268
  %v271 = vpack.c.bf16 %v270, %v269
  %v274 = vunpack.c.l.b16 %v211
  %v275 = vunpack.c.l.b16 %v212
  %v276 = vpack.c.b16 %v275, %v274
  %v278 = vsel %vm247, %v271, 0
  %vm280 = vcmask 1044480
  %v282 = vsel %vm280, %v276, 0
  %284 = vmatpush.bf16.msra.mxu0 0
  %285 = vmatpush.bf16.msra.mxu0 0
  %286 = vmatpush.bf16.msra.mxu0 0
  %287 = vmatpush.bf16.msra.mxu0 0
  %288 = vmatpush.bf16.msra.mxu0 0
  %289 = vmatpush.bf16.msra.mxu0 0
  %290 = vmatpush.bf16.msra.mxu0 0
  %291 = vmatpush.bf16.msra.mxu0 %v282
  %292 = vmatmul.bf16.gmra.mxu0 %v278
  %v293 = vpop.f32.mrf.mxu0
  %v294 = vadd.f32 0.0, %v293
  %v295 = vpop.f32.mrf.mxu0
  %v296 = vadd.f32 0.0, %v295
  %297 = vdwg.mxu0
  %298 = vrot.lane.b32.xlu0 %v218, 120
  %v299 = vpop.permute.xlu0 %298
  %300 = vrot.lane.b32.xlu0 %v223, 120
  %v301 = vpop.permute.xlu0 %300
  %v303 = vsel %vm224, %v299, 0
  %v306 = vsel %vm224, %v301, 0
  %308 = vmatpush.bf16.xpose.msra.mxu0 0
  %309 = vmatpush.bf16.xpose.msra.mxu0 0
  %310 = vmatpush.bf16.xpose.msra.mxu0 0
  %311 = vmatpush.bf16.xpose.msra.mxu0 0
  %312 = vmatpush.bf16.xpose.msra.mxu0 0
  %313 = vmatpush.bf16.xpose.msra.mxu0 0
  %314 = vmatpush.bf16.xpose.msra.mxu0 0
  %315 = vmatpush.bf16.xpose.msra.mxu0 %v306
  %316 = vmatmul.bf16.gmra.mxu0 %v303
  %v317 = vpop.f32.mrf.mxu0
  %v318 = vadd.f32 0.0, %v317
  %v319 = vpop.f32.mrf.mxu0
  %v320 = vadd.f32 0.0, %v319
  %321 = vdwg.mxu0
  %v322 = vmul.f32 %v318, 0.35355338
  %v323 = vmul.f32 %v320, 0.35355338
  %v324 = vsel %vm247, %v322, -inf
  %325 = vmax.xlane.f32.xlu0 %v324
  %v326 = vpop.xlane.xlu0 %325
  %v327 = vsel %vm251, %v323, -inf
  %328 = vmax.xlane.f32.xlu0 %v327
  %v329 = vpop.xlane.xlu0 %328
  %v330 = vsub.f32 %v322, %v326
  %v331 = vsub.f32 %v323, %v329
  %v332 = vmul.f32 %v330, 1.442695
  %v333 = vpow.pop %v332
  %v334 = vmul.f32 %v331, 1.442695
  %v335 = vpow.pop %v334
  %v336 = vsel %vm247, %v333, 0.0
  %337 = vadd.xlane.f32.xlu0 %v336
  %v338 = vpop.xlane.xlu0 %337
  %v339 = vsel %vm251, %v335, 0.0
  %340 = vadd.xlane.f32.xlu0 %v339
  %v341 = vpop.xlane.xlu0 %340
  %v342 = vrcp.pop %v338
  %v343 = vrcp.pop %v341
  %v344 = vmul.f32 %v333, %v342
  %v345 = vmul.f32 %v335, %v343
  %v346 = vpack.c.bf16 %v345, %v344
  %347 = vrot.lane.b32.xlu0 %v276, 120
  %v348 = vpop.permute.xlu0 %347
  %v350 = vsel %vm247, %v346, 0
  %v353 = vsel %vm280, %v348, 0
  %355 = vmatpush.bf16.msra.mxu0 0
  %356 = vmatpush.bf16.msra.mxu0 0
  %357 = vmatpush.bf16.msra.mxu0 0
  %358 = vmatpush.bf16.msra.mxu0 0
  %359 = vmatpush.bf16.msra.mxu0 0
  %360 = vmatpush.bf16.msra.mxu0 0
  %361 = vmatpush.bf16.msra.mxu0 0
  %362 = vmatpush.bf16.msra.mxu0 %v353
  %363 = vmatmul.bf16.gmra.mxu0 %v350
  %v364 = vpop.f32.mrf.mxu0
  %v365 = vadd.f32 0.0, %v364
  %v366 = vpop.f32.mrf.mxu0
  %v367 = vadd.f32 0.0, %v366
  %368 = vdwg.mxu0
  %369 = vrot.lane.b32.xlu0 %v218, 112
  %v370 = vpop.permute.xlu0 %369
  %371 = vrot.lane.b32.xlu0 %v223, 112
  %v372 = vpop.permute.xlu0 %371
  %v374 = vsel %vm224, %v370, 0
  %v377 = vsel %vm224, %v372, 0
  %379 = vmatpush.bf16.xpose.msra.mxu0 0
  %380 = vmatpush.bf16.xpose.msra.mxu0 0
  %381 = vmatpush.bf16.xpose.msra.mxu0 0
  %382 = vmatpush.bf16.xpose.msra.mxu0 0
  %383 = vmatpush.bf16.xpose.msra.mxu0 0
  %384 = vmatpush.bf16.xpose.msra.mxu0 0
  %385 = vmatpush.bf16.xpose.msra.mxu0 0
  %386 = vmatpush.bf16.xpose.msra.mxu0 %v377
  %387 = vmatmul.bf16.gmra.mxu0 %v374
  %v388 = vpop.f32.mrf.mxu0
  %v389 = vadd.f32 0.0, %v388
  %v390 = vpop.f32.mrf.mxu0
  %v391 = vadd.f32 0.0, %v390
  %392 = vdwg.mxu0
  %v393 = vmul.f32 %v389, 0.35355338
  %v394 = vmul.f32 %v391, 0.35355338
  %v395 = vsel %vm247, %v393, -inf
  %396 = vmax.xlane.f32.xlu0 %v395
  %v397 = vpop.xlane.xlu0 %396
  %v398 = vsel %vm251, %v394, -inf
  %399 = vmax.xlane.f32.xlu0 %v398
  %v400 = vpop.xlane.xlu0 %399
  %v401 = vsub.f32 %v393, %v397
  %v402 = vsub.f32 %v394, %v400
  %v403 = vmul.f32 %v401, 1.442695
  %v404 = vpow.pop %v403
  %v405 = vmul.f32 %v402, 1.442695
  %v406 = vpow.pop %v405
  %v407 = vsel %vm247, %v404, 0.0
  %408 = vadd.xlane.f32.xlu0 %v407
  %v409 = vpop.xlane.xlu0 %408
  %v410 = vsel %vm251, %v406, 0.0
  %411 = vadd.xlane.f32.xlu0 %v410
  %v412 = vpop.xlane.xlu0 %411
  %v413 = vrcp.pop %v409
  %v414 = vrcp.pop %v412
  %v415 = vmul.f32 %v404, %v413
  %v416 = vmul.f32 %v406, %v414
  %v417 = vpack.c.bf16 %v416, %v415
  %418 = vrot.lane.b32.xlu0 %v276, 112
  %v419 = vpop.permute.xlu0 %418
  %v421 = vsel %vm247, %v417, 0
  %v424 = vsel %vm280, %v419, 0
  %426 = vmatpush.bf16.msra.mxu0 0
  %427 = vmatpush.bf16.msra.mxu0 0
  %428 = vmatpush.bf16.msra.mxu0 0
  %429 = vmatpush.bf16.msra.mxu0 0
  %430 = vmatpush.bf16.msra.mxu0 0
  %431 = vmatpush.bf16.msra.mxu0 0
  %432 = vmatpush.bf16.msra.mxu0 0
  %433 = vmatpush.bf16.msra.mxu0 %v424
  %434 = vmatmul.bf16.gmra.mxu0 %v421
  %v435 = vpop.f32.mrf.mxu0
  %v436 = vadd.f32 0.0, %v435
  %v437 = vpop.f32.mrf.mxu0
  %v438 = vadd.f32 0.0, %v437
  %439 = vdwg.mxu0
  %440 = vrot.lane.b32.xlu0 %v218, 104
  %v441 = vpop.permute.xlu0 %440
  %442 = vrot.lane.b32.xlu0 %v223, 104
  %v443 = vpop.permute.xlu0 %442
  %v445 = vsel %vm224, %v441, 0
  %v448 = vsel %vm224, %v443, 0
  %450 = vmatpush.bf16.xpose.msra.mxu0 0
  %451 = vmatpush.bf16.xpose.msra.mxu0 0
  %452 = vmatpush.bf16.xpose.msra.mxu0 0
  %453 = vmatpush.bf16.xpose.msra.mxu0 0
  %454 = vmatpush.bf16.xpose.msra.mxu0 0
  %455 = vmatpush.bf16.xpose.msra.mxu0 0
  %456 = vmatpush.bf16.xpose.msra.mxu0 0
  %457 = vmatpush.bf16.xpose.msra.mxu0 %v448
  %458 = vmatmul.bf16.gmra.mxu0 %v445
  %v459 = vpop.f32.mrf.mxu0
  %v460 = vadd.f32 0.0, %v459
  %v461 = vpop.f32.mrf.mxu0
  %v462 = vadd.f32 0.0, %v461
  %463 = vdwg.mxu0
  %v464 = vmul.f32 %v460, 0.35355338
  %v465 = vmul.f32 %v462, 0.35355338
  %v466 = vsel %vm247, %v464, -inf
  %467 = vmax.xlane.f32.xlu0 %v466
  %v468 = vpop.xlane.xlu0 %467
  %v469 = vsel %vm251, %v465, -inf
  %470 = vmax.xlane.f32.xlu0 %v469
  %v471 = vpop.xlane.xlu0 %470
  %v472 = vsub.f32 %v464, %v468
  %v473 = vsub.f32 %v465, %v471
  %v474 = vmul.f32 %v472, 1.442695
  %v475 = vpow.pop %v474
  %v476 = vmul.f32 %v473, 1.442695
  %v477 = vpow.pop %v476
  %v478 = vsel %vm247, %v475, 0.0
  %479 = vadd.xlane.f32.xlu0 %v478
  %v480 = vpop.xlane.xlu0 %479
  %v481 = vsel %vm251, %v477, 0.0
  %482 = vadd.xlane.f32.xlu0 %v481
  %v483 = vpop.xlane.xlu0 %482
  %v484 = vrcp.pop %v480
  %v485 = vrcp.pop %v483
  %v486 = vmul.f32 %v475, %v484
  %v487 = vmul.f32 %v477, %v485
  %v488 = vpack.c.bf16 %v487, %v486
  %489 = vrot.lane.b32.xlu0 %v276, 104
  %v490 = vpop.permute.xlu0 %489
  %v492 = vsel %vm247, %v488, 0
  %v495 = vsel %vm280, %v490, 0
  %497 = vmatpush.bf16.msra.mxu0 0
  %498 = vmatpush.bf16.msra.mxu0 0
  %499 = vmatpush.bf16.msra.mxu0 0
  %500 = vmatpush.bf16.msra.mxu0 0
  %501 = vmatpush.bf16.msra.mxu0 0
  %502 = vmatpush.bf16.msra.mxu0 0
  %503 = vmatpush.bf16.msra.mxu0 0
  %504 = vmatpush.bf16.msra.mxu0 %v495
  %505 = vmatmul.bf16.gmra.mxu0 %v492
  %v506 = vpop.f32.mrf.mxu0
  %v507 = vadd.f32 0.0, %v506
  %v508 = vpop.f32.mrf.mxu0
  %v509 = vadd.f32 0.0, %v508
  %510 = vdwg.mxu0
  %513 = vrot.lane.b32.xlu0 %v365, 8
  %v514 = vpop.permute.xlu0 %513
  %515 = vrot.lane.b32.xlu0 %v367, 8
  %v516 = vpop.permute.xlu0 %515
  %521 = vrot.lane.b32.xlu0 %v436, 16
  %v522 = vpop.permute.xlu0 %521
  %523 = vrot.lane.b32.xlu0 %v438, 16
  %v524 = vpop.permute.xlu0 %523
  %529 = vrot.lane.b32.xlu0 %v507, 24
  %v530 = vpop.permute.xlu0 %529
  %531 = vrot.lane.b32.xlu0 %v509, 24
  %v532 = vpop.permute.xlu0 %531
  %v535 = vsel %vm224, %v294, %v514
  %v536 = vsel %vm224, %v296, %v516
  %vm537 = vcmask 130048
  %v538 = vsel %vm537, %v535, %v522
  %v539 = vsel %vm537, %v536, %v524
  %vm540 = vcmask 195584
  %v541 = vsel %vm540, %v538, %v530
  %v542 = vsel %vm540, %v539, %v532
  %v544 = vunpack.c.l.b16 %v141
  %v545 = vpack.c.b16 %v544, %v217
  %v546 = vrot.slane %v545, 1
  %v548 = vunpack.c.l.b16 %v177
  %v549 = vpack.c.b16 %v548, %v222
  %v550 = vrot.slane %v549, 1
  %v552 = vsel %vm224, %v546, 0
  %v555 = vsel %vm224, %v550, 0
  %557 = vmatpush.bf16.xpose.msra.mxu0 0
  %558 = vmatpush.bf16.xpose.msra.mxu0 0
  %559 = vmatpush.bf16.xpose.msra.mxu0 0
  %560 = vmatpush.bf16.xpose.msra.mxu0 0
  %561 = vmatpush.bf16.xpose.msra.mxu0 0
  %562 = vmatpush.bf16.xpose.msra.mxu0 0
  %563 = vmatpush.bf16.xpose.msra.mxu0 0
  %564 = vmatpush.bf16.xpose.msra.mxu0 %v555
  %565 = vmatmul.bf16.gmra.mxu0 %v552
  %v566 = vpop.f32.mrf.mxu0
  %v567 = vadd.f32 0.0, %v566
  %v568 = vpop.f32.mrf.mxu0
  %v569 = vadd.f32 0.0, %v568
  %570 = vdwg.mxu0
  %v571 = vmul.f32 %v567, 0.35355338
  %v572 = vmul.f32 %v569, 0.35355338
  %v573 = vsel %vm247, %v571, -inf
  %574 = vmax.xlane.f32.xlu0 %v573
  %v575 = vpop.xlane.xlu0 %574
  %v576 = vsel %vm251, %v572, -inf
  %577 = vmax.xlane.f32.xlu0 %v576
  %v578 = vpop.xlane.xlu0 %577
  %v579 = vsub.f32 %v571, %v575
  %v580 = vsub.f32 %v572, %v578
  %v581 = vmul.f32 %v579, 1.442695
  %v582 = vpow.pop %v581
  %v583 = vmul.f32 %v580, 1.442695
  %v584 = vpow.pop %v583
  %v585 = vsel %vm247, %v582, 0.0
  %586 = vadd.xlane.f32.xlu0 %v585
  %v587 = vpop.xlane.xlu0 %586
  %v588 = vsel %vm251, %v584, 0.0
  %589 = vadd.xlane.f32.xlu0 %v588
  %v590 = vpop.xlane.xlu0 %589
  %v591 = vrcp.pop %v587
  %v592 = vrcp.pop %v590
  %v593 = vmul.f32 %v582, %v591
  %v594 = vmul.f32 %v584, %v592
  %v595 = vpack.c.bf16 %v594, %v593
  %v597 = vunpack.c.l.b16 %v213
  %v598 = vpack.c.b16 %v597, %v275
  %v599 = vrot.slane %v598, 1
  %v601 = vsel %vm247, %v595, 0
  %v604 = vsel %vm280, %v599, 0
  %606 = vmatpush.bf16.msra.mxu0 0
  %607 = vmatpush.bf16.msra.mxu0 0
  %608 = vmatpush.bf16.msra.mxu0 0
  %609 = vmatpush.bf16.msra.mxu0 0
  %610 = vmatpush.bf16.msra.mxu0 0
  %611 = vmatpush.bf16.msra.mxu0 0
  %612 = vmatpush.bf16.msra.mxu0 0
  %613 = vmatpush.bf16.msra.mxu0 %v604
  %614 = vmatmul.bf16.gmra.mxu0 %v601
  %v615 = vpop.f32.mrf.mxu0
  %v616 = vadd.f32 0.0, %v615
  %v617 = vpop.f32.mrf.mxu0
  %v618 = vadd.f32 0.0, %v617
  %619 = vdwg.mxu0
  %620 = vrot.lane.b32.xlu0 %v546, 120
  %v621 = vpop.permute.xlu0 %620
  %622 = vrot.lane.b32.xlu0 %v550, 120
  %v623 = vpop.permute.xlu0 %622
  %v625 = vsel %vm224, %v621, 0
  %v628 = vsel %vm224, %v623, 0
  %630 = vmatpush.bf16.xpose.msra.mxu0 0
  %631 = vmatpush.bf16.xpose.msra.mxu0 0
  %632 = vmatpush.bf16.xpose.msra.mxu0 0
  %633 = vmatpush.bf16.xpose.msra.mxu0 0
  %634 = vmatpush.bf16.xpose.msra.mxu0 0
  %635 = vmatpush.bf16.xpose.msra.mxu0 0
  %636 = vmatpush.bf16.xpose.msra.mxu0 0
  %637 = vmatpush.bf16.xpose.msra.mxu0 %v628
  %638 = vmatmul.bf16.gmra.mxu0 %v625
  %v639 = vpop.f32.mrf.mxu0
  %v640 = vadd.f32 0.0, %v639
  %v641 = vpop.f32.mrf.mxu0
  %v642 = vadd.f32 0.0, %v641
  %643 = vdwg.mxu0
  %v644 = vmul.f32 %v640, 0.35355338
  %v645 = vmul.f32 %v642, 0.35355338
  %v646 = vsel %vm247, %v644, -inf
  %647 = vmax.xlane.f32.xlu0 %v646
  %v648 = vpop.xlane.xlu0 %647
  %v649 = vsel %vm251, %v645, -inf
  %650 = vmax.xlane.f32.xlu0 %v649
  %v651 = vpop.xlane.xlu0 %650
  %v652 = vsub.f32 %v644, %v648
  %v653 = vsub.f32 %v645, %v651
  %v654 = vmul.f32 %v652, 1.442695
  %v655 = vpow.pop %v654
  %v656 = vmul.f32 %v653, 1.442695
  %v657 = vpow.pop %v656
  %v658 = vsel %vm247, %v655, 0.0
  %659 = vadd.xlane.f32.xlu0 %v658
  %v660 = vpop.xlane.xlu0 %659
  %v661 = vsel %vm251, %v657, 0.0
  %662 = vadd.xlane.f32.xlu0 %v661
  %v663 = vpop.xlane.xlu0 %662
  %v664 = vrcp.pop %v660
  %v665 = vrcp.pop %v663
  %v666 = vmul.f32 %v655, %v664
  %v667 = vmul.f32 %v657, %v665
  %v668 = vpack.c.bf16 %v667, %v666
  %669 = vrot.lane.b32.xlu0 %v599, 120
  %v670 = vpop.permute.xlu0 %669
  %v672 = vsel %vm247, %v668, 0
  %v675 = vsel %vm280, %v670, 0
  %677 = vmatpush.bf16.msra.mxu0 0
  %678 = vmatpush.bf16.msra.mxu0 0
  %679 = vmatpush.bf16.msra.mxu0 0
  %680 = vmatpush.bf16.msra.mxu0 0
  %681 = vmatpush.bf16.msra.mxu0 0
  %682 = vmatpush.bf16.msra.mxu0 0
  %683 = vmatpush.bf16.msra.mxu0 0
  %684 = vmatpush.bf16.msra.mxu0 %v675
  %685 = vmatmul.bf16.gmra.mxu0 %v672
  %v686 = vpop.f32.mrf.mxu0
  %v687 = vadd.f32 0.0, %v686
  %v688 = vpop.f32.mrf.mxu0
  %v689 = vadd.f32 0.0, %v688
  %690 = vdwg.mxu0
  %691 = vrot.lane.b32.xlu0 %v546, 112
  %v692 = vpop.permute.xlu0 %691
  %693 = vrot.lane.b32.xlu0 %v550, 112
  %v694 = vpop.permute.xlu0 %693
  %v696 = vsel %vm224, %v692, 0
  %v699 = vsel %vm224, %v694, 0
  %701 = vmatpush.bf16.xpose.msra.mxu0 0
  %702 = vmatpush.bf16.xpose.msra.mxu0 0
  %703 = vmatpush.bf16.xpose.msra.mxu0 0
  %704 = vmatpush.bf16.xpose.msra.mxu0 0
  %705 = vmatpush.bf16.xpose.msra.mxu0 0
  %706 = vmatpush.bf16.xpose.msra.mxu0 0
  %707 = vmatpush.bf16.xpose.msra.mxu0 0
  %708 = vmatpush.bf16.xpose.msra.mxu0 %v699
  %709 = vmatmul.bf16.gmra.mxu0 %v696
  %v710 = vpop.f32.mrf.mxu0
  %v711 = vadd.f32 0.0, %v710
  %v712 = vpop.f32.mrf.mxu0
  %v713 = vadd.f32 0.0, %v712
  %714 = vdwg.mxu0
  %v715 = vmul.f32 %v711, 0.35355338
  %v716 = vmul.f32 %v713, 0.35355338
  %v717 = vsel %vm247, %v715, -inf
  %718 = vmax.xlane.f32.xlu0 %v717
  %v719 = vpop.xlane.xlu0 %718
  %v720 = vsel %vm251, %v716, -inf
  %721 = vmax.xlane.f32.xlu0 %v720
  %v722 = vpop.xlane.xlu0 %721
  %v723 = vsub.f32 %v715, %v719
  %v724 = vsub.f32 %v716, %v722
  %v725 = vmul.f32 %v723, 1.442695
  %v726 = vpow.pop %v725
  %v727 = vmul.f32 %v724, 1.442695
  %v728 = vpow.pop %v727
  %v729 = vsel %vm247, %v726, 0.0
  %730 = vadd.xlane.f32.xlu0 %v729
  %v731 = vpop.xlane.xlu0 %730
  %v732 = vsel %vm251, %v728, 0.0
  %733 = vadd.xlane.f32.xlu0 %v732
  %v734 = vpop.xlane.xlu0 %733
  %v735 = vrcp.pop %v731
  %v736 = vrcp.pop %v734
  %v737 = vmul.f32 %v726, %v735
  %v738 = vmul.f32 %v728, %v736
  %v739 = vpack.c.bf16 %v738, %v737
  %740 = vrot.lane.b32.xlu0 %v599, 112
  %v741 = vpop.permute.xlu0 %740
  %v743 = vsel %vm247, %v739, 0
  %v746 = vsel %vm280, %v741, 0
  %748 = vmatpush.bf16.msra.mxu0 0
  %749 = vmatpush.bf16.msra.mxu0 0
  %750 = vmatpush.bf16.msra.mxu0 0
  %751 = vmatpush.bf16.msra.mxu0 0
  %752 = vmatpush.bf16.msra.mxu0 0
  %753 = vmatpush.bf16.msra.mxu0 0
  %754 = vmatpush.bf16.msra.mxu0 0
  %755 = vmatpush.bf16.msra.mxu0 %v746
  %756 = vmatmul.bf16.gmra.mxu0 %v743
  %v757 = vpop.f32.mrf.mxu0
  %v758 = vadd.f32 0.0, %v757
  %v759 = vpop.f32.mrf.mxu0
  %v760 = vadd.f32 0.0, %v759
  %761 = vdwg.mxu0
  %762 = vrot.lane.b32.xlu0 %v546, 104
  %v763 = vpop.permute.xlu0 %762
  %764 = vrot.lane.b32.xlu0 %v550, 104
  %v765 = vpop.permute.xlu0 %764
  %v767 = vsel %vm224, %v763, 0
  %v770 = vsel %vm224, %v765, 0
  %772 = vmatpush.bf16.xpose.msra.mxu0 0
  %773 = vmatpush.bf16.xpose.msra.mxu0 0
  %774 = vmatpush.bf16.xpose.msra.mxu0 0
  %775 = vmatpush.bf16.xpose.msra.mxu0 0
  %776 = vmatpush.bf16.xpose.msra.mxu0 0
  %777 = vmatpush.bf16.xpose.msra.mxu0 0
  %778 = vmatpush.bf16.xpose.msra.mxu0 0
  %779 = vmatpush.bf16.xpose.msra.mxu0 %v770
  %780 = vmatmul.bf16.gmra.mxu0 %v767
  %v781 = vpop.f32.mrf.mxu0
  %v782 = vadd.f32 0.0, %v781
  %v783 = vpop.f32.mrf.mxu0
  %v784 = vadd.f32 0.0, %v783
  %785 = vdwg.mxu0
  %v786 = vmul.f32 %v782, 0.35355338
  %v787 = vmul.f32 %v784, 0.35355338
  %v788 = vsel %vm247, %v786, -inf
  %789 = vmax.xlane.f32.xlu0 %v788
  %v790 = vpop.xlane.xlu0 %789
  %v791 = vsel %vm251, %v787, -inf
  %792 = vmax.xlane.f32.xlu0 %v791
  %v793 = vpop.xlane.xlu0 %792
  %v794 = vsub.f32 %v786, %v790
  %v795 = vsub.f32 %v787, %v793
  %v796 = vmul.f32 %v794, 1.442695
  %v797 = vpow.pop %v796
  %v798 = vmul.f32 %v795, 1.442695
  %v799 = vpow.pop %v798
  %v800 = vsel %vm247, %v797, 0.0
  %801 = vadd.xlane.f32.xlu0 %v800
  %v802 = vpop.xlane.xlu0 %801
  %v803 = vsel %vm251, %v799, 0.0
  %804 = vadd.xlane.f32.xlu0 %v803
  %v805 = vpop.xlane.xlu0 %804
  %v806 = vrcp.pop %v802
  %v807 = vrcp.pop %v805
  %v808 = vmul.f32 %v797, %v806
  %v809 = vmul.f32 %v799, %v807
  %v810 = vpack.c.bf16 %v809, %v808
  %811 = vrot.lane.b32.xlu0 %v599, 104
  %v812 = vpop.permute.xlu0 %811
  %v814 = vsel %vm247, %v810, 0
  %v817 = vsel %vm280, %v812, 0
  %819 = vmatpush.bf16.msra.mxu0 0
  %820 = vmatpush.bf16.msra.mxu0 0
  %821 = vmatpush.bf16.msra.mxu0 0
  %822 = vmatpush.bf16.msra.mxu0 0
  %823 = vmatpush.bf16.msra.mxu0 0
  %824 = vmatpush.bf16.msra.mxu0 0
  %825 = vmatpush.bf16.msra.mxu0 0
  %826 = vmatpush.bf16.msra.mxu0 %v817
  %827 = vmatmul.bf16.gmra.mxu0 %v814
  %v828 = vpop.f32.mrf.mxu0
  %v829 = vadd.f32 0.0, %v828
  %v830 = vpop.f32.mrf.mxu0
  %v831 = vadd.f32 0.0, %v830
  %832 = vdwg.mxu0
  %835 = vrot.lane.b32.xlu0 %v687, 8
  %v836 = vpop.permute.xlu0 %835
  %837 = vrot.lane.b32.xlu0 %v689, 8
  %v838 = vpop.permute.xlu0 %837
  %843 = vrot.lane.b32.xlu0 %v758, 16
  %v844 = vpop.permute.xlu0 %843
  %845 = vrot.lane.b32.xlu0 %v760, 16
  %v846 = vpop.permute.xlu0 %845
  %851 = vrot.lane.b32.xlu0 %v829, 24
  %v852 = vpop.permute.xlu0 %851
  %853 = vrot.lane.b32.xlu0 %v831, 24
  %v854 = vpop.permute.xlu0 %853
  %v857 = vsel %vm224, %v616, %v836
  %v858 = vsel %vm224, %v618, %v838
  %v859 = vsel %vm537, %v857, %v844
  %v860 = vsel %vm537, %v858, %v846
  %v861 = vsel %vm540, %v859, %v852
  %v862 = vsel %vm540, %v860, %v854
  %vm865 = vcmask 1041408
  %v866 = vrot.slane %v861, 6
  %v867 = vrot.slane %v862, 6
  %v868 = vsel %vm865, %v866, %v867
  %v871 = vsel %vm865, %v542, %v866
  %v872 = vpack.c.bf16 %v871, %v541
  %v873 = vpack.c.bf16 %v868, %v868
  %v875 = vperm.slane %v88, 0
  %v881 = vunpack.c.l.b16 %v84
  %v882 = vunpack.c.l.b16 %v85
  %v883 = vunpack.c.l.b16 %v86
  %v884 = vunpack.c.l.b16 %v87
  %v885 = vpack.c.b16 %v882, %v881
  %v886 = vpack.c.b16 %v884, %v883
  %v890 = vsel %vm114, %v872, 0
  %v893 = vsel %vm114, %v873, 0
  %895 = vmatpush.bf16.msra.mxu0 0
  %896 = vmatpush.bf16.msra.mxu0 0
  %897 = vmatpush.bf16.msra.mxu0 0
  %898 = vmatpush.bf16.msra.mxu0 0
  %899 = vmatpush.bf16.msra.mxu0 0
  %900 = vmatpush.bf16.msra.mxu0 0
  %901 = vmatpush.bf16.msra.mxu0 %v886
  %902 = vmatpush.bf16.msra.mxu0 %v885
  %903 = vmatmul.bf16.gmra.mxu0 %v890
  %v904 = vpop.f32.mrf.mxu0
  %v905 = vadd.f32 %v875, %v904
  %v906 = vpop.f32.mrf.mxu0
  %v907 = vadd.f32 %v875, %v906
  %908 = vmatmul.bf16.gmra.mxu0 %v893
  %v909 = vpop.f32.mrf.mxu0
  %v910 = vadd.f32 %v875, %v909
  %v911 = vpop.f32.mrf.mxu0
  %912 = vdwg.mxu0
  %v913 = vadd.f32 %v66, %v905
  %v914 = vadd.f32 %v67, %v907
  %v915 = vadd.f32 %v68, %v910
  %v916 = vsel %vm114, %v913, 0.0
  %917 = vadd.xlane.f32.xlu0 %v916
  %v918 = vpop.xlane.xlu0 %917
  %v919 = vsel %vm114, %v914, 0.0
  %920 = vadd.xlane.f32.xlu0 %v919
  %v921 = vpop.xlane.xlu0 %920
  %vm922 = vcmask 257024
  %v923 = vsel %vm922, %v915, 0.0
  %924 = vadd.xlane.f32.xlu0 %v923
  %v925 = vpop.xlane.xlu0 %924
  %v926 = vrcp.pop 32.0
  %v927 = vmul.f32 32.0, %v926
  %v928 = vsub.f32 1.0, %v927
  %v929 = vmul.f32 %v926, %v928
  %v930 = vadd.f32 %v926, %v929
  %vm931 = vweird.f32 %v926
  %v932 = vsel %vm931, %v926, %v930
  %v933 = vmul.f32 %v918, %v932
  %v934 = vmul.f32 %v921, %v932
  %v935 = vmul.f32 %v925, %v932
  %v936 = vsub.f32 %v913, %v933
  %v937 = vsub.f32 %v914, %v934
  %v938 = vsub.f32 %v915, %v935
  %v939 = vmul.f32 %v936, %v936
  %v940 = vmul.f32 %v937, %v937
  %v941 = vmul.f32 %v938, %v938
  %v942 = vsel %vm114, %v939, 0.0
  %943 = vadd.xlane.f32.xlu0 %v942
  %v944 = vpop.xlane.xlu0 %943
  %v945 = vsel %vm114, %v940, 0.0
  %946 = vadd.xlane.f32.xlu0 %v945
  %v947 = vpop.xlane.xlu0 %946
  %v948 = vsel %vm922, %v941, 0.0
  %949 = vadd.xlane.f32.xlu0 %v948
  %v950 = vpop.xlane.xlu0 %949
  %v951 = vmul.f32 %v944, %v932
  %v952 = vmul.f32 %v947, %v932
  %v953 = vmul.f32 %v950, %v932
  %v954 = vadd.f32 %v951, 1e-05
  %v955 = vadd.f32 %v952, 1e-05
  %v956 = vadd.f32 %v953, 1e-05
  %v957 = vrsqrt.pop %v954
  %v958 = vmul.f32 %v957, %v954
  %v959 = vmul.f32 %v958, %v957
  %v960 = vmul.f32 0.5, %v959
  %v961 = vsub.f32 1.5, %v960
  %v962 = vmul.f32 %v957, %v961
  %vm963 = vweird.f32 %v954
  %vm964 = vweird.f32 %v957
  %vm965 = vmor %vm963, %vm964
  %v966 = vsel %vm965, %v957, %v962
  %v967 = vrsqrt.pop %v955
  %v968 = vmul.f32 %v967, %v955
  %v969 = vmul.f32 %v968, %v967
  %v970 = vmul.f32 0.5, %v969
  %v971 = vsub.f32 1.5, %v970
  %v972 = vmul.f32 %v967, %v971
  %vm973 = vweird.f32 %v955
  %vm974 = vweird.f32 %v967
  %vm975 = vmor %vm973, %vm974
  %v976 = vsel %vm975, %v967, %v972
  %v977 = vrsqrt.pop %v956
  %v978 = vmul.f32 %v977, %v956
  %v979 = vmul.f32 %v978, %v977
  %v980 = vmul.f32 0.5, %v979
  %v981 = vsub.f32 1.5, %v980
  %v982 = vmul.f32 %v977, %v981
  %vm983 = vweird.f32 %v956
  %vm984 = vweird.f32 %v977
  %vm985 = vmor %vm983, %vm984
  %v986 = vsel %vm985, %v977, %v982
  %v987 = vmul.f32 %v936, %v966
  %v988 = vmul.f32 %v937, %v976
  %v989 = vmul.f32 %v938, %v986
  %v991 = vperm.slane %v89, 0
  %v993 = vmul.f32 %v987, %v991
  %v994 = vmul.f32 %v988, %v991
  %v995 = vmul.f32 %v989, %v991
  %v997 = vperm.slane %v90, 0
  %v999 = vadd.f32 %v993, %v997
  %v1000 = vadd.f32 %v994, %v997
  %v1001 = vadd.f32 %v995, %v997
  %v1002 = vld [vmem:[%s11] sm:$0xf]
  %v1003 = vld [vmem:[%s11 + $0x4] sm:$0xf]
  %v1004 = vld [vmem:[%s11 + $0x8] sm:$0xf]
  %v1005 = vld [vmem:[%s11 + $0xc] sm:$0xf]
  %v1006 = vld [vmem:[%s12] sm:$0x1]
  %v1007 = vld [vmem:[%s13] sm:$0xf]
  %v1008 = vld [vmem:[%s13 + $0x4] sm:$0xf]
  %v1009 = vld [vmem:[%s13 + $0x8] sm:$0xf]
  %v1010 = vld [vmem:[%s13 + $0xc] sm:$0xf]
  %v1011 = vld [vmem:[%s13 + $0x10] sm:$0xf]
  %v1012 = vld [vmem:[%s13 + $0x14] sm:$0xf]
  %v1013 = vld [vmem:[%s13 + $0x18] sm:$0xf]
  %v1014 = vld [vmem:[%s13 + $0x1c] sm:$0xf]
  %v1015 = vld [vmem:[%s14] sm:$0x1]
  %v1016 = vld [vmem:[%s15] sm:$0x1]
  %v1017 = vld [vmem:[%s16] sm:$0x1]
  %v1018 = vpack.c.bf16 %v1000, %v999
  %v1019 = vpack.c.bf16 %v1001, %v1001
  %v1021 = vperm.slane %v1006, 0
  %v1027 = vunpack.c.l.b16 %v1002
  %v1028 = vunpack.c.l.b16 %v1003
  %v1029 = vunpack.c.l.b16 %v1004
  %v1030 = vunpack.c.l.b16 %v1005
  %v1031 = vpack.c.b16 %v1028, %v1027
  %v1032 = vpack.c.b16 %v1030, %v1029
  %v1036 = vsel %vm114, %v1018, 0
  %v1039 = vsel %vm114, %v1019, 0
  %1041 = vmatpush.bf16.msra.mxu0 0
  %1042 = vmatpush.bf16.msra.mxu0 0
  %1043 = vmatpush.bf16.msra.mxu0 0
  %1044 = vmatpush.bf16.msra.mxu0 0
  %1045 = vmatpush.bf16.msra.mxu0 0
  %1046 = vmatpush.bf16.msra.mxu0 0
  %1047 = vmatpush.bf16.msra.mxu0 %v1032
  %1048 = vmatpush.bf16.msra.mxu0 %v1031
  %1049 = vmatmul.bf16.gmra.mxu0 %v1036
  %v1050 = vpop.f32.mrf.mxu0
  %v1051 = vadd.f32 %v1021, %v1050
  %v1052 = vpop.f32.mrf.mxu0
  %v1053 = vadd.f32 %v1021, %v1052
  %1054 = vmatmul.bf16.gmra.mxu0 %v1039
  %v1055 = vpop.f32.mrf.mxu0
  %v1056 = vadd.f32 %v1021, %v1055
  %v1057 = vpop.f32.mrf.mxu0
  %1058 = vdwg.mxu0
  %v1059 = vmax.f32 %v1051, 0.0
  %v1060 = vmax.f32 %v1053, 0.0
  %v1061 = vmax.f32 %v1056, 0.0
  %v1062 = vpack.c.bf16 %v1060, %v1059
  %v1063 = vpack.c.bf16 %v1061, %v1061
  %v1072 = vunpack.c.l.b16 %v1007
  %v1073 = vunpack.c.l.b16 %v1008
  %v1074 = vunpack.c.l.b16 %v1009
  %v1075 = vunpack.c.l.b16 %v1010
  %v1076 = vunpack.c.l.b16 %v1011
  %v1077 = vunpack.c.l.b16 %v1012
  %v1078 = vunpack.c.l.b16 %v1013
  %v1079 = vunpack.c.l.b16 %v1014
  %v1080 = vpack.c.b16 %v1073, %v1072
  %v1081 = vpack.c.b16 %v1075, %v1074
  %v1082 = vpack.c.b16 %v1077, %v1076
  %v1083 = vpack.c.b16 %v1079, %v1078
  %vm1088 = vcmask 523264
  %v1090 = vsel %vm1088, %v1062, 0
  %v1093 = vsel %vm1088, %v1063, 0
  %1095 = vmatpush.bf16.msra.mxu0 0
  %1096 = vmatpush.bf16.msra.mxu0 0
  %1097 = vmatpush.bf16.msra.mxu0 0
  %1098 = vmatpush.bf16.msra.mxu0 0
  %1099 = vmatpush.bf16.msra.mxu0 %v1083
  %1100 = vmatpush.bf16.msra.mxu0 %v1082
  %1101 = vmatpush.bf16.msra.mxu0 %v1081
  %1102 = vmatpush.bf16.msra.mxu0 %v1080
  %1103 = vmatmul.bf16.gmra.mxu0 %v1090
  %v1104 = vpop.f32.mrf.mxu0
  %v1105 = vadd.f32 0.0, %v1104
  %v1106 = vpop.f32.mrf.mxu0
  %v1107 = vadd.f32 0.0, %v1106
  %1108 = vmatmul.bf16.gmra.mxu0 %v1093
  %v1109 = vpop.f32.mrf.mxu0
  %v1110 = vadd.f32 0.0, %v1109
  %v1111 = vpop.f32.mrf.mxu0
  %1112 = vdwg.mxu0
  %v1113 = vadd.f32 %v999, %v1105
  %v1114 = vadd.f32 %v1000, %v1107
  %v1115 = vadd.f32 %v1001, %v1110
  %v1117 = vperm.slane %v1015, 0
  %v1119 = vadd.f32 %v1113, %v1117
  %v1120 = vadd.f32 %v1114, %v1117
  %v1121 = vadd.f32 %v1115, %v1117
  %v1122 = vsel %vm114, %v1119, 0.0
  %1123 = vadd.xlane.f32.xlu0 %v1122
  %v1124 = vpop.xlane.xlu0 %1123
  %v1125 = vsel %vm114, %v1120, 0.0
  %1126 = vadd.xlane.f32.xlu0 %v1125
  %v1127 = vpop.xlane.xlu0 %1126
  %v1128 = vsel %vm922, %v1121, 0.0
  %1129 = vadd.xlane.f32.xlu0 %v1128
  %v1130 = vpop.xlane.xlu0 %1129
  %v1131 = vmul.f32 %v1124, %v932
  %v1132 = vmul.f32 %v1127, %v932
  %v1133 = vmul.f32 %v1130, %v932
  %v1134 = vsub.f32 %v1119, %v1131
  %v1135 = vsub.f32 %v1120, %v1132
  %v1136 = vsub.f32 %v1121, %v1133
  %v1137 = vmul.f32 %v1134, %v1134
  %v1138 = vmul.f32 %v1135, %v1135
  %v1139 = vmul.f32 %v1136, %v1136
  %v1140 = vsel %vm114, %v1137, 0.0
  %1141 = vadd.xlane.f32.xlu0 %v1140
  %v1142 = vpop.xlane.xlu0 %1141
  %v1143 = vsel %vm114, %v1138, 0.0
  %1144 = vadd.xlane.f32.xlu0 %v1143
  %v1145 = vpop.xlane.xlu0 %1144
  %v1146 = vsel %vm922, %v1139, 0.0
  %1147 = vadd.xlane.f32.xlu0 %v1146
  %v1148 = vpop.xlane.xlu0 %1147
  %v1149 = vmul.f32 %v1142, %v932
  %v1150 = vmul.f32 %v1145, %v932
  %v1151 = vmul.f32 %v1148, %v932
  %v1152 = vadd.f32 %v1149, 1e-05
  %v1153 = vadd.f32 %v1150, 1e-05
  %v1154 = vadd.f32 %v1151, 1e-05
  %v1155 = vrsqrt.pop %v1152
  %v1156 = vmul.f32 %v1155, %v1152
  %v1157 = vmul.f32 %v1156, %v1155
  %v1158 = vmul.f32 0.5, %v1157
  %v1159 = vsub.f32 1.5, %v1158
  %v1160 = vmul.f32 %v1155, %v1159
  %vm1161 = vweird.f32 %v1152
  %vm1162 = vweird.f32 %v1155
  %vm1163 = vmor %vm1161, %vm1162
  %v1164 = vsel %vm1163, %v1155, %v1160
  %v1165 = vrsqrt.pop %v1153
  %v1166 = vmul.f32 %v1165, %v1153
  %v1167 = vmul.f32 %v1166, %v1165
  %v1168 = vmul.f32 0.5, %v1167
  %v1169 = vsub.f32 1.5, %v1168
  %v1170 = vmul.f32 %v1165, %v1169
  %vm1171 = vweird.f32 %v1153
  %vm1172 = vweird.f32 %v1165
  %vm1173 = vmor %vm1171, %vm1172
  %v1174 = vsel %vm1173, %v1165, %v1170
  %v1175 = vrsqrt.pop %v1154
  %v1176 = vmul.f32 %v1175, %v1154
  %v1177 = vmul.f32 %v1176, %v1175
  %v1178 = vmul.f32 0.5, %v1177
  %v1179 = vsub.f32 1.5, %v1178
  %v1180 = vmul.f32 %v1175, %v1179
  %vm1181 = vweird.f32 %v1154
  %vm1182 = vweird.f32 %v1175
  %vm1183 = vmor %vm1181, %vm1182
  %v1184 = vsel %vm1183, %v1175, %v1180
  %v1185 = vmul.f32 %v1134, %v1164
  %v1186 = vmul.f32 %v1135, %v1174
  %v1187 = vmul.f32 %v1136, %v1184
  %v1189 = vperm.slane %v1016, 0
  %v1191 = vmul.f32 %v1185, %v1189
  %v1192 = vmul.f32 %v1186, %v1189
  %v1193 = vmul.f32 %v1187, %v1189
  %v1195 = vperm.slane %v1017, 0
  %v1197 = vadd.f32 %v1191, %v1195
  %v1198 = vadd.f32 %v1192, %v1195
  %v1199 = vadd.f32 %v1193, %v1195
  %v1200 = vld [vmem:[%s17] sm:$0x1]
  %v1201 = vld [vmem:[%s18] sm:$0x1]
  %v1202 = vsel %vm114, %v1197, 0.0
  %1203 = vadd.xlane.f32.xlu0 %v1202
  %v1204 = vpop.xlane.xlu0 %1203
  %v1205 = vsel %vm114, %v1198, 0.0
  %1206 = vadd.xlane.f32.xlu0 %v1205
  %v1207 = vpop.xlane.xlu0 %1206
  %v1208 = vsel %vm922, %v1199, 0.0
  %1209 = vadd.xlane.f32.xlu0 %v1208
  %v1210 = vpop.xlane.xlu0 %1209
  %v1211 = vmul.f32 %v1204, %v932
  %v1212 = vmul.f32 %v1207, %v932
  %v1213 = vmul.f32 %v1210, %v932
  %v1214 = vsub.f32 %v1197, %v1211
  %v1215 = vsub.f32 %v1198, %v1212
  %v1216 = vsub.f32 %v1199, %v1213
  %v1217 = vmul.f32 %v1214, %v1214
  %v1218 = vmul.f32 %v1215, %v1215
  %v1219 = vmul.f32 %v1216, %v1216
  %v1220 = vsel %vm114, %v1217, 0.0
  %1221 = vadd.xlane.f32.xlu0 %v1220
  %v1222 = vpop.xlane.xlu0 %1221
  %v1223 = vsel %vm114, %v1218, 0.0
  %1224 = vadd.xlane.f32.xlu0 %v1223
  %v1225 = vpop.xlane.xlu0 %1224
  %v1226 = vsel %vm922, %v1219, 0.0
  %1227 = vadd.xlane.f32.xlu0 %v1226
  %v1228 = vpop.xlane.xlu0 %1227
  %v1229 = vmul.f32 %v1222, %v932
  %v1230 = vmul.f32 %v1225, %v932
  %v1231 = vmul.f32 %v1228, %v932
  %v1232 = vadd.f32 %v1229, 1e-05
  %v1233 = vadd.f32 %v1230, 1e-05
  %v1234 = vadd.f32 %v1231, 1e-05
  %v1235 = vrsqrt.pop %v1232
  %v1236 = vmul.f32 %v1235, %v1232
  %v1237 = vmul.f32 %v1236, %v1235
  %v1238 = vmul.f32 0.5, %v1237
  %v1239 = vsub.f32 1.5, %v1238
  %v1240 = vmul.f32 %v1235, %v1239
  %vm1241 = vweird.f32 %v1232
  %vm1242 = vweird.f32 %v1235
  %vm1243 = vmor %vm1241, %vm1242
  %v1244 = vsel %vm1243, %v1235, %v1240
  %v1245 = vrsqrt.pop %v1233
  %v1246 = vmul.f32 %v1245, %v1233
  %v1247 = vmul.f32 %v1246, %v1245
  %v1248 = vmul.f32 0.5, %v1247
  %v1249 = vsub.f32 1.5, %v1248
  %v1250 = vmul.f32 %v1245, %v1249
  %vm1251 = vweird.f32 %v1233
  %vm1252 = vweird.f32 %v1245
  %vm1253 = vmor %vm1251, %vm1252
  %v1254 = vsel %vm1253, %v1245, %v1250
  %v1255 = vrsqrt.pop %v1234
  %v1256 = vmul.f32 %v1255, %v1234
  %v1257 = vmul.f32 %v1256, %v1255
  %v1258 = vmul.f32 0.5, %v1257
  %v1259 = vsub.f32 1.5, %v1258
  %v1260 = vmul.f32 %v1255, %v1259
  %vm1261 = vweird.f32 %v1234
  %vm1262 = vweird.f32 %v1255
  %vm1263 = vmor %vm1261, %vm1262
  %v1264 = vsel %vm1263, %v1255, %v1260
  %v1265 = vmul.f32 %v1214, %v1244
  %v1266 = vmul.f32 %v1215, %v1254
  %v1267 = vmul.f32 %v1216, %v1264
  %v1269 = vperm.slane %v1200, 0
  %v1271 = vmul.f32 %v1265, %v1269
  %v1272 = vmul.f32 %v1266, %v1269
  %v1273 = vmul.f32 %v1267, %v1269
  %v1275 = vperm.slane %v1201, 0
  %v1277 = vadd.f32 %v1271, %v1275
  %v1278 = vadd.f32 %v1272, %v1275
  %v1279 = vadd.f32 %v1273, %v1275
  %v1280 = vpack.c.bf16 %v1277, %v1277
  %v1281 = vpack.c.bf16 %v1278, %v1278
  %v1282 = vpack.c.bf16 %v1279, %v1279
  %1283 = vst.msk [vmem:[%s19] sm:$0xf] %vm922, %v1280
  %1284 = vst.msk [vmem:[%s19 + $0x4] sm:$0xf] %vm922, %v1281
  %vm1285 = vcmask 254976
  %1286 = vst.msk [vmem:[%s19 + $0x8] sm:$0x3] %vm1285, %v1282
  // Predicated region
  $region78: #{transformer_forward.6} parent=0 // pred_check
    _
  $region79: #{transformer_forward.6} parent=0 // pred_check_branch
    %1288 = sbr.rel (0) target = $region81
  $region80: #{transformer_forward.6} parent=0 // pred_region
    _
  $region81: #{transformer_forward.6} parent=0 // pred_fallthru
    _
  // Predicated region
  $region82: #{transformer_forward.6} parent=0 // pred_check
    _
  $region83: #{transformer_forward.6} parent=0 // pred_check_branch
    %1290 = sbr.rel (0) target = $region85
  $region84: #{transformer_forward.6} parent=0 // pred_region
    _
  $region85: #{transformer_forward.6} parent=0 // pred_fallthru
    _

// kernel: transformer_forward.5
$region0: #{transformer_forward.5}
  #allocation0 [shape = 'u32[]', space=smem, size = 0x4, offset = 0x4, fixed_abs, tag = 'smem constant byte address 0x4 - core index']
  #allocation1 [shape = 'u32[72,128]{1,0:T(1,128)}', space=vmem, size = 0x9000, scoped, tag = 'internal scratch']
  %s0 = inlined_call_operand.vmem [shape: bf16[20,32], index: 0, kind: input, shape index: {}]
  %s1 = inlined_call_operand.vmem [shape: bf16[32,32], index: 1, kind: input, shape index: {}]
  %s2 = inlined_call_operand.vmem [shape: f32[1,32], index: 2, kind: input, shape index: {}]
  %s3 = inlined_call_operand.vmem [shape: bf16[32,32], index: 3, kind: input, shape index: {}]
  %s4 = inlined_call_operand.vmem [shape: f32[1,32], index: 4, kind: input, shape index: {}]
  %s5 = inlined_call_operand.vmem [shape: bf16[32,32], index: 5, kind: input, shape index: {}]
  %s6 = inlined_call_operand.vmem [shape: f32[1,32], index: 6, kind: input, shape index: {}]
  %s7 = inlined_call_operand.vmem [shape: bf16[32,32], index: 7, kind: input, shape index: {}]
  %s8 = inlined_call_operand.vmem [shape: f32[1,32], index: 8, kind: input, shape index: {}]
  %s9 = inlined_call_operand.vmem [shape: f32[1,32], index: 9, kind: input, shape index: {}]
  %s10 = inlined_call_operand.vmem [shape: f32[1,32], index: 10, kind: input, shape index: {}]
  %s11 = inlined_call_operand.vmem [shape: bf16[32,64], index: 11, kind: input, shape index: {}]
  %s12 = inlined_call_operand.vmem [shape: f32[1,64], index: 12, kind: input, shape index: {}]
  %s13 = inlined_call_operand.vmem [shape: bf16[64,32], index: 13, kind: input, shape index: {}]
  %s14 = inlined_call_operand.vmem [shape: f32[1,32], index: 14, kind: input, shape index: {}]
  %s15 = inlined_call_operand.vmem [shape: f32[1,32], index: 15, kind: input, shape index: {}]
  %s16 = inlined_call_operand.vmem [shape: f32[1,32], index: 16, kind: input, shape index: {}]
  %s17 = inlined_call_operand.vmem [shape: bf16[20,32], index: 17, kind: output, shape index: {}]
  %s18 = sld [smem:[#allocation0]]
  $region78: #{transformer_forward.5} parent=0
    _
  %s20 = ssub.s32 1, %s18
  %s21 = scalar_select 0, %s20, %s18
  // Predicated region
  $region2: #{transformer_forward.5} parent=0 // pred_check
    _
  $region3: #{transformer_forward.5} parent=0 // pred_check_branch
    %23 = sbr.rel (0) target = $region5
  $region4: #{transformer_forward.5} parent=0 // pred_region
    _
  $region5: #{transformer_forward.5} parent=0 // pred_fallthru
    _
  // Predicated region
  $region6: #{transformer_forward.5} parent=0 // pred_check
    _
  $region7: #{transformer_forward.5} parent=0 // pred_check_branch
    %25 = sbr.rel (0) target = $region9
  $region8: #{transformer_forward.5} parent=0 // pred_region
    _
  $region9: #{transformer_forward.5} parent=0 // pred_fallthru
    _
  // Predicated region
  $region10: #{transformer_forward.5} parent=0 // pred_check
    _
  $region11: #{transformer_forward.5} parent=0 // pred_check_branch
    %27 = sbr.rel (0) target = $region13
  $region12: #{transformer_forward.5} parent=0 // pred_region
    _
  $region13: #{transformer_forward.5} parent=0 // pred_fallthru
    _
  // Predicated region
  $region14: #{transformer_forward.5} parent=0 // pred_check
    _
  $region15: #{transformer_forward.5} parent=0 // pred_check_branch
    %29 = sbr.rel (0) target = $region17
  $region16: #{transformer_forward.5} parent=0 // pred_region
    _
  $region17: #{transformer_forward.5} parent=0 // pred_fallthru
    _
  // Predicated region
  $region18: #{transformer_forward.5} parent=0 // pred_check
    _
  $region19: #{transformer_forward.5} parent=0 // pred_check_branch
    %31 = sbr.rel (0) target = $region21
  $region20: #{transformer_forward.5} parent=0 // pred_region
    _
  $region21: #{transformer_forward.5} parent=0 // pred_fallthru
    _
  // Predicated region
  $region22: #{transformer_forward.5} parent=0 // pred_check
    _
  $region23: #{transformer_forward.5} parent=0 // pred_check_branch
    %33 = sbr.rel (0) target = $region25
  $region24: #{transformer_forward.5} parent=0 // pred_region
    _
  $region25: #{transformer_forward.5} parent=0 // pred_fallthru
    _
  // Predicated region
  $region26: #{transformer_forward.5} parent=0 // pred_check
    _
  $region27: #{transformer_forward.5} parent=0 // pred_check_branch
    %35 = sbr.rel (0) target = $region29
  $region28: #{transformer_forward.5} parent=0 // pred_region
    _
  $region29: #{transformer_forward.5} parent=0 // pred_fallthru
    _
  // Predicated region
  $region30: #{transformer_forward.5} parent=0 // pred_check
    _
  $region31: #{transformer_forward.5} parent=0 // pred_check_branch
    %37 = sbr.rel (0) target = $region33
  $region32: #{transformer_forward.5} parent=0 // pred_region
    _
  $region33: #{transformer_forward.5} parent=0 // pred_fallthru
    _
  // Predicated region
  $region34: #{transformer_forward.5} parent=0 // pred_check
    _
  $region35: #{transformer_forward.5} parent=0 // pred_check_branch
    %39 = sbr.rel (0) target = $region37
  $region36: #{transformer_forward.5} parent=0 // pred_region
    _
  $region37: #{transformer_forward.5} parent=0 // pred_fallthru
    _
  // Predicated region
  $region38: #{transformer_forward.5} parent=0 // pred_check
    _
  $region39: #{transformer_forward.5} parent=0 // pred_check_branch
    %41 = sbr.rel (0) target = $region41
  $region40: #{transformer_forward.5} parent=0 // pred_region
    _
  $region41: #{transformer_forward.5} parent=0 // pred_fallthru
    _
  // Predicated region
  $region42: #{transformer_forward.5} parent=0 // pred_check
    _
  $region43: #{transformer_forward.5} parent=0 // pred_check_branch
    %43 = sbr.rel (0) target = $region45
  $region44: #{transformer_forward.5} parent=0 // pred_region
    _
  $region45: #{transformer_forward.5} parent=0 // pred_fallthru
    _
  // Predicated region
  $region46: #{transformer_forward.5} parent=0 // pred_check
    _
  $region47: #{transformer_forward.5} parent=0 // pred_check_branch
    %45 = sbr.rel (0) target = $region49
  $region48: #{transformer_forward.5} parent=0 // pred_region
    _
  $region49: #{transformer_forward.5} parent=0 // pred_fallthru
    _
  // Predicated region
  $region50: #{transformer_forward.5} parent=0 // pred_check
    _
  $region51: #{transformer_forward.5} parent=0 // pred_check_branch
    %47 = sbr.rel (0) target = $region53
  $region52: #{transformer_forward.5} parent=0 // pred_region
    _
  $region53: #{transformer_forward.5} parent=0 // pred_fallthru
    _
  // Predicated region
  $region54: #{transformer_forward.5} parent=0 // pred_check
    _
  $region55: #{transformer_forward.5} parent=0 // pred_check_branch
    %49 = sbr.rel (0) target = $region57
  $region56: #{transformer_forward.5} parent=0 // pred_region
    _
  $region57: #{transformer_forward.5} parent=0 // pred_fallthru
    _
  // Predicated region
  $region58: #{transformer_forward.5} parent=0 // pred_check
    _
  $region59: #{transformer_forward.5} parent=0 // pred_check_branch
    %51 = sbr.rel (0) target = $region61
  $region60: #{transformer_forward.5} parent=0 // pred_region
    _
  $region61: #{transformer_forward.5} parent=0 // pred_fallthru
    _
  // Predicated region
  $region62: #{transformer_forward.5} parent=0 // pred_check
    _
  $region63: #{transformer_forward.5} parent=0 // pred_check_branch
    %53 = sbr.rel (0) target = $region65
  $region64: #{transformer_forward.5} parent=0 // pred_region
    _
  $region65: #{transformer_forward.5} parent=0 // pred_fallthru
    _
  // Predicated region
  $region66: #{transformer_forward.5} parent=0 // pred_check
    _
  $region67: #{transformer_forward.5} parent=0 // pred_check_branch
    %55 = sbr.rel (0) target = $region69
  $region68: #{transformer_forward.5} parent=0 // pred_region
    _
  $region69: #{transformer_forward.5} parent=0 // pred_fallthru
    _
  %v57 = vld [vmem:[%s0] sm:$0xf]
  %v58 = vld [vmem:[%s0 + $0x4] sm:$0xf]
  %v59 = vld [vmem:[%s0 + $0x8] sm:$0x3]
  %v60 = vunpack.c.l.bf16 %v57
  %v61 = vunpack.c.l.bf16 %v58
  %v62 = vunpack.c.l.bf16 %v59
  %v63 = vld [vmem:[%s1] sm:$0xf]
  %v64 = vld [vmem:[%s1 + $0x4] sm:$0xf]
  %v65 = vld [vmem:[%s1 + $0x8] sm:$0xf]
  %v66 = vld [vmem:[%s1 + $0xc] sm:$0xf]
  %v67 = vld [vmem:[%s2] sm:$0x1]
  %v68 = vld [vmem:[%s3] sm:$0xf]
  %v69 = vld [vmem:[%s3 + $0x4] sm:$0xf]
  %v70 = vld [vmem:[%s3 + $0x8] sm:$0xf]
  %v71 = vld [vmem:[%s3 + $0xc] sm:$0xf]
  %v72 = vld [vmem:[%s4] sm:$0x1]
  %v73 = vld [vmem:[%s5] sm:$0xf]
  %v74 = vld [vmem:[%s5 + $0x4] sm:$0xf]
  %v75 = vld [vmem:[%s5 + $0x8] sm:$0xf]
  %v76 = vld [vmem:[%s5 + $0xc] sm:$0xf]
  %v77 = vld [vmem:[%s6] sm:$0x1]
  %v78 = vld [vmem:[%s7] sm:$0xf]
  %v79 = vld [vmem:[%s7 + $0x4] sm:$0xf]
  %v80 = vld [vmem:[%s7 + $0x8] sm:$0xf]
  %v81 = vld [vmem:[%s7 + $0xc] sm:$0xf]
  %v82 = vld [vmem:[%s8] sm:$0x1]
  %v83 = vld [vmem:[%s9] sm:$0x1]
  %v84 = vld [vmem:[%s10] sm:$0x1]
  %v86 = vperm.slane %v67, 0
  %v91 = vunpack.c.l.b16 %v57
  %v92 = vunpack.c.l.b16 %v58
  %v93 = vunpack.c.l.b16 %v59
  %v94 = vpack.c.b16 %v92, %v91
  %v95 = vpack.c.b16 %v93, %v93
  %v100 = vunpack.c.l.b16 %v63
  %v101 = vunpack.c.l.b16 %v64
  %v102 = vunpack.c.l.b16 %v65
  %v103 = vunpack.c.l.b16 %v66
  %v104 = vpack.c.b16 %v101, %v100
  %v105 = vpack.c.b16 %v103, %v102
  %vm108 = vcmask 261120
  %v110 = vsel %vm108, %v94, 0
  %v113 = vsel %vm108, %v95, 0
  %115 = vmatpush.bf16.msra.mxu0 0
  %116 = vmatpush.bf16.msra.mxu0 0
  %117 = vmatpush.bf16.msra.mxu0 0
  %118 = vmatpush.bf16.msra.mxu0 0
  %119 = vmatpush.bf16.msra.mxu0 0
  %120 = vmatpush.bf16.msra.mxu0 0
  %121 = vmatpush.bf16.msra.mxu0 %v105
  %122 = vmatpush.bf16.msra.mxu0 %v104
  %123 = vmatmul.bf16.gmra.mxu0 %v110
  %v124 = vpop.f32.mrf.mxu0
  %v125 = vadd.f32 %v86, %v124
  %v126 = vpop.f32.mrf.mxu0
  %v127 = vadd.f32 %v86, %v126
  %128 = vmatmul.bf16.gmra.mxu0 %v113
  %v129 = vpop.f32.mrf.mxu0
  %v130 = vadd.f32 %v86, %v129
  %v131 = vpop.f32.mrf.mxu0
  %132 = vdwg.mxu0
  %v133 = vpack.c.bf16 %v125, %v125
  %v134 = vpack.c.bf16 %v127, %v127
  %v135 = vpack.c.bf16 %v130, %v130
  %v137 = vperm.slane %v72, 0
  %v143 = vunpack.c.l.b16 %v68
  %v144 = vunpack.c.l.b16 %v69
  %v145 = vunpack.c.l.b16 %v70
  %v146 = vunpack.c.l.b16 %v71
  %v147 = vpack.c.b16 %v144, %v143
  %v148 = vpack.c.b16 %v146, %v145
  %151 = vmatpush.bf16.msra.mxu0 0
  %152 = vmatpush.bf16.msra.mxu0 0
  %153 = vmatpush.bf16.msra.mxu0 0
  %154 = vmatpush.bf16.msra.mxu0 0
  %155 = vmatpush.bf16.msra.mxu0 0
  %156 = vmatpush.bf16.msra.mxu0 0
  %157 = vmatpush.bf16.msra.mxu0 %v148
  %158 = vmatpush.bf16.msra.mxu0 %v147
  %159 = vmatmul.bf16.gmra.mxu0 %v110
  %v160 = vpop.f32.mrf.mxu0
  %v161 = vadd.f32 %v137, %v160
  %v162 = vpop.f32.mrf.mxu0
  %v163 = vadd.f32 %v137, %v162
  %164 = vmatmul.bf16.gmra.mxu0 %v113
  %v165 = vpop.f32.mrf.mxu0
  %v166 = vadd.f32 %v137, %v165
  %v167 = vpop.f32.mrf.mxu0
  %168 = vdwg.mxu0
  %v169 = vpack.c.bf16 %v161, %v161
  %v170 = vpack.c.bf16 %v163, %v163
  %v171 = vpack.c.bf16 %v166, %v166
  %v173 = vperm.slane %v77, 0
  %v179 = vunpack.c.l.b16 %v73
  %v180 = vunpack.c.l.b16 %v74
  %v181 = vunpack.c.l.b16 %v75
  %v182 = vunpack.c.l.b16 %v76
  %v183 = vpack.c.b16 %v180, %v179
  %v184 = vpack.c.b16 %v182, %v181
  %187 = vmatpush.bf16.msra.mxu0 0
  %188 = vmatpush.bf16.msra.mxu0 0
  %189 = vmatpush.bf16.msra.mxu0 0
  %190 = vmatpush.bf16.msra.mxu0 0
  %191 = vmatpush.bf16.msra.mxu0 0
  %192 = vmatpush.bf16.msra.mxu0 0
  %193 = vmatpush.bf16.msra.mxu0 %v184
  %194 = vmatpush.bf16.msra.mxu0 %v183
  %195 = vmatmul.bf16.gmra.mxu0 %v110
  %v196 = vpop.f32.mrf.mxu0
  %v197 = vadd.f32 %v173, %v196
  %v198 = vpop.f32.mrf.mxu0
  %v199 = vadd.f32 %v173, %v198
  %200 = vmatmul.bf16.gmra.mxu0 %v113
  %v201 = vpop.f32.mrf.mxu0
  %v202 = vadd.f32 %v173, %v201
  %v203 = vpop.f32.mrf.mxu0
  %204 = vdwg.mxu0
  %v205 = vpack.c.bf16 %v197, %v197
  %v206 = vpack.c.bf16 %v199, %v199
  %v207 = vpack.c.bf16 %v202, %v202
  %v210 = vunpack.c.l.b16 %v133
  %v211 = vunpack.c.l.b16 %v134
  %v212 = vpack.c.b16 %v211, %v210
  %v215 = vunpack.c.l.b16 %v169
  %v216 = vunpack.c.l.b16 %v170
  %v217 = vpack.c.b16 %v216, %v215
  %vm218 = vcmask 64512
  %v220 = vsel %vm218, %v212, 0
  %v223 = vsel %vm218, %v217, 0
  %225 = vmatpush.bf16.xpose.msra.mxu0 0
  %226 = vmatpush.bf16.xpose.msra.mxu0 0
  %227 = vmatpush.bf16.xpose.msra.mxu0 0
  %228 = vmatpush.bf16.xpose.msra.mxu0 0
  %229 = vmatpush.bf16.xpose.msra.mxu0 0
  %230 = vmatpush.bf16.xpose.msra.mxu0 0
  %231 = vmatpush.bf16.xpose.msra.mxu0 0
  %232 = vmatpush.bf16.xpose.msra.mxu0 %v223
  %233 = vmatmul.bf16.gmra.mxu0 %v220
  %v234 = vpop.f32.mrf.mxu0
  %v235 = vadd.f32 0.0, %v234
  %v236 = vpop.f32.mrf.mxu0
  %v237 = vadd.f32 0.0, %v236
  %238 = vdwg.mxu0
  %v239 = vmul.f32 %v235, 0.35355338
  %v240 = vmul.f32 %v237, 0.35355338
  %vm241 = vcmask 80896
  %v242 = vsel %vm241, %v239, -inf
  %243 = vmax.xlane.f32.xlu0 %v242
  %v244 = vpop.xlane.xlu0 %243
  %vm245 = vcmask 74752
  %v246 = vsel %vm245, %v240, -inf
  %247 = vmax.xlane.f32.xlu0 %v246
  %v248 = vpop.xlane.xlu0 %247
  %v249 = vsub.f32 %v239, %v244
  %v250 = vsub.f32 %v240, %v248
  %v251 = vmul.f32 %v249, 1.442695
  %v252 = vpow.pop %v251
  %v253 = vmul.f32 %v250, 1.442695
  %v254 = vpow.pop %v253
  %v255 = vsel %vm241, %v252, 0.0
  %256 = vadd.xlane.f32.xlu0 %v255
  %v257 = vpop.xlane.xlu0 %256
  %v258 = vsel %vm245, %v254, 0.0
  %259 = vadd.xlane.f32.xlu0 %v258
  %v260 = vpop.xlane.xlu0 %259
  %v261 = vrcp.pop %v257
  %v262 = vrcp.pop %v260
  %v263 = vmul.f32 %v252, %v261
  %v264 = vmul.f32 %v254, %v262
  %v265 = vpack.c.bf16 %v264, %v263
  %v268 = vunpack.c.l.b16 %v205
  %v269 = vunpack.c.l.b16 %v206
  %v270 = vpack.c.b16 %v269, %v268
  %v272 = vsel %vm241, %v265, 0
  %vm274 = vcmask 1044480
  %v276 = vsel %vm274, %v270, 0
  %278 = vmatpush.bf16.msra.mxu0 0
  %279 = vmatpush.bf16.msra.mxu0 0
  %280 = vmatpush.bf16.msra.mxu0 0
  %281 = vmatpush.bf16.msra.mxu0 0
  %282 = vmatpush.bf16.msra.mxu0 0
  %283 = vmatpush.bf16.msra.mxu0 0
  %284 = vmatpush.bf16.msra.mxu0 0
  %285 = vmatpush.bf16.msra.mxu0 %v276
  %286 = vmatmul.bf16.gmra.mxu0 %v272
  %v287 = vpop.f32.mrf.mxu0
  %v288 = vadd.f32 0.0, %v287
  %v289 = vpop.f32.mrf.mxu0
  %v290 = vadd.f32 0.0, %v289
  %291 = vdwg.mxu0
  %292 = vrot.lane.b32.xlu0 %v212, 120
  %v293 = vpop.permute.xlu0 %292
  %294 = vrot.lane.b32.xlu0 %v217, 120
  %v295 = vpop.permute.xlu0 %294
  %v297 = vsel %vm218, %v293, 0
  %v300 = vsel %vm218, %v295, 0
  %302 = vmatpush.bf16.xpose.msra.mxu0 0
  %303 = vmatpush.bf16.xpose.msra.mxu0 0
  %304 = vmatpush.bf16.xpose.msra.mxu0 0
  %305 = vmatpush.bf16.xpose.msra.mxu0 0
  %306 = vmatpush.bf16.xpose.msra.mxu0 0
  %307 = vmatpush.bf16.xpose.msra.mxu0 0
  %308 = vmatpush.bf16.xpose.msra.mxu0 0
  %309 = vmatpush.bf16.xpose.msra.mxu0 %v300
  %310 = vmatmul.bf16.gmra.mxu0 %v297
  %v311 = vpop.f32.mrf.mxu0
  %v312 = vadd.f32 0.0, %v311
  %v313 = vpop.f32.mrf.mxu0
  %v314 = vadd.f32 0.0, %v313
  %315 = vdwg.mxu0
  %v316 = vmul.f32 %v312, 0.35355338
  %v317 = vmul.f32 %v314, 0.35355338
  %v318 = vsel %vm241, %v316, -inf
  %319 = vmax.xlane.f32.xlu0 %v318
  %v320 = vpop.xlane.xlu0 %319
  %v321 = vsel %vm245, %v317, -inf
  %322 = vmax.xlane.f32.xlu0 %v321
  %v323 = vpop.xlane.xlu0 %322
  %v324 = vsub.f32 %v316, %v320
  %v325 = vsub.f32 %v317, %v323
  %v326 = vmul.f32 %v324, 1.442695
  %v327 = vpow.pop %v326
  %v328 = vmul.f32 %v325, 1.442695
  %v329 = vpow.pop %v328
  %v330 = vsel %vm241, %v327, 0.0
  %331 = vadd.xlane.f32.xlu0 %v330
  %v332 = vpop.xlane.xlu0 %331
  %v333 = vsel %vm245, %v329, 0.0
  %334 = vadd.xlane.f32.xlu0 %v333
  %v335 = vpop.xlane.xlu0 %334
  %v336 = vrcp.pop %v332
  %v337 = vrcp.pop %v335
  %v338 = vmul.f32 %v327, %v336
  %v339 = vmul.f32 %v329, %v337
  %v340 = vpack.c.bf16 %v339, %v338
  %341 = vrot.lane.b32.xlu0 %v270, 120
  %v342 = vpop.permute.xlu0 %341
  %v344 = vsel %vm241, %v340, 0
  %v347 = vsel %vm274, %v342, 0
  %349 = vmatpush.bf16.msra.mxu0 0
  %350 = vmatpush.bf16.msra.mxu0 0
  %351 = vmatpush.bf16.msra.mxu0 0
  %352 = vmatpush.bf16.msra.mxu0 0
  %353 = vmatpush.bf16.msra.mxu0 0
  %354 = vmatpush.bf16.msra.mxu0 0
  %355 = vmatpush.bf16.msra.mxu0 0
  %356 = vmatpush.bf16.msra.mxu0 %v347
  %357 = vmatmul.bf16.gmra.mxu0 %v344
  %v358 = vpop.f32.mrf.mxu0
  %v359 = vadd.f32 0.0, %v358
  %v360 = vpop.f32.mrf.mxu0
  %v361 = vadd.f32 0.0, %v360
  %362 = vdwg.mxu0
  %363 = vrot.lane.b32.xlu0 %v212, 112
  %v364 = vpop.permute.xlu0 %363
  %365 = vrot.lane.b32.xlu0 %v217, 112
  %v366 = vpop.permute.xlu0 %365
  %v368 = vsel %vm218, %v364, 0
  %v371 = vsel %vm218, %v366, 0
  %373 = vmatpush.bf16.xpose.msra.mxu0 0
  %374 = vmatpush.bf16.xpose.msra.mxu0 0
  %375 = vmatpush.bf16.xpose.msra.mxu0 0
  %376 = vmatpush.bf16.xpose.msra.mxu0 0
  %377 = vmatpush.bf16.xpose.msra.mxu0 0
  %378 = vmatpush.bf16.xpose.msra.mxu0 0
  %379 = vmatpush.bf16.xpose.msra.mxu0 0
  %380 = vmatpush.bf16.xpose.msra.mxu0 %v371
  %381 = vmatmul.bf16.gmra.mxu0 %v368
  %v382 = vpop.f32.mrf.mxu0
  %v383 = vadd.f32 0.0, %v382
  %v384 = vpop.f32.mrf.mxu0
  %v385 = vadd.f32 0.0, %v384
  %386 = vdwg.mxu0
  %v387 = vmul.f32 %v383, 0.35355338
  %v388 = vmul.f32 %v385, 0.35355338
  %v389 = vsel %vm241, %v387, -inf
  %390 = vmax.xlane.f32.xlu0 %v389
  %v391 = vpop.xlane.xlu0 %390
  %v392 = vsel %vm245, %v388, -inf
  %393 = vmax.xlane.f32.xlu0 %v392
  %v394 = vpop.xlane.xlu0 %393
  %v395 = vsub.f32 %v387, %v391
  %v396 = vsub.f32 %v388, %v394
  %v397 = vmul.f32 %v395, 1.442695
  %v398 = vpow.pop %v397
  %v399 = vmul.f32 %v396, 1.442695
  %v400 = vpow.pop %v399
  %v401 = vsel %vm241, %v398, 0.0
  %402 = vadd.xlane.f32.xlu0 %v401
  %v403 = vpop.xlane.xlu0 %402
  %v404 = vsel %vm245, %v400, 0.0
  %405 = vadd.xlane.f32.xlu0 %v404
  %v406 = vpop.xlane.xlu0 %405
  %v407 = vrcp.pop %v403
  %v408 = vrcp.pop %v406
  %v409 = vmul.f32 %v398, %v407
  %v410 = vmul.f32 %v400, %v408
  %v411 = vpack.c.bf16 %v410, %v409
  %412 = vrot.lane.b32.xlu0 %v270, 112
  %v413 = vpop.permute.xlu0 %412
  %v415 = vsel %vm241, %v411, 0
  %v418 = vsel %vm274, %v413, 0
  %420 = vmatpush.bf16.msra.mxu0 0
  %421 = vmatpush.bf16.msra.mxu0 0
  %422 = vmatpush.bf16.msra.mxu0 0
  %423 = vmatpush.bf16.msra.mxu0 0
  %424 = vmatpush.bf16.msra.mxu0 0
  %425 = vmatpush.bf16.msra.mxu0 0
  %426 = vmatpush.bf16.msra.mxu0 0
  %427 = vmatpush.bf16.msra.mxu0 %v418
  %428 = vmatmul.bf16.gmra.mxu0 %v415
  %v429 = vpop.f32.mrf.mxu0
  %v430 = vadd.f32 0.0, %v429
  %v431 = vpop.f32.mrf.mxu0
  %v432 = vadd.f32 0.0, %v431
  %433 = vdwg.mxu0
  %434 = vrot.lane.b32.xlu0 %v212, 104
  %v435 = vpop.permute.xlu0 %434
  %436 = vrot.lane.b32.xlu0 %v217, 104
  %v437 = vpop.permute.xlu0 %436
  %v439 = vsel %vm218, %v435, 0
  %v442 = vsel %vm218, %v437, 0
  %444 = vmatpush.bf16.xpose.msra.mxu0 0
  %445 = vmatpush.bf16.xpose.msra.mxu0 0
  %446 = vmatpush.bf16.xpose.msra.mxu0 0
  %447 = vmatpush.bf16.xpose.msra.mxu0 0
  %448 = vmatpush.bf16.xpose.msra.mxu0 0
  %449 = vmatpush.bf16.xpose.msra.mxu0 0
  %450 = vmatpush.bf16.xpose.msra.mxu0 0
  %451 = vmatpush.bf16.xpose.msra.mxu0 %v442
  %452 = vmatmul.bf16.gmra.mxu0 %v439
  %v453 = vpop.f32.mrf.mxu0
  %v454 = vadd.f32 0.0, %v453
  %v455 = vpop.f32.mrf.mxu0
  %v456 = vadd.f32 0.0, %v455
  %457 = vdwg.mxu0
  %v458 = vmul.f32 %v454, 0.35355338
  %v459 = vmul.f32 %v456, 0.35355338
  %v460 = vsel %vm241, %v458, -inf
  %461 = vmax.xlane.f32.xlu0 %v460
  %v462 = vpop.xlane.xlu0 %461
  %v463 = vsel %vm245, %v459, -inf
  %464 = vmax.xlane.f32.xlu0 %v463
  %v465 = vpop.xlane.xlu0 %464
  %v466 = vsub.f32 %v458, %v462
  %v467 = vsub.f32 %v459, %v465
  %v468 = vmul.f32 %v466, 1.442695
  %v469 = vpow.pop %v468
  %v470 = vmul.f32 %v467, 1.442695
  %v471 = vpow.pop %v470
  %v472 = vsel %vm241, %v469, 0.0
  %473 = vadd.xlane.f32.xlu0 %v472
  %v474 = vpop.xlane.xlu0 %473
  %v475 = vsel %vm245, %v471, 0.0
  %476 = vadd.xlane.f32.xlu0 %v475
  %v477 = vpop.xlane.xlu0 %476
  %v478 = vrcp.pop %v474
  %v479 = vrcp.pop %v477
  %v480 = vmul.f32 %v469, %v478
  %v481 = vmul.f32 %v471, %v479
  %v482 = vpack.c.bf16 %v481, %v480
  %483 = vrot.lane.b32.xlu0 %v270, 104
  %v484 = vpop.permute.xlu0 %483
  %v486 = vsel %vm241, %v482, 0
  %v489 = vsel %vm274, %v484, 0
  %491 = vmatpush.bf16.msra.mxu0 0
  %492 = vmatpush.bf16.msra.mxu0 0
  %493 = vmatpush.bf16.msra.mxu0 0
  %494 = vmatpush.bf16.msra.mxu0 0
  %495 = vmatpush.bf16.msra.mxu0 0
  %496 = vmatpush.bf16.msra.mxu0 0
  %497 = vmatpush.bf16.msra.mxu0 0
  %498 = vmatpush.bf16.msra.mxu0 %v489
  %499 = vmatmul.bf16.gmra.mxu0 %v486
  %v500 = vpop.f32.mrf.mxu0
  %v501 = vadd.f32 0.0, %v500
  %v502 = vpop.f32.mrf.mxu0
  %v503 = vadd.f32 0.0, %v502
  %504 = vdwg.mxu0
  %507 = vrot.lane.b32.xlu0 %v359, 8
  %v508 = vpop.permute.xlu0 %507
  %509 = vrot.lane.b32.xlu0 %v361, 8
  %v510 = vpop.permute.xlu0 %509
  %515 = vrot.lane.b32.xlu0 %v430, 16
  %v516 = vpop.permute.xlu0 %515
  %517 = vrot.lane.b32.xlu0 %v432, 16
  %v518 = vpop.permute.xlu0 %517
  %523 = vrot.lane.b32.xlu0 %v501, 24
  %v524 = vpop.permute.xlu0 %523
  %525 = vrot.lane.b32.xlu0 %v503, 24
  %v526 = vpop.permute.xlu0 %525
  %v529 = vsel %vm218, %v288, %v508
  %v530 = vsel %vm218, %v290, %v510
  %vm531 = vcmask 130048
  %v532 = vsel %vm531, %v529, %v516
  %v533 = vsel %vm531, %v530, %v518
  %vm534 = vcmask 195584
  %v535 = vsel %vm534, %v532, %v524
  %v536 = vsel %vm534, %v533, %v526
  %v538 = vunpack.c.l.b16 %v135
  %v539 = vpack.c.b16 %v538, %v211
  %v540 = vrot.slane %v539, 1
  %v542 = vunpack.c.l.b16 %v171
  %v543 = vpack.c.b16 %v542, %v216
  %v544 = vrot.slane %v543, 1
  %v546 = vsel %vm218, %v540, 0
  %v549 = vsel %vm218, %v544, 0
  %551 = vmatpush.bf16.xpose.msra.mxu0 0
  %552 = vmatpush.bf16.xpose.msra.mxu0 0
  %553 = vmatpush.bf16.xpose.msra.mxu0 0
  %554 = vmatpush.bf16.xpose.msra.mxu0 0
  %555 = vmatpush.bf16.xpose.msra.mxu0 0
  %556 = vmatpush.bf16.xpose.msra.mxu0 0
  %557 = vmatpush.bf16.xpose.msra.mxu0 0
  %558 = vmatpush.bf16.xpose.msra.mxu0 %v549
  %559 = vmatmul.bf16.gmra.mxu0 %v546
  %v560 = vpop.f32.mrf.mxu0
  %v561 = vadd.f32 0.0, %v560
  %v562 = vpop.f32.mrf.mxu0
  %v563 = vadd.f32 0.0, %v562
  %564 = vdwg.mxu0
  %v565 = vmul.f32 %v561, 0.35355338
  %v566 = vmul.f32 %v563, 0.35355338
  %v567 = vsel %vm241, %v565, -inf
  %568 = vmax.xlane.f32.xlu0 %v567
  %v569 = vpop.xlane.xlu0 %568
  %v570 = vsel %vm245, %v566, -inf
  %571 = vmax.xlane.f32.xlu0 %v570
  %v572 = vpop.xlane.xlu0 %571
  %v573 = vsub.f32 %v565, %v569
  %v574 = vsub.f32 %v566, %v572
  %v575 = vmul.f32 %v573, 1.442695
  %v576 = vpow.pop %v575
  %v577 = vmul.f32 %v574, 1.442695
  %v578 = vpow.pop %v577
  %v579 = vsel %vm241, %v576, 0.0
  %580 = vadd.xlane.f32.xlu0 %v579
  %v581 = vpop.xlane.xlu0 %580
  %v582 = vsel %vm245, %v578, 0.0
  %583 = vadd.xlane.f32.xlu0 %v582
  %v584 = vpop.xlane.xlu0 %583
  %v585 = vrcp.pop %v581
  %v586 = vrcp.pop %v584
  %v587 = vmul.f32 %v576, %v585
  %v588 = vmul.f32 %v578, %v586
  %v589 = vpack.c.bf16 %v588, %v587
  %v591 = vunpack.c.l.b16 %v207
  %v592 = vpack.c.b16 %v591, %v269
  %v593 = vrot.slane %v592, 1
  %v595 = vsel %vm241, %v589, 0
  %v598 = vsel %vm274, %v593, 0
  %600 = vmatpush.bf16.msra.mxu0 0
  %601 = vmatpush.bf16.msra.mxu0 0
  %602 = vmatpush.bf16.msra.mxu0 0
  %603 = vmatpush.bf16.msra.mxu0 0
  %604 = vmatpush.bf16.msra.mxu0 0
  %605 = vmatpush.bf16.msra.mxu0 0
  %606 = vmatpush.bf16.msra.mxu0 0
  %607 = vmatpush.bf16.msra.mxu0 %v598
  %608 = vmatmul.bf16.gmra.mxu0 %v595
  %v609 = vpop.f32.mrf.mxu0
  %v610 = vadd.f32 0.0, %v609
  %v611 = vpop.f32.mrf.mxu0
  %v612 = vadd.f32 0.0, %v611
  %613 = vdwg.mxu0
  %614 = vrot.lane.b32.xlu0 %v540, 120
  %v615 = vpop.permute.xlu0 %614
  %616 = vrot.lane.b32.xlu0 %v544, 120
  %v617 = vpop.permute.xlu0 %616
  %v619 = vsel %vm218, %v615, 0
  %v622 = vsel %vm218, %v617, 0
  %624 = vmatpush.bf16.xpose.msra.mxu0 0
  %625 = vmatpush.bf16.xpose.msra.mxu0 0
  %626 = vmatpush.bf16.xpose.msra.mxu0 0
  %627 = vmatpush.bf16.xpose.msra.mxu0 0
  %628 = vmatpush.bf16.xpose.msra.mxu0 0
  %629 = vmatpush.bf16.xpose.msra.mxu0 0
  %630 = vmatpush.bf16.xpose.msra.mxu0 0
  %631 = vmatpush.bf16.xpose.msra.mxu0 %v622
  %632 = vmatmul.bf16.gmra.mxu0 %v619
  %v633 = vpop.f32.mrf.mxu0
  %v634 = vadd.f32 0.0, %v633
  %v635 = vpop.f32.mrf.mxu0
  %v636 = vadd.f32 0.0, %v635
  %637 = vdwg.mxu0
  %v638 = vmul.f32 %v634, 0.35355338
  %v639 = vmul.f32 %v636, 0.35355338
  %v640 = vsel %vm241, %v638, -inf
  %641 = vmax.xlane.f32.xlu0 %v640
  %v642 = vpop.xlane.xlu0 %641
  %v643 = vsel %vm245, %v639, -inf
  %644 = vmax.xlane.f32.xlu0 %v643
  %v645 = vpop.xlane.xlu0 %644
  %v646 = vsub.f32 %v638, %v642
  %v647 = vsub.f32 %v639, %v645
  %v648 = vmul.f32 %v646, 1.442695
  %v649 = vpow.pop %v648
  %v650 = vmul.f32 %v647, 1.442695
  %v651 = vpow.pop %v650
  %v652 = vsel %vm241, %v649, 0.0
  %653 = vadd.xlane.f32.xlu0 %v652
  %v654 = vpop.xlane.xlu0 %653
  %v655 = vsel %vm245, %v651, 0.0
  %656 = vadd.xlane.f32.xlu0 %v655
  %v657 = vpop.xlane.xlu0 %656
  %v658 = vrcp.pop %v654
  %v659 = vrcp.pop %v657
  %v660 = vmul.f32 %v649, %v658
  %v661 = vmul.f32 %v651, %v659
  %v662 = vpack.c.bf16 %v661, %v660
  %663 = vrot.lane.b32.xlu0 %v593, 120
  %v664 = vpop.permute.xlu0 %663
  %v666 = vsel %vm241, %v662, 0
  %v669 = vsel %vm274, %v664, 0
  %671 = vmatpush.bf16.msra.mxu0 0
  %672 = vmatpush.bf16.msra.mxu0 0
  %673 = vmatpush.bf16.msra.mxu0 0
  %674 = vmatpush.bf16.msra.mxu0 0
  %675 = vmatpush.bf16.msra.mxu0 0
  %676 = vmatpush.bf16.msra.mxu0 0
  %677 = vmatpush.bf16.msra.mxu0 0
  %678 = vmatpush.bf16.msra.mxu0 %v669
  %679 = vmatmul.bf16.gmra.mxu0 %v666
  %v680 = vpop.f32.mrf.mxu0
  %v681 = vadd.f32 0.0, %v680
  %v682 = vpop.f32.mrf.mxu0
  %v683 = vadd.f32 0.0, %v682
  %684 = vdwg.mxu0
  %685 = vrot.lane.b32.xlu0 %v540, 112
  %v686 = vpop.permute.xlu0 %685
  %687 = vrot.lane.b32.xlu0 %v544, 112
  %v688 = vpop.permute.xlu0 %687
  %v690 = vsel %vm218, %v686, 0
  %v693 = vsel %vm218, %v688, 0
  %695 = vmatpush.bf16.xpose.msra.mxu0 0
  %696 = vmatpush.bf16.xpose.msra.mxu0 0
  %697 = vmatpush.bf16.xpose.msra.mxu0 0
  %698 = vmatpush.bf16.xpose.msra.mxu0 0
  %699 = vmatpush.bf16.xpose.msra.mxu0 0
  %700 = vmatpush.bf16.xpose.msra.mxu0 0
  %701 = vmatpush.bf16.xpose.msra.mxu0 0
  %702 = vmatpush.bf16.xpose.msra.mxu0 %v693
  %703 = vmatmul.bf16.gmra.mxu0 %v690
  %v704 = vpop.f32.mrf.mxu0
  %v705 = vadd.f32 0.0, %v704
  %v706 = vpop.f32.mrf.mxu0
  %v707 = vadd.f32 0.0, %v706
  %708 = vdwg.mxu0
  %v709 = vmul.f32 %v705, 0.35355338
  %v710 = vmul.f32 %v707, 0.35355338
  %v711 = vsel %vm241, %v709, -inf
  %712 = vmax.xlane.f32.xlu0 %v711
  %v713 = vpop.xlane.xlu0 %712
  %v714 = vsel %vm245, %v710, -inf
  %715 = vmax.xlane.f32.xlu0 %v714
  %v716 = vpop.xlane.xlu0 %715
  %v717 = vsub.f32 %v709, %v713
  %v718 = vsub.f32 %v710, %v716
  %v719 = vmul.f32 %v717, 1.442695
  %v720 = vpow.pop %v719
  %v721 = vmul.f32 %v718, 1.442695
  %v722 = vpow.pop %v721
  %v723 = vsel %vm241, %v720, 0.0
  %724 = vadd.xlane.f32.xlu0 %v723
  %v725 = vpop.xlane.xlu0 %724
  %v726 = vsel %vm245, %v722, 0.0
  %727 = vadd.xlane.f32.xlu0 %v726
  %v728 = vpop.xlane.xlu0 %727
  %v729 = vrcp.pop %v725
  %v730 = vrcp.pop %v728
  %v731 = vmul.f32 %v720, %v729
  %v732 = vmul.f32 %v722, %v730
  %v733 = vpack.c.bf16 %v732, %v731
  %734 = vrot.lane.b32.xlu0 %v593, 112
  %v735 = vpop.permute.xlu0 %734
  %v737 = vsel %vm241, %v733, 0
  %v740 = vsel %vm274, %v735, 0
  %742 = vmatpush.bf16.msra.mxu0 0
  %743 = vmatpush.bf16.msra.mxu0 0
  %744 = vmatpush.bf16.msra.mxu0 0
  %745 = vmatpush.bf16.msra.mxu0 0
  %746 = vmatpush.bf16.msra.mxu0 0
  %747 = vmatpush.bf16.msra.mxu0 0
  %748 = vmatpush.bf16.msra.mxu0 0
  %749 = vmatpush.bf16.msra.mxu0 %v740
  %750 = vmatmul.bf16.gmra.mxu0 %v737
  %v751 = vpop.f32.mrf.mxu0
  %v752 = vadd.f32 0.0, %v751
  %v753 = vpop.f32.mrf.mxu0
  %v754 = vadd.f32 0.0, %v753
  %755 = vdwg.mxu0
  %756 = vrot.lane.b32.xlu0 %v540, 104
  %v757 = vpop.permute.xlu0 %756
  %758 = vrot.lane.b32.xlu0 %v544, 104
  %v759 = vpop.permute.xlu0 %758
  %v761 = vsel %vm218, %v757, 0
  %v764 = vsel %vm218, %v759, 0
  %766 = vmatpush.bf16.xpose.msra.mxu0 0
  %767 = vmatpush.bf16.xpose.msra.mxu0 0
  %768 = vmatpush.bf16.xpose.msra.mxu0 0
  %769 = vmatpush.bf16.xpose.msra.mxu0 0
  %770 = vmatpush.bf16.xpose.msra.mxu0 0
  %771 = vmatpush.bf16.xpose.msra.mxu0 0
  %772 = vmatpush.bf16.xpose.msra.mxu0 0
  %773 = vmatpush.bf16.xpose.msra.mxu0 %v764
  %774 = vmatmul.bf16.gmra.mxu0 %v761
  %v775 = vpop.f32.mrf.mxu0
  %v776 = vadd.f32 0.0, %v775
  %v777 = vpop.f32.mrf.mxu0
  %v778 = vadd.f32 0.0, %v777
  %779 = vdwg.mxu0
  %v780 = vmul.f32 %v776, 0.35355338
  %v781 = vmul.f32 %v778, 0.35355338
  %v782 = vsel %vm241, %v780, -inf
  %783 = vmax.xlane.f32.xlu0 %v782
  %v784 = vpop.xlane.xlu0 %783
  %v785 = vsel %vm245, %v781, -inf
  %786 = vmax.xlane.f32.xlu0 %v785
  %v787 = vpop.xlane.xlu0 %786
  %v788 = vsub.f32 %v780, %v784
  %v789 = vsub.f32 %v781, %v787
  %v790 = vmul.f32 %v788, 1.442695
  %v791 = vpow.pop %v790
  %v792 = vmul.f32 %v789, 1.442695
  %v793 = vpow.pop %v792
  %v794 = vsel %vm241, %v791, 0.0
  %795 = vadd.xlane.f32.xlu0 %v794
  %v796 = vpop.xlane.xlu0 %795
  %v797 = vsel %vm245, %v793, 0.0
  %798 = vadd.xlane.f32.xlu0 %v797
  %v799 = vpop.xlane.xlu0 %798
  %v800 = vrcp.pop %v796
  %v801 = vrcp.pop %v799
  %v802 = vmul.f32 %v791, %v800
  %v803 = vmul.f32 %v793, %v801
  %v804 = vpack.c.bf16 %v803, %v802
  %805 = vrot.lane.b32.xlu0 %v593, 104
  %v806 = vpop.permute.xlu0 %805
  %v808 = vsel %vm241, %v804, 0
  %v811 = vsel %vm274, %v806, 0
  %813 = vmatpush.bf16.msra.mxu0 0
  %814 = vmatpush.bf16.msra.mxu0 0
  %815 = vmatpush.bf16.msra.mxu0 0
  %816 = vmatpush.bf16.msra.mxu0 0
  %817 = vmatpush.bf16.msra.mxu0 0
  %818 = vmatpush.bf16.msra.mxu0 0
  %819 = vmatpush.bf16.msra.mxu0 0
  %820 = vmatpush.bf16.msra.mxu0 %v811
  %821 = vmatmul.bf16.gmra.mxu0 %v808
  %v822 = vpop.f32.mrf.mxu0
  %v823 = vadd.f32 0.0, %v822
  %v824 = vpop.f32.mrf.mxu0
  %v825 = vadd.f32 0.0, %v824
  %826 = vdwg.mxu0
  %829 = vrot.lane.b32.xlu0 %v681, 8
  %v830 = vpop.permute.xlu0 %829
  %831 = vrot.lane.b32.xlu0 %v683, 8
  %v832 = vpop.permute.xlu0 %831
  %837 = vrot.lane.b32.xlu0 %v752, 16
  %v838 = vpop.permute.xlu0 %837
  %839 = vrot.lane.b32.xlu0 %v754, 16
  %v840 = vpop.permute.xlu0 %839
  %845 = vrot.lane.b32.xlu0 %v823, 24
  %v846 = vpop.permute.xlu0 %845
  %847 = vrot.lane.b32.xlu0 %v825, 24
  %v848 = vpop.permute.xlu0 %847
  %v851 = vsel %vm218, %v610, %v830
  %v852 = vsel %vm218, %v612, %v832
  %v853 = vsel %vm531, %v851, %v838
  %v854 = vsel %vm531, %v852, %v840
  %v855 = vsel %vm534, %v853, %v846
  %v856 = vsel %vm534, %v854, %v848
  %vm859 = vcmask 1041408
  %v860 = vrot.slane %v855, 6
  %v861 = vrot.slane %v856, 6
  %v862 = vsel %vm859, %v860, %v861
  %v865 = vsel %vm859, %v536, %v860
  %v866 = vpack.c.bf16 %v865, %v535
  %v867 = vpack.c.bf16 %v862, %v862
  %v869 = vperm.slane %v82, 0
  %v875 = vunpack.c.l.b16 %v78
  %v876 = vunpack.c.l.b16 %v79
  %v877 = vunpack.c.l.b16 %v80
  %v878 = vunpack.c.l.b16 %v81
  %v879 = vpack.c.b16 %v876, %v875
  %v880 = vpack.c.b16 %v878, %v877
  %v884 = vsel %vm108, %v866, 0
  %v887 = vsel %vm108, %v867, 0
  %889 = vmatpush.bf16.msra.mxu0 0
  %890 = vmatpush.bf16.msra.mxu0 0
  %891 = vmatpush.bf16.msra.mxu0 0
  %892 = vmatpush.bf16.msra.mxu0 0
  %893 = vmatpush.bf16.msra.mxu0 0
  %894 = vmatpush.bf16.msra.mxu0 0
  %895 = vmatpush.bf16.msra.mxu0 %v880
  %896 = vmatpush.bf16.msra.mxu0 %v879
  %897 = vmatmul.bf16.gmra.mxu0 %v884
  %v898 = vpop.f32.mrf.mxu0
  %v899 = vadd.f32 %v869, %v898
  %v900 = vpop.f32.mrf.mxu0
  %v901 = vadd.f32 %v869, %v900
  %902 = vmatmul.bf16.gmra.mxu0 %v887
  %v903 = vpop.f32.mrf.mxu0
  %v904 = vadd.f32 %v869, %v903
  %v905 = vpop.f32.mrf.mxu0
  %906 = vdwg.mxu0
  %v907 = vadd.f32 %v60, %v899
  %v908 = vadd.f32 %v61, %v901
  %v909 = vadd.f32 %v62, %v904
  %v910 = vsel %vm108, %v907, 0.0
  %911 = vadd.xlane.f32.xlu0 %v910
  %v912 = vpop.xlane.xlu0 %911
  %v913 = vsel %vm108, %v908, 0.0
  %914 = vadd.xlane.f32.xlu0 %v913
  %v915 = vpop.xlane.xlu0 %914
  %vm916 = vcmask 257024
  %v917 = vsel %vm916, %v909, 0.0
  %918 = vadd.xlane.f32.xlu0 %v917
  %v919 = vpop.xlane.xlu0 %918
  %v920 = vrcp.pop 32.0
  %v921 = vmul.f32 32.0, %v920
  %v922 = vsub.f32 1.0, %v921
  %v923 = vmul.f32 %v920, %v922
  %v924 = vadd.f32 %v920, %v923
  %vm925 = vweird.f32 %v920
  %v926 = vsel %vm925, %v920, %v924
  %v927 = vmul.f32 %v912, %v926
  %v928 = vmul.f32 %v915, %v926
  %v929 = vmul.f32 %v919, %v926
  %v930 = vsub.f32 %v907, %v927
  %v931 = vsub.f32 %v908, %v928
  %v932 = vsub.f32 %v909, %v929
  %v933 = vmul.f32 %v930, %v930
  %v934 = vmul.f32 %v931, %v931
  %v935 = vmul.f32 %v932, %v932
  %v936 = vsel %vm108, %v933, 0.0
  %937 = vadd.xlane.f32.xlu0 %v936
  %v938 = vpop.xlane.xlu0 %937
  %v939 = vsel %vm108, %v934, 0.0
  %940 = vadd.xlane.f32.xlu0 %v939
  %v941 = vpop.xlane.xlu0 %940
  %v942 = vsel %vm916, %v935, 0.0
  %943 = vadd.xlane.f32.xlu0 %v942
  %v944 = vpop.xlane.xlu0 %943
  %v945 = vmul.f32 %v938, %v926
  %v946 = vmul.f32 %v941, %v926
  %v947 = vmul.f32 %v944, %v926
  %v948 = vadd.f32 %v945, 1e-05
  %v949 = vadd.f32 %v946, 1e-05
  %v950 = vadd.f32 %v947, 1e-05
  %v951 = vrsqrt.pop %v948
  %v952 = vmul.f32 %v951, %v948
  %v953 = vmul.f32 %v952, %v951
  %v954 = vmul.f32 0.5, %v953
  %v955 = vsub.f32 1.5, %v954
  %v956 = vmul.f32 %v951, %v955
  %vm957 = vweird.f32 %v948
  %vm958 = vweird.f32 %v951
  %vm959 = vmor %vm957, %vm958
  %v960 = vsel %vm959, %v951, %v956
  %v961 = vrsqrt.pop %v949
  %v962 = vmul.f32 %v961, %v949
  %v963 = vmul.f32 %v962, %v961
  %v964 = vmul.f32 0.5, %v963
  %v965 = vsub.f32 1.5, %v964
  %v966 = vmul.f32 %v961, %v965
  %vm967 = vweird.f32 %v949
  %vm968 = vweird.f32 %v961
  %vm969 = vmor %vm967, %vm968
  %v970 = vsel %vm969, %v961, %v966
  %v971 = vrsqrt.pop %v950
  %v972 = vmul.f32 %v971, %v950
  %v973 = vmul.f32 %v972, %v971
  %v974 = vmul.f32 0.5, %v973
  %v975 = vsub.f32 1.5, %v974
  %v976 = vmul.f32 %v971, %v975
  %vm977 = vweird.f32 %v950
  %vm978 = vweird.f32 %v971
  %vm979 = vmor %vm977, %vm978
  %v980 = vsel %vm979, %v971, %v976
  %v981 = vmul.f32 %v930, %v960
  %v982 = vmul.f32 %v931, %v970
  %v983 = vmul.f32 %v932, %v980
  %v985 = vperm.slane %v83, 0
  %v987 = vmul.f32 %v981, %v985
  %v988 = vmul.f32 %v982, %v985
  %v989 = vmul.f32 %v983, %v985
  %v991 = vperm.slane %v84, 0
  %v993 = vadd.f32 %v987, %v991
  %v994 = vadd.f32 %v988, %v991
  %v995 = vadd.f32 %v989, %v991
  %v996 = vld [vmem:[%s11] sm:$0xf]
  %v997 = vld [vmem:[%s11 + $0x4] sm:$0xf]
  %v998 = vld [vmem:[%s11 + $0x8] sm:$0xf]
  %v999 = vld [vmem:[%s11 + $0xc] sm:$0xf]
  %v1000 = vld [vmem:[%s12] sm:$0x1]
  %v1001 = vld [vmem:[%s13] sm:$0xf]
  %v1002 = vld [vmem:[%s13 + $0x4] sm:$0xf]
  %v1003 = vld [vmem:[%s13 + $0x8] sm:$0xf]
  %v1004 = vld [vmem:[%s13 + $0xc] sm:$0xf]
  %v1005 = vld [vmem:[%s13 + $0x10] sm:$0xf]
  %v1006 = vld [vmem:[%s13 + $0x14] sm:$0xf]
  %v1007 = vld [vmem:[%s13 + $0x18] sm:$0xf]
  %v1008 = vld [vmem:[%s13 + $0x1c] sm:$0xf]
  %v1009 = vld [vmem:[%s14] sm:$0x1]
  %v1010 = vld [vmem:[%s15] sm:$0x1]
  %v1011 = vld [vmem:[%s16] sm:$0x1]
  %v1012 = vpack.c.bf16 %v994, %v993
  %v1013 = vpack.c.bf16 %v995, %v995
  %v1015 = vperm.slane %v1000, 0
  %v1021 = vunpack.c.l.b16 %v996
  %v1022 = vunpack.c.l.b16 %v997
  %v1023 = vunpack.c.l.b16 %v998
  %v1024 = vunpack.c.l.b16 %v999
  %v1025 = vpack.c.b16 %v1022, %v1021
  %v1026 = vpack.c.b16 %v1024, %v1023
  %v1030 = vsel %vm108, %v1012, 0
  %v1033 = vsel %vm108, %v1013, 0
  %1035 = vmatpush.bf16.msra.mxu0 0
  %1036 = vmatpush.bf16.msra.mxu0 0
  %1037 = vmatpush.bf16.msra.mxu0 0
  %1038 = vmatpush.bf16.msra.mxu0 0
  %1039 = vmatpush.bf16.msra.mxu0 0
  %1040 = vmatpush.bf16.msra.mxu0 0
  %1041 = vmatpush.bf16.msra.mxu0 %v1026
  %1042 = vmatpush.bf16.msra.mxu0 %v1025
  %1043 = vmatmul.bf16.gmra.mxu0 %v1030
  %v1044 = vpop.f32.mrf.mxu0
  %v1045 = vadd.f32 %v1015, %v1044
  %v1046 = vpop.f32.mrf.mxu0
  %v1047 = vadd.f32 %v1015, %v1046
  %1048 = vmatmul.bf16.gmra.mxu0 %v1033
  %v1049 = vpop.f32.mrf.mxu0
  %v1050 = vadd.f32 %v1015, %v1049
  %v1051 = vpop.f32.mrf.mxu0
  %1052 = vdwg.mxu0
  %v1053 = vmax.f32 %v1045, 0.0
  %v1054 = vmax.f32 %v1047, 0.0
  %v1055 = vmax.f32 %v1050, 0.0
  %v1056 = vpack.c.bf16 %v1054, %v1053
  %v1057 = vpack.c.bf16 %v1055, %v1055
  %v1066 = vunpack.c.l.b16 %v1001
  %v1067 = vunpack.c.l.b16 %v1002
  %v1068 = vunpack.c.l.b16 %v1003
  %v1069 = vunpack.c.l.b16 %v1004
  %v1070 = vunpack.c.l.b16 %v1005
  %v1071 = vunpack.c.l.b16 %v1006
  %v1072 = vunpack.c.l.b16 %v1007
  %v1073 = vunpack.c.l.b16 %v1008
  %v1074 = vpack.c.b16 %v1067, %v1066
  %v1075 = vpack.c.b16 %v1069, %v1068
  %v1076 = vpack.c.b16 %v1071, %v1070
  %v1077 = vpack.c.b16 %v1073, %v1072
  %vm1082 = vcmask 523264
  %v1084 = vsel %vm1082, %v1056, 0
  %v1087 = vsel %vm1082, %v1057, 0
  %1089 = vmatpush.bf16.msra.mxu0 0
  %1090 = vmatpush.bf16.msra.mxu0 0
  %1091 = vmatpush.bf16.msra.mxu0 0
  %1092 = vmatpush.bf16.msra.mxu0 0
  %1093 = vmatpush.bf16.msra.mxu0 %v1077
  %1094 = vmatpush.bf16.msra.mxu0 %v1076
  %1095 = vmatpush.bf16.msra.mxu0 %v1075
  %1096 = vmatpush.bf16.msra.mxu0 %v1074
  %1097 = vmatmul.bf16.gmra.mxu0 %v1084
  %v1098 = vpop.f32.mrf.mxu0
  %v1099 = vadd.f32 0.0, %v1098
  %v1100 = vpop.f32.mrf.mxu0
  %v1101 = vadd.f32 0.0, %v1100
  %1102 = vmatmul.bf16.gmra.mxu0 %v1087
  %v1103 = vpop.f32.mrf.mxu0
  %v1104 = vadd.f32 0.0, %v1103
  %v1105 = vpop.f32.mrf.mxu0
  %1106 = vdwg.mxu0
  %v1107 = vadd.f32 %v993, %v1099
  %v1108 = vadd.f32 %v994, %v1101
  %v1109 = vadd.f32 %v995, %v1104
  %v1111 = vperm.slane %v1009, 0
  %v1113 = vadd.f32 %v1107, %v1111
  %v1114 = vadd.f32 %v1108, %v1111
  %v1115 = vadd.f32 %v1109, %v1111
  %v1116 = vsel %vm108, %v1113, 0.0
  %1117 = vadd.xlane.f32.xlu0 %v1116
  %v1118 = vpop.xlane.xlu0 %1117
  %v1119 = vsel %vm108, %v1114, 0.0
  %1120 = vadd.xlane.f32.xlu0 %v1119
  %v1121 = vpop.xlane.xlu0 %1120
  %v1122 = vsel %vm916, %v1115, 0.0
  %1123 = vadd.xlane.f32.xlu0 %v1122
  %v1124 = vpop.xlane.xlu0 %1123
  %v1125 = vmul.f32 %v1118, %v926
  %v1126 = vmul.f32 %v1121, %v926
  %v1127 = vmul.f32 %v1124, %v926
  %v1128 = vsub.f32 %v1113, %v1125
  %v1129 = vsub.f32 %v1114, %v1126
  %v1130 = vsub.f32 %v1115, %v1127
  %v1131 = vmul.f32 %v1128, %v1128
  %v1132 = vmul.f32 %v1129, %v1129
  %v1133 = vmul.f32 %v1130, %v1130
  %v1134 = vsel %vm108, %v1131, 0.0
  %1135 = vadd.xlane.f32.xlu0 %v1134
  %v1136 = vpop.xlane.xlu0 %1135
  %v1137 = vsel %vm108, %v1132, 0.0
  %1138 = vadd.xlane.f32.xlu0 %v1137
  %v1139 = vpop.xlane.xlu0 %1138
  %v1140 = vsel %vm916, %v1133, 0.0
  %1141 = vadd.xlane.f32.xlu0 %v1140
  %v1142 = vpop.xlane.xlu0 %1141
  %v1143 = vmul.f32 %v1136, %v926
  %v1144 = vmul.f32 %v1139, %v926
  %v1145 = vmul.f32 %v1142, %v926
  %v1146 = vadd.f32 %v1143, 1e-05
  %v1147 = vadd.f32 %v1144, 1e-05
  %v1148 = vadd.f32 %v1145, 1e-05
  %v1149 = vrsqrt.pop %v1146
  %v1150 = vmul.f32 %v1149, %v1146
  %v1151 = vmul.f32 %v1150, %v1149
  %v1152 = vmul.f32 0.5, %v1151
  %v1153 = vsub.f32 1.5, %v1152
  %v1154 = vmul.f32 %v1149, %v1153
  %vm1155 = vweird.f32 %v1146
  %vm1156 = vweird.f32 %v1149
  %vm1157 = vmor %vm1155, %vm1156
  %v1158 = vsel %vm1157, %v1149, %v1154
  %v1159 = vrsqrt.pop %v1147
  %v1160 = vmul.f32 %v1159, %v1147
  %v1161 = vmul.f32 %v1160, %v1159
  %v1162 = vmul.f32 0.5, %v1161
  %v1163 = vsub.f32 1.5, %v1162
  %v1164 = vmul.f32 %v1159, %v1163
  %vm1165 = vweird.f32 %v1147
  %vm1166 = vweird.f32 %v1159
  %vm1167 = vmor %vm1165, %vm1166
  %v1168 = vsel %vm1167, %v1159, %v1164
  %v1169 = vrsqrt.pop %v1148
  %v1170 = vmul.f32 %v1169, %v1148
  %v1171 = vmul.f32 %v1170, %v1169
  %v1172 = vmul.f32 0.5, %v1171
  %v1173 = vsub.f32 1.5, %v1172
  %v1174 = vmul.f32 %v1169, %v1173
  %vm1175 = vweird.f32 %v1148
  %vm1176 = vweird.f32 %v1169
  %vm1177 = vmor %vm1175, %vm1176
  %v1178 = vsel %vm1177, %v1169, %v1174
  %v1179 = vmul.f32 %v1128, %v1158
  %v1180 = vmul.f32 %v1129, %v1168
  %v1181 = vmul.f32 %v1130, %v1178
  %v1183 = vperm.slane %v1010, 0
  %v1185 = vmul.f32 %v1179, %v1183
  %v1186 = vmul.f32 %v1180, %v1183
  %v1187 = vmul.f32 %v1181, %v1183
  %v1189 = vperm.slane %v1011, 0
  %v1191 = vadd.f32 %v1185, %v1189
  %v1192 = vadd.f32 %v1186, %v1189
  %v1193 = vadd.f32 %v1187, %v1189
  %v1194 = vpack.c.bf16 %v1191, %v1191
  %v1195 = vpack.c.bf16 %v1192, %v1192
  %v1196 = vpack.c.bf16 %v1193, %v1193
  %1197 = vst.msk [vmem:[%s17] sm:$0xf] %vm916, %v1194
  %1198 = vst.msk [vmem:[%s17 + $0x4] sm:$0xf] %vm916, %v1195
  %vm1199 = vcmask 254976
  %1200 = vst.msk [vmem:[%s17 + $0x8] sm:$0x3] %vm1199, %v1196
  // Predicated region
  $region70: #{transformer_forward.5} parent=0 // pred_check
    _
  $region71: #{transformer_forward.5} parent=0 // pred_check_branch
    %1202 = sbr.rel (0) target = $region73
  $region72: #{transformer_forward.5} parent=0 // pred_region
    _
  $region73: #{transformer_forward.5} parent=0 // pred_fallthru
    _
  // Predicated region
  $region74: #{transformer_forward.5} parent=0 // pred_check
    _
  $region75: #{transformer_forward.5} parent=0 // pred_check_branch
    %1204 = sbr.rel (0) target = $region77
  $region76: #{transformer_forward.5} parent=0 // pred_region
    _
  $region77: #{transformer_forward.5} parent=0 // pred_fallthru
    _

// kernel: transformer_forward.8
$region0: #{transformer_forward.8}
  #allocation0 [shape = 'u32[]', space=smem, size = 0x4, offset = 0x4, fixed_abs, tag = 'smem constant byte address 0x4 - core index']
  #allocation1 [shape = 'u32[72,128]{1,0:T(1,128)}', space=vmem, size = 0x9000, scoped, tag = 'internal scratch']
  %s0 = inlined_call_operand.vmem [shape: bf16[16,32], index: 0, kind: input, shape index: {}]
  %s1 = inlined_call_operand.vmem [shape: bf16[20,32], index: 1, kind: input, shape index: {}]
  %s2 = inlined_call_operand.vmem [shape: bf16[32,32], index: 2, kind: input, shape index: {}]
  %s3 = inlined_call_operand.hbm [shape: f32[1,32], index: 3, kind: input, shape index: {}]
  %s4 = inlined_call_operand.vmem [shape: bf16[32,32], index: 4, kind: input, shape index: {}]
  %s5 = inlined_call_operand.hbm [shape: f32[1,32], index: 5, kind: input, shape index: {}]
  %s6 = inlined_call_operand.vmem [shape: bf16[32,32], index: 6, kind: input, shape index: {}]
  %s7 = inlined_call_operand.hbm [shape: f32[1,32], index: 7, kind: input, shape index: {}]
  %s8 = inlined_call_operand.vmem [shape: bf16[32,32], index: 8, kind: input, shape index: {}]
  %s9 = inlined_call_operand.hbm [shape: f32[1,32], index: 9, kind: input, shape index: {}]
  %s10 = inlined_call_operand.hbm [shape: f32[1,32], index: 10, kind: input, shape index: {}]
  %s11 = inlined_call_operand.hbm [shape: f32[1,32], index: 11, kind: input, shape index: {}]
  %s12 = inlined_call_operand.vmem [shape: bf16[32,32], index: 12, kind: input, shape index: {}]
  %s13 = inlined_call_operand.hbm [shape: f32[1,32], index: 13, kind: input, shape index: {}]
  %s14 = inlined_call_operand.vmem [shape: bf16[32,32], index: 14, kind: input, shape index: {}]
  %s15 = inlined_call_operand.hbm [shape: f32[1,32], index: 15, kind: input, shape index: {}]
  %s16 = inlined_call_operand.vmem [shape: bf16[32,32], index: 16, kind: input, shape index: {}]
  %s17 = inlined_call_operand.hbm [shape: f32[1,32], index: 17, kind: input, shape index: {}]
  %s18 = inlined_call_operand.vmem [shape: bf16[32,32], index: 18, kind: input, shape index: {}]
  %s19 = inlined_call_operand.hbm [shape: f32[1,32], index: 19, kind: input, shape index: {}]
  %s20 = inlined_call_operand.hbm [shape: f32[1,32], index: 20, kind: input, shape index: {}]
  %s21 = inlined_call_operand.hbm [shape: f32[1,32], index: 21, kind: input, shape index: {}]
  %s22 = inlined_call_operand.vmem [shape: bf16[32,64], index: 22, kind: input, shape index: {}]
  %s23 = inlined_call_operand.hbm [shape: f32[1,64], index: 23, kind: input, shape index: {}]
  %s24 = inlined_call_operand.vmem [shape: bf16[64,32], index: 24, kind: input, shape index: {}]
  %s25 = inlined_call_operand.hbm [shape: f32[1,32], index: 25, kind: input, shape index: {}]
  %s26 = inlined_call_operand.hbm [shape: f32[1,32], index: 26, kind: input, shape index: {}]
  %s27 = inlined_call_operand.hbm [shape: f32[1,32], index: 27, kind: input, shape index: {}]
  %s28 = inlined_call_operand.vmem [shape: bf16[16,32], index: 28, kind: output, shape index: {}]
  %s29 = sld [smem:[#allocation0]]
  $region186: #{transformer_forward.8} parent=0
    _
  %s31 = ssub.s32 1, %s29
  %s32 = scalar_select 0, %s31, %s29
  $region1: #{transformer_forward.8} parent=0
    #allocation2 [shape = 'u8[512]{0}', space=vmem, size = 0x400, scoped, tag = 'input window, operand 3, single buffered']
    #allocation3 [shape = 's32[1]{0}', space=sflag, size = 0x4, scoped, tag = 'scoped memory for transformer_forward.8']
    #allocation4 [shape = 'u8[512]{0}', space=vmem, size = 0x400, scoped, tag = 'input window, operand 5, single buffered']
    #allocation5 [shape = 's32[1]{0}', space=sflag, size = 0x4, scoped, tag = 'scoped memory for transformer_forward.8']
    #allocation6 [shape = 'u8[512]{0}', space=vmem, size = 0x400, scoped, tag = 'input window, operand 7, single buffered']
    #allocation7 [shape = 'u8[512]{0}', space=vmem, size = 0x400, scoped, tag = 'input window, operand 9, single buffered']
    #allocation8 [shape = 's32[1]{0}', space=sflag, size = 0x4, scoped, tag = 'scoped memory for transformer_forward.8']
    #allocation9 [shape = 'u8[512]{0}', space=vmem, size = 0x400, scoped, tag = 'input window, operand 10, single buffered']
    #allocation10 [shape = 'u8[512]{0}', space=vmem, size = 0x400, scoped, tag = 'input window, operand 11, single buffered']
    #allocation11 [shape = 's32[1]{0}', space=sflag, size = 0x4, scoped, tag = 'scoped memory for transformer_forward.8']
    #allocation12 [shape = 'u8[512]{0}', space=vmem, size = 0x400, scoped, tag = 'input window, operand 13, single buffered']
    #allocation13 [shape = 'u8[512]{0}', space=vmem, size = 0x400, scoped, tag = 'input window, operand 15, single buffered']
    #allocation14 [shape = 's32[1]{0}', space=sflag, size = 0x4, scoped, tag = 'scoped memory for transformer_forward.8']
    #allocation15 [shape = 'u8[512]{0}', space=vmem, size = 0x400, scoped, tag = 'input window, operand 17, single buffered']
    #allocation16 [shape = 'u8[512]{0}', space=vmem, size = 0x400, scoped, tag = 'input window, operand 19, single buffered']
    #allocation17 [shape = 's32[1]{0}', space=sflag, size = 0x4, scoped, tag = 'scoped memory for transformer_forward.8']
    #allocation18 [shape = 'u8[512]{0}', space=vmem, size = 0x400, scoped, tag = 'input window, operand 20, single buffered']
    #allocation19 [shape = 'u8[512]{0}', space=vmem, size = 0x400, scoped, tag = 'input window, operand 21, single buffered']
    #allocation20 [shape = 's32[1]{0}', space=sflag, size = 0x4, scoped, tag = 'scoped memory for transformer_forward.8']
    #allocation21 [shape = 'u8[512]{0}', space=vmem, size = 0x400, scoped, tag = 'input window, operand 23, single buffered']
    #allocation22 [shape = 'u8[512]{0}', space=vmem, size = 0x400, scoped, tag = 'input window, operand 25, single buffered']
    #allocation23 [shape = 's32[1]{0}', space=sflag, size = 0x4, scoped, tag = 'scoped memory for transformer_forward.8']
    #allocation24 [shape = 'u8[512]{0}', space=vmem, size = 0x400, scoped, tag = 'input window, operand 26, single buffered']
    #allocation25 [shape = 'u8[512]{0}', space=vmem, size = 0x400, scoped, tag = 'input window, operand 27, single buffered']
    #allocation26 [shape = 's32[1]{0}', space=sflag, size = 0x4, scoped, tag = 'scoped memory for transformer_forward.8']
    %33 = vsyncpa [#allocation3], 0
    %34 = vsyncpa [#allocation5], 0
    %35 = vsyncpa [#allocation8], 0
    %36 = vsyncpa [#allocation11], 0
    %37 = vsyncpa [#allocation14], 0
    %38 = vsyncpa [#allocation17], 0
    %39 = vsyncpa [#allocation20], 0
    %40 = vsyncpa [#allocation23], 0
    %41 = vsyncpa [#allocation26], 0
    // Predicated region
    $region2: #{transformer_forward.8} parent=1 // pred_check
      _
    $region3: #{transformer_forward.8} parent=1 // pred_check_branch
      %43 = sbr.rel (0) target = $region5
    $region4: #{transformer_forward.8} parent=1 // pred_region
      _
    $region5: #{transformer_forward.8} parent=1 // pred_fallthru
      _
    // Predicated region
    $region6: #{transformer_forward.8} parent=1 // pred_check
      _
    $region7: #{transformer_forward.8} parent=1 // pred_check_branch
      %45 = sbr.rel (0) target = $region9
    $region8: #{transformer_forward.8} parent=1 // pred_region
      _
    $region9: #{transformer_forward.8} parent=1 // pred_fallthru
      _
    // Predicated region
    $region10: #{transformer_forward.8} parent=1 // pred_check
      _
    $region11: #{transformer_forward.8} parent=1 // pred_check_branch
      %47 = sbr.rel (0) target = $region13
    $region12: #{transformer_forward.8} parent=1 // pred_region
      _
    $region13: #{transformer_forward.8} parent=1 // pred_fallthru
      _
    // Predicated region
    $region14: #{transformer_forward.8} parent=1 // pred_check
      _
    $region15: #{transformer_forward.8} parent=1 // pred_check_branch
      %49 = sbr.rel (0) target = $region17
    $region16: #{transformer_forward.8} parent=1 // pred_region
      %51 = vsyncadd [#allocation3], 0
      %s53 = sshll.u32 %s3, 4
      %s54 = int_to_ptr.hbm [resolvable:$true] %s53
      %s55 = sshll.u32 [#allocation2], 4
      %s56 = int_to_ptr.vmem [resolvable:$true] %s55
      %58 = dma.hbm_to_vmem [thread:$0]  %s54, 16, %s56, [#allocation3]
    $region17: #{transformer_forward.8} parent=1 // pred_fallthru
      _
    // Predicated region
    $region18: #{transformer_forward.8} parent=1 // pred_check
      _
    $region19: #{transformer_forward.8} parent=1 // pred_check_branch
      %60 = sbr.rel (0) target = $region21
    $region20: #{transformer_forward.8} parent=1 // pred_region
      _
    $region21: #{transformer_forward.8} parent=1 // pred_fallthru
      _
    // Predicated region
    $region22: #{transformer_forward.8} parent=1 // pred_check
      _
    $region23: #{transformer_forward.8} parent=1 // pred_check_branch
      %62 = sbr.rel (0) target = $region25
    $region24: #{transformer_forward.8} parent=1 // pred_region
      %64 = vsyncadd [#allocation5], 0
      %s66 = sshll.u32 %s5, 4
      %s67 = int_to_ptr.hbm [resolvable:$true] %s66
      %s68 = sshll.u32 [#allocation4], 4
      %s69 = int_to_ptr.vmem [resolvable:$true] %s68
      %71 = dma.hbm_to_vmem [thread:$0]  %s67, 16, %s69, [#allocation5]
    $region25: #{transformer_forward.8} parent=1 // pred_fallthru
      _
    // Predicated region
    $region26: #{transformer_forward.8} parent=1 // pred_check
      _
    $region27: #{transformer_forward.8} parent=1 // pred_check_branch
      %73 = sbr.rel (0) target = $region29
    $region28: #{transformer_forward.8} parent=1 // pred_region
      _
    $region29: #{transformer_forward.8} parent=1 // pred_fallthru
      _
    // Predicated region
    $region30: #{transformer_forward.8} parent=1 // pred_check
      _
    $region31: #{transformer_forward.8} parent=1 // pred_check_branch
      %75 = sbr.rel (0) target = $region33
    $region32: #{transformer_forward.8} parent=1 // pred_region
      %77 = vsyncadd [#allocation5], 0
      %s79 = sshll.u32 %s7, 4
      %s80 = int_to_ptr.hbm [resolvable:$true] %s79
      %s81 = sshll.u32 [#allocation6], 4
      %s82 = int_to_ptr.vmem [resolvable:$true] %s81
      %84 = dma.hbm_to_vmem [thread:$0]  %s80, 16, %s82, [#allocation5]
    $region33: #{transformer_forward.8} parent=1 // pred_fallthru
      _
    // Predicated region
    $region34: #{transformer_forward.8} parent=1 // pred_check
      _
    $region35: #{transformer_forward.8} parent=1 // pred_check_branch
      %86 = sbr.rel (0) target = $region37
    $region36: #{transformer_forward.8} parent=1 // pred_region
      _
    $region37: #{transformer_forward.8} parent=1 // pred_fallthru
      _
    // Predicated region
    $region38: #{transformer_forward.8} parent=1 // pred_check
      _
    $region39: #{transformer_forward.8} parent=1 // pred_check_branch
      %88 = sbr.rel (0) target = $region41
    $region40: #{transformer_forward.8} parent=1 // pred_region
      %90 = vsyncadd [#allocation8], 0
      %s92 = sshll.u32 %s9, 4
      %s93 = int_to_ptr.hbm [resolvable:$true] %s92
      %s94 = sshll.u32 [#allocation7], 4
      %s95 = int_to_ptr.vmem [resolvable:$true] %s94
      %97 = dma.hbm_to_vmem [thread:$0]  %s93, 16, %s95, [#allocation8]
    $region41: #{transformer_forward.8} parent=1 // pred_fallthru
      _
    // Predicated region
    $region42: #{transformer_forward.8} parent=1 // pred_check
      _
    $region43: #{transformer_forward.8} parent=1 // pred_check_branch
      %99 = sbr.rel (0) target = $region45
    $region44: #{transformer_forward.8} parent=1 // pred_region
      %101 = vsyncadd [#allocation8], 0
      %s103 = sshll.u32 %s10, 4
      %s104 = int_to_ptr.hbm [resolvable:$true] %s103
      %s105 = sshll.u32 [#allocation9], 4
      %s106 = int_to_ptr.vmem [resolvable:$true] %s105
      %108 = dma.hbm_to_vmem [thread:$0]  %s104, 16, %s106, [#allocation8]
    $region45: #{transformer_forward.8} parent=1 // pred_fallthru
      _
    // Predicated region
    $region46: #{transformer_forward.8} parent=1 // pred_check
      _
    $region47: #{transformer_forward.8} parent=1 // pred_check_branch
      %110 = sbr.rel (0) target = $region49
    $region48: #{transformer_forward.8} parent=1 // pred_region
      %112 = vsyncadd [#allocation11], 0
      %s114 = sshll.u32 %s11, 4
      %s115 = int_to_ptr.hbm [resolvable:$true] %s114
      %s116 = sshll.u32 [#allocation10], 4
      %s117 = int_to_ptr.vmem [resolvable:$true] %s116
      %119 = dma.hbm_to_vmem [thread:$0]  %s115, 16, %s117, [#allocation11]
    $region49: #{transformer_forward.8} parent=1 // pred_fallthru
      _
    // Predicated region
    $region50: #{transformer_forward.8} parent=1 // pred_check
      _
    $region51: #{transformer_forward.8} parent=1 // pred_check_branch
      %121 = sbr.rel (0) target = $region53
    $region52: #{transformer_forward.8} parent=1 // pred_region
      _
    $region53: #{transformer_forward.8} parent=1 // pred_fallthru
      _
    // Predicated region
    $region54: #{transformer_forward.8} parent=1 // pred_check
      _
    $region55: #{transformer_forward.8} parent=1 // pred_check_branch
      %123 = sbr.rel (0) target = $region57
    $region56: #{transformer_forward.8} parent=1 // pred_region
      %125 = vsyncadd [#allocation11], 0
      %s127 = sshll.u32 %s13, 4
      %s128 = int_to_ptr.hbm [resolvable:$true] %s127
      %s129 = sshll.u32 [#allocation12], 4
      %s130 = int_to_ptr.vmem [resolvable:$true] %s129
      %132 = dma.hbm_to_vmem [thread:$0]  %s128, 16, %s130, [#allocation11]
    $region57: #{transformer_forward.8} parent=1 // pred_fallthru
      _
    // Predicated region
    $region58: #{transformer_forward.8} parent=1 // pred_check
      _
    $region59: #{transformer_forward.8} parent=1 // pred_check_branch
      %134 = sbr.rel (0) target = $region61
    $region60: #{transformer_forward.8} parent=1 // pred_region
      _
    $region61: #{transformer_forward.8} parent=1 // pred_fallthru
      _
    // Predicated region
    $region62: #{transformer_forward.8} parent=1 // pred_check
      _
    $region63: #{transformer_forward.8} parent=1 // pred_check_branch
      %136 = sbr.rel (0) target = $region65
    $region64: #{transformer_forward.8} parent=1 // pred_region
      %138 = vsyncadd [#allocation14], 0
      %s140 = sshll.u32 %s15, 4
      %s141 = int_to_ptr.hbm [resolvable:$true] %s140
      %s142 = sshll.u32 [#allocation13], 4
      %s143 = int_to_ptr.vmem [resolvable:$true] %s142
      %145 = dma.hbm_to_vmem [thread:$0]  %s141, 16, %s143, [#allocation14]
    $region65: #{transformer_forward.8} parent=1 // pred_fallthru
      _
    // Predicated region
    $region66: #{transformer_forward.8} parent=1 // pred_check
      _
    $region67: #{transformer_forward.8} parent=1 // pred_check_branch
      %147 = sbr.rel (0) target = $region69
    $region68: #{transformer_forward.8} parent=1 // pred_region
      _
    $region69: #{transformer_forward.8} parent=1 // pred_fallthru
      _
    // Predicated region
    $region70: #{transformer_forward.8} parent=1 // pred_check
      _
    $region71: #{transformer_forward.8} parent=1 // pred_check_branch
      %149 = sbr.rel (0) target = $region73
    $region72: #{transformer_forward.8} parent=1 // pred_region
      %151 = vsyncadd [#allocation14], 0
      %s153 = sshll.u32 %s17, 4
      %s154 = int_to_ptr.hbm [resolvable:$true] %s153
      %s155 = sshll.u32 [#allocation15], 4
      %s156 = int_to_ptr.vmem [resolvable:$true] %s155
      %158 = dma.hbm_to_vmem [thread:$0]  %s154, 16, %s156, [#allocation14]
    $region73: #{transformer_forward.8} parent=1 // pred_fallthru
      _
    // Predicated region
    $region74: #{transformer_forward.8} parent=1 // pred_check
      _
    $region75: #{transformer_forward.8} parent=1 // pred_check_branch
      %160 = sbr.rel (0) target = $region77
    $region76: #{transformer_forward.8} parent=1 // pred_region
      _
    $region77: #{transformer_forward.8} parent=1 // pred_fallthru
      _
    // Predicated region
    $region78: #{transformer_forward.8} parent=1 // pred_check
      _
    $region79: #{transformer_forward.8} parent=1 // pred_check_branch
      %162 = sbr.rel (0) target = $region81
    $region80: #{transformer_forward.8} parent=1 // pred_region
      %164 = vsyncadd [#allocation17], 0
      %s166 = sshll.u32 %s19, 4
      %s167 = int_to_ptr.hbm [resolvable:$true] %s166
      %s168 = sshll.u32 [#allocation16], 4
      %s169 = int_to_ptr.vmem [resolvable:$true] %s168
      %171 = dma.hbm_to_vmem [thread:$0]  %s167, 16, %s169, [#allocation17]
    $region81: #{transformer_forward.8} parent=1 // pred_fallthru
      _
    // Predicated region
    $region82: #{transformer_forward.8} parent=1 // pred_check
      _
    $region83: #{transformer_forward.8} parent=1 // pred_check_branch
      %173 = sbr.rel (0) target = $region85
    $region84: #{transformer_forward.8} parent=1 // pred_region
      %175 = vsyncadd [#allocation17], 0
      %s177 = sshll.u32 %s20, 4
      %s178 = int_to_ptr.hbm [resolvable:$true] %s177
      %s179 = sshll.u32 [#allocation18], 4
      %s180 = int_to_ptr.vmem [resolvable:$true] %s179
      %182 = dma.hbm_to_vmem [thread:$0]  %s178, 16, %s180, [#allocation17]
    $region85: #{transformer_forward.8} parent=1 // pred_fallthru
      _
    // Predicated region
    $region86: #{transformer_forward.8} parent=1 // pred_check
      _
    $region87: #{transformer_forward.8} parent=1 // pred_check_branch
      %184 = sbr.rel (0) target = $region89
    $region88: #{transformer_forward.8} parent=1 // pred_region
      %186 = vsyncadd [#allocation20], 0
      %s188 = sshll.u32 %s21, 4
      %s189 = int_to_ptr.hbm [resolvable:$true] %s188
      %s190 = sshll.u32 [#allocation19], 4
      %s191 = int_to_ptr.vmem [resolvable:$true] %s190
      %193 = dma.hbm_to_vmem [thread:$0]  %s189, 16, %s191, [#allocation20]
    $region89: #{transformer_forward.8} parent=1 // pred_fallthru
      _
    // Predicated region
    $region90: #{transformer_forward.8} parent=1 // pred_check
      _
    $region91: #{transformer_forward.8} parent=1 // pred_check_branch
      %195 = sbr.rel (0) target = $region93
    $region92: #{transformer_forward.8} parent=1 // pred_region
      _
    $region93: #{transformer_forward.8} parent=1 // pred_fallthru
      _
    // Predicated region
    $region94: #{transformer_forward.8} parent=1 // pred_check
      _
    $region95: #{transformer_forward.8} parent=1 // pred_check_branch
      %197 = sbr.rel (0) target = $region97
    $region96: #{transformer_forward.8} parent=1 // pred_region
      %199 = vsyncadd [#allocation20], 0
      %s201 = sshll.u32 %s23, 4
      %s202 = int_to_ptr.hbm [resolvable:$true] %s201
      %s203 = sshll.u32 [#allocation21], 4
      %s204 = int_to_ptr.vmem [resolvable:$true] %s203
      %206 = dma.hbm_to_vmem [thread:$0]  %s202, 16, %s204, [#allocation20]
    $region97: #{transformer_forward.8} parent=1 // pred_fallthru
      _
    // Predicated region
    $region98: #{transformer_forward.8} parent=1 // pred_check
      _
    $region99: #{transformer_forward.8} parent=1 // pred_check_branch
      %208 = sbr.rel (0) target = $region101
    $region100: #{transformer_forward.8} parent=1 // pred_region
      _
    $region101: #{transformer_forward.8} parent=1 // pred_fallthru
      _
    // Predicated region
    $region102: #{transformer_forward.8} parent=1 // pred_check
      _
    $region103: #{transformer_forward.8} parent=1 // pred_check_branch
      %210 = sbr.rel (0) target = $region105
    $region104: #{transformer_forward.8} parent=1 // pred_region
      %212 = vsyncadd [#allocation23], 0
      %s214 = sshll.u32 %s25, 4
      %s215 = int_to_ptr.hbm [resolvable:$true] %s214
      %s216 = sshll.u32 [#allocation22], 4
      %s217 = int_to_ptr.vmem [resolvable:$true] %s216
      %219 = dma.hbm_to_vmem [thread:$0]  %s215, 16, %s217, [#allocation23]
    $region105: #{transformer_forward.8} parent=1 // pred_fallthru
      _
    // Predicated region
    $region106: #{transformer_forward.8} parent=1 // pred_check
      _
    $region107: #{transformer_forward.8} parent=1 // pred_check_branch
      %221 = sbr.rel (0) target = $region109
    $region108: #{transformer_forward.8} parent=1 // pred_region
      %223 = vsyncadd [#allocation23], 0
      %s225 = sshll.u32 %s26, 4
      %s226 = int_to_ptr.hbm [resolvable:$true] %s225
      %s227 = sshll.u32 [#allocation24], 4
      %s228 = int_to_ptr.vmem [resolvable:$true] %s227
      %230 = dma.hbm_to_vmem [thread:$0]  %s226, 16, %s228, [#allocation23]
    $region109: #{transformer_forward.8} parent=1 // pred_fallthru
      _
    // Predicated region
    $region110: #{transformer_forward.8} parent=1 // pred_check
      _
    $region111: #{transformer_forward.8} parent=1 // pred_check_branch
      %232 = sbr.rel (0) target = $region113
    $region112: #{transformer_forward.8} parent=1 // pred_region
      %234 = vsyncadd [#allocation26], 0
      %s236 = sshll.u32 %s27, 4
      %s237 = int_to_ptr.hbm [resolvable:$true] %s236
      %s238 = sshll.u32 [#allocation25], 4
      %s239 = int_to_ptr.vmem [resolvable:$true] %s238
      %241 = dma.hbm_to_vmem [thread:$0]  %s237, 16, %s239, [#allocation26]
    $region113: #{transformer_forward.8} parent=1 // pred_fallthru
      _
    // Predicated region
    $region114: #{transformer_forward.8} parent=1 // pred_check
      _
    $region115: #{transformer_forward.8} parent=1 // pred_check_branch
      %243 = sbr.rel (0) target = $region117
    $region116: #{transformer_forward.8} parent=1 // pred_region
      %245 = dma.done [#allocation3], 16
    $region117: #{transformer_forward.8} parent=1 // pred_fallthru
      _
    // Predicated region
    $region118: #{transformer_forward.8} parent=1 // pred_check
      _
    $region119: #{transformer_forward.8} parent=1 // pred_check_branch
      %247 = sbr.rel (0) target = $region121
    $region120: #{transformer_forward.8} parent=1 // pred_region
      %249 = dma.done [#allocation5], 16
    $region121: #{transformer_forward.8} parent=1 // pred_fallthru
      _
    // Predicated region
    $region122: #{transformer_forward.8} parent=1 // pred_check
      _
    $region123: #{transformer_forward.8} parent=1 // pred_check_branch
      %251 = sbr.rel (0) target = $region125
    $region124: #{transformer_forward.8} parent=1 // pred_region
      %253 = dma.done [#allocation5], 16
    $region125: #{transformer_forward.8} parent=1 // pred_fallthru
      _
    // Predicated region
    $region126: #{transformer_forward.8} parent=1 // pred_check
      _
    $region127: #{transformer_forward.8} parent=1 // pred_check_branch
      %255 = sbr.rel (0) target = $region129
    $region128: #{transformer_forward.8} parent=1 // pred_region
      %257 = dma.done [#allocation8], 16
    $region129: #{transformer_forward.8} parent=1 // pred_fallthru
      _
    // Predicated region
    $region130: #{transformer_forward.8} parent=1 // pred_check
      _
    $region131: #{transformer_forward.8} parent=1 // pred_check_branch
      %259 = sbr.rel (0) target = $region133
    $region132: #{transformer_forward.8} parent=1 // pred_region
      %261 = dma.done [#allocation8], 16
    $region133: #{transformer_forward.8} parent=1 // pred_fallthru
      _
    // Predicated region
    $region134: #{transformer_forward.8} parent=1 // pred_check
      _
    $region135: #{transformer_forward.8} parent=1 // pred_check_branch
      %263 = sbr.rel (0) target = $region137
    $region136: #{transformer_forward.8} parent=1 // pred_region
      %265 = dma.done [#allocation11], 16
    $region137: #{transformer_forward.8} parent=1 // pred_fallthru
      _
    // Predicated region
    $region138: #{transformer_forward.8} parent=1 // pred_check
      _
    $region139: #{transformer_forward.8} parent=1 // pred_check_branch
      %267 = sbr.rel (0) target = $region141
    $region140: #{transformer_forward.8} parent=1 // pred_region
      %269 = dma.done [#allocation11], 16
    $region141: #{transformer_forward.8} parent=1 // pred_fallthru
      _
    // Predicated region
    $region142: #{transformer_forward.8} parent=1 // pred_check
      _
    $region143: #{transformer_forward.8} parent=1 // pred_check_branch
      %271 = sbr.rel (0) target = $region145
    $region144: #{transformer_forward.8} parent=1 // pred_region
      %273 = dma.done [#allocation14], 16
    $region145: #{transformer_forward.8} parent=1 // pred_fallthru
      _
    // Predicated region
    $region146: #{transformer_forward.8} parent=1 // pred_check
      _
    $region147: #{transformer_forward.8} parent=1 // pred_check_branch
      %275 = sbr.rel (0) target = $region149
    $region148: #{transformer_forward.8} parent=1 // pred_region
      %277 = dma.done [#allocation14], 16
    $region149: #{transformer_forward.8} parent=1 // pred_fallthru
      _
    // Predicated region
    $region150: #{transformer_forward.8} parent=1 // pred_check
      _
    $region151: #{transformer_forward.8} parent=1 // pred_check_branch
      %279 = sbr.rel (0) target = $region153
    $region152: #{transformer_forward.8} parent=1 // pred_region
      %281 = dma.done [#allocation17], 16
    $region153: #{transformer_forward.8} parent=1 // pred_fallthru
      _
    // Predicated region
    $region154: #{transformer_forward.8} parent=1 // pred_check
      _
    $region155: #{transformer_forward.8} parent=1 // pred_check_branch
      %283 = sbr.rel (0) target = $region157
    $region156: #{transformer_forward.8} parent=1 // pred_region
      %285 = dma.done [#allocation17], 16
    $region157: #{transformer_forward.8} parent=1 // pred_fallthru
      _
    // Predicated region
    $region158: #{transformer_forward.8} parent=1 // pred_check
      _
    $region159: #{transformer_forward.8} parent=1 // pred_check_branch
      %287 = sbr.rel (0) target = $region161
    $region160: #{transformer_forward.8} parent=1 // pred_region
      %289 = dma.done [#allocation20], 16
    $region161: #{transformer_forward.8} parent=1 // pred_fallthru
      _
    // Predicated region
    $region162: #{transformer_forward.8} parent=1 // pred_check
      _
    $region163: #{transformer_forward.8} parent=1 // pred_check_branch
      %291 = sbr.rel (0) target = $region165
    $region164: #{transformer_forward.8} parent=1 // pred_region
      %293 = dma.done [#allocation20], 16
    $region165: #{transformer_forward.8} parent=1 // pred_fallthru
      _
    // Predicated region
    $region166: #{transformer_forward.8} parent=1 // pred_check
      _
    $region167: #{transformer_forward.8} parent=1 // pred_check_branch
      %295 = sbr.rel (0) target = $region169
    $region168: #{transformer_forward.8} parent=1 // pred_region
      %297 = dma.done [#allocation23], 16
    $region169: #{transformer_forward.8} parent=1 // pred_fallthru
      _
    // Predicated region
    $region170: #{transformer_forward.8} parent=1 // pred_check
      _
    $region171: #{transformer_forward.8} parent=1 // pred_check_branch
      %299 = sbr.rel (0) target = $region173
    $region172: #{transformer_forward.8} parent=1 // pred_region
      %301 = dma.done [#allocation23], 16
    $region173: #{transformer_forward.8} parent=1 // pred_fallthru
      _
    // Predicated region
    $region174: #{transformer_forward.8} parent=1 // pred_check
      _
    $region175: #{transformer_forward.8} parent=1 // pred_check_branch
      %303 = sbr.rel (0) target = $region177
    $region176: #{transformer_forward.8} parent=1 // pred_region
      %305 = dma.done [#allocation26], 16
    $region177: #{transformer_forward.8} parent=1 // pred_fallthru
      _
    %v307 = vld [vmem:[%s0] sm:$0xf]
    %v308 = vld [vmem:[%s0 + $0x4] sm:$0xf]
    %v309 = vunpack.c.l.bf16 %v307
    %v310 = vunpack.c.l.bf16 %v308
    %v311 = vld [vmem:[%s1] sm:$0xf]
    %v312 = vld [vmem:[%s1 + $0x4] sm:$0xf]
    %v313 = vld [vmem:[%s1 + $0x8] sm:$0x3]
    %v314 = vld [vmem:[%s2] sm:$0xf]
    %v315 = vld [vmem:[%s2 + $0x4] sm:$0xf]
    %v316 = vld [vmem:[%s2 + $0x8] sm:$0xf]
    %v317 = vld [vmem:[%s2 + $0xc] sm:$0xf]
    %v318 = vld [vmem:[#allocation2] sm:$0x1]
    %v319 = vld [vmem:[%s4] sm:$0xf]
    %v320 = vld [vmem:[%s4 + $0x4] sm:$0xf]
    %v321 = vld [vmem:[%s4 + $0x8] sm:$0xf]
    %v322 = vld [vmem:[%s4 + $0xc] sm:$0xf]
    %v323 = vld [vmem:[#allocation4] sm:$0x1]
    %v324 = vld [vmem:[%s6] sm:$0xf]
    %v325 = vld [vmem:[%s6 + $0x4] sm:$0xf]
    %v326 = vld [vmem:[%s6 + $0x8] sm:$0xf]
    %v327 = vld [vmem:[%s6 + $0xc] sm:$0xf]
    %v328 = vld [vmem:[#allocation6] sm:$0x1]
    %v329 = vld [vmem:[%s8] sm:$0xf]
    %v330 = vld [vmem:[%s8 + $0x4] sm:$0xf]
    %v331 = vld [vmem:[%s8 + $0x8] sm:$0xf]
    %v332 = vld [vmem:[%s8 + $0xc] sm:$0xf]
    %v333 = vld [vmem:[#allocation7] sm:$0x1]
    %v334 = vld [vmem:[#allocation9] sm:$0x1]
    %v335 = vld [vmem:[#allocation10] sm:$0x1]
    %v337 = vperm.slane %v318, 0
    %v341 = vunpack.c.l.b16 %v307
    %v342 = vunpack.c.l.b16 %v308
    %v343 = vpack.c.b16 %v342, %v341
    %v348 = vunpack.c.l.b16 %v314
    %v349 = vunpack.c.l.b16 %v315
    %v350 = vunpack.c.l.b16 %v316
    %v351 = vunpack.c.l.b16 %v317
    %v352 = vpack.c.b16 %v349, %v348
    %v353 = vpack.c.b16 %v351, %v350
    %vm356 = vcmask 261120
    %v358 = vsel %vm356, %v343, 0
    %360 = vmatpush.bf16.msra.mxu0 0
    %361 = vmatpush.bf16.msra.mxu0 0
    %362 = vmatpush.bf16.msra.mxu0 0
    %363 = vmatpush.bf16.msra.mxu0 0
    %364 = vmatpush.bf16.msra.mxu0 0
    %365 = vmatpush.bf16.msra.mxu0 0
    %366 = vmatpush.bf16.msra.mxu0 %v353
    %367 = vmatpush.bf16.msra.mxu0 %v352
    %368 = vmatmul.bf16.gmra.mxu0 %v358
    %v369 = vpop.f32.mrf.mxu0
    %v370 = vadd.f32 %v337, %v369
    %v371 = vpop.f32.mrf.mxu0
    %v372 = vadd.f32 %v337, %v371
    %373 = vdwg.mxu0
    %v374 = vpack.c.bf16 %v370, %v370
    %v375 = vpack.c.bf16 %v372, %v372
    %v377 = vperm.slane %v323, 0
    %v383 = vunpack.c.l.b16 %v319
    %v384 = vunpack.c.l.b16 %v320
    %v385 = vunpack.c.l.b16 %v321
    %v386 = vunpack.c.l.b16 %v322
    %v387 = vpack.c.b16 %v384, %v383
    %v388 = vpack.c.b16 %v386, %v385
    %391 = vmatpush.bf16.msra.mxu0 0
    %392 = vmatpush.bf16.msra.mxu0 0
    %393 = vmatpush.bf16.msra.mxu0 0
    %394 = vmatpush.bf16.msra.mxu0 0
    %395 = vmatpush.bf16.msra.mxu0 0
    %396 = vmatpush.bf16.msra.mxu0 0
    %397 = vmatpush.bf16.msra.mxu0 %v388
    %398 = vmatpush.bf16.msra.mxu0 %v387
    %399 = vmatmul.bf16.gmra.mxu0 %v358
    %v400 = vpop.f32.mrf.mxu0
    %v401 = vadd.f32 %v377, %v400
    %v402 = vpop.f32.mrf.mxu0
    %v403 = vadd.f32 %v377, %v402
    %404 = vdwg.mxu0
    %v405 = vpack.c.bf16 %v401, %v401
    %v406 = vpack.c.bf16 %v403, %v403
    %v408 = vperm.slane %v328, 0
    %v414 = vunpack.c.l.b16 %v324
    %v415 = vunpack.c.l.b16 %v325
    %v416 = vunpack.c.l.b16 %v326
    %v417 = vunpack.c.l.b16 %v327
    %v418 = vpack.c.b16 %v415, %v414
    %v419 = vpack.c.b16 %v417, %v416
    %422 = vmatpush.bf16.msra.mxu0 0
    %423 = vmatpush.bf16.msra.mxu0 0
    %424 = vmatpush.bf16.msra.mxu0 0
    %425 = vmatpush.bf16.msra.mxu0 0
    %426 = vmatpush.bf16.msra.mxu0 0
    %427 = vmatpush.bf16.msra.mxu0 0
    %428 = vmatpush.bf16.msra.mxu0 %v419
    %429 = vmatpush.bf16.msra.mxu0 %v418
    %430 = vmatmul.bf16.gmra.mxu0 %v358
    %v431 = vpop.f32.mrf.mxu0
    %v432 = vadd.f32 %v408, %v431
    %v433 = vpop.f32.mrf.mxu0
    %v434 = vadd.f32 %v408, %v433
    %435 = vdwg.mxu0
    %v436 = vpack.c.bf16 %v432, %v432
    %v437 = vpack.c.bf16 %v434, %v434
    %v438 = vlaneseq
    %v439 = vshrl.u32 %v438, 7
    %v440 = vlaneseq
    %v441 = vand.u32 %v440, 127
    %vm442 = vcmp.gt.s32.totalorder %v441, %v439
    %v443 = vsel %vm442, -1e+09, 0.0
    %vm444 = vcmask 64512
    %v446 = vsel %vm444, %v374, 0
    %v449 = vsel %vm444, %v405, 0
    %451 = vmatpush.bf16.xpose.msra.mxu0 0
    %452 = vmatpush.bf16.xpose.msra.mxu0 0
    %453 = vmatpush.bf16.xpose.msra.mxu0 0
    %454 = vmatpush.bf16.xpose.msra.mxu0 0
    %455 = vmatpush.bf16.xpose.msra.mxu0 0
    %456 = vmatpush.bf16.xpose.msra.mxu0 0
    %457 = vmatpush.bf16.xpose.msra.mxu0 0
    %458 = vmatpush.bf16.xpose.msra.mxu0 %v449
    %459 = vmatmul.bf16.gmra.mxu0 %v446
    %v460 = vpop.f32.mrf.mxu0
    %v461 = vadd.f32 0.0, %v460
    %v462 = vpop.f32.mrf.mxu0
    %463 = vdwg.mxu0
    %v464 = vmul.f32 %v461, 0.35355338
    %v465 = vadd.f32 %v464, %v443
    %v466 = vsel %vm444, %v465, -inf
    %467 = vmax.xlane.f32.xlu0 %v466
    %v468 = vpop.xlane.xlu0 %467
    %v469 = vsub.f32 %v465, %v468
    %v470 = vmul.f32 %v469, 1.442695
    %v471 = vpow.pop %v470
    %v472 = vsel %vm444, %v471, 0.0
    %473 = vadd.xlane.f32.xlu0 %v472
    %v474 = vpop.xlane.xlu0 %473
    %v475 = vrcp.pop %v474
    %v476 = vmul.f32 %v471, %v475
    %v477 = vpack.c.bf16 %v476, %v476
    %v479 = vsel %vm444, %v477, 0
    %vm481 = vcmask 1043456
    %v483 = vsel %vm481, %v436, 0
    %485 = vmatpush.bf16.msra.mxu0 0
    %486 = vmatpush.bf16.msra.mxu0 0
    %487 = vmatpush.bf16.msra.mxu0 0
    %488 = vmatpush.bf16.msra.mxu0 0
    %489 = vmatpush.bf16.msra.mxu0 0
    %490 = vmatpush.bf16.msra.mxu0 0
    %491 = vmatpush.bf16.msra.mxu0 0
    %492 = vmatpush.bf16.msra.mxu0 %v483
    %493 = vmatmul.bf16.gmra.mxu0 %v479
    %v494 = vpop.f32.mrf.mxu0
    %v495 = vadd.f32 0.0, %v494
    %v496 = vpop.f32.mrf.mxu0
    %497 = vdwg.mxu0
    %v499 = vunpack.c.l.b16 %v374
    %v500 = vpack.c.b16 %v499, %v499
    %501 = vrot.lane.b32.xlu0 %v500, 120
    %v502 = vpop.permute.xlu0 %501
    %v504 = vunpack.c.l.b16 %v405
    %v505 = vpack.c.b16 %v504, %v504
    %506 = vrot.lane.b32.xlu0 %v505, 120
    %v507 = vpop.permute.xlu0 %506
    %v509 = vsel %vm444, %v502, 0
    %v512 = vsel %vm444, %v507, 0
    %514 = vmatpush.bf16.xpose.msra.mxu0 0
    %515 = vmatpush.bf16.xpose.msra.mxu0 0
    %516 = vmatpush.bf16.xpose.msra.mxu0 0
    %517 = vmatpush.bf16.xpose.msra.mxu0 0
    %518 = vmatpush.bf16.xpose.msra.mxu0 0
    %519 = vmatpush.bf16.xpose.msra.mxu0 0
    %520 = vmatpush.bf16.xpose.msra.mxu0 0
    %521 = vmatpush.bf16.xpose.msra.mxu0 %v512
    %522 = vmatmul.bf16.gmra.mxu0 %v509
    %v523 = vpop.f32.mrf.mxu0
    %v524 = vadd.f32 0.0, %v523
    %v525 = vpop.f32.mrf.mxu0
    %526 = vdwg.mxu0
    %v527 = vmul.f32 %v524, 0.35355338
    %v528 = vadd.f32 %v527, %v443
    %v529 = vsel %vm444, %v528, -inf
    %530 = vmax.xlane.f32.xlu0 %v529
    %v531 = vpop.xlane.xlu0 %530
    %v532 = vsub.f32 %v528, %v531
    %v533 = vmul.f32 %v532, 1.442695
    %v534 = vpow.pop %v533
    %v535 = vsel %vm444, %v534, 0.0
    %536 = vadd.xlane.f32.xlu0 %v535
    %v537 = vpop.xlane.xlu0 %536
    %v538 = vrcp.pop %v537
    %v539 = vmul.f32 %v534, %v538
    %v540 = vpack.c.bf16 %v539, %v539
    %v542 = vunpack.c.l.b16 %v436
    %v543 = vpack.c.b16 %v542, %v542
    %544 = vrot.lane.b32.xlu0 %v543, 120
    %v545 = vpop.permute.xlu0 %544
    %v547 = vsel %vm444, %v540, 0
    %v550 = vsel %vm481, %v545, 0
    %552 = vmatpush.bf16.msra.mxu0 0
    %553 = vmatpush.bf16.msra.mxu0 0
    %554 = vmatpush.bf16.msra.mxu0 0
    %555 = vmatpush.bf16.msra.mxu0 0
    %556 = vmatpush.bf16.msra.mxu0 0
    %557 = vmatpush.bf16.msra.mxu0 0
    %558 = vmatpush.bf16.msra.mxu0 0
    %559 = vmatpush.bf16.msra.mxu0 %v550
    %560 = vmatmul.bf16.gmra.mxu0 %v547
    %v561 = vpop.f32.mrf.mxu0
    %v562 = vadd.f32 0.0, %v561
    %v563 = vpop.f32.mrf.mxu0
    %564 = vdwg.mxu0
    %565 = vrot.lane.b32.xlu0 %v500, 112
    %v566 = vpop.permute.xlu0 %565
    %567 = vrot.lane.b32.xlu0 %v505, 112
    %v568 = vpop.permute.xlu0 %567
    %v570 = vsel %vm444, %v566, 0
    %v573 = vsel %vm444, %v568, 0
    %575 = vmatpush.bf16.xpose.msra.mxu0 0
    %576 = vmatpush.bf16.xpose.msra.mxu0 0
    %577 = vmatpush.bf16.xpose.msra.mxu0 0
    %578 = vmatpush.bf16.xpose.msra.mxu0 0
    %579 = vmatpush.bf16.xpose.msra.mxu0 0
    %580 = vmatpush.bf16.xpose.msra.mxu0 0
    %581 = vmatpush.bf16.xpose.msra.mxu0 0
    %582 = vmatpush.bf16.xpose.msra.mxu0 %v573
    %583 = vmatmul.bf16.gmra.mxu0 %v570
    %v584 = vpop.f32.mrf.mxu0
    %v585 = vadd.f32 0.0, %v584
    %v586 = vpop.f32.mrf.mxu0
    %587 = vdwg.mxu0
    %v588 = vmul.f32 %v585, 0.35355338
    %v589 = vadd.f32 %v588, %v443
    %v590 = vsel %vm444, %v589, -inf
    %591 = vmax.xlane.f32.xlu0 %v590
    %v592 = vpop.xlane.xlu0 %591
    %v593 = vsub.f32 %v589, %v592
    %v594 = vmul.f32 %v593, 1.442695
    %v595 = vpow.pop %v594
    %v596 = vsel %vm444, %v595, 0.0
    %597 = vadd.xlane.f32.xlu0 %v596
    %v598 = vpop.xlane.xlu0 %597
    %v599 = vrcp.pop %v598
    %v600 = vmul.f32 %v595, %v599
    %v601 = vpack.c.bf16 %v600, %v600
    %602 = vrot.lane.b32.xlu0 %v543, 112
    %v603 = vpop.permute.xlu0 %602
    %v605 = vsel %vm444, %v601, 0
    %v608 = vsel %vm481, %v603, 0
    %610 = vmatpush.bf16.msra.mxu0 0
    %611 = vmatpush.bf16.msra.mxu0 0
    %612 = vmatpush.bf16.msra.mxu0 0
    %613 = vmatpush.bf16.msra.mxu0 0
    %614 = vmatpush.bf16.msra.mxu0 0
    %615 = vmatpush.bf16.msra.mxu0 0
    %616 = vmatpush.bf16.msra.mxu0 0
    %617 = vmatpush.bf16.msra.mxu0 %v608
    %618 = vmatmul.bf16.gmra.mxu0 %v605
    %v619 = vpop.f32.mrf.mxu0
    %v620 = vadd.f32 0.0, %v619
    %v621 = vpop.f32.mrf.mxu0
    %622 = vdwg.mxu0
    %623 = vrot.lane.b32.xlu0 %v500, 104
    %v624 = vpop.permute.xlu0 %623
    %625 = vrot.lane.b32.xlu0 %v505, 104
    %v626 = vpop.permute.xlu0 %625
    %v628 = vsel %vm444, %v624, 0
    %v631 = vsel %vm444, %v626, 0
    %633 = vmatpush.bf16.xpose.msra.mxu0 0
    %634 = vmatpush.bf16.xpose.msra.mxu0 0
    %635 = vmatpush.bf16.xpose.msra.mxu0 0
    %636 = vmatpush.bf16.xpose.msra.mxu0 0
    %637 = vmatpush.bf16.xpose.msra.mxu0 0
    %638 = vmatpush.bf16.xpose.msra.mxu0 0
    %639 = vmatpush.bf16.xpose.msra.mxu0 0
    %640 = vmatpush.bf16.xpose.msra.mxu0 %v631
    %641 = vmatmul.bf16.gmra.mxu0 %v628
    %v642 = vpop.f32.mrf.mxu0
    %v643 = vadd.f32 0.0, %v642
    %v644 = vpop.f32.mrf.mxu0
    %645 = vdwg.mxu0
    %v646 = vmul.f32 %v643, 0.35355338
    %v647 = vadd.f32 %v646, %v443
    %v648 = vsel %vm444, %v647, -inf
    %649 = vmax.xlane.f32.xlu0 %v648
    %v650 = vpop.xlane.xlu0 %649
    %v651 = vsub.f32 %v647, %v650
    %v652 = vmul.f32 %v651, 1.442695
    %v653 = vpow.pop %v652
    %v654 = vsel %vm444, %v653, 0.0
    %655 = vadd.xlane.f32.xlu0 %v654
    %v656 = vpop.xlane.xlu0 %655
    %v657 = vrcp.pop %v656
    %v658 = vmul.f32 %v653, %v657
    %v659 = vpack.c.bf16 %v658, %v658
    %660 = vrot.lane.b32.xlu0 %v543, 104
    %v661 = vpop.permute.xlu0 %660
    %v663 = vsel %vm444, %v659, 0
    %v666 = vsel %vm481, %v661, 0
    %668 = vmatpush.bf16.msra.mxu0 0
    %669 = vmatpush.bf16.msra.mxu0 0
    %670 = vmatpush.bf16.msra.mxu0 0
    %671 = vmatpush.bf16.msra.mxu0 0
    %672 = vmatpush.bf16.msra.mxu0 0
    %673 = vmatpush.bf16.msra.mxu0 0
    %674 = vmatpush.bf16.msra.mxu0 0
    %675 = vmatpush.bf16.msra.mxu0 %v666
    %676 = vmatmul.bf16.gmra.mxu0 %v663
    %v677 = vpop.f32.mrf.mxu0
    %v678 = vadd.f32 0.0, %v677
    %v679 = vpop.f32.mrf.mxu0
    %680 = vdwg.mxu0
    %682 = vrot.lane.b32.xlu0 %v562, 8
    %v683 = vpop.permute.xlu0 %682
    %686 = vrot.lane.b32.xlu0 %v620, 16
    %v687 = vpop.permute.xlu0 %686
    %690 = vrot.lane.b32.xlu0 %v678, 24
    %v691 = vpop.permute.xlu0 %690
    %v693 = vsel %vm444, %v495, %v683
    %vm694 = vcmask 130048
    %v695 = vsel %vm694, %v693, %v687
    %vm696 = vcmask 195584
    %v697 = vsel %vm696, %v695, %v691
    %v699 = vsel %vm444, %v375, 0
    %v702 = vsel %vm444, %v406, 0
    %704 = vmatpush.bf16.xpose.msra.mxu0 0
    %705 = vmatpush.bf16.xpose.msra.mxu0 0
    %706 = vmatpush.bf16.xpose.msra.mxu0 0
    %707 = vmatpush.bf16.xpose.msra.mxu0 0
    %708 = vmatpush.bf16.xpose.msra.mxu0 0
    %709 = vmatpush.bf16.xpose.msra.mxu0 0
    %710 = vmatpush.bf16.xpose.msra.mxu0 0
    %711 = vmatpush.bf16.xpose.msra.mxu0 %v702
    %712 = vmatmul.bf16.gmra.mxu0 %v699
    %v713 = vpop.f32.mrf.mxu0
    %v714 = vadd.f32 0.0, %v713
    %v715 = vpop.f32.mrf.mxu0
    %716 = vdwg.mxu0
    %v717 = vmul.f32 %v714, 0.35355338
    %v718 = vadd.f32 %v717, %v443
    %v719 = vsel %vm444, %v718, -inf
    %720 = vmax.xlane.f32.xlu0 %v719
    %v721 = vpop.xlane.xlu0 %720
    %v722 = vsub.f32 %v718, %v721
    %v723 = vmul.f32 %v722, 1.442695
    %v724 = vpow.pop %v723
    %v725 = vsel %vm444, %v724, 0.0
    %726 = vadd.xlane.f32.xlu0 %v725
    %v727 = vpop.xlane.xlu0 %726
    %v728 = vrcp.pop %v727
    %v729 = vmul.f32 %v724, %v728
    %v730 = vpack.c.bf16 %v729, %v729
    %v732 = vsel %vm444, %v730, 0
    %v735 = vsel %vm481, %v437, 0
    %737 = vmatpush.bf16.msra.mxu0 0
    %738 = vmatpush.bf16.msra.mxu0 0
    %739 = vmatpush.bf16.msra.mxu0 0
    %740 = vmatpush.bf16.msra.mxu0 0
    %741 = vmatpush.bf16.msra.mxu0 0
    %742 = vmatpush.bf16.msra.mxu0 0
    %743 = vmatpush.bf16.msra.mxu0 0
    %744 = vmatpush.bf16.msra.mxu0 %v735
    %745 = vmatmul.bf16.gmra.mxu0 %v732
    %v746 = vpop.f32.mrf.mxu0
    %v747 = vadd.f32 0.0, %v746
    %v748 = vpop.f32.mrf.mxu0
    %749 = vdwg.mxu0
    %v751 = vunpack.c.l.b16 %v375
    %v752 = vpack.c.b16 %v751, %v751
    %753 = vrot.lane.b32.xlu0 %v752, 120
    %v754 = vpop.permute.xlu0 %753
    %v756 = vunpack.c.l.b16 %v406
    %v757 = vpack.c.b16 %v756, %v756
    %758 = vrot.lane.b32.xlu0 %v757, 120
    %v759 = vpop.permute.xlu0 %758
    %v761 = vsel %vm444, %v754, 0
    %v764 = vsel %vm444, %v759, 0
    %766 = vmatpush.bf16.xpose.msra.mxu0 0
    %767 = vmatpush.bf16.xpose.msra.mxu0 0
    %768 = vmatpush.bf16.xpose.msra.mxu0 0
    %769 = vmatpush.bf16.xpose.msra.mxu0 0
    %770 = vmatpush.bf16.xpose.msra.mxu0 0
    %771 = vmatpush.bf16.xpose.msra.mxu0 0
    %772 = vmatpush.bf16.xpose.msra.mxu0 0
    %773 = vmatpush.bf16.xpose.msra.mxu0 %v764
    %774 = vmatmul.bf16.gmra.mxu0 %v761
    %v775 = vpop.f32.mrf.mxu0
    %v776 = vadd.f32 0.0, %v775
    %v777 = vpop.f32.mrf.mxu0
    %778 = vdwg.mxu0
    %v779 = vmul.f32 %v776, 0.35355338
    %v780 = vadd.f32 %v779, %v443
    %v781 = vsel %vm444, %v780, -inf
    %782 = vmax.xlane.f32.xlu0 %v781
    %v783 = vpop.xlane.xlu0 %782
    %v784 = vsub.f32 %v780, %v783
    %v785 = vmul.f32 %v784, 1.442695
    %v786 = vpow.pop %v785
    %v787 = vsel %vm444, %v786, 0.0
    %788 = vadd.xlane.f32.xlu0 %v787
    %v789 = vpop.xlane.xlu0 %788
    %v790 = vrcp.pop %v789
    %v791 = vmul.f32 %v786, %v790
    %v792 = vpack.c.bf16 %v791, %v791
    %v794 = vunpack.c.l.b16 %v437
    %v795 = vpack.c.b16 %v794, %v794
    %796 = vrot.lane.b32.xlu0 %v795, 120
    %v797 = vpop.permute.xlu0 %796
    %v799 = vsel %vm444, %v792, 0
    %v802 = vsel %vm481, %v797, 0
    %804 = vmatpush.bf16.msra.mxu0 0
    %805 = vmatpush.bf16.msra.mxu0 0
    %806 = vmatpush.bf16.msra.mxu0 0
    %807 = vmatpush.bf16.msra.mxu0 0
    %808 = vmatpush.bf16.msra.mxu0 0
    %809 = vmatpush.bf16.msra.mxu0 0
    %810 = vmatpush.bf16.msra.mxu0 0
    %811 = vmatpush.bf16.msra.mxu0 %v802
    %812 = vmatmul.bf16.gmra.mxu0 %v799
    %v813 = vpop.f32.mrf.mxu0
    %v814 = vadd.f32 0.0, %v813
    %v815 = vpop.f32.mrf.mxu0
    %816 = vdwg.mxu0
    %817 = vrot.lane.b32.xlu0 %v752, 112
    %v818 = vpop.permute.xlu0 %817
    %819 = vrot.lane.b32.xlu0 %v757, 112
    %v820 = vpop.permute.xlu0 %819
    %v822 = vsel %vm444, %v818, 0
    %v825 = vsel %vm444, %v820, 0
    %827 = vmatpush.bf16.xpose.msra.mxu0 0
    %828 = vmatpush.bf16.xpose.msra.mxu0 0
    %829 = vmatpush.bf16.xpose.msra.mxu0 0
    %830 = vmatpush.bf16.xpose.msra.mxu0 0
    %831 = vmatpush.bf16.xpose.msra.mxu0 0
    %832 = vmatpush.bf16.xpose.msra.mxu0 0
    %833 = vmatpush.bf16.xpose.msra.mxu0 0
    %834 = vmatpush.bf16.xpose.msra.mxu0 %v825
    %835 = vmatmul.bf16.gmra.mxu0 %v822
    %v836 = vpop.f32.mrf.mxu0
    %v837 = vadd.f32 0.0, %v836
    %v838 = vpop.f32.mrf.mxu0
    %839 = vdwg.mxu0
    %v840 = vmul.f32 %v837, 0.35355338
    %v841 = vadd.f32 %v840, %v443
    %v842 = vsel %vm444, %v841, -inf
    %843 = vmax.xlane.f32.xlu0 %v842
    %v844 = vpop.xlane.xlu0 %843
    %v845 = vsub.f32 %v841, %v844
    %v846 = vmul.f32 %v845, 1.442695
    %v847 = vpow.pop %v846
    %v848 = vsel %vm444, %v847, 0.0
    %849 = vadd.xlane.f32.xlu0 %v848
    %v850 = vpop.xlane.xlu0 %849
    %v851 = vrcp.pop %v850
    %v852 = vmul.f32 %v847, %v851
    %v853 = vpack.c.bf16 %v852, %v852
    %854 = vrot.lane.b32.xlu0 %v795, 112
    %v855 = vpop.permute.xlu0 %854
    %v857 = vsel %vm444, %v853, 0
    %v860 = vsel %vm481, %v855, 0
    %862 = vmatpush.bf16.msra.mxu0 0
    %863 = vmatpush.bf16.msra.mxu0 0
    %864 = vmatpush.bf16.msra.mxu0 0
    %865 = vmatpush.bf16.msra.mxu0 0
    %866 = vmatpush.bf16.msra.mxu0 0
    %867 = vmatpush.bf16.msra.mxu0 0
    %868 = vmatpush.bf16.msra.mxu0 0
    %869 = vmatpush.bf16.msra.mxu0 %v860
    %870 = vmatmul.bf16.gmra.mxu0 %v857
    %v871 = vpop.f32.mrf.mxu0
    %v872 = vadd.f32 0.0, %v871
    %v873 = vpop.f32.mrf.mxu0
    %874 = vdwg.mxu0
    %875 = vrot.lane.b32.xlu0 %v752, 104
    %v876 = vpop.permute.xlu0 %875
    %877 = vrot.lane.b32.xlu0 %v757, 104
    %v878 = vpop.permute.xlu0 %877
    %v880 = vsel %vm444, %v876, 0
    %v883 = vsel %vm444, %v878, 0
    %885 = vmatpush.bf16.xpose.msra.mxu0 0
    %886 = vmatpush.bf16.xpose.msra.mxu0 0
    %887 = vmatpush.bf16.xpose.msra.mxu0 0
    %888 = vmatpush.bf16.xpose.msra.mxu0 0
    %889 = vmatpush.bf16.xpose.msra.mxu0 0
    %890 = vmatpush.bf16.xpose.msra.mxu0 0
    %891 = vmatpush.bf16.xpose.msra.mxu0 0
    %892 = vmatpush.bf16.xpose.msra.mxu0 %v883
    %893 = vmatmul.bf16.gmra.mxu0 %v880
    %v894 = vpop.f32.mrf.mxu0
    %v895 = vadd.f32 0.0, %v894
    %v896 = vpop.f32.mrf.mxu0
    %897 = vdwg.mxu0
    %v898 = vmul.f32 %v895, 0.35355338
    %v899 = vadd.f32 %v898, %v443
    %v900 = vsel %vm444, %v899, -inf
    %901 = vmax.xlane.f32.xlu0 %v900
    %v902 = vpop.xlane.xlu0 %901
    %v903 = vsub.f32 %v899, %v902
    %v904 = vmul.f32 %v903, 1.442695
    %v905 = vpow.pop %v904
    %v906 = vsel %vm444, %v905, 0.0
    %907 = vadd.xlane.f32.xlu0 %v906
    %v908 = vpop.xlane.xlu0 %907
    %v909 = vrcp.pop %v908
    %v910 = vmul.f32 %v905, %v909
    %v911 = vpack.c.bf16 %v910, %v910
    %912 = vrot.lane.b32.xlu0 %v795, 104
    %v913 = vpop.permute.xlu0 %912
    %v915 = vsel %vm444, %v911, 0
    %v918 = vsel %vm481, %v913, 0
    %920 = vmatpush.bf16.msra.mxu0 0
    %921 = vmatpush.bf16.msra.mxu0 0
    %922 = vmatpush.bf16.msra.mxu0 0
    %923 = vmatpush.bf16.msra.mxu0 0
    %924 = vmatpush.bf16.msra.mxu0 0
    %925 = vmatpush.bf16.msra.mxu0 0
    %926 = vmatpush.bf16.msra.mxu0 0
    %927 = vmatpush.bf16.msra.mxu0 %v918
    %928 = vmatmul.bf16.gmra.mxu0 %v915
    %v929 = vpop.f32.mrf.mxu0
    %v930 = vadd.f32 0.0, %v929
    %v931 = vpop.f32.mrf.mxu0
    %932 = vdwg.mxu0
    %934 = vrot.lane.b32.xlu0 %v814, 8
    %v935 = vpop.permute.xlu0 %934
    %938 = vrot.lane.b32.xlu0 %v872, 16
    %v939 = vpop.permute.xlu0 %938
    %942 = vrot.lane.b32.xlu0 %v930, 24
    %v943 = vpop.permute.xlu0 %942
    %v945 = vsel %vm444, %v747, %v935
    %v946 = vsel %vm694, %v945, %v939
    %v947 = vsel %vm696, %v946, %v943
    %v948 = vpack.c.bf16 %v947, %v697
    %v950 = vperm.slane %v333, 0
    %v956 = vunpack.c.l.b16 %v329
    %v957 = vunpack.c.l.b16 %v330
    %v958 = vunpack.c.l.b16 %v331
    %v959 = vunpack.c.l.b16 %v332
    %v960 = vpack.c.b16 %v957, %v956
    %v961 = vpack.c.b16 %v959, %v958
    %v965 = vsel %vm356, %v948, 0
    %967 = vmatpush.bf16.msra.mxu0 0
    %968 = vmatpush.bf16.msra.mxu0 0
    %969 = vmatpush.bf16.msra.mxu0 0
    %970 = vmatpush.bf16.msra.mxu0 0
    %971 = vmatpush.bf16.msra.mxu0 0
    %972 = vmatpush.bf16.msra.mxu0 0
    %973 = vmatpush.bf16.msra.mxu0 %v961
    %974 = vmatpush.bf16.msra.mxu0 %v960
    %975 = vmatmul.bf16.gmra.mxu0 %v965
    %v976 = vpop.f32.mrf.mxu0
    %v977 = vadd.f32 %v950, %v976
    %v978 = vpop.f32.mrf.mxu0
    %v979 = vadd.f32 %v950, %v978
    %980 = vdwg.mxu0
    %v981 = vadd.f32 %v309, %v977
    %v982 = vadd.f32 %v310, %v979
    %v983 = vsel %vm356, %v981, 0.0
    %984 = vadd.xlane.f32.xlu0 %v983
    %v985 = vpop.xlane.xlu0 %984
    %v986 = vsel %vm356, %v982, 0.0
    %987 = vadd.xlane.f32.xlu0 %v986
    %v988 = vpop.xlane.xlu0 %987
    %v989 = vrcp.pop 32.0
    %v990 = vmul.f32 32.0, %v989
    %v991 = vsub.f32 1.0, %v990
    %v992 = vmul.f32 %v989, %v991
    %v993 = vadd.f32 %v989, %v992
    %vm994 = vweird.f32 %v989
    %v995 = vsel %vm994, %v989, %v993
    %v996 = vmul.f32 %v985, %v995
    %v997 = vmul.f32 %v988, %v995
    %v998 = vsub.f32 %v981, %v996
    %v999 = vsub.f32 %v982, %v997
    %v1000 = vmul.f32 %v998, %v998
    %v1001 = vmul.f32 %v999, %v999
    %v1002 = vsel %vm356, %v1000, 0.0
    %1003 = vadd.xlane.f32.xlu0 %v1002
    %v1004 = vpop.xlane.xlu0 %1003
    %v1005 = vsel %vm356, %v1001, 0.0
    %1006 = vadd.xlane.f32.xlu0 %v1005
    %v1007 = vpop.xlane.xlu0 %1006
    %v1008 = vmul.f32 %v1004, %v995
    %v1009 = vmul.f32 %v1007, %v995
    %v1010 = vadd.f32 %v1008, 1e-05
    %v1011 = vadd.f32 %v1009, 1e-05
    %v1012 = vrsqrt.pop %v1010
    %v1013 = vmul.f32 %v1012, %v1010
    %v1014 = vmul.f32 %v1013, %v1012
    %v1015 = vmul.f32 0.5, %v1014
    %v1016 = vsub.f32 1.5, %v1015
    %v1017 = vmul.f32 %v1012, %v1016
    %vm1018 = vweird.f32 %v1010
    %vm1019 = vweird.f32 %v1012
    %vm1020 = vmor %vm1018, %vm1019
    %v1021 = vsel %vm1020, %v1012, %v1017
    %v1022 = vrsqrt.pop %v1011
    %v1023 = vmul.f32 %v1022, %v1011
    %v1024 = vmul.f32 %v1023, %v1022
    %v1025 = vmul.f32 0.5, %v1024
    %v1026 = vsub.f32 1.5, %v1025
    %v1027 = vmul.f32 %v1022, %v1026
    %vm1028 = vweird.f32 %v1011
    %vm1029 = vweird.f32 %v1022
    %vm1030 = vmor %vm1028, %vm1029
    %v1031 = vsel %vm1030, %v1022, %v1027
    %v1032 = vmul.f32 %v998, %v1021
    %v1033 = vmul.f32 %v999, %v1031
    %v1035 = vperm.slane %v334, 0
    %v1037 = vmul.f32 %v1032, %v1035
    %v1038 = vmul.f32 %v1033, %v1035
    %v1040 = vperm.slane %v335, 0
    %v1042 = vadd.f32 %v1037, %v1040
    %v1043 = vadd.f32 %v1038, %v1040
    %v1044 = vpack.c.bf16 %v1043, %v1042
    %v1045 = vld [vmem:[%s12] sm:$0xf]
    %v1046 = vld [vmem:[%s12 + $0x4] sm:$0xf]
    %v1047 = vld [vmem:[%s12 + $0x8] sm:$0xf]
    %v1048 = vld [vmem:[%s12 + $0xc] sm:$0xf]
    %v1049 = vld [vmem:[#allocation12] sm:$0x1]
    %v1050 = vld [vmem:[%s14] sm:$0xf]
    %v1051 = vld [vmem:[%s14 + $0x4] sm:$0xf]
    %v1052 = vld [vmem:[%s14 + $0x8] sm:$0xf]
    %v1053 = vld [vmem:[%s14 + $0xc] sm:$0xf]
    %v1054 = vld [vmem:[#allocation13] sm:$0x1]
    %v1055 = vld [vmem:[%s16] sm:$0xf]
    %v1056 = vld [vmem:[%s16 + $0x4] sm:$0xf]
    %v1057 = vld [vmem:[%s16 + $0x8] sm:$0xf]
    %v1058 = vld [vmem:[%s16 + $0xc] sm:$0xf]
    %v1059 = vld [vmem:[#allocation15] sm:$0x1]
    %v1060 = vld [vmem:[%s18] sm:$0xf]
    %v1061 = vld [vmem:[%s18 + $0x4] sm:$0xf]
    %v1062 = vld [vmem:[%s18 + $0x8] sm:$0xf]
    %v1063 = vld [vmem:[%s18 + $0xc] sm:$0xf]
    %v1064 = vld [vmem:[#allocation16] sm:$0x1]
    %v1065 = vld [vmem:[#allocation18] sm:$0x1]
    %v1066 = vld [vmem:[#allocation19] sm:$0x1]
    %v1068 = vperm.slane %v1049, 0
    %v1074 = vunpack.c.l.b16 %v1045
    %v1075 = vunpack.c.l.b16 %v1046
    %v1076 = vunpack.c.l.b16 %v1047
    %v1077 = vunpack.c.l.b16 %v1048
    %v1078 = vpack.c.b16 %v1075, %v1074
    %v1079 = vpack.c.b16 %v1077, %v1076
    %v1083 = vsel %vm356, %v1044, 0
    %1085 = vmatpush.bf16.msra.mxu0 0
    %1086 = vmatpush.bf16.msra.mxu0 0
    %1087 = vmatpush.bf16.msra.mxu0 0
    %1088 = vmatpush.bf16.msra.mxu0 0
    %1089 = vmatpush.bf16.msra.mxu0 0
    %1090 = vmatpush.bf16.msra.mxu0 0
    %1091 = vmatpush.bf16.msra.mxu0 %v1079
    %1092 = vmatpush.bf16.msra.mxu0 %v1078
    %1093 = vmatmul.bf16.gmra.mxu0 %v1083
    %v1094 = vpop.f32.mrf.mxu0
    %v1095 = vadd.f32 %v1068, %v1094
    %v1096 = vpop.f32.mrf.mxu0
    %v1097 = vadd.f32 %v1068, %v1096
    %1098 = vdwg.mxu0
    %v1099 = vpack.c.bf16 %v1095, %v1095
    %v1100 = vpack.c.bf16 %v1097, %v1097
    %v1102 = vperm.slane %v1054, 0
    %v1107 = vunpack.c.l.b16 %v311
    %v1108 = vunpack.c.l.b16 %v312
    %v1109 = vunpack.c.l.b16 %v313
    %v1110 = vpack.c.b16 %v1108, %v1107
    %v1111 = vpack.c.b16 %v1109, %v1109
    %v1116 = vunpack.c.l.b16 %v1050
    %v1117 = vunpack.c.l.b16 %v1051
    %v1118 = vunpack.c.l.b16 %v1052
    %v1119 = vunpack.c.l.b16 %v1053
    %v1120 = vpack.c.b16 %v1117, %v1116
    %v1121 = vpack.c.b16 %v1119, %v1118
    %v1125 = vsel %vm356, %v1110, 0
    %v1128 = vsel %vm356, %v1111, 0
    %1130 = vmatpush.bf16.msra.mxu0 0
    %1131 = vmatpush.bf16.msra.mxu0 0
    %1132 = vmatpush.bf16.msra.mxu0 0
    %1133 = vmatpush.bf16.msra.mxu0 0
    %1134 = vmatpush.bf16.msra.mxu0 0
    %1135 = vmatpush.bf16.msra.mxu0 0
    %1136 = vmatpush.bf16.msra.mxu0 %v1121
    %1137 = vmatpush.bf16.msra.mxu0 %v1120
    %1138 = vmatmul.bf16.gmra.mxu0 %v1125
    %v1139 = vpop.f32.mrf.mxu0
    %v1140 = vadd.f32 %v1102, %v1139
    %v1141 = vpop.f32.mrf.mxu0
    %v1142 = vadd.f32 %v1102, %v1141
    %1143 = vmatmul.bf16.gmra.mxu0 %v1128
    %v1144 = vpop.f32.mrf.mxu0
    %v1145 = vadd.f32 %v1102, %v1144
    %v1146 = vpop.f32.mrf.mxu0
    %1147 = vdwg.mxu0
    %v1148 = vpack.c.bf16 %v1140, %v1140
    %v1149 = vpack.c.bf16 %v1142, %v1142
    %v1150 = vpack.c.bf16 %v1145, %v1145
    %v1152 = vperm.slane %v1059, 0
    %v1158 = vunpack.c.l.b16 %v1055
    %v1159 = vunpack.c.l.b16 %v1056
    %v1160 = vunpack.c.l.b16 %v1057
    %v1161 = vunpack.c.l.b16 %v1058
    %v1162 = vpack.c.b16 %v1159, %v1158
    %v1163 = vpack.c.b16 %v1161, %v1160
    %1166 = vmatpush.bf16.msra.mxu0 0
    %1167 = vmatpush.bf16.msra.mxu0 0
    %1168 = vmatpush.bf16.msra.mxu0 0
    %1169 = vmatpush.bf16.msra.mxu0 0
    %1170 = vmatpush.bf16.msra.mxu0 0
    %1171 = vmatpush.bf16.msra.mxu0 0
    %1172 = vmatpush.bf16.msra.mxu0 %v1163
    %1173 = vmatpush.bf16.msra.mxu0 %v1162
    %1174 = vmatmul.bf16.gmra.mxu0 %v1125
    %v1175 = vpop.f32.mrf.mxu0
    %v1176 = vadd.f32 %v1152, %v1175
    %v1177 = vpop.f32.mrf.mxu0
    %v1178 = vadd.f32 %v1152, %v1177
    %1179 = vmatmul.bf16.gmra.mxu0 %v1128
    %v1180 = vpop.f32.mrf.mxu0
    %v1181 = vadd.f32 %v1152, %v1180
    %v1182 = vpop.f32.mrf.mxu0
    %1183 = vdwg.mxu0
    %v1184 = vpack.c.bf16 %v1176, %v1176
    %v1185 = vpack.c.bf16 %v1178, %v1178
    %v1186 = vpack.c.bf16 %v1181, %v1181
    %v1189 = vunpack.c.l.b16 %v1148
    %v1190 = vunpack.c.l.b16 %v1149
    %v1191 = vpack.c.b16 %v1190, %v1189
    %v1193 = vsel %vm444, %v1099, 0
    %v1196 = vsel %vm444, %v1191, 0
    %1198 = vmatpush.bf16.xpose.msra.mxu0 0
    %1199 = vmatpush.bf16.xpose.msra.mxu0 0
    %1200 = vmatpush.bf16.xpose.msra.mxu0 0
    %1201 = vmatpush.bf16.xpose.msra.mxu0 0
    %1202 = vmatpush.bf16.xpose.msra.mxu0 0
    %1203 = vmatpush.bf16.xpose.msra.mxu0 0
    %1204 = vmatpush.bf16.xpose.msra.mxu0 0
    %1205 = vmatpush.bf16.xpose.msra.mxu0 %v1196
    %1206 = vmatmul.bf16.gmra.mxu0 %v1193
    %v1207 = vpop.f32.mrf.mxu0
    %v1208 = vadd.f32 0.0, %v1207
    %v1209 = vpop.f32.mrf.mxu0
    %1210 = vdwg.mxu0
    %v1211 = vmul.f32 %v1208, 0.35355338
    %vm1212 = vcmask 80896
    %v1213 = vsel %vm1212, %v1211, -inf
    %1214 = vmax.xlane.f32.xlu0 %v1213
    %v1215 = vpop.xlane.xlu0 %1214
    %v1216 = vsub.f32 %v1211, %v1215
    %v1217 = vmul.f32 %v1216, 1.442695
    %v1218 = vpow.pop %v1217
    %v1219 = vsel %vm1212, %v1218, 0.0
    %1220 = vadd.xlane.f32.xlu0 %v1219
    %v1221 = vpop.xlane.xlu0 %1220
    %v1222 = vrcp.pop %v1221
    %v1223 = vmul.f32 %v1218, %v1222
    %v1224 = vpack.c.bf16 %v1223, %v1223
    %v1227 = vunpack.c.l.b16 %v1184
    %v1228 = vunpack.c.l.b16 %v1185
    %v1229 = vpack.c.b16 %v1228, %v1227
    %v1231 = vsel %vm1212, %v1224, 0
    %vm1233 = vcmask 1044480
    %v1235 = vsel %vm1233, %v1229, 0
    %1237 = vmatpush.bf16.msra.mxu0 0
    %1238 = vmatpush.bf16.msra.mxu0 0
    %1239 = vmatpush.bf16.msra.mxu0 0
    %1240 = vmatpush.bf16.msra.mxu0 0
    %1241 = vmatpush.bf16.msra.mxu0 0
    %1242 = vmatpush.bf16.msra.mxu0 0
    %1243 = vmatpush.bf16.msra.mxu0 0
    %1244 = vmatpush.bf16.msra.mxu0 %v1235
    %1245 = vmatmul.bf16.gmra.mxu0 %v1231
    %v1246 = vpop.f32.mrf.mxu0
    %v1247 = vadd.f32 0.0, %v1246
    %v1248 = vpop.f32.mrf.mxu0
    %1249 = vdwg.mxu0
    %v1251 = vunpack.c.l.b16 %v1099
    %v1252 = vpack.c.b16 %v1251, %v1251
    %1253 = vrot.lane.b32.xlu0 %v1252, 120
    %v1254 = vpop.permute.xlu0 %1253
    %1255 = vrot.lane.b32.xlu0 %v1191, 120
    %v1256 = vpop.permute.xlu0 %1255
    %v1258 = vsel %vm444, %v1254, 0
    %v1261 = vsel %vm444, %v1256, 0
    %1263 = vmatpush.bf16.xpose.msra.mxu0 0
    %1264 = vmatpush.bf16.xpose.msra.mxu0 0
    %1265 = vmatpush.bf16.xpose.msra.mxu0 0
    %1266 = vmatpush.bf16.xpose.msra.mxu0 0
    %1267 = vmatpush.bf16.xpose.msra.mxu0 0
    %1268 = vmatpush.bf16.xpose.msra.mxu0 0
    %1269 = vmatpush.bf16.xpose.msra.mxu0 0
    %1270 = vmatpush.bf16.xpose.msra.mxu0 %v1261
    %1271 = vmatmul.bf16.gmra.mxu0 %v1258
    %v1272 = vpop.f32.mrf.mxu0
    %v1273 = vadd.f32 0.0, %v1272
    %v1274 = vpop.f32.mrf.mxu0
    %1275 = vdwg.mxu0
    %v1276 = vmul.f32 %v1273, 0.35355338
    %v1277 = vsel %vm1212, %v1276, -inf
    %1278 = vmax.xlane.f32.xlu0 %v1277
    %v1279 = vpop.xlane.xlu0 %1278
    %v1280 = vsub.f32 %v1276, %v1279
    %v1281 = vmul.f32 %v1280, 1.442695
    %v1282 = vpow.pop %v1281
    %v1283 = vsel %vm1212, %v1282, 0.0
    %1284 = vadd.xlane.f32.xlu0 %v1283
    %v1285 = vpop.xlane.xlu0 %1284
    %v1286 = vrcp.pop %v1285
    %v1287 = vmul.f32 %v1282, %v1286
    %v1288 = vpack.c.bf16 %v1287, %v1287
    %1289 = vrot.lane.b32.xlu0 %v1229, 120
    %v1290 = vpop.permute.xlu0 %1289
    %v1292 = vsel %vm1212, %v1288, 0
    %v1295 = vsel %vm1233, %v1290, 0
    %1297 = vmatpush.bf16.msra.mxu0 0
    %1298 = vmatpush.bf16.msra.mxu0 0
    %1299 = vmatpush.bf16.msra.mxu0 0
    %1300 = vmatpush.bf16.msra.mxu0 0
    %1301 = vmatpush.bf16.msra.mxu0 0
    %1302 = vmatpush.bf16.msra.mxu0 0
    %1303 = vmatpush.bf16.msra.mxu0 0
    %1304 = vmatpush.bf16.msra.mxu0 %v1295
    %1305 = vmatmul.bf16.gmra.mxu0 %v1292
    %v1306 = vpop.f32.mrf.mxu0
    %v1307 = vadd.f32 0.0, %v1306
    %v1308 = vpop.f32.mrf.mxu0
    %1309 = vdwg.mxu0
    %1310 = vrot.lane.b32.xlu0 %v1252, 112
    %v1311 = vpop.permute.xlu0 %1310
    %1312 = vrot.lane.b32.xlu0 %v1191, 112
    %v1313 = vpop.permute.xlu0 %1312
    %v1315 = vsel %vm444, %v1311, 0
    %v1318 = vsel %vm444, %v1313, 0
    %1320 = vmatpush.bf16.xpose.msra.mxu0 0
    %1321 = vmatpush.bf16.xpose.msra.mxu0 0
    %1322 = vmatpush.bf16.xpose.msra.mxu0 0
    %1323 = vmatpush.bf16.xpose.msra.mxu0 0
    %1324 = vmatpush.bf16.xpose.msra.mxu0 0
    %1325 = vmatpush.bf16.xpose.msra.mxu0 0
    %1326 = vmatpush.bf16.xpose.msra.mxu0 0
    %1327 = vmatpush.bf16.xpose.msra.mxu0 %v1318
    %1328 = vmatmul.bf16.gmra.mxu0 %v1315
    %v1329 = vpop.f32.mrf.mxu0
    %v1330 = vadd.f32 0.0, %v1329
    %v1331 = vpop.f32.mrf.mxu0
    %1332 = vdwg.mxu0
    %v1333 = vmul.f32 %v1330, 0.35355338
    %v1334 = vsel %vm1212, %v1333, -inf
    %1335 = vmax.xlane.f32.xlu0 %v1334
    %v1336 = vpop.xlane.xlu0 %1335
    %v1337 = vsub.f32 %v1333, %v1336
    %v1338 = vmul.f32 %v1337, 1.442695
    %v1339 = vpow.pop %v1338
    %v1340 = vsel %vm1212, %v1339, 0.0
    %1341 = vadd.xlane.f32.xlu0 %v1340
    %v1342 = vpop.xlane.xlu0 %1341
    %v1343 = vrcp.pop %v1342
    %v1344 = vmul.f32 %v1339, %v1343
    %v1345 = vpack.c.bf16 %v1344, %v1344
    %1346 = vrot.lane.b32.xlu0 %v1229, 112
    %v1347 = vpop.permute.xlu0 %1346
    %v1349 = vsel %vm1212, %v1345, 0
    %v1352 = vsel %vm1233, %v1347, 0
    %1354 = vmatpush.bf16.msra.mxu0 0
    %1355 = vmatpush.bf16.msra.mxu0 0
    %1356 = vmatpush.bf16.msra.mxu0 0
    %1357 = vmatpush.bf16.msra.mxu0 0
    %1358 = vmatpush.bf16.msra.mxu0 0
    %1359 = vmatpush.bf16.msra.mxu0 0
    %1360 = vmatpush.bf16.msra.mxu0 0
    %1361 = vmatpush.bf16.msra.mxu0 %v1352
    %1362 = vmatmul.bf16.gmra.mxu0 %v1349
    %v1363 = vpop.f32.mrf.mxu0
    %v1364 = vadd.f32 0.0, %v1363
    %v1365 = vpop.f32.mrf.mxu0
    %1366 = vdwg.mxu0
    %1367 = vrot.lane.b32.xlu0 %v1252, 104
    %v1368 = vpop.permute.xlu0 %1367
    %1369 = vrot.lane.b32.xlu0 %v1191, 104
    %v1370 = vpop.permute.xlu0 %1369
    %v1372 = vsel %vm444, %v1368, 0
    %v1375 = vsel %vm444, %v1370, 0
    %1377 = vmatpush.bf16.xpose.msra.mxu0 0
    %1378 = vmatpush.bf16.xpose.msra.mxu0 0
    %1379 = vmatpush.bf16.xpose.msra.mxu0 0
    %1380 = vmatpush.bf16.xpose.msra.mxu0 0
    %1381 = vmatpush.bf16.xpose.msra.mxu0 0
    %1382 = vmatpush.bf16.xpose.msra.mxu0 0
    %1383 = vmatpush.bf16.xpose.msra.mxu0 0
    %1384 = vmatpush.bf16.xpose.msra.mxu0 %v1375
    %1385 = vmatmul.bf16.gmra.mxu0 %v1372
    %v1386 = vpop.f32.mrf.mxu0
    %v1387 = vadd.f32 0.0, %v1386
    %v1388 = vpop.f32.mrf.mxu0
    %1389 = vdwg.mxu0
    %v1390 = vmul.f32 %v1387, 0.35355338
    %v1391 = vsel %vm1212, %v1390, -inf
    %1392 = vmax.xlane.f32.xlu0 %v1391
    %v1393 = vpop.xlane.xlu0 %1392
    %v1394 = vsub.f32 %v1390, %v1393
    %v1395 = vmul.f32 %v1394, 1.442695
    %v1396 = vpow.pop %v1395
    %v1397 = vsel %vm1212, %v1396, 0.0
    %1398 = vadd.xlane.f32.xlu0 %v1397
    %v1399 = vpop.xlane.xlu0 %1398
    %v1400 = vrcp.pop %v1399
    %v1401 = vmul.f32 %v1396, %v1400
    %v1402 = vpack.c.bf16 %v1401, %v1401
    %1403 = vrot.lane.b32.xlu0 %v1229, 104
    %v1404 = vpop.permute.xlu0 %1403
    %v1406 = vsel %vm1212, %v1402, 0
    %v1409 = vsel %vm1233, %v1404, 0
    %1411 = vmatpush.bf16.msra.mxu0 0
    %1412 = vmatpush.bf16.msra.mxu0 0
    %1413 = vmatpush.bf16.msra.mxu0 0
    %1414 = vmatpush.bf16.msra.mxu0 0
    %1415 = vmatpush.bf16.msra.mxu0 0
    %1416 = vmatpush.bf16.msra.mxu0 0
    %1417 = vmatpush.bf16.msra.mxu0 0
    %1418 = vmatpush.bf16.msra.mxu0 %v1409
    %1419 = vmatmul.bf16.gmra.mxu0 %v1406
    %v1420 = vpop.f32.mrf.mxu0
    %v1421 = vadd.f32 0.0, %v1420
    %v1422 = vpop.f32.mrf.mxu0
    %1423 = vdwg.mxu0
    %1425 = vrot.lane.b32.xlu0 %v1307, 8
    %v1426 = vpop.permute.xlu0 %1425
    %1429 = vrot.lane.b32.xlu0 %v1364, 16
    %v1430 = vpop.permute.xlu0 %1429
    %1433 = vrot.lane.b32.xlu0 %v1421, 24
    %v1434 = vpop.permute.xlu0 %1433
    %v1436 = vsel %vm444, %v1247, %v1426
    %v1437 = vsel %vm694, %v1436, %v1430
    %v1438 = vsel %vm696, %v1437, %v1434
    %v1440 = vunpack.c.l.b16 %v1150
    %v1441 = vpack.c.b16 %v1440, %v1190
    %v1442 = vrot.slane %v1441, 1
    %v1444 = vsel %vm444, %v1100, 0
    %v1447 = vsel %vm444, %v1442, 0
    %1449 = vmatpush.bf16.xpose.msra.mxu0 0
    %1450 = vmatpush.bf16.xpose.msra.mxu0 0
    %1451 = vmatpush.bf16.xpose.msra.mxu0 0
    %1452 = vmatpush.bf16.xpose.msra.mxu0 0
    %1453 = vmatpush.bf16.xpose.msra.mxu0 0
    %1454 = vmatpush.bf16.xpose.msra.mxu0 0
    %1455 = vmatpush.bf16.xpose.msra.mxu0 0
    %1456 = vmatpush.bf16.xpose.msra.mxu0 %v1447
    %1457 = vmatmul.bf16.gmra.mxu0 %v1444
    %v1458 = vpop.f32.mrf.mxu0
    %v1459 = vadd.f32 0.0, %v1458
    %v1460 = vpop.f32.mrf.mxu0
    %1461 = vdwg.mxu0
    %v1462 = vmul.f32 %v1459, 0.35355338
    %v1463 = vsel %vm1212, %v1462, -inf
    %1464 = vmax.xlane.f32.xlu0 %v1463
    %v1465 = vpop.xlane.xlu0 %1464
    %v1466 = vsub.f32 %v1462, %v1465
    %v1467 = vmul.f32 %v1466, 1.442695
    %v1468 = vpow.pop %v1467
    %v1469 = vsel %vm1212, %v1468, 0.0
    %1470 = vadd.xlane.f32.xlu0 %v1469
    %v1471 = vpop.xlane.xlu0 %1470
    %v1472 = vrcp.pop %v1471
    %v1473 = vmul.f32 %v1468, %v1472
    %v1474 = vpack.c.bf16 %v1473, %v1473
    %v1476 = vunpack.c.l.b16 %v1186
    %v1477 = vpack.c.b16 %v1476, %v1228
    %v1478 = vrot.slane %v1477, 1
    %v1480 = vsel %vm1212, %v1474, 0
    %v1483 = vsel %vm1233, %v1478, 0
    %1485 = vmatpush.bf16.msra.mxu0 0
    %1486 = vmatpush.bf16.msra.mxu0 0
    %1487 = vmatpush.bf16.msra.mxu0 0
    %1488 = vmatpush.bf16.msra.mxu0 0
    %1489 = vmatpush.bf16.msra.mxu0 0
    %1490 = vmatpush.bf16.msra.mxu0 0
    %1491 = vmatpush.bf16.msra.mxu0 0
    %1492 = vmatpush.bf16.msra.mxu0 %v1483
    %1493 = vmatmul.bf16.gmra.mxu0 %v1480
    %v1494 = vpop.f32.mrf.mxu0
    %v1495 = vadd.f32 0.0, %v1494
    %v1496 = vpop.f32.mrf.mxu0
    %1497 = vdwg.mxu0
    %v1499 = vunpack.c.l.b16 %v1100
    %v1500 = vpack.c.b16 %v1499, %v1499
    %1501 = vrot.lane.b32.xlu0 %v1500, 120
    %v1502 = vpop.permute.xlu0 %1501
    %1503 = vrot.lane.b32.xlu0 %v1442, 120
    %v1504 = vpop.permute.xlu0 %1503
    %v1506 = vsel %vm444, %v1502, 0
    %v1509 = vsel %vm444, %v1504, 0
    %1511 = vmatpush.bf16.xpose.msra.mxu0 0
    %1512 = vmatpush.bf16.xpose.msra.mxu0 0
    %1513 = vmatpush.bf16.xpose.msra.mxu0 0
    %1514 = vmatpush.bf16.xpose.msra.mxu0 0
    %1515 = vmatpush.bf16.xpose.msra.mxu0 0
    %1516 = vmatpush.bf16.xpose.msra.mxu0 0
    %1517 = vmatpush.bf16.xpose.msra.mxu0 0
    %1518 = vmatpush.bf16.xpose.msra.mxu0 %v1509
    %1519 = vmatmul.bf16.gmra.mxu0 %v1506
    %v1520 = vpop.f32.mrf.mxu0
    %v1521 = vadd.f32 0.0, %v1520
    %v1522 = vpop.f32.mrf.mxu0
    %1523 = vdwg.mxu0
    %v1524 = vmul.f32 %v1521, 0.35355338
    %v1525 = vsel %vm1212, %v1524, -inf
    %1526 = vmax.xlane.f32.xlu0 %v1525
    %v1527 = vpop.xlane.xlu0 %1526
    %v1528 = vsub.f32 %v1524, %v1527
    %v1529 = vmul.f32 %v1528, 1.442695
    %v1530 = vpow.pop %v1529
    %v1531 = vsel %vm1212, %v1530, 0.0
    %1532 = vadd.xlane.f32.xlu0 %v1531
    %v1533 = vpop.xlane.xlu0 %1532
    %v1534 = vrcp.pop %v1533
    %v1535 = vmul.f32 %v1530, %v1534
    %v1536 = vpack.c.bf16 %v1535, %v1535
    %1537 = vrot.lane.b32.xlu0 %v1478, 120
    %v1538 = vpop.permute.xlu0 %1537
    %v1540 = vsel %vm1212, %v1536, 0
    %v1543 = vsel %vm1233, %v1538, 0
    %1545 = vmatpush.bf16.msra.mxu0 0
    %1546 = vmatpush.bf16.msra.mxu0 0
    %1547 = vmatpush.bf16.msra.mxu0 0
    %1548 = vmatpush.bf16.msra.mxu0 0
    %1549 = vmatpush.bf16.msra.mxu0 0
    %1550 = vmatpush.bf16.msra.mxu0 0
    %1551 = vmatpush.bf16.msra.mxu0 0
    %1552 = vmatpush.bf16.msra.mxu0 %v1543
    %1553 = vmatmul.bf16.gmra.mxu0 %v1540
    %v1554 = vpop.f32.mrf.mxu0
    %v1555 = vadd.f32 0.0, %v1554
    %v1556 = vpop.f32.mrf.mxu0
    %1557 = vdwg.mxu0
    %1558 = vrot.lane.b32.xlu0 %v1500, 112
    %v1559 = vpop.permute.xlu0 %1558
    %1560 = vrot.lane.b32.xlu0 %v1442, 112
    %v1561 = vpop.permute.xlu0 %1560
    %v1563 = vsel %vm444, %v1559, 0
    %v1566 = vsel %vm444, %v1561, 0
    %1568 = vmatpush.bf16.xpose.msra.mxu0 0
    %1569 = vmatpush.bf16.xpose.msra.mxu0 0
    %1570 = vmatpush.bf16.xpose.msra.mxu0 0
    %1571 = vmatpush.bf16.xpose.msra.mxu0 0
    %1572 = vmatpush.bf16.xpose.msra.mxu0 0
    %1573 = vmatpush.bf16.xpose.msra.mxu0 0
    %1574 = vmatpush.bf16.xpose.msra.mxu0 0
    %1575 = vmatpush.bf16.xpose.msra.mxu0 %v1566
    %1576 = vmatmul.bf16.gmra.mxu0 %v1563
    %v1577 = vpop.f32.mrf.mxu0
    %v1578 = vadd.f32 0.0, %v1577
    %v1579 = vpop.f32.mrf.mxu0
    %1580 = vdwg.mxu0
    %v1581 = vmul.f32 %v1578, 0.35355338
    %v1582 = vsel %vm1212, %v1581, -inf
    %1583 = vmax.xlane.f32.xlu0 %v1582
    %v1584 = vpop.xlane.xlu0 %1583
    %v1585 = vsub.f32 %v1581, %v1584
    %v1586 = vmul.f32 %v1585, 1.442695
    %v1587 = vpow.pop %v1586
    %v1588 = vsel %vm1212, %v1587, 0.0
    %1589 = vadd.xlane.f32.xlu0 %v1588
    %v1590 = vpop.xlane.xlu0 %1589
    %v1591 = vrcp.pop %v1590
    %v1592 = vmul.f32 %v1587, %v1591
    %v1593 = vpack.c.bf16 %v1592, %v1592
    %1594 = vrot.lane.b32.xlu0 %v1478, 112
    %v1595 = vpop.permute.xlu0 %1594
    %v1597 = vsel %vm1212, %v1593, 0
    %v1600 = vsel %vm1233, %v1595, 0
    %1602 = vmatpush.bf16.msra.mxu0 0
    %1603 = vmatpush.bf16.msra.mxu0 0
    %1604 = vmatpush.bf16.msra.mxu0 0
    %1605 = vmatpush.bf16.msra.mxu0 0
    %1606 = vmatpush.bf16.msra.mxu0 0
    %1607 = vmatpush.bf16.msra.mxu0 0
    %1608 = vmatpush.bf16.msra.mxu0 0
    %1609 = vmatpush.bf16.msra.mxu0 %v1600
    %1610 = vmatmul.bf16.gmra.mxu0 %v1597
    %v1611 = vpop.f32.mrf.mxu0
    %v1612 = vadd.f32 0.0, %v1611
    %v1613 = vpop.f32.mrf.mxu0
    %1614 = vdwg.mxu0
    %1615 = vrot.lane.b32.xlu0 %v1500, 104
    %v1616 = vpop.permute.xlu0 %1615
    %1617 = vrot.lane.b32.xlu0 %v1442, 104
    %v1618 = vpop.permute.xlu0 %1617
    %v1620 = vsel %vm444, %v1616, 0
    %v1623 = vsel %vm444, %v1618, 0
    %1625 = vmatpush.bf16.xpose.msra.mxu0 0
    %1626 = vmatpush.bf16.xpose.msra.mxu0 0
    %1627 = vmatpush.bf16.xpose.msra.mxu0 0
    %1628 = vmatpush.bf16.xpose.msra.mxu0 0
    %1629 = vmatpush.bf16.xpose.msra.mxu0 0
    %1630 = vmatpush.bf16.xpose.msra.mxu0 0
    %1631 = vmatpush.bf16.xpose.msra.mxu0 0
    %1632 = vmatpush.bf16.xpose.msra.mxu0 %v1623
    %1633 = vmatmul.bf16.gmra.mxu0 %v1620
    %v1634 = vpop.f32.mrf.mxu0
    %v1635 = vadd.f32 0.0, %v1634
    %v1636 = vpop.f32.mrf.mxu0
    %1637 = vdwg.mxu0
    %v1638 = vmul.f32 %v1635, 0.35355338
    %v1639 = vsel %vm1212, %v1638, -inf
    %1640 = vmax.xlane.f32.xlu0 %v1639
    %v1641 = vpop.xlane.xlu0 %1640
    %v1642 = vsub.f32 %v1638, %v1641
    %v1643 = vmul.f32 %v1642, 1.442695
    %v1644 = vpow.pop %v1643
    %v1645 = vsel %vm1212, %v1644, 0.0
    %1646 = vadd.xlane.f32.xlu0 %v1645
    %v1647 = vpop.xlane.xlu0 %1646
    %v1648 = vrcp.pop %v1647
    %v1649 = vmul.f32 %v1644, %v1648
    %v1650 = vpack.c.bf16 %v1649, %v1649
    %1651 = vrot.lane.b32.xlu0 %v1478, 104
    %v1652 = vpop.permute.xlu0 %1651
    %v1654 = vsel %vm1212, %v1650, 0
    %v1657 = vsel %vm1233, %v1652, 0
    %1659 = vmatpush.bf16.msra.mxu0 0
    %1660 = vmatpush.bf16.msra.mxu0 0
    %1661 = vmatpush.bf16.msra.mxu0 0
    %1662 = vmatpush.bf16.msra.mxu0 0
    %1663 = vmatpush.bf16.msra.mxu0 0
    %1664 = vmatpush.bf16.msra.mxu0 0
    %1665 = vmatpush.bf16.msra.mxu0 0
    %1666 = vmatpush.bf16.msra.mxu0 %v1657
    %1667 = vmatmul.bf16.gmra.mxu0 %v1654
    %v1668 = vpop.f32.mrf.mxu0
    %v1669 = vadd.f32 0.0, %v1668
    %v1670 = vpop.f32.mrf.mxu0
    %1671 = vdwg.mxu0
    %1673 = vrot.lane.b32.xlu0 %v1555, 8
    %v1674 = vpop.permute.xlu0 %1673
    %1677 = vrot.lane.b32.xlu0 %v1612, 16
    %v1678 = vpop.permute.xlu0 %1677
    %1681 = vrot.lane.b32.xlu0 %v1669, 24
    %v1682 = vpop.permute.xlu0 %1681
    %v1684 = vsel %vm444, %v1495, %v1674
    %v1685 = vsel %vm694, %v1684, %v1678
    %v1686 = vsel %vm696, %v1685, %v1682
    %v1687 = vpack.c.bf16 %v1686, %v1438
    %v1689 = vperm.slane %v1064, 0
    %v1695 = vunpack.c.l.b16 %v1060
    %v1696 = vunpack.c.l.b16 %v1061
    %v1697 = vunpack.c.l.b16 %v1062
    %v1698 = vunpack.c.l.b16 %v1063
    %v1699 = vpack.c.b16 %v1696, %v1695
    %v1700 = vpack.c.b16 %v1698, %v1697
    %v1704 = vsel %vm356, %v1687, 0
    %1706 = vmatpush.bf16.msra.mxu0 0
    %1707 = vmatpush.bf16.msra.mxu0 0
    %1708 = vmatpush.bf16.msra.mxu0 0
    %1709 = vmatpush.bf16.msra.mxu0 0
    %1710 = vmatpush.bf16.msra.mxu0 0
    %1711 = vmatpush.bf16.msra.mxu0 0
    %1712 = vmatpush.bf16.msra.mxu0 %v1700
    %1713 = vmatpush.bf16.msra.mxu0 %v1699
    %1714 = vmatmul.bf16.gmra.mxu0 %v1704
    %v1715 = vpop.f32.mrf.mxu0
    %v1716 = vadd.f32 %v1689, %v1715
    %v1717 = vpop.f32.mrf.mxu0
    %v1718 = vadd.f32 %v1689, %v1717
    %1719 = vdwg.mxu0
    %v1720 = vadd.f32 %v1042, %v1716
    %v1721 = vadd.f32 %v1043, %v1718
    %v1722 = vsel %vm356, %v1720, 0.0
    %1723 = vadd.xlane.f32.xlu0 %v1722
    %v1724 = vpop.xlane.xlu0 %1723
    %v1725 = vsel %vm356, %v1721, 0.0
    %1726 = vadd.xlane.f32.xlu0 %v1725
    %v1727 = vpop.xlane.xlu0 %1726
    %v1728 = vmul.f32 %v1724, %v995
    %v1729 = vmul.f32 %v1727, %v995
    %v1730 = vsub.f32 %v1720, %v1728
    %v1731 = vsub.f32 %v1721, %v1729
    %v1732 = vmul.f32 %v1730, %v1730
    %v1733 = vmul.f32 %v1731, %v1731
    %v1734 = vsel %vm356, %v1732, 0.0
    %1735 = vadd.xlane.f32.xlu0 %v1734
    %v1736 = vpop.xlane.xlu0 %1735
    %v1737 = vsel %vm356, %v1733, 0.0
    %1738 = vadd.xlane.f32.xlu0 %v1737
    %v1739 = vpop.xlane.xlu0 %1738
    %v1740 = vmul.f32 %v1736, %v995
    %v1741 = vmul.f32 %v1739, %v995
    %v1742 = vadd.f32 %v1740, 1e-05
    %v1743 = vadd.f32 %v1741, 1e-05
    %v1744 = vrsqrt.pop %v1742
    %v1745 = vmul.f32 %v1744, %v1742
    %v1746 = vmul.f32 %v1745, %v1744
    %v1747 = vmul.f32 0.5, %v1746
    %v1748 = vsub.f32 1.5, %v1747
    %v1749 = vmul.f32 %v1744, %v1748
    %vm1750 = vweird.f32 %v1742
    %vm1751 = vweird.f32 %v1744
    %vm1752 = vmor %vm1750, %vm1751
    %v1753 = vsel %vm1752, %v1744, %v1749
    %v1754 = vrsqrt.pop %v1743
    %v1755 = vmul.f32 %v1754, %v1743
    %v1756 = vmul.f32 %v1755, %v1754
    %v1757 = vmul.f32 0.5, %v1756
    %v1758 = vsub.f32 1.5, %v1757
    %v1759 = vmul.f32 %v1754, %v1758
    %vm1760 = vweird.f32 %v1743
    %vm1761 = vweird.f32 %v1754
    %vm1762 = vmor %vm1760, %vm1761
    %v1763 = vsel %vm1762, %v1754, %v1759
    %v1764 = vmul.f32 %v1730, %v1753
    %v1765 = vmul.f32 %v1731, %v1763
    %v1767 = vperm.slane %v1065, 0
    %v1769 = vmul.f32 %v1764, %v1767
    %v1770 = vmul.f32 %v1765, %v1767
    %v1772 = vperm.slane %v1066, 0
    %v1774 = vadd.f32 %v1769, %v1772
    %v1775 = vadd.f32 %v1770, %v1772
    %v1776 = vld [vmem:[%s22] sm:$0xf]
    %v1777 = vld [vmem:[%s22 + $0x4] sm:$0xf]
    %v1778 = vld [vmem:[%s22 + $0x8] sm:$0xf]
    %v1779 = vld [vmem:[%s22 + $0xc] sm:$0xf]
    %v1780 = vld [vmem:[#allocation21] sm:$0x1]
    %v1781 = vld [vmem:[%s24] sm:$0xf]
    %v1782 = vld [vmem:[%s24 + $0x4] sm:$0xf]
    %v1783 = vld [vmem:[%s24 + $0x8] sm:$0xf]
    %v1784 = vld [vmem:[%s24 + $0xc] sm:$0xf]
    %v1785 = vld [vmem:[%s24 + $0x10] sm:$0xf]
    %v1786 = vld [vmem:[%s24 + $0x14] sm:$0xf]
    %v1787 = vld [vmem:[%s24 + $0x18] sm:$0xf]
    %v1788 = vld [vmem:[%s24 + $0x1c] sm:$0xf]
    %v1789 = vld [vmem:[#allocation22] sm:$0x1]
    %v1790 = vld [vmem:[#allocation24] sm:$0x1]
    %v1791 = vld [vmem:[#allocation25] sm:$0x1]
    %v1792 = vpack.c.bf16 %v1775, %v1774
    %v1794 = vperm.slane %v1780, 0
    %v1800 = vunpack.c.l.b16 %v1776
    %v1801 = vunpack.c.l.b16 %v1777
    %v1802 = vunpack.c.l.b16 %v1778
    %v1803 = vunpack.c.l.b16 %v1779
    %v1804 = vpack.c.b16 %v1801, %v1800
    %v1805 = vpack.c.b16 %v1803, %v1802
    %v1809 = vsel %vm356, %v1792, 0
    %1811 = vmatpush.bf16.msra.mxu0 0
    %1812 = vmatpush.bf16.msra.mxu0 0
    %1813 = vmatpush.bf16.msra.mxu0 0
    %1814 = vmatpush.bf16.msra.mxu0 0
    %1815 = vmatpush.bf16.msra.mxu0 0
    %1816 = vmatpush.bf16.msra.mxu0 0
    %1817 = vmatpush.bf16.msra.mxu0 %v1805
    %1818 = vmatpush.bf16.msra.mxu0 %v1804
    %1819 = vmatmul.bf16.gmra.mxu0 %v1809
    %v1820 = vpop.f32.mrf.mxu0
    %v1821 = vadd.f32 %v1794, %v1820
    %v1822 = vpop.f32.mrf.mxu0
    %v1823 = vadd.f32 %v1794, %v1822
    %1824 = vdwg.mxu0
    %v1825 = vmax.f32 %v1821, 0.0
    %v1826 = vmax.f32 %v1823, 0.0
    %v1827 = vpack.c.bf16 %v1826, %v1825
    %v1836 = vunpack.c.l.b16 %v1781
    %v1837 = vunpack.c.l.b16 %v1782
    %v1838 = vunpack.c.l.b16 %v1783
    %v1839 = vunpack.c.l.b16 %v1784
    %v1840 = vunpack.c.l.b16 %v1785
    %v1841 = vunpack.c.l.b16 %v1786
    %v1842 = vunpack.c.l.b16 %v1787
    %v1843 = vunpack.c.l.b16 %v1788
    %v1844 = vpack.c.b16 %v1837, %v1836
    %v1845 = vpack.c.b16 %v1839, %v1838
    %v1846 = vpack.c.b16 %v1841, %v1840
    %v1847 = vpack.c.b16 %v1843, %v1842
    %vm1852 = vcmask 523264
    %v1854 = vsel %vm1852, %v1827, 0
    %1856 = vmatpush.bf16.msra.mxu0 0
    %1857 = vmatpush.bf16.msra.mxu0 0
    %1858 = vmatpush.bf16.msra.mxu0 0
    %1859 = vmatpush.bf16.msra.mxu0 0
    %1860 = vmatpush.bf16.msra.mxu0 %v1847
    %1861 = vmatpush.bf16.msra.mxu0 %v1846
    %1862 = vmatpush.bf16.msra.mxu0 %v1845
    %1863 = vmatpush.bf16.msra.mxu0 %v1844
    %1864 = vmatmul.bf16.gmra.mxu0 %v1854
    %v1865 = vpop.f32.mrf.mxu0
    %v1866 = vadd.f32 0.0, %v1865
    %v1867 = vpop.f32.mrf.mxu0
    %v1868 = vadd.f32 0.0, %v1867
    %1869 = vdwg.mxu0
    %v1870 = vadd.f32 %v1774, %v1866
    %v1871 = vadd.f32 %v1775, %v1868
    %v1873 = vperm.slane %v1789, 0
    %v1875 = vadd.f32 %v1870, %v1873
    %v1876 = vadd.f32 %v1871, %v1873
    %v1877 = vsel %vm356, %v1875, 0.0
    %1878 = vadd.xlane.f32.xlu0 %v1877
    %v1879 = vpop.xlane.xlu0 %1878
    %v1880 = vsel %vm356, %v1876, 0.0
    %1881 = vadd.xlane.f32.xlu0 %v1880
    %v1882 = vpop.xlane.xlu0 %1881
    %v1883 = vmul.f32 %v1879, %v995
    %v1884 = vmul.f32 %v1882, %v995
    %v1885 = vsub.f32 %v1875, %v1883
    %v1886 = vsub.f32 %v1876, %v1884
    %v1887 = vmul.f32 %v1885, %v1885
    %v1888 = vmul.f32 %v1886, %v1886
    %v1889 = vsel %vm356, %v1887, 0.0
    %1890 = vadd.xlane.f32.xlu0 %v1889
    %v1891 = vpop.xlane.xlu0 %1890
    %v1892 = vsel %vm356, %v1888, 0.0
    %1893 = vadd.xlane.f32.xlu0 %v1892
    %v1894 = vpop.xlane.xlu0 %1893
    %v1895 = vmul.f32 %v1891, %v995
    %v1896 = vmul.f32 %v1894, %v995
    %v1897 = vadd.f32 %v1895, 1e-05
    %v1898 = vadd.f32 %v1896, 1e-05
    %v1899 = vrsqrt.pop %v1897
    %v1900 = vmul.f32 %v1899, %v1897
    %v1901 = vmul.f32 %v1900, %v1899
    %v1902 = vmul.f32 0.5, %v1901
    %v1903 = vsub.f32 1.5, %v1902
    %v1904 = vmul.f32 %v1899, %v1903
    %vm1905 = vweird.f32 %v1897
    %vm1906 = vweird.f32 %v1899
    %vm1907 = vmor %vm1905, %vm1906
    %v1908 = vsel %vm1907, %v1899, %v1904
    %v1909 = vrsqrt.pop %v1898
    %v1910 = vmul.f32 %v1909, %v1898
    %v1911 = vmul.f32 %v1910, %v1909
    %v1912 = vmul.f32 0.5, %v1911
    %v1913 = vsub.f32 1.5, %v1912
    %v1914 = vmul.f32 %v1909, %v1913
    %vm1915 = vweird.f32 %v1898
    %vm1916 = vweird.f32 %v1909
    %vm1917 = vmor %vm1915, %vm1916
    %v1918 = vsel %vm1917, %v1909, %v1914
    %v1919 = vmul.f32 %v1885, %v1908
    %v1920 = vmul.f32 %v1886, %v1918
    %v1922 = vperm.slane %v1790, 0
    %v1924 = vmul.f32 %v1919, %v1922
    %v1925 = vmul.f32 %v1920, %v1922
    %v1927 = vperm.slane %v1791, 0
    %v1929 = vadd.f32 %v1924, %v1927
    %v1930 = vadd.f32 %v1925, %v1927
    %v1931 = vpack.c.bf16 %v1929, %v1929
    %v1932 = vpack.c.bf16 %v1930, %v1930
    %vm1933 = vcmask 257024
    %1934 = vst.msk [vmem:[%s28] sm:$0xf] %vm1933, %v1931
    %1935 = vst.msk [vmem:[%s28 + $0x4] sm:$0xf] %vm1933, %v1932
    // Predicated region
    $region178: #{transformer_forward.8} parent=1 // pred_check
      _
    $region179: #{transformer_forward.8} parent=1 // pred_check_branch
      %1937 = sbr.rel (0) target = $region181
    $region180: #{transformer_forward.8} parent=1 // pred_region
      _
    $region181: #{transformer_forward.8} parent=1 // pred_fallthru
      _
    // Predicated region
    $region182: #{transformer_forward.8} parent=1 // pred_check
      _
    $region183: #{transformer_forward.8} parent=1 // pred_check_branch
      %1939 = sbr.rel (0) target = $region185
    $region184: #{transformer_forward.8} parent=1 // pred_region
      _
    $region185: #{transformer_forward.8} parent=1 // pred_fallthru
      _
    %1940 = vsyncpa [#allocation3], 1
    %1941 = vsyncpa [#allocation5], 1
    %1942 = vsyncpa [#allocation8], 1
    %1943 = vsyncpa [#allocation11], 1
    %1944 = vsyncpa [#allocation14], 1
    %1945 = vsyncpa [#allocation17], 1
    %1946 = vsyncpa [#allocation20], 1
    %1947 = vsyncpa [#allocation23], 1
    %1948 = vsyncpa [#allocation26], 1

// kernel: transformer_forward.7
$region0: #{transformer_forward.7}
  #allocation0 [shape = 'u32[]', space=smem, size = 0x4, offset = 0x4, fixed_abs, tag = 'smem constant byte address 0x4 - core index']
  #allocation1 [shape = 'u32[72,128]{1,0:T(1,128)}', space=vmem, size = 0x9000, scoped, tag = 'internal scratch']
  %s0 = inlined_call_operand.vmem [shape: bf16[16,32], index: 0, kind: input, shape index: {}]
  %s1 = inlined_call_operand.vmem [shape: bf16[20,32], index: 1, kind: input, shape index: {}]
  %s2 = inlined_call_operand.vmem [shape: bf16[32,32], index: 2, kind: input, shape index: {}]
  %s3 = inlined_call_operand.vmem [shape: f32[1,32], index: 3, kind: input, shape index: {}]
  %s4 = inlined_call_operand.vmem [shape: bf16[32,32], index: 4, kind: input, shape index: {}]
  %s5 = inlined_call_operand.vmem [shape: f32[1,32], index: 5, kind: input, shape index: {}]
  %s6 = inlined_call_operand.vmem [shape: bf16[32,32], index: 6, kind: input, shape index: {}]
  %s7 = inlined_call_operand.vmem [shape: f32[1,32], index: 7, kind: input, shape index: {}]
  %s8 = inlined_call_operand.vmem [shape: bf16[32,32], index: 8, kind: input, shape index: {}]
  %s9 = inlined_call_operand.vmem [shape: f32[1,32], index: 9, kind: input, shape index: {}]
  %s10 = inlined_call_operand.vmem [shape: f32[1,32], index: 10, kind: input, shape index: {}]
  %s11 = inlined_call_operand.vmem [shape: f32[1,32], index: 11, kind: input, shape index: {}]
  %s12 = inlined_call_operand.vmem [shape: bf16[32,32], index: 12, kind: input, shape index: {}]
  %s13 = inlined_call_operand.vmem [shape: f32[1,32], index: 13, kind: input, shape index: {}]
  %s14 = inlined_call_operand.vmem [shape: bf16[32,32], index: 14, kind: input, shape index: {}]
  %s15 = inlined_call_operand.vmem [shape: f32[1,32], index: 15, kind: input, shape index: {}]
  %s16 = inlined_call_operand.vmem [shape: bf16[32,32], index: 16, kind: input, shape index: {}]
  %s17 = inlined_call_operand.vmem [shape: f32[1,32], index: 17, kind: input, shape index: {}]
  %s18 = inlined_call_operand.vmem [shape: bf16[32,32], index: 18, kind: input, shape index: {}]
  %s19 = inlined_call_operand.vmem [shape: f32[1,32], index: 19, kind: input, shape index: {}]
  %s20 = inlined_call_operand.vmem [shape: f32[1,32], index: 20, kind: input, shape index: {}]
  %s21 = inlined_call_operand.vmem [shape: f32[1,32], index: 21, kind: input, shape index: {}]
  %s22 = inlined_call_operand.vmem [shape: bf16[32,64], index: 22, kind: input, shape index: {}]
  %s23 = inlined_call_operand.hbm [shape: f32[1,64], index: 23, kind: input, shape index: {}]
  %s24 = inlined_call_operand.vmem [shape: bf16[64,32], index: 24, kind: input, shape index: {}]
  %s25 = inlined_call_operand.hbm [shape: f32[1,32], index: 25, kind: input, shape index: {}]
  %s26 = inlined_call_operand.hbm [shape: f32[1,32], index: 26, kind: input, shape index: {}]
  %s27 = inlined_call_operand.hbm [shape: f32[1,32], index: 27, kind: input, shape index: {}]
  %s28 = inlined_call_operand.vmem [shape: bf16[16,32], index: 28, kind: output, shape index: {}]
  %s29 = sld [smem:[#allocation0]]
  $region138: #{transformer_forward.7} parent=0
    _
  %s31 = ssub.s32 1, %s29
  %s32 = scalar_select 0, %s31, %s29
  $region1: #{transformer_forward.7} parent=0
    #allocation2 [shape = 'u8[512]{0}', space=vmem, size = 0x400, scoped, tag = 'input window, operand 23, single buffered']
    #allocation3 [shape = 's32[1]{0}', space=sflag, size = 0x4, scoped, tag = 'scoped memory for transformer_forward.7']
    #allocation4 [shape = 'u8[512]{0}', space=vmem, size = 0x400, scoped, tag = 'input window, operand 25, single buffered']
    #allocation5 [shape = 's32[1]{0}', space=sflag, size = 0x4, scoped, tag = 'scoped memory for transformer_forward.7']
    #allocation6 [shape = 'u8[512]{0}', space=vmem, size = 0x400, scoped, tag = 'input window, operand 26, single buffered']
    #allocation7 [shape = 'u8[512]{0}', space=vmem, size = 0x400, scoped, tag = 'input window, operand 27, single buffered']
    #allocation8 [shape = 's32[1]{0}', space=sflag, size = 0x4, scoped, tag = 'scoped memory for transformer_forward.7']
    %33 = vsyncpa [#allocation3], 0
    %34 = vsyncpa [#allocation5], 0
    %35 = vsyncpa [#allocation8], 0
    // Predicated region
    $region2: #{transformer_forward.7} parent=1 // pred_check
      _
    $region3: #{transformer_forward.7} parent=1 // pred_check_branch
      %37 = sbr.rel (0) target = $region5
    $region4: #{transformer_forward.7} parent=1 // pred_region
      _
    $region5: #{transformer_forward.7} parent=1 // pred_fallthru
      _
    // Predicated region
    $region6: #{transformer_forward.7} parent=1 // pred_check
      _
    $region7: #{transformer_forward.7} parent=1 // pred_check_branch
      %39 = sbr.rel (0) target = $region9
    $region8: #{transformer_forward.7} parent=1 // pred_region
      _
    $region9: #{transformer_forward.7} parent=1 // pred_fallthru
      _
    // Predicated region
    $region10: #{transformer_forward.7} parent=1 // pred_check
      _
    $region11: #{transformer_forward.7} parent=1 // pred_check_branch
      %41 = sbr.rel (0) target = $region13
    $region12: #{transformer_forward.7} parent=1 // pred_region
      _
    $region13: #{transformer_forward.7} parent=1 // pred_fallthru
      _
    // Predicated region
    $region14: #{transformer_forward.7} parent=1 // pred_check
      _
    $region15: #{transformer_forward.7} parent=1 // pred_check_branch
      %43 = sbr.rel (0) target = $region17
    $region16: #{transformer_forward.7} parent=1 // pred_region
      _
    $region17: #{transformer_forward.7} parent=1 // pred_fallthru
      _
    // Predicated region
    $region18: #{transformer_forward.7} parent=1 // pred_check
      _
    $region19: #{transformer_forward.7} parent=1 // pred_check_branch
      %45 = sbr.rel (0) target = $region21
    $region20: #{transformer_forward.7} parent=1 // pred_region
      _
    $region21: #{transformer_forward.7} parent=1 // pred_fallthru
      _
    // Predicated region
    $region22: #{transformer_forward.7} parent=1 // pred_check
      _
    $region23: #{transformer_forward.7} parent=1 // pred_check_branch
      %47 = sbr.rel (0) target = $region25
    $region24: #{transformer_forward.7} parent=1 // pred_region
      _
    $region25: #{transformer_forward.7} parent=1 // pred_fallthru
      _
    // Predicated region
    $region26: #{transformer_forward.7} parent=1 // pred_check
      _
    $region27: #{transformer_forward.7} parent=1 // pred_check_branch
      %49 = sbr.rel (0) target = $region29
    $region28: #{transformer_forward.7} parent=1 // pred_region
      _
    $region29: #{transformer_forward.7} parent=1 // pred_fallthru
      _
    // Predicated region
    $region30: #{transformer_forward.7} parent=1 // pred_check
      _
    $region31: #{transformer_forward.7} parent=1 // pred_check_branch
      %51 = sbr.rel (0) target = $region33
    $region32: #{transformer_forward.7} parent=1 // pred_region
      _
    $region33: #{transformer_forward.7} parent=1 // pred_fallthru
      _
    // Predicated region
    $region34: #{transformer_forward.7} parent=1 // pred_check
      _
    $region35: #{transformer_forward.7} parent=1 // pred_check_branch
      %53 = sbr.rel (0) target = $region37
    $region36: #{transformer_forward.7} parent=1 // pred_region
      _
    $region37: #{transformer_forward.7} parent=1 // pred_fallthru
      _
    // Predicated region
    $region38: #{transformer_forward.7} parent=1 // pred_check
      _
    $region39: #{transformer_forward.7} parent=1 // pred_check_branch
      %55 = sbr.rel (0) target = $region41
    $region40: #{transformer_forward.7} parent=1 // pred_region
      _
    $region41: #{transformer_forward.7} parent=1 // pred_fallthru
      _
    // Predicated region
    $region42: #{transformer_forward.7} parent=1 // pred_check
      _
    $region43: #{transformer_forward.7} parent=1 // pred_check_branch
      %57 = sbr.rel (0) target = $region45
    $region44: #{transformer_forward.7} parent=1 // pred_region
      _
    $region45: #{transformer_forward.7} parent=1 // pred_fallthru
      _
    // Predicated region
    $region46: #{transformer_forward.7} parent=1 // pred_check
      _
    $region47: #{transformer_forward.7} parent=1 // pred_check_branch
      %59 = sbr.rel (0) target = $region49
    $region48: #{transformer_forward.7} parent=1 // pred_region
      _
    $region49: #{transformer_forward.7} parent=1 // pred_fallthru
      _
    // Predicated region
    $region50: #{transformer_forward.7} parent=1 // pred_check
      _
    $region51: #{transformer_forward.7} parent=1 // pred_check_branch
      %61 = sbr.rel (0) target = $region53
    $region52: #{transformer_forward.7} parent=1 // pred_region
      _
    $region53: #{transformer_forward.7} parent=1 // pred_fallthru
      _
    // Predicated region
    $region54: #{transformer_forward.7} parent=1 // pred_check
      _
    $region55: #{transformer_forward.7} parent=1 // pred_check_branch
      %63 = sbr.rel (0) target = $region57
    $region56: #{transformer_forward.7} parent=1 // pred_region
      _
    $region57: #{transformer_forward.7} parent=1 // pred_fallthru
      _
    // Predicated region
    $region58: #{transformer_forward.7} parent=1 // pred_check
      _
    $region59: #{transformer_forward.7} parent=1 // pred_check_branch
      %65 = sbr.rel (0) target = $region61
    $region60: #{transformer_forward.7} parent=1 // pred_region
      _
    $region61: #{transformer_forward.7} parent=1 // pred_fallthru
      _
    // Predicated region
    $region62: #{transformer_forward.7} parent=1 // pred_check
      _
    $region63: #{transformer_forward.7} parent=1 // pred_check_branch
      %67 = sbr.rel (0) target = $region65
    $region64: #{transformer_forward.7} parent=1 // pred_region
      _
    $region65: #{transformer_forward.7} parent=1 // pred_fallthru
      _
    // Predicated region
    $region66: #{transformer_forward.7} parent=1 // pred_check
      _
    $region67: #{transformer_forward.7} parent=1 // pred_check_branch
      %69 = sbr.rel (0) target = $region69
    $region68: #{transformer_forward.7} parent=1 // pred_region
      _
    $region69: #{transformer_forward.7} parent=1 // pred_fallthru
      _
    // Predicated region
    $region70: #{transformer_forward.7} parent=1 // pred_check
      _
    $region71: #{transformer_forward.7} parent=1 // pred_check_branch
      %71 = sbr.rel (0) target = $region73
    $region72: #{transformer_forward.7} parent=1 // pred_region
      _
    $region73: #{transformer_forward.7} parent=1 // pred_fallthru
      _
    // Predicated region
    $region74: #{transformer_forward.7} parent=1 // pred_check
      _
    $region75: #{transformer_forward.7} parent=1 // pred_check_branch
      %73 = sbr.rel (0) target = $region77
    $region76: #{transformer_forward.7} parent=1 // pred_region
      _
    $region77: #{transformer_forward.7} parent=1 // pred_fallthru
      _
    // Predicated region
    $region78: #{transformer_forward.7} parent=1 // pred_check
      _
    $region79: #{transformer_forward.7} parent=1 // pred_check_branch
      %75 = sbr.rel (0) target = $region81
    $region80: #{transformer_forward.7} parent=1 // pred_region
      _
    $region81: #{transformer_forward.7} parent=1 // pred_fallthru
      _
    // Predicated region
    $region82: #{transformer_forward.7} parent=1 // pred_check
      _
    $region83: #{transformer_forward.7} parent=1 // pred_check_branch
      %77 = sbr.rel (0) target = $region85
    $region84: #{transformer_forward.7} parent=1 // pred_region
      _
    $region85: #{transformer_forward.7} parent=1 // pred_fallthru
      _
    // Predicated region
    $region86: #{transformer_forward.7} parent=1 // pred_check
      _
    $region87: #{transformer_forward.7} parent=1 // pred_check_branch
      %79 = sbr.rel (0) target = $region89
    $region88: #{transformer_forward.7} parent=1 // pred_region
      _
    $region89: #{transformer_forward.7} parent=1 // pred_fallthru
      _
    // Predicated region
    $region90: #{transformer_forward.7} parent=1 // pred_check
      _
    $region91: #{transformer_forward.7} parent=1 // pred_check_branch
      %81 = sbr.rel (0) target = $region93
    $region92: #{transformer_forward.7} parent=1 // pred_region
      _
    $region93: #{transformer_forward.7} parent=1 // pred_fallthru
      _
    // Predicated region
    $region94: #{transformer_forward.7} parent=1 // pred_check
      _
    $region95: #{transformer_forward.7} parent=1 // pred_check_branch
      %83 = sbr.rel (0) target = $region97
    $region96: #{transformer_forward.7} parent=1 // pred_region
      %85 = vsyncadd [#allocation3], 0
      %s87 = sshll.u32 %s23, 4
      %s88 = int_to_ptr.hbm [resolvable:$true] %s87
      %s89 = sshll.u32 [#allocation2], 4
      %s90 = int_to_ptr.vmem [resolvable:$true] %s89
      %92 = dma.hbm_to_vmem [thread:$0]  %s88, 16, %s90, [#allocation3]
    $region97: #{transformer_forward.7} parent=1 // pred_fallthru
      _
    // Predicated region
    $region98: #{transformer_forward.7} parent=1 // pred_check
      _
    $region99: #{transformer_forward.7} parent=1 // pred_check_branch
      %94 = sbr.rel (0) target = $region101
    $region100: #{transformer_forward.7} parent=1 // pred_region
      _
    $region101: #{transformer_forward.7} parent=1 // pred_fallthru
      _
    // Predicated region
    $region102: #{transformer_forward.7} parent=1 // pred_check
      _
    $region103: #{transformer_forward.7} parent=1 // pred_check_branch
      %96 = sbr.rel (0) target = $region105
    $region104: #{transformer_forward.7} parent=1 // pred_region
      %98 = vsyncadd [#allocation5], 0
      %s100 = sshll.u32 %s25, 4
      %s101 = int_to_ptr.hbm [resolvable:$true] %s100
      %s102 = sshll.u32 [#allocation4], 4
      %s103 = int_to_ptr.vmem [resolvable:$true] %s102
      %105 = dma.hbm_to_vmem [thread:$0]  %s101, 16, %s103, [#allocation5]
    $region105: #{transformer_forward.7} parent=1 // pred_fallthru
      _
    // Predicated region
    $region106: #{transformer_forward.7} parent=1 // pred_check
      _
    $region107: #{transformer_forward.7} parent=1 // pred_check_branch
      %107 = sbr.rel (0) target = $region109
    $region108: #{transformer_forward.7} parent=1 // pred_region
      %109 = vsyncadd [#allocation5], 0
      %s111 = sshll.u32 %s26, 4
      %s112 = int_to_ptr.hbm [resolvable:$true] %s111
      %s113 = sshll.u32 [#allocation6], 4
      %s114 = int_to_ptr.vmem [resolvable:$true] %s113
      %116 = dma.hbm_to_vmem [thread:$0]  %s112, 16, %s114, [#allocation5]
    $region109: #{transformer_forward.7} parent=1 // pred_fallthru
      _
    // Predicated region
    $region110: #{transformer_forward.7} parent=1 // pred_check
      _
    $region111: #{transformer_forward.7} parent=1 // pred_check_branch
      %118 = sbr.rel (0) target = $region113
    $region112: #{transformer_forward.7} parent=1 // pred_region
      %120 = vsyncadd [#allocation8], 0
      %s122 = sshll.u32 %s27, 4
      %s123 = int_to_ptr.hbm [resolvable:$true] %s122
      %s124 = sshll.u32 [#allocation7], 4
      %s125 = int_to_ptr.vmem [resolvable:$true] %s124
      %127 = dma.hbm_to_vmem [thread:$0]  %s123, 16, %s125, [#allocation8]
    $region113: #{transformer_forward.7} parent=1 // pred_fallthru
      _
    // Predicated region
    $region114: #{transformer_forward.7} parent=1 // pred_check
      _
    $region115: #{transformer_forward.7} parent=1 // pred_check_branch
      %129 = sbr.rel (0) target = $region117
    $region116: #{transformer_forward.7} parent=1 // pred_region
      %131 = dma.done [#allocation3], 16
    $region117: #{transformer_forward.7} parent=1 // pred_fallthru
      _
    // Predicated region
    $region118: #{transformer_forward.7} parent=1 // pred_check
      _
    $region119: #{transformer_forward.7} parent=1 // pred_check_branch
      %133 = sbr.rel (0) target = $region121
    $region120: #{transformer_forward.7} parent=1 // pred_region
      %135 = dma.done [#allocation5], 16
    $region121: #{transformer_forward.7} parent=1 // pred_fallthru
      _
    // Predicated region
    $region122: #{transformer_forward.7} parent=1 // pred_check
      _
    $region123: #{transformer_forward.7} parent=1 // pred_check_branch
      %137 = sbr.rel (0) target = $region125
    $region124: #{transformer_forward.7} parent=1 // pred_region
      %139 = dma.done [#allocation5], 16
    $region125: #{transformer_forward.7} parent=1 // pred_fallthru
      _
    // Predicated region
    $region126: #{transformer_forward.7} parent=1 // pred_check
      _
    $region127: #{transformer_forward.7} parent=1 // pred_check_branch
      %141 = sbr.rel (0) target = $region129
    $region128: #{transformer_forward.7} parent=1 // pred_region
      %143 = dma.done [#allocation8], 16
    $region129: #{transformer_forward.7} parent=1 // pred_fallthru
      _
    %v145 = vld [vmem:[%s0] sm:$0xf]
    %v146 = vld [vmem:[%s0 + $0x4] sm:$0xf]
    %v147 = vunpack.c.l.bf16 %v145
    %v148 = vunpack.c.l.bf16 %v146
    %v149 = vld [vmem:[%s1] sm:$0xf]
    %v150 = vld [vmem:[%s1 + $0x4] sm:$0xf]
    %v151 = vld [vmem:[%s1 + $0x8] sm:$0x3]
    %v152 = vld [vmem:[%s2] sm:$0xf]
    %v153 = vld [vmem:[%s2 + $0x4] sm:$0xf]
    %v154 = vld [vmem:[%s2 + $0x8] sm:$0xf]
    %v155 = vld [vmem:[%s2 + $0xc] sm:$0xf]
    %v156 = vld [vmem:[%s3] sm:$0x1]
    %v157 = vld [vmem:[%s4] sm:$0xf]
    %v158 = vld [vmem:[%s4 + $0x4] sm:$0xf]
    %v159 = vld [vmem:[%s4 + $0x8] sm:$0xf]
    %v160 = vld [vmem:[%s4 + $0xc] sm:$0xf]
    %v161 = vld [vmem:[%s5] sm:$0x1]
    %v162 = vld [vmem:[%s6] sm:$0xf]
    %v163 = vld [vmem:[%s6 + $0x4] sm:$0xf]
    %v164 = vld [vmem:[%s6 + $0x8] sm:$0xf]
    %v165 = vld [vmem:[%s6 + $0xc] sm:$0xf]
    %v166 = vld [vmem:[%s7] sm:$0x1]
    %v167 = vld [vmem:[%s8] sm:$0xf]
    %v168 = vld [vmem:[%s8 + $0x4] sm:$0xf]
    %v169 = vld [vmem:[%s8 + $0x8] sm:$0xf]
    %v170 = vld [vmem:[%s8 + $0xc] sm:$0xf]
    %v171 = vld [vmem:[%s9] sm:$0x1]
    %v172 = vld [vmem:[%s10] sm:$0x1]
    %v173 = vld [vmem:[%s11] sm:$0x1]
    %v175 = vperm.slane %v156, 0
    %v179 = vunpack.c.l.b16 %v145
    %v180 = vunpack.c.l.b16 %v146
    %v181 = vpack.c.b16 %v180, %v179
    %v186 = vunpack.c.l.b16 %v152
    %v187 = vunpack.c.l.b16 %v153
    %v188 = vunpack.c.l.b16 %v154
    %v189 = vunpack.c.l.b16 %v155
    %v190 = vpack.c.b16 %v187, %v186
    %v191 = vpack.c.b16 %v189, %v188
    %vm194 = vcmask 261120
    %v196 = vsel %vm194, %v181, 0
    %198 = vmatpush.bf16.msra.mxu0 0
    %199 = vmatpush.bf16.msra.mxu0 0
    %200 = vmatpush.bf16.msra.mxu0 0
    %201 = vmatpush.bf16.msra.mxu0 0
    %202 = vmatpush.bf16.msra.mxu0 0
    %203 = vmatpush.bf16.msra.mxu0 0
    %204 = vmatpush.bf16.msra.mxu0 %v191
    %205 = vmatpush.bf16.msra.mxu0 %v190
    %206 = vmatmul.bf16.gmra.mxu0 %v196
    %v207 = vpop.f32.mrf.mxu0
    %v208 = vadd.f32 %v175, %v207
    %v209 = vpop.f32.mrf.mxu0
    %v210 = vadd.f32 %v175, %v209
    %211 = vdwg.mxu0
    %v212 = vpack.c.bf16 %v208, %v208
    %v213 = vpack.c.bf16 %v210, %v210
    %v215 = vperm.slane %v161, 0
    %v221 = vunpack.c.l.b16 %v157
    %v222 = vunpack.c.l.b16 %v158
    %v223 = vunpack.c.l.b16 %v159
    %v224 = vunpack.c.l.b16 %v160
    %v225 = vpack.c.b16 %v222, %v221
    %v226 = vpack.c.b16 %v224, %v223
    %229 = vmatpush.bf16.msra.mxu0 0
    %230 = vmatpush.bf16.msra.mxu0 0
    %231 = vmatpush.bf16.msra.mxu0 0
    %232 = vmatpush.bf16.msra.mxu0 0
    %233 = vmatpush.bf16.msra.mxu0 0
    %234 = vmatpush.bf16.msra.mxu0 0
    %235 = vmatpush.bf16.msra.mxu0 %v226
    %236 = vmatpush.bf16.msra.mxu0 %v225
    %237 = vmatmul.bf16.gmra.mxu0 %v196
    %v238 = vpop.f32.mrf.mxu0
    %v239 = vadd.f32 %v215, %v238
    %v240 = vpop.f32.mrf.mxu0
    %v241 = vadd.f32 %v215, %v240
    %242 = vdwg.mxu0
    %v243 = vpack.c.bf16 %v239, %v239
    %v244 = vpack.c.bf16 %v241, %v241
    %v246 = vperm.slane %v166, 0
    %v252 = vunpack.c.l.b16 %v162
    %v253 = vunpack.c.l.b16 %v163
    %v254 = vunpack.c.l.b16 %v164
    %v255 = vunpack.c.l.b16 %v165
    %v256 = vpack.c.b16 %v253, %v252
    %v257 = vpack.c.b16 %v255, %v254
    %260 = vmatpush.bf16.msra.mxu0 0
    %261 = vmatpush.bf16.msra.mxu0 0
    %262 = vmatpush.bf16.msra.mxu0 0
    %263 = vmatpush.bf16.msra.mxu0 0
    %264 = vmatpush.bf16.msra.mxu0 0
    %265 = vmatpush.bf16.msra.mxu0 0
    %266 = vmatpush.bf16.msra.mxu0 %v257
    %267 = vmatpush.bf16.msra.mxu0 %v256
    %268 = vmatmul.bf16.gmra.mxu0 %v196
    %v269 = vpop.f32.mrf.mxu0
    %v270 = vadd.f32 %v246, %v269
    %v271 = vpop.f32.mrf.mxu0
    %v272 = vadd.f32 %v246, %v271
    %273 = vdwg.mxu0
    %v274 = vpack.c.bf16 %v270, %v270
    %v275 = vpack.c.bf16 %v272, %v272
    %v276 = vlaneseq
    %v277 = vshrl.u32 %v276, 7
    %v278 = vlaneseq
    %v279 = vand.u32 %v278, 127
    %vm280 = vcmp.gt.s32.totalorder %v279, %v277
    %v281 = vsel %vm280, -1e+09, 0.0
    %vm282 = vcmask 64512
    %v284 = vsel %vm282, %v212, 0
    %v287 = vsel %vm282, %v243, 0
    %289 = vmatpush.bf16.xpose.msra.mxu0 0
    %290 = vmatpush.bf16.xpose.msra.mxu0 0
    %291 = vmatpush.bf16.xpose.msra.mxu0 0
    %292 = vmatpush.bf16.xpose.msra.mxu0 0
    %293 = vmatpush.bf16.xpose.msra.mxu0 0
    %294 = vmatpush.bf16.xpose.msra.mxu0 0
    %295 = vmatpush.bf16.xpose.msra.mxu0 0
    %296 = vmatpush.bf16.xpose.msra.mxu0 %v287
    %297 = vmatmul.bf16.gmra.mxu0 %v284
    %v298 = vpop.f32.mrf.mxu0
    %v299 = vadd.f32 0.0, %v298
    %v300 = vpop.f32.mrf.mxu0
    %301 = vdwg.mxu0
    %v302 = vmul.f32 %v299, 0.35355338
    %v303 = vadd.f32 %v302, %v281
    %v304 = vsel %vm282, %v303, -inf
    %305 = vmax.xlane.f32.xlu0 %v304
    %v306 = vpop.xlane.xlu0 %305
    %v307 = vsub.f32 %v303, %v306
    %v308 = vmul.f32 %v307, 1.442695
    %v309 = vpow.pop %v308
    %v310 = vsel %vm282, %v309, 0.0
    %311 = vadd.xlane.f32.xlu0 %v310
    %v312 = vpop.xlane.xlu0 %311
    %v313 = vrcp.pop %v312
    %v314 = vmul.f32 %v309, %v313
    %v315 = vpack.c.bf16 %v314, %v314
    %v317 = vsel %vm282, %v315, 0
    %vm319 = vcmask 1043456
    %v321 = vsel %vm319, %v274, 0
    %323 = vmatpush.bf16.msra.mxu0 0
    %324 = vmatpush.bf16.msra.mxu0 0
    %325 = vmatpush.bf16.msra.mxu0 0
    %326 = vmatpush.bf16.msra.mxu0 0
    %327 = vmatpush.bf16.msra.mxu0 0
    %328 = vmatpush.bf16.msra.mxu0 0
    %329 = vmatpush.bf16.msra.mxu0 0
    %330 = vmatpush.bf16.msra.mxu0 %v321
    %331 = vmatmul.bf16.gmra.mxu0 %v317
    %v332 = vpop.f32.mrf.mxu0
    %v333 = vadd.f32 0.0, %v332
    %v334 = vpop.f32.mrf.mxu0
    %335 = vdwg.mxu0
    %v337 = vunpack.c.l.b16 %v212
    %v338 = vpack.c.b16 %v337, %v337
    %339 = vrot.lane.b32.xlu0 %v338, 120
    %v340 = vpop.permute.xlu0 %339
    %v342 = vunpack.c.l.b16 %v243
    %v343 = vpack.c.b16 %v342, %v342
    %344 = vrot.lane.b32.xlu0 %v343, 120
    %v345 = vpop.permute.xlu0 %344
    %v347 = vsel %vm282, %v340, 0
    %v350 = vsel %vm282, %v345, 0
    %352 = vmatpush.bf16.xpose.msra.mxu0 0
    %353 = vmatpush.bf16.xpose.msra.mxu0 0
    %354 = vmatpush.bf16.xpose.msra.mxu0 0
    %355 = vmatpush.bf16.xpose.msra.mxu0 0
    %356 = vmatpush.bf16.xpose.msra.mxu0 0
    %357 = vmatpush.bf16.xpose.msra.mxu0 0
    %358 = vmatpush.bf16.xpose.msra.mxu0 0
    %359 = vmatpush.bf16.xpose.msra.mxu0 %v350
    %360 = vmatmul.bf16.gmra.mxu0 %v347
    %v361 = vpop.f32.mrf.mxu0
    %v362 = vadd.f32 0.0, %v361
    %v363 = vpop.f32.mrf.mxu0
    %364 = vdwg.mxu0
    %v365 = vmul.f32 %v362, 0.35355338
    %v366 = vadd.f32 %v365, %v281
    %v367 = vsel %vm282, %v366, -inf
    %368 = vmax.xlane.f32.xlu0 %v367
    %v369 = vpop.xlane.xlu0 %368
    %v370 = vsub.f32 %v366, %v369
    %v371 = vmul.f32 %v370, 1.442695
    %v372 = vpow.pop %v371
    %v373 = vsel %vm282, %v372, 0.0
    %374 = vadd.xlane.f32.xlu0 %v373
    %v375 = vpop.xlane.xlu0 %374
    %v376 = vrcp.pop %v375
    %v377 = vmul.f32 %v372, %v376
    %v378 = vpack.c.bf16 %v377, %v377
    %v380 = vunpack.c.l.b16 %v274
    %v381 = vpack.c.b16 %v380, %v380
    %382 = vrot.lane.b32.xlu0 %v381, 120
    %v383 = vpop.permute.xlu0 %382
    %v385 = vsel %vm282, %v378, 0
    %v388 = vsel %vm319, %v383, 0
    %390 = vmatpush.bf16.msra.mxu0 0
    %391 = vmatpush.bf16.msra.mxu0 0
    %392 = vmatpush.bf16.msra.mxu0 0
    %393 = vmatpush.bf16.msra.mxu0 0
    %394 = vmatpush.bf16.msra.mxu0 0
    %395 = vmatpush.bf16.msra.mxu0 0
    %396 = vmatpush.bf16.msra.mxu0 0
    %397 = vmatpush.bf16.msra.mxu0 %v388
    %398 = vmatmul.bf16.gmra.mxu0 %v385
    %v399 = vpop.f32.mrf.mxu0
    %v400 = vadd.f32 0.0, %v399
    %v401 = vpop.f32.mrf.mxu0
    %402 = vdwg.mxu0
    %403 = vrot.lane.b32.xlu0 %v338, 112
    %v404 = vpop.permute.xlu0 %403
    %405 = vrot.lane.b32.xlu0 %v343, 112
    %v406 = vpop.permute.xlu0 %405
    %v408 = vsel %vm282, %v404, 0
    %v411 = vsel %vm282, %v406, 0
    %413 = vmatpush.bf16.xpose.msra.mxu0 0
    %414 = vmatpush.bf16.xpose.msra.mxu0 0
    %415 = vmatpush.bf16.xpose.msra.mxu0 0
    %416 = vmatpush.bf16.xpose.msra.mxu0 0
    %417 = vmatpush.bf16.xpose.msra.mxu0 0
    %418 = vmatpush.bf16.xpose.msra.mxu0 0
    %419 = vmatpush.bf16.xpose.msra.mxu0 0
    %420 = vmatpush.bf16.xpose.msra.mxu0 %v411
    %421 = vmatmul.bf16.gmra.mxu0 %v408
    %v422 = vpop.f32.mrf.mxu0
    %v423 = vadd.f32 0.0, %v422
    %v424 = vpop.f32.mrf.mxu0
    %425 = vdwg.mxu0
    %v426 = vmul.f32 %v423, 0.35355338
    %v427 = vadd.f32 %v426, %v281
    %v428 = vsel %vm282, %v427, -inf
    %429 = vmax.xlane.f32.xlu0 %v428
    %v430 = vpop.xlane.xlu0 %429
    %v431 = vsub.f32 %v427, %v430
    %v432 = vmul.f32 %v431, 1.442695
    %v433 = vpow.pop %v432
    %v434 = vsel %vm282, %v433, 0.0
    %435 = vadd.xlane.f32.xlu0 %v434
    %v436 = vpop.xlane.xlu0 %435
    %v437 = vrcp.pop %v436
    %v438 = vmul.f32 %v433, %v437
    %v439 = vpack.c.bf16 %v438, %v438
    %440 = vrot.lane.b32.xlu0 %v381, 112
    %v441 = vpop.permute.xlu0 %440
    %v443 = vsel %vm282, %v439, 0
    %v446 = vsel %vm319, %v441, 0
    %448 = vmatpush.bf16.msra.mxu0 0
    %449 = vmatpush.bf16.msra.mxu0 0
    %450 = vmatpush.bf16.msra.mxu0 0
    %451 = vmatpush.bf16.msra.mxu0 0
    %452 = vmatpush.bf16.msra.mxu0 0
    %453 = vmatpush.bf16.msra.mxu0 0
    %454 = vmatpush.bf16.msra.mxu0 0
    %455 = vmatpush.bf16.msra.mxu0 %v446
    %456 = vmatmul.bf16.gmra.mxu0 %v443
    %v457 = vpop.f32.mrf.mxu0
    %v458 = vadd.f32 0.0, %v457
    %v459 = vpop.f32.mrf.mxu0
    %460 = vdwg.mxu0
    %461 = vrot.lane.b32.xlu0 %v338, 104
    %v462 = vpop.permute.xlu0 %461
    %463 = vrot.lane.b32.xlu0 %v343, 104
    %v464 = vpop.permute.xlu0 %463
    %v466 = vsel %vm282, %v462, 0
    %v469 = vsel %vm282, %v464, 0
    %471 = vmatpush.bf16.xpose.msra.mxu0 0
    %472 = vmatpush.bf16.xpose.msra.mxu0 0
    %473 = vmatpush.bf16.xpose.msra.mxu0 0
    %474 = vmatpush.bf16.xpose.msra.mxu0 0
    %475 = vmatpush.bf16.xpose.msra.mxu0 0
    %476 = vmatpush.bf16.xpose.msra.mxu0 0
    %477 = vmatpush.bf16.xpose.msra.mxu0 0
    %478 = vmatpush.bf16.xpose.msra.mxu0 %v469
    %479 = vmatmul.bf16.gmra.mxu0 %v466
    %v480 = vpop.f32.mrf.mxu0
    %v481 = vadd.f32 0.0, %v480
    %v482 = vpop.f32.mrf.mxu0
    %483 = vdwg.mxu0
    %v484 = vmul.f32 %v481, 0.35355338
    %v485 = vadd.f32 %v484, %v281
    %v486 = vsel %vm282, %v485, -inf
    %487 = vmax.xlane.f32.xlu0 %v486
    %v488 = vpop.xlane.xlu0 %487
    %v489 = vsub.f32 %v485, %v488
    %v490 = vmul.f32 %v489, 1.442695
    %v491 = vpow.pop %v490
    %v492 = vsel %vm282, %v491, 0.0
    %493 = vadd.xlane.f32.xlu0 %v492
    %v494 = vpop.xlane.xlu0 %493
    %v495 = vrcp.pop %v494
    %v496 = vmul.f32 %v491, %v495
    %v497 = vpack.c.bf16 %v496, %v496
    %498 = vrot.lane.b32.xlu0 %v381, 104
    %v499 = vpop.permute.xlu0 %498
    %v501 = vsel %vm282, %v497, 0
    %v504 = vsel %vm319, %v499, 0
    %506 = vmatpush.bf16.msra.mxu0 0
    %507 = vmatpush.bf16.msra.mxu0 0
    %508 = vmatpush.bf16.msra.mxu0 0
    %509 = vmatpush.bf16.msra.mxu0 0
    %510 = vmatpush.bf16.msra.mxu0 0
    %511 = vmatpush.bf16.msra.mxu0 0
    %512 = vmatpush.bf16.msra.mxu0 0
    %513 = vmatpush.bf16.msra.mxu0 %v504
    %514 = vmatmul.bf16.gmra.mxu0 %v501
    %v515 = vpop.f32.mrf.mxu0
    %v516 = vadd.f32 0.0, %v515
    %v517 = vpop.f32.mrf.mxu0
    %518 = vdwg.mxu0
    %520 = vrot.lane.b32.xlu0 %v400, 8
    %v521 = vpop.permute.xlu0 %520
    %524 = vrot.lane.b32.xlu0 %v458, 16
    %v525 = vpop.permute.xlu0 %524
    %528 = vrot.lane.b32.xlu0 %v516, 24
    %v529 = vpop.permute.xlu0 %528
    %v531 = vsel %vm282, %v333, %v521
    %vm532 = vcmask 130048
    %v533 = vsel %vm532, %v531, %v525
    %vm534 = vcmask 195584
    %v535 = vsel %vm534, %v533, %v529
    %v537 = vsel %vm282, %v213, 0
    %v540 = vsel %vm282, %v244, 0
    %542 = vmatpush.bf16.xpose.msra.mxu0 0
    %543 = vmatpush.bf16.xpose.msra.mxu0 0
    %544 = vmatpush.bf16.xpose.msra.mxu0 0
    %545 = vmatpush.bf16.xpose.msra.mxu0 0
    %546 = vmatpush.bf16.xpose.msra.mxu0 0
    %547 = vmatpush.bf16.xpose.msra.mxu0 0
    %548 = vmatpush.bf16.xpose.msra.mxu0 0
    %549 = vmatpush.bf16.xpose.msra.mxu0 %v540
    %550 = vmatmul.bf16.gmra.mxu0 %v537
    %v551 = vpop.f32.mrf.mxu0
    %v552 = vadd.f32 0.0, %v551
    %v553 = vpop.f32.mrf.mxu0
    %554 = vdwg.mxu0
    %v555 = vmul.f32 %v552, 0.35355338
    %v556 = vadd.f32 %v555, %v281
    %v557 = vsel %vm282, %v556, -inf
    %558 = vmax.xlane.f32.xlu0 %v557
    %v559 = vpop.xlane.xlu0 %558
    %v560 = vsub.f32 %v556, %v559
    %v561 = vmul.f32 %v560, 1.442695
    %v562 = vpow.pop %v561
    %v563 = vsel %vm282, %v562, 0.0
    %564 = vadd.xlane.f32.xlu0 %v563
    %v565 = vpop.xlane.xlu0 %564
    %v566 = vrcp.pop %v565
    %v567 = vmul.f32 %v562, %v566
    %v568 = vpack.c.bf16 %v567, %v567
    %v570 = vsel %vm282, %v568, 0
    %v573 = vsel %vm319, %v275, 0
    %575 = vmatpush.bf16.msra.mxu0 0
    %576 = vmatpush.bf16.msra.mxu0 0
    %577 = vmatpush.bf16.msra.mxu0 0
    %578 = vmatpush.bf16.msra.mxu0 0
    %579 = vmatpush.bf16.msra.mxu0 0
    %580 = vmatpush.bf16.msra.mxu0 0
    %581 = vmatpush.bf16.msra.mxu0 0
    %582 = vmatpush.bf16.msra.mxu0 %v573
    %583 = vmatmul.bf16.gmra.mxu0 %v570
    %v584 = vpop.f32.mrf.mxu0
    %v585 = vadd.f32 0.0, %v584
    %v586 = vpop.f32.mrf.mxu0
    %587 = vdwg.mxu0
    %v589 = vunpack.c.l.b16 %v213
    %v590 = vpack.c.b16 %v589, %v589
    %591 = vrot.lane.b32.xlu0 %v590, 120
    %v592 = vpop.permute.xlu0 %591
    %v594 = vunpack.c.l.b16 %v244
    %v595 = vpack.c.b16 %v594, %v594
    %596 = vrot.lane.b32.xlu0 %v595, 120
    %v597 = vpop.permute.xlu0 %596
    %v599 = vsel %vm282, %v592, 0
    %v602 = vsel %vm282, %v597, 0
    %604 = vmatpush.bf16.xpose.msra.mxu0 0
    %605 = vmatpush.bf16.xpose.msra.mxu0 0
    %606 = vmatpush.bf16.xpose.msra.mxu0 0
    %607 = vmatpush.bf16.xpose.msra.mxu0 0
    %608 = vmatpush.bf16.xpose.msra.mxu0 0
    %609 = vmatpush.bf16.xpose.msra.mxu0 0
    %610 = vmatpush.bf16.xpose.msra.mxu0 0
    %611 = vmatpush.bf16.xpose.msra.mxu0 %v602
    %612 = vmatmul.bf16.gmra.mxu0 %v599
    %v613 = vpop.f32.mrf.mxu0
    %v614 = vadd.f32 0.0, %v613
    %v615 = vpop.f32.mrf.mxu0
    %616 = vdwg.mxu0
    %v617 = vmul.f32 %v614, 0.35355338
    %v618 = vadd.f32 %v617, %v281
    %v619 = vsel %vm282, %v618, -inf
    %620 = vmax.xlane.f32.xlu0 %v619
    %v621 = vpop.xlane.xlu0 %620
    %v622 = vsub.f32 %v618, %v621
    %v623 = vmul.f32 %v622, 1.442695
    %v624 = vpow.pop %v623
    %v625 = vsel %vm282, %v624, 0.0
    %626 = vadd.xlane.f32.xlu0 %v625
    %v627 = vpop.xlane.xlu0 %626
    %v628 = vrcp.pop %v627
    %v629 = vmul.f32 %v624, %v628
    %v630 = vpack.c.bf16 %v629, %v629
    %v632 = vunpack.c.l.b16 %v275
    %v633 = vpack.c.b16 %v632, %v632
    %634 = vrot.lane.b32.xlu0 %v633, 120
    %v635 = vpop.permute.xlu0 %634
    %v637 = vsel %vm282, %v630, 0
    %v640 = vsel %vm319, %v635, 0
    %642 = vmatpush.bf16.msra.mxu0 0
    %643 = vmatpush.bf16.msra.mxu0 0
    %644 = vmatpush.bf16.msra.mxu0 0
    %645 = vmatpush.bf16.msra.mxu0 0
    %646 = vmatpush.bf16.msra.mxu0 0
    %647 = vmatpush.bf16.msra.mxu0 0
    %648 = vmatpush.bf16.msra.mxu0 0
    %649 = vmatpush.bf16.msra.mxu0 %v640
    %650 = vmatmul.bf16.gmra.mxu0 %v637
    %v651 = vpop.f32.mrf.mxu0
    %v652 = vadd.f32 0.0, %v651
    %v653 = vpop.f32.mrf.mxu0
    %654 = vdwg.mxu0
    %655 = vrot.lane.b32.xlu0 %v590, 112
    %v656 = vpop.permute.xlu0 %655
    %657 = vrot.lane.b32.xlu0 %v595, 112
    %v658 = vpop.permute.xlu0 %657
    %v660 = vsel %vm282, %v656, 0
    %v663 = vsel %vm282, %v658, 0
    %665 = vmatpush.bf16.xpose.msra.mxu0 0
    %666 = vmatpush.bf16.xpose.msra.mxu0 0
    %667 = vmatpush.bf16.xpose.msra.mxu0 0
    %668 = vmatpush.bf16.xpose.msra.mxu0 0
    %669 = vmatpush.bf16.xpose.msra.mxu0 0
    %670 = vmatpush.bf16.xpose.msra.mxu0 0
    %671 = vmatpush.bf16.xpose.msra.mxu0 0
    %672 = vmatpush.bf16.xpose.msra.mxu0 %v663
    %673 = vmatmul.bf16.gmra.mxu0 %v660
    %v674 = vpop.f32.mrf.mxu0
    %v675 = vadd.f32 0.0, %v674
    %v676 = vpop.f32.mrf.mxu0
    %677 = vdwg.mxu0
    %v678 = vmul.f32 %v675, 0.35355338
    %v679 = vadd.f32 %v678, %v281
    %v680 = vsel %vm282, %v679, -inf
    %681 = vmax.xlane.f32.xlu0 %v680
    %v682 = vpop.xlane.xlu0 %681
    %v683 = vsub.f32 %v679, %v682
    %v684 = vmul.f32 %v683, 1.442695
    %v685 = vpow.pop %v684
    %v686 = vsel %vm282, %v685, 0.0
    %687 = vadd.xlane.f32.xlu0 %v686
    %v688 = vpop.xlane.xlu0 %687
    %v689 = vrcp.pop %v688
    %v690 = vmul.f32 %v685, %v689
    %v691 = vpack.c.bf16 %v690, %v690
    %692 = vrot.lane.b32.xlu0 %v633, 112
    %v693 = vpop.permute.xlu0 %692
    %v695 = vsel %vm282, %v691, 0
    %v698 = vsel %vm319, %v693, 0
    %700 = vmatpush.bf16.msra.mxu0 0
    %701 = vmatpush.bf16.msra.mxu0 0
    %702 = vmatpush.bf16.msra.mxu0 0
    %703 = vmatpush.bf16.msra.mxu0 0
    %704 = vmatpush.bf16.msra.mxu0 0
    %705 = vmatpush.bf16.msra.mxu0 0
    %706 = vmatpush.bf16.msra.mxu0 0
    %707 = vmatpush.bf16.msra.mxu0 %v698
    %708 = vmatmul.bf16.gmra.mxu0 %v695
    %v709 = vpop.f32.mrf.mxu0
    %v710 = vadd.f32 0.0, %v709
    %v711 = vpop.f32.mrf.mxu0
    %712 = vdwg.mxu0
    %713 = vrot.lane.b32.xlu0 %v590, 104
    %v714 = vpop.permute.xlu0 %713
    %715 = vrot.lane.b32.xlu0 %v595, 104
    %v716 = vpop.permute.xlu0 %715
    %v718 = vsel %vm282, %v714, 0
    %v721 = vsel %vm282, %v716, 0
    %723 = vmatpush.bf16.xpose.msra.mxu0 0
    %724 = vmatpush.bf16.xpose.msra.mxu0 0
    %725 = vmatpush.bf16.xpose.msra.mxu0 0
    %726 = vmatpush.bf16.xpose.msra.mxu0 0
    %727 = vmatpush.bf16.xpose.msra.mxu0 0
    %728 = vmatpush.bf16.xpose.msra.mxu0 0
    %729 = vmatpush.bf16.xpose.msra.mxu0 0
    %730 = vmatpush.bf16.xpose.msra.mxu0 %v721
    %731 = vmatmul.bf16.gmra.mxu0 %v718
    %v732 = vpop.f32.mrf.mxu0
    %v733 = vadd.f32 0.0, %v732
    %v734 = vpop.f32.mrf.mxu0
    %735 = vdwg.mxu0
    %v736 = vmul.f32 %v733, 0.35355338
    %v737 = vadd.f32 %v736, %v281
    %v738 = vsel %vm282, %v737, -inf
    %739 = vmax.xlane.f32.xlu0 %v738
    %v740 = vpop.xlane.xlu0 %739
    %v741 = vsub.f32 %v737, %v740
    %v742 = vmul.f32 %v741, 1.442695
    %v743 = vpow.pop %v742
    %v744 = vsel %vm282, %v743, 0.0
    %745 = vadd.xlane.f32.xlu0 %v744
    %v746 = vpop.xlane.xlu0 %745
    %v747 = vrcp.pop %v746
    %v748 = vmul.f32 %v743, %v747
    %v749 = vpack.c.bf16 %v748, %v748
    %750 = vrot.lane.b32.xlu0 %v633, 104
    %v751 = vpop.permute.xlu0 %750
    %v753 = vsel %vm282, %v749, 0
    %v756 = vsel %vm319, %v751, 0
    %758 = vmatpush.bf16.msra.mxu0 0
    %759 = vmatpush.bf16.msra.mxu0 0
    %760 = vmatpush.bf16.msra.mxu0 0
    %761 = vmatpush.bf16.msra.mxu0 0
    %762 = vmatpush.bf16.msra.mxu0 0
    %763 = vmatpush.bf16.msra.mxu0 0
    %764 = vmatpush.bf16.msra.mxu0 0
    %765 = vmatpush.bf16.msra.mxu0 %v756
    %766 = vmatmul.bf16.gmra.mxu0 %v753
    %v767 = vpop.f32.mrf.mxu0
    %v768 = vadd.f32 0.0, %v767
    %v769 = vpop.f32.mrf.mxu0
    %770 = vdwg.mxu0
    %772 = vrot.lane.b32.xlu0 %v652, 8
    %v773 = vpop.permute.xlu0 %772
    %776 = vrot.lane.b32.xlu0 %v710, 16
    %v777 = vpop.permute.xlu0 %776
    %780 = vrot.lane.b32.xlu0 %v768, 24
    %v781 = vpop.permute.xlu0 %780
    %v783 = vsel %vm282, %v585, %v773
    %v784 = vsel %vm532, %v783, %v777
    %v785 = vsel %vm534, %v784, %v781
    %v786 = vpack.c.bf16 %v785, %v535
    %v788 = vperm.slane %v171, 0
    %v794 = vunpack.c.l.b16 %v167
    %v795 = vunpack.c.l.b16 %v168
    %v796 = vunpack.c.l.b16 %v169
    %v797 = vunpack.c.l.b16 %v170
    %v798 = vpack.c.b16 %v795, %v794
    %v799 = vpack.c.b16 %v797, %v796
    %v803 = vsel %vm194, %v786, 0
    %805 = vmatpush.bf16.msra.mxu0 0
    %806 = vmatpush.bf16.msra.mxu0 0
    %807 = vmatpush.bf16.msra.mxu0 0
    %808 = vmatpush.bf16.msra.mxu0 0
    %809 = vmatpush.bf16.msra.mxu0 0
    %810 = vmatpush.bf16.msra.mxu0 0
    %811 = vmatpush.bf16.msra.mxu0 %v799
    %812 = vmatpush.bf16.msra.mxu0 %v798
    %813 = vmatmul.bf16.gmra.mxu0 %v803
    %v814 = vpop.f32.mrf.mxu0
    %v815 = vadd.f32 %v788, %v814
    %v816 = vpop.f32.mrf.mxu0
    %v817 = vadd.f32 %v788, %v816
    %818 = vdwg.mxu0
    %v819 = vadd.f32 %v147, %v815
    %v820 = vadd.f32 %v148, %v817
    %v821 = vsel %vm194, %v819, 0.0
    %822 = vadd.xlane.f32.xlu0 %v821
    %v823 = vpop.xlane.xlu0 %822
    %v824 = vsel %vm194, %v820, 0.0
    %825 = vadd.xlane.f32.xlu0 %v824
    %v826 = vpop.xlane.xlu0 %825
    %v827 = vrcp.pop 32.0
    %v828 = vmul.f32 32.0, %v827
    %v829 = vsub.f32 1.0, %v828
    %v830 = vmul.f32 %v827, %v829
    %v831 = vadd.f32 %v827, %v830
    %vm832 = vweird.f32 %v827
    %v833 = vsel %vm832, %v827, %v831
    %v834 = vmul.f32 %v823, %v833
    %v835 = vmul.f32 %v826, %v833
    %v836 = vsub.f32 %v819, %v834
    %v837 = vsub.f32 %v820, %v835
    %v838 = vmul.f32 %v836, %v836
    %v839 = vmul.f32 %v837, %v837
    %v840 = vsel %vm194, %v838, 0.0
    %841 = vadd.xlane.f32.xlu0 %v840
    %v842 = vpop.xlane.xlu0 %841
    %v843 = vsel %vm194, %v839, 0.0
    %844 = vadd.xlane.f32.xlu0 %v843
    %v845 = vpop.xlane.xlu0 %844
    %v846 = vmul.f32 %v842, %v833
    %v847 = vmul.f32 %v845, %v833
    %v848 = vadd.f32 %v846, 1e-05
    %v849 = vadd.f32 %v847, 1e-05
    %v850 = vrsqrt.pop %v848
    %v851 = vmul.f32 %v850, %v848
    %v852 = vmul.f32 %v851, %v850
    %v853 = vmul.f32 0.5, %v852
    %v854 = vsub.f32 1.5, %v853
    %v855 = vmul.f32 %v850, %v854
    %vm856 = vweird.f32 %v848
    %vm857 = vweird.f32 %v850
    %vm858 = vmor %vm856, %vm857
    %v859 = vsel %vm858, %v850, %v855
    %v860 = vrsqrt.pop %v849
    %v861 = vmul.f32 %v860, %v849
    %v862 = vmul.f32 %v861, %v860
    %v863 = vmul.f32 0.5, %v862
    %v864 = vsub.f32 1.5, %v863
    %v865 = vmul.f32 %v860, %v864
    %vm866 = vweird.f32 %v849
    %vm867 = vweird.f32 %v860
    %vm868 = vmor %vm866, %vm867
    %v869 = vsel %vm868, %v860, %v865
    %v870 = vmul.f32 %v836, %v859
    %v871 = vmul.f32 %v837, %v869
    %v873 = vperm.slane %v172, 0
    %v875 = vmul.f32 %v870, %v873
    %v876 = vmul.f32 %v871, %v873
    %v878 = vperm.slane %v173, 0
    %v880 = vadd.f32 %v875, %v878
    %v881 = vadd.f32 %v876, %v878
    %v882 = vpack.c.bf16 %v881, %v880
    %v883 = vld [vmem:[%s12] sm:$0xf]
    %v884 = vld [vmem:[%s12 + $0x4] sm:$0xf]
    %v885 = vld [vmem:[%s12 + $0x8] sm:$0xf]
    %v886 = vld [vmem:[%s12 + $0xc] sm:$0xf]
    %v887 = vld [vmem:[%s13] sm:$0x1]
    %v888 = vld [vmem:[%s14] sm:$0xf]
    %v889 = vld [vmem:[%s14 + $0x4] sm:$0xf]
    %v890 = vld [vmem:[%s14 + $0x8] sm:$0xf]
    %v891 = vld [vmem:[%s14 + $0xc] sm:$0xf]
    %v892 = vld [vmem:[%s15] sm:$0x1]
    %v893 = vld [vmem:[%s16] sm:$0xf]
    %v894 = vld [vmem:[%s16 + $0x4] sm:$0xf]
    %v895 = vld [vmem:[%s16 + $0x8] sm:$0xf]
    %v896 = vld [vmem:[%s16 + $0xc] sm:$0xf]
    %v897 = vld [vmem:[%s17] sm:$0x1]
    %v898 = vld [vmem:[%s18] sm:$0xf]
    %v899 = vld [vmem:[%s18 + $0x4] sm:$0xf]
    %v900 = vld [vmem:[%s18 + $0x8] sm:$0xf]
    %v901 = vld [vmem:[%s18 + $0xc] sm:$0xf]
    %v902 = vld [vmem:[%s19] sm:$0x1]
    %v903 = vld [vmem:[%s20] sm:$0x1]
    %v904 = vld [vmem:[%s21] sm:$0x1]
    %v906 = vperm.slane %v887, 0
    %v912 = vunpack.c.l.b16 %v883
    %v913 = vunpack.c.l.b16 %v884
    %v914 = vunpack.c.l.b16 %v885
    %v915 = vunpack.c.l.b16 %v886
    %v916 = vpack.c.b16 %v913, %v912
    %v917 = vpack.c.b16 %v915, %v914
    %v921 = vsel %vm194, %v882, 0
    %923 = vmatpush.bf16.msra.mxu0 0
    %924 = vmatpush.bf16.msra.mxu0 0
    %925 = vmatpush.bf16.msra.mxu0 0
    %926 = vmatpush.bf16.msra.mxu0 0
    %927 = vmatpush.bf16.msra.mxu0 0
    %928 = vmatpush.bf16.msra.mxu0 0
    %929 = vmatpush.bf16.msra.mxu0 %v917
    %930 = vmatpush.bf16.msra.mxu0 %v916
    %931 = vmatmul.bf16.gmra.mxu0 %v921
    %v932 = vpop.f32.mrf.mxu0
    %v933 = vadd.f32 %v906, %v932
    %v934 = vpop.f32.mrf.mxu0
    %v935 = vadd.f32 %v906, %v934
    %936 = vdwg.mxu0
    %v937 = vpack.c.bf16 %v933, %v933
    %v938 = vpack.c.bf16 %v935, %v935
    %v940 = vperm.slane %v892, 0
    %v945 = vunpack.c.l.b16 %v149
    %v946 = vunpack.c.l.b16 %v150
    %v947 = vunpack.c.l.b16 %v151
    %v948 = vpack.c.b16 %v946, %v945
    %v949 = vpack.c.b16 %v947, %v947
    %v954 = vunpack.c.l.b16 %v888
    %v955 = vunpack.c.l.b16 %v889
    %v956 = vunpack.c.l.b16 %v890
    %v957 = vunpack.c.l.b16 %v891
    %v958 = vpack.c.b16 %v955, %v954
    %v959 = vpack.c.b16 %v957, %v956
    %v963 = vsel %vm194, %v948, 0
    %v966 = vsel %vm194, %v949, 0
    %968 = vmatpush.bf16.msra.mxu0 0
    %969 = vmatpush.bf16.msra.mxu0 0
    %970 = vmatpush.bf16.msra.mxu0 0
    %971 = vmatpush.bf16.msra.mxu0 0
    %972 = vmatpush.bf16.msra.mxu0 0
    %973 = vmatpush.bf16.msra.mxu0 0
    %974 = vmatpush.bf16.msra.mxu0 %v959
    %975 = vmatpush.bf16.msra.mxu0 %v958
    %976 = vmatmul.bf16.gmra.mxu0 %v963
    %v977 = vpop.f32.mrf.mxu0
    %v978 = vadd.f32 %v940, %v977
    %v979 = vpop.f32.mrf.mxu0
    %v980 = vadd.f32 %v940, %v979
    %981 = vmatmul.bf16.gmra.mxu0 %v966
    %v982 = vpop.f32.mrf.mxu0
    %v983 = vadd.f32 %v940, %v982
    %v984 = vpop.f32.mrf.mxu0
    %985 = vdwg.mxu0
    %v986 = vpack.c.bf16 %v978, %v978
    %v987 = vpack.c.bf16 %v980, %v980
    %v988 = vpack.c.bf16 %v983, %v983
    %v990 = vperm.slane %v897, 0
    %v996 = vunpack.c.l.b16 %v893
    %v997 = vunpack.c.l.b16 %v894
    %v998 = vunpack.c.l.b16 %v895
    %v999 = vunpack.c.l.b16 %v896
    %v1000 = vpack.c.b16 %v997, %v996
    %v1001 = vpack.c.b16 %v999, %v998
    %1004 = vmatpush.bf16.msra.mxu0 0
    %1005 = vmatpush.bf16.msra.mxu0 0
    %1006 = vmatpush.bf16.msra.mxu0 0
    %1007 = vmatpush.bf16.msra.mxu0 0
    %1008 = vmatpush.bf16.msra.mxu0 0
    %1009 = vmatpush.bf16.msra.mxu0 0
    %1010 = vmatpush.bf16.msra.mxu0 %v1001
    %1011 = vmatpush.bf16.msra.mxu0 %v1000
    %1012 = vmatmul.bf16.gmra.mxu0 %v963
    %v1013 = vpop.f32.mrf.mxu0
    %v1014 = vadd.f32 %v990, %v1013
    %v1015 = vpop.f32.mrf.mxu0
    %v1016 = vadd.f32 %v990, %v1015
    %1017 = vmatmul.bf16.gmra.mxu0 %v966
    %v1018 = vpop.f32.mrf.mxu0
    %v1019 = vadd.f32 %v990, %v1018
    %v1020 = vpop.f32.mrf.mxu0
    %1021 = vdwg.mxu0
    %v1022 = vpack.c.bf16 %v1014, %v1014
    %v1023 = vpack.c.bf16 %v1016, %v1016
    %v1024 = vpack.c.bf16 %v1019, %v1019
    %v1027 = vunpack.c.l.b16 %v986
    %v1028 = vunpack.c.l.b16 %v987
    %v1029 = vpack.c.b16 %v1028, %v1027
    %v1031 = vsel %vm282, %v937, 0
    %v1034 = vsel %vm282, %v1029, 0
    %1036 = vmatpush.bf16.xpose.msra.mxu0 0
    %1037 = vmatpush.bf16.xpose.msra.mxu0 0
    %1038 = vmatpush.bf16.xpose.msra.mxu0 0
    %1039 = vmatpush.bf16.xpose.msra.mxu0 0
    %1040 = vmatpush.bf16.xpose.msra.mxu0 0
    %1041 = vmatpush.bf16.xpose.msra.mxu0 0
    %1042 = vmatpush.bf16.xpose.msra.mxu0 0
    %1043 = vmatpush.bf16.xpose.msra.mxu0 %v1034
    %1044 = vmatmul.bf16.gmra.mxu0 %v1031
    %v1045 = vpop.f32.mrf.mxu0
    %v1046 = vadd.f32 0.0, %v1045
    %v1047 = vpop.f32.mrf.mxu0
    %1048 = vdwg.mxu0
    %v1049 = vmul.f32 %v1046, 0.35355338
    %vm1050 = vcmask 80896
    %v1051 = vsel %vm1050, %v1049, -inf
    %1052 = vmax.xlane.f32.xlu0 %v1051
    %v1053 = vpop.xlane.xlu0 %1052
    %v1054 = vsub.f32 %v1049, %v1053
    %v1055 = vmul.f32 %v1054, 1.442695
    %v1056 = vpow.pop %v1055
    %v1057 = vsel %vm1050, %v1056, 0.0
    %1058 = vadd.xlane.f32.xlu0 %v1057
    %v1059 = vpop.xlane.xlu0 %1058
    %v1060 = vrcp.pop %v1059
    %v1061 = vmul.f32 %v1056, %v1060
    %v1062 = vpack.c.bf16 %v1061, %v1061
    %v1065 = vunpack.c.l.b16 %v1022
    %v1066 = vunpack.c.l.b16 %v1023
    %v1067 = vpack.c.b16 %v1066, %v1065
    %v1069 = vsel %vm1050, %v1062, 0
    %vm1071 = vcmask 1044480
    %v1073 = vsel %vm1071, %v1067, 0
    %1075 = vmatpush.bf16.msra.mxu0 0
    %1076 = vmatpush.bf16.msra.mxu0 0
    %1077 = vmatpush.bf16.msra.mxu0 0
    %1078 = vmatpush.bf16.msra.mxu0 0
    %1079 = vmatpush.bf16.msra.mxu0 0
    %1080 = vmatpush.bf16.msra.mxu0 0
    %1081 = vmatpush.bf16.msra.mxu0 0
    %1082 = vmatpush.bf16.msra.mxu0 %v1073
    %1083 = vmatmul.bf16.gmra.mxu0 %v1069
    %v1084 = vpop.f32.mrf.mxu0
    %v1085 = vadd.f32 0.0, %v1084
    %v1086 = vpop.f32.mrf.mxu0
    %1087 = vdwg.mxu0
    %v1089 = vunpack.c.l.b16 %v937
    %v1090 = vpack.c.b16 %v1089, %v1089
    %1091 = vrot.lane.b32.xlu0 %v1090, 120
    %v1092 = vpop.permute.xlu0 %1091
    %1093 = vrot.lane.b32.xlu0 %v1029, 120
    %v1094 = vpop.permute.xlu0 %1093
    %v1096 = vsel %vm282, %v1092, 0
    %v1099 = vsel %vm282, %v1094, 0
    %1101 = vmatpush.bf16.xpose.msra.mxu0 0
    %1102 = vmatpush.bf16.xpose.msra.mxu0 0
    %1103 = vmatpush.bf16.xpose.msra.mxu0 0
    %1104 = vmatpush.bf16.xpose.msra.mxu0 0
    %1105 = vmatpush.bf16.xpose.msra.mxu0 0
    %1106 = vmatpush.bf16.xpose.msra.mxu0 0
    %1107 = vmatpush.bf16.xpose.msra.mxu0 0
    %1108 = vmatpush.bf16.xpose.msra.mxu0 %v1099
    %1109 = vmatmul.bf16.gmra.mxu0 %v1096
    %v1110 = vpop.f32.mrf.mxu0
    %v1111 = vadd.f32 0.0, %v1110
    %v1112 = vpop.f32.mrf.mxu0
    %1113 = vdwg.mxu0
    %v1114 = vmul.f32 %v1111, 0.35355338
    %v1115 = vsel %vm1050, %v1114, -inf
    %1116 = vmax.xlane.f32.xlu0 %v1115
    %v1117 = vpop.xlane.xlu0 %1116
    %v1118 = vsub.f32 %v1114, %v1117
    %v1119 = vmul.f32 %v1118, 1.442695
    %v1120 = vpow.pop %v1119
    %v1121 = vsel %vm1050, %v1120, 0.0
    %1122 = vadd.xlane.f32.xlu0 %v1121
    %v1123 = vpop.xlane.xlu0 %1122
    %v1124 = vrcp.pop %v1123
    %v1125 = vmul.f32 %v1120, %v1124
    %v1126 = vpack.c.bf16 %v1125, %v1125
    %1127 = vrot.lane.b32.xlu0 %v1067, 120
    %v1128 = vpop.permute.xlu0 %1127
    %v1130 = vsel %vm1050, %v1126, 0
    %v1133 = vsel %vm1071, %v1128, 0
    %1135 = vmatpush.bf16.msra.mxu0 0
    %1136 = vmatpush.bf16.msra.mxu0 0
    %1137 = vmatpush.bf16.msra.mxu0 0
    %1138 = vmatpush.bf16.msra.mxu0 0
    %1139 = vmatpush.bf16.msra.mxu0 0
    %1140 = vmatpush.bf16.msra.mxu0 0
    %1141 = vmatpush.bf16.msra.mxu0 0
    %1142 = vmatpush.bf16.msra.mxu0 %v1133
    %1143 = vmatmul.bf16.gmra.mxu0 %v1130
    %v1144 = vpop.f32.mrf.mxu0
    %v1145 = vadd.f32 0.0, %v1144
    %v1146 = vpop.f32.mrf.mxu0
    %1147 = vdwg.mxu0
    %1148 = vrot.lane.b32.xlu0 %v1090, 112
    %v1149 = vpop.permute.xlu0 %1148
    %1150 = vrot.lane.b32.xlu0 %v1029, 112
    %v1151 = vpop.permute.xlu0 %1150
    %v1153 = vsel %vm282, %v1149, 0
    %v1156 = vsel %vm282, %v1151, 0
    %1158 = vmatpush.bf16.xpose.msra.mxu0 0
    %1159 = vmatpush.bf16.xpose.msra.mxu0 0
    %1160 = vmatpush.bf16.xpose.msra.mxu0 0
    %1161 = vmatpush.bf16.xpose.msra.mxu0 0
    %1162 = vmatpush.bf16.xpose.msra.mxu0 0
    %1163 = vmatpush.bf16.xpose.msra.mxu0 0
    %1164 = vmatpush.bf16.xpose.msra.mxu0 0
    %1165 = vmatpush.bf16.xpose.msra.mxu0 %v1156
    %1166 = vmatmul.bf16.gmra.mxu0 %v1153
    %v1167 = vpop.f32.mrf.mxu0
    %v1168 = vadd.f32 0.0, %v1167
    %v1169 = vpop.f32.mrf.mxu0
    %1170 = vdwg.mxu0
    %v1171 = vmul.f32 %v1168, 0.35355338
    %v1172 = vsel %vm1050, %v1171, -inf
    %1173 = vmax.xlane.f32.xlu0 %v1172
    %v1174 = vpop.xlane.xlu0 %1173
    %v1175 = vsub.f32 %v1171, %v1174
    %v1176 = vmul.f32 %v1175, 1.442695
    %v1177 = vpow.pop %v1176
    %v1178 = vsel %vm1050, %v1177, 0.0
    %1179 = vadd.xlane.f32.xlu0 %v1178
    %v1180 = vpop.xlane.xlu0 %1179
    %v1181 = vrcp.pop %v1180
    %v1182 = vmul.f32 %v1177, %v1181
    %v1183 = vpack.c.bf16 %v1182, %v1182
    %1184 = vrot.lane.b32.xlu0 %v1067, 112
    %v1185 = vpop.permute.xlu0 %1184
    %v1187 = vsel %vm1050, %v1183, 0
    %v1190 = vsel %vm1071, %v1185, 0
    %1192 = vmatpush.bf16.msra.mxu0 0
    %1193 = vmatpush.bf16.msra.mxu0 0
    %1194 = vmatpush.bf16.msra.mxu0 0
    %1195 = vmatpush.bf16.msra.mxu0 0
    %1196 = vmatpush.bf16.msra.mxu0 0
    %1197 = vmatpush.bf16.msra.mxu0 0
    %1198 = vmatpush.bf16.msra.mxu0 0
    %1199 = vmatpush.bf16.msra.mxu0 %v1190
    %1200 = vmatmul.bf16.gmra.mxu0 %v1187
    %v1201 = vpop.f32.mrf.mxu0
    %v1202 = vadd.f32 0.0, %v1201
    %v1203 = vpop.f32.mrf.mxu0
    %1204 = vdwg.mxu0
    %1205 = vrot.lane.b32.xlu0 %v1090, 104
    %v1206 = vpop.permute.xlu0 %1205
    %1207 = vrot.lane.b32.xlu0 %v1029, 104
    %v1208 = vpop.permute.xlu0 %1207
    %v1210 = vsel %vm282, %v1206, 0
    %v1213 = vsel %vm282, %v1208, 0
    %1215 = vmatpush.bf16.xpose.msra.mxu0 0
    %1216 = vmatpush.bf16.xpose.msra.mxu0 0
    %1217 = vmatpush.bf16.xpose.msra.mxu0 0
    %1218 = vmatpush.bf16.xpose.msra.mxu0 0
    %1219 = vmatpush.bf16.xpose.msra.mxu0 0
    %1220 = vmatpush.bf16.xpose.msra.mxu0 0
    %1221 = vmatpush.bf16.xpose.msra.mxu0 0
    %1222 = vmatpush.bf16.xpose.msra.mxu0 %v1213
    %1223 = vmatmul.bf16.gmra.mxu0 %v1210
    %v1224 = vpop.f32.mrf.mxu0
    %v1225 = vadd.f32 0.0, %v1224
    %v1226 = vpop.f32.mrf.mxu0
    %1227 = vdwg.mxu0
    %v1228 = vmul.f32 %v1225, 0.35355338
    %v1229 = vsel %vm1050, %v1228, -inf
    %1230 = vmax.xlane.f32.xlu0 %v1229
    %v1231 = vpop.xlane.xlu0 %1230
    %v1232 = vsub.f32 %v1228, %v1231
    %v1233 = vmul.f32 %v1232, 1.442695
    %v1234 = vpow.pop %v1233
    %v1235 = vsel %vm1050, %v1234, 0.0
    %1236 = vadd.xlane.f32.xlu0 %v1235
    %v1237 = vpop.xlane.xlu0 %1236
    %v1238 = vrcp.pop %v1237
    %v1239 = vmul.f32 %v1234, %v1238
    %v1240 = vpack.c.bf16 %v1239, %v1239
    %1241 = vrot.lane.b32.xlu0 %v1067, 104
    %v1242 = vpop.permute.xlu0 %1241
    %v1244 = vsel %vm1050, %v1240, 0
    %v1247 = vsel %vm1071, %v1242, 0
    %1249 = vmatpush.bf16.msra.mxu0 0
    %1250 = vmatpush.bf16.msra.mxu0 0
    %1251 = vmatpush.bf16.msra.mxu0 0
    %1252 = vmatpush.bf16.msra.mxu0 0
    %1253 = vmatpush.bf16.msra.mxu0 0
    %1254 = vmatpush.bf16.msra.mxu0 0
    %1255 = vmatpush.bf16.msra.mxu0 0
    %1256 = vmatpush.bf16.msra.mxu0 %v1247
    %1257 = vmatmul.bf16.gmra.mxu0 %v1244
    %v1258 = vpop.f32.mrf.mxu0
    %v1259 = vadd.f32 0.0, %v1258
    %v1260 = vpop.f32.mrf.mxu0
    %1261 = vdwg.mxu0
    %1263 = vrot.lane.b32.xlu0 %v1145, 8
    %v1264 = vpop.permute.xlu0 %1263
    %1267 = vrot.lane.b32.xlu0 %v1202, 16
    %v1268 = vpop.permute.xlu0 %1267
    %1271 = vrot.lane.b32.xlu0 %v1259, 24
    %v1272 = vpop.permute.xlu0 %1271
    %v1274 = vsel %vm282, %v1085, %v1264
    %v1275 = vsel %vm532, %v1274, %v1268
    %v1276 = vsel %vm534, %v1275, %v1272
    %v1278 = vunpack.c.l.b16 %v988
    %v1279 = vpack.c.b16 %v1278, %v1028
    %v1280 = vrot.slane %v1279, 1
    %v1282 = vsel %vm282, %v938, 0
    %v1285 = vsel %vm282, %v1280, 0
    %1287 = vmatpush.bf16.xpose.msra.mxu0 0
    %1288 = vmatpush.bf16.xpose.msra.mxu0 0
    %1289 = vmatpush.bf16.xpose.msra.mxu0 0
    %1290 = vmatpush.bf16.xpose.msra.mxu0 0
    %1291 = vmatpush.bf16.xpose.msra.mxu0 0
    %1292 = vmatpush.bf16.xpose.msra.mxu0 0
    %1293 = vmatpush.bf16.xpose.msra.mxu0 0
    %1294 = vmatpush.bf16.xpose.msra.mxu0 %v1285
    %1295 = vmatmul.bf16.gmra.mxu0 %v1282
    %v1296 = vpop.f32.mrf.mxu0
    %v1297 = vadd.f32 0.0, %v1296
    %v1298 = vpop.f32.mrf.mxu0
    %1299 = vdwg.mxu0
    %v1300 = vmul.f32 %v1297, 0.35355338
    %v1301 = vsel %vm1050, %v1300, -inf
    %1302 = vmax.xlane.f32.xlu0 %v1301
    %v1303 = vpop.xlane.xlu0 %1302
    %v1304 = vsub.f32 %v1300, %v1303
    %v1305 = vmul.f32 %v1304, 1.442695
    %v1306 = vpow.pop %v1305
    %v1307 = vsel %vm1050, %v1306, 0.0
    %1308 = vadd.xlane.f32.xlu0 %v1307
    %v1309 = vpop.xlane.xlu0 %1308
    %v1310 = vrcp.pop %v1309
    %v1311 = vmul.f32 %v1306, %v1310
    %v1312 = vpack.c.bf16 %v1311, %v1311
    %v1314 = vunpack.c.l.b16 %v1024
    %v1315 = vpack.c.b16 %v1314, %v1066
    %v1316 = vrot.slane %v1315, 1
    %v1318 = vsel %vm1050, %v1312, 0
    %v1321 = vsel %vm1071, %v1316, 0
    %1323 = vmatpush.bf16.msra.mxu0 0
    %1324 = vmatpush.bf16.msra.mxu0 0
    %1325 = vmatpush.bf16.msra.mxu0 0
    %1326 = vmatpush.bf16.msra.mxu0 0
    %1327 = vmatpush.bf16.msra.mxu0 0
    %1328 = vmatpush.bf16.msra.mxu0 0
    %1329 = vmatpush.bf16.msra.mxu0 0
    %1330 = vmatpush.bf16.msra.mxu0 %v1321
    %1331 = vmatmul.bf16.gmra.mxu0 %v1318
    %v1332 = vpop.f32.mrf.mxu0
    %v1333 = vadd.f32 0.0, %v1332
    %v1334 = vpop.f32.mrf.mxu0
    %1335 = vdwg.mxu0
    %v1337 = vunpack.c.l.b16 %v938
    %v1338 = vpack.c.b16 %v1337, %v1337
    %1339 = vrot.lane.b32.xlu0 %v1338, 120
    %v1340 = vpop.permute.xlu0 %1339
    %1341 = vrot.lane.b32.xlu0 %v1280, 120
    %v1342 = vpop.permute.xlu0 %1341
    %v1344 = vsel %vm282, %v1340, 0
    %v1347 = vsel %vm282, %v1342, 0
    %1349 = vmatpush.bf16.xpose.msra.mxu0 0
    %1350 = vmatpush.bf16.xpose.msra.mxu0 0
    %1351 = vmatpush.bf16.xpose.msra.mxu0 0
    %1352 = vmatpush.bf16.xpose.msra.mxu0 0
    %1353 = vmatpush.bf16.xpose.msra.mxu0 0
    %1354 = vmatpush.bf16.xpose.msra.mxu0 0
    %1355 = vmatpush.bf16.xpose.msra.mxu0 0
    %1356 = vmatpush.bf16.xpose.msra.mxu0 %v1347
    %1357 = vmatmul.bf16.gmra.mxu0 %v1344
    %v1358 = vpop.f32.mrf.mxu0
    %v1359 = vadd.f32 0.0, %v1358
    %v1360 = vpop.f32.mrf.mxu0
    %1361 = vdwg.mxu0
    %v1362 = vmul.f32 %v1359, 0.35355338
    %v1363 = vsel %vm1050, %v1362, -inf
    %1364 = vmax.xlane.f32.xlu0 %v1363
    %v1365 = vpop.xlane.xlu0 %1364
    %v1366 = vsub.f32 %v1362, %v1365
    %v1367 = vmul.f32 %v1366, 1.442695
    %v1368 = vpow.pop %v1367
    %v1369 = vsel %vm1050, %v1368, 0.0
    %1370 = vadd.xlane.f32.xlu0 %v1369
    %v1371 = vpop.xlane.xlu0 %1370
    %v1372 = vrcp.pop %v1371
    %v1373 = vmul.f32 %v1368, %v1372
    %v1374 = vpack.c.bf16 %v1373, %v1373
    %1375 = vrot.lane.b32.xlu0 %v1316, 120
    %v1376 = vpop.permute.xlu0 %1375
    %v1378 = vsel %vm1050, %v1374, 0
    %v1381 = vsel %vm1071, %v1376, 0
    %1383 = vmatpush.bf16.msra.mxu0 0
    %1384 = vmatpush.bf16.msra.mxu0 0
    %1385 = vmatpush.bf16.msra.mxu0 0
    %1386 = vmatpush.bf16.msra.mxu0 0
    %1387 = vmatpush.bf16.msra.mxu0 0
    %1388 = vmatpush.bf16.msra.mxu0 0
    %1389 = vmatpush.bf16.msra.mxu0 0
    %1390 = vmatpush.bf16.msra.mxu0 %v1381
    %1391 = vmatmul.bf16.gmra.mxu0 %v1378
    %v1392 = vpop.f32.mrf.mxu0
    %v1393 = vadd.f32 0.0, %v1392
    %v1394 = vpop.f32.mrf.mxu0
    %1395 = vdwg.mxu0
    %1396 = vrot.lane.b32.xlu0 %v1338, 112
    %v1397 = vpop.permute.xlu0 %1396
    %1398 = vrot.lane.b32.xlu0 %v1280, 112
    %v1399 = vpop.permute.xlu0 %1398
    %v1401 = vsel %vm282, %v1397, 0
    %v1404 = vsel %vm282, %v1399, 0
    %1406 = vmatpush.bf16.xpose.msra.mxu0 0
    %1407 = vmatpush.bf16.xpose.msra.mxu0 0
    %1408 = vmatpush.bf16.xpose.msra.mxu0 0
    %1409 = vmatpush.bf16.xpose.msra.mxu0 0
    %1410 = vmatpush.bf16.xpose.msra.mxu0 0
    %1411 = vmatpush.bf16.xpose.msra.mxu0 0
    %1412 = vmatpush.bf16.xpose.msra.mxu0 0
    %1413 = vmatpush.bf16.xpose.msra.mxu0 %v1404
    %1414 = vmatmul.bf16.gmra.mxu0 %v1401
    %v1415 = vpop.f32.mrf.mxu0
    %v1416 = vadd.f32 0.0, %v1415
    %v1417 = vpop.f32.mrf.mxu0
    %1418 = vdwg.mxu0
    %v1419 = vmul.f32 %v1416, 0.35355338
    %v1420 = vsel %vm1050, %v1419, -inf
    %1421 = vmax.xlane.f32.xlu0 %v1420
    %v1422 = vpop.xlane.xlu0 %1421
    %v1423 = vsub.f32 %v1419, %v1422
    %v1424 = vmul.f32 %v1423, 1.442695
    %v1425 = vpow.pop %v1424
    %v1426 = vsel %vm1050, %v1425, 0.0
    %1427 = vadd.xlane.f32.xlu0 %v1426
    %v1428 = vpop.xlane.xlu0 %1427
    %v1429 = vrcp.pop %v1428
    %v1430 = vmul.f32 %v1425, %v1429
    %v1431 = vpack.c.bf16 %v1430, %v1430
    %1432 = vrot.lane.b32.xlu0 %v1316, 112
    %v1433 = vpop.permute.xlu0 %1432
    %v1435 = vsel %vm1050, %v1431, 0
    %v1438 = vsel %vm1071, %v1433, 0
    %1440 = vmatpush.bf16.msra.mxu0 0
    %1441 = vmatpush.bf16.msra.mxu0 0
    %1442 = vmatpush.bf16.msra.mxu0 0
    %1443 = vmatpush.bf16.msra.mxu0 0
    %1444 = vmatpush.bf16.msra.mxu0 0
    %1445 = vmatpush.bf16.msra.mxu0 0
    %1446 = vmatpush.bf16.msra.mxu0 0
    %1447 = vmatpush.bf16.msra.mxu0 %v1438
    %1448 = vmatmul.bf16.gmra.mxu0 %v1435
    %v1449 = vpop.f32.mrf.mxu0
    %v1450 = vadd.f32 0.0, %v1449
    %v1451 = vpop.f32.mrf.mxu0
    %1452 = vdwg.mxu0
    %1453 = vrot.lane.b32.xlu0 %v1338, 104
    %v1454 = vpop.permute.xlu0 %1453
    %1455 = vrot.lane.b32.xlu0 %v1280, 104
    %v1456 = vpop.permute.xlu0 %1455
    %v1458 = vsel %vm282, %v1454, 0
    %v1461 = vsel %vm282, %v1456, 0
    %1463 = vmatpush.bf16.xpose.msra.mxu0 0
    %1464 = vmatpush.bf16.xpose.msra.mxu0 0
    %1465 = vmatpush.bf16.xpose.msra.mxu0 0
    %1466 = vmatpush.bf16.xpose.msra.mxu0 0
    %1467 = vmatpush.bf16.xpose.msra.mxu0 0
    %1468 = vmatpush.bf16.xpose.msra.mxu0 0
    %1469 = vmatpush.bf16.xpose.msra.mxu0 0
    %1470 = vmatpush.bf16.xpose.msra.mxu0 %v1461
    %1471 = vmatmul.bf16.gmra.mxu0 %v1458
    %v1472 = vpop.f32.mrf.mxu0
    %v1473 = vadd.f32 0.0, %v1472
    %v1474 = vpop.f32.mrf.mxu0
    %1475 = vdwg.mxu0
    %v1476 = vmul.f32 %v1473, 0.35355338
    %v1477 = vsel %vm1050, %v1476, -inf
    %1478 = vmax.xlane.f32.xlu0 %v1477
    %v1479 = vpop.xlane.xlu0 %1478
    %v1480 = vsub.f32 %v1476, %v1479
    %v1481 = vmul.f32 %v1480, 1.442695
    %v1482 = vpow.pop %v1481
    %v1483 = vsel %vm1050, %v1482, 0.0
    %1484 = vadd.xlane.f32.xlu0 %v1483
    %v1485 = vpop.xlane.xlu0 %1484
    %v1486 = vrcp.pop %v1485
    %v1487 = vmul.f32 %v1482, %v1486
    %v1488 = vpack.c.bf16 %v1487, %v1487
    %1489 = vrot.lane.b32.xlu0 %v1316, 104
    %v1490 = vpop.permute.xlu0 %1489
    %v1492 = vsel %vm1050, %v1488, 0
    %v1495 = vsel %vm1071, %v1490, 0
    %1497 = vmatpush.bf16.msra.mxu0 0
    %1498 = vmatpush.bf16.msra.mxu0 0
    %1499 = vmatpush.bf16.msra.mxu0 0
    %1500 = vmatpush.bf16.msra.mxu0 0
    %1501 = vmatpush.bf16.msra.mxu0 0
    %1502 = vmatpush.bf16.msra.mxu0 0
    %1503 = vmatpush.bf16.msra.mxu0 0
    %1504 = vmatpush.bf16.msra.mxu0 %v1495
    %1505 = vmatmul.bf16.gmra.mxu0 %v1492
    %v1506 = vpop.f32.mrf.mxu0
    %v1507 = vadd.f32 0.0, %v1506
    %v1508 = vpop.f32.mrf.mxu0
    %1509 = vdwg.mxu0
    %1511 = vrot.lane.b32.xlu0 %v1393, 8
    %v1512 = vpop.permute.xlu0 %1511
    %1515 = vrot.lane.b32.xlu0 %v1450, 16
    %v1516 = vpop.permute.xlu0 %1515
    %1519 = vrot.lane.b32.xlu0 %v1507, 24
    %v1520 = vpop.permute.xlu0 %1519
    %v1522 = vsel %vm282, %v1333, %v1512
    %v1523 = vsel %vm532, %v1522, %v1516
    %v1524 = vsel %vm534, %v1523, %v1520
    %v1525 = vpack.c.bf16 %v1524, %v1276
    %v1527 = vperm.slane %v902, 0
    %v1533 = vunpack.c.l.b16 %v898
    %v1534 = vunpack.c.l.b16 %v899
    %v1535 = vunpack.c.l.b16 %v900
    %v1536 = vunpack.c.l.b16 %v901
    %v1537 = vpack.c.b16 %v1534, %v1533
    %v1538 = vpack.c.b16 %v1536, %v1535
    %v1542 = vsel %vm194, %v1525, 0
    %1544 = vmatpush.bf16.msra.mxu0 0
    %1545 = vmatpush.bf16.msra.mxu0 0
    %1546 = vmatpush.bf16.msra.mxu0 0
    %1547 = vmatpush.bf16.msra.mxu0 0
    %1548 = vmatpush.bf16.msra.mxu0 0
    %1549 = vmatpush.bf16.msra.mxu0 0
    %1550 = vmatpush.bf16.msra.mxu0 %v1538
    %1551 = vmatpush.bf16.msra.mxu0 %v1537
    %1552 = vmatmul.bf16.gmra.mxu0 %v1542
    %v1553 = vpop.f32.mrf.mxu0
    %v1554 = vadd.f32 %v1527, %v1553
    %v1555 = vpop.f32.mrf.mxu0
    %v1556 = vadd.f32 %v1527, %v1555
    %1557 = vdwg.mxu0
    %v1558 = vadd.f32 %v880, %v1554
    %v1559 = vadd.f32 %v881, %v1556
    %v1560 = vsel %vm194, %v1558, 0.0
    %1561 = vadd.xlane.f32.xlu0 %v1560
    %v1562 = vpop.xlane.xlu0 %1561
    %v1563 = vsel %vm194, %v1559, 0.0
    %1564 = vadd.xlane.f32.xlu0 %v1563
    %v1565 = vpop.xlane.xlu0 %1564
    %v1566 = vmul.f32 %v1562, %v833
    %v1567 = vmul.f32 %v1565, %v833
    %v1568 = vsub.f32 %v1558, %v1566
    %v1569 = vsub.f32 %v1559, %v1567
    %v1570 = vmul.f32 %v1568, %v1568
    %v1571 = vmul.f32 %v1569, %v1569
    %v1572 = vsel %vm194, %v1570, 0.0
    %1573 = vadd.xlane.f32.xlu0 %v1572
    %v1574 = vpop.xlane.xlu0 %1573
    %v1575 = vsel %vm194, %v1571, 0.0
    %1576 = vadd.xlane.f32.xlu0 %v1575
    %v1577 = vpop.xlane.xlu0 %1576
    %v1578 = vmul.f32 %v1574, %v833
    %v1579 = vmul.f32 %v1577, %v833
    %v1580 = vadd.f32 %v1578, 1e-05
    %v1581 = vadd.f32 %v1579, 1e-05
    %v1582 = vrsqrt.pop %v1580
    %v1583 = vmul.f32 %v1582, %v1580
    %v1584 = vmul.f32 %v1583, %v1582
    %v1585 = vmul.f32 0.5, %v1584
    %v1586 = vsub.f32 1.5, %v1585
    %v1587 = vmul.f32 %v1582, %v1586
    %vm1588 = vweird.f32 %v1580
    %vm1589 = vweird.f32 %v1582
    %vm1590 = vmor %vm1588, %vm1589
    %v1591 = vsel %vm1590, %v1582, %v1587
    %v1592 = vrsqrt.pop %v1581
    %v1593 = vmul.f32 %v1592, %v1581
    %v1594 = vmul.f32 %v1593, %v1592
    %v1595 = vmul.f32 0.5, %v1594
    %v1596 = vsub.f32 1.5, %v1595
    %v1597 = vmul.f32 %v1592, %v1596
    %vm1598 = vweird.f32 %v1581
    %vm1599 = vweird.f32 %v1592
    %vm1600 = vmor %vm1598, %vm1599
    %v1601 = vsel %vm1600, %v1592, %v1597
    %v1602 = vmul.f32 %v1568, %v1591
    %v1603 = vmul.f32 %v1569, %v1601
    %v1605 = vperm.slane %v903, 0
    %v1607 = vmul.f32 %v1602, %v1605
    %v1608 = vmul.f32 %v1603, %v1605
    %v1610 = vperm.slane %v904, 0
    %v1612 = vadd.f32 %v1607, %v1610
    %v1613 = vadd.f32 %v1608, %v1610
    %v1614 = vld [vmem:[%s22] sm:$0xf]
    %v1615 = vld [vmem:[%s22 + $0x4] sm:$0xf]
    %v1616 = vld [vmem:[%s22 + $0x8] sm:$0xf]
    %v1617 = vld [vmem:[%s22 + $0xc] sm:$0xf]
    %v1618 = vld [vmem:[#allocation2] sm:$0x1]
    %v1619 = vld [vmem:[%s24] sm:$0xf]
    %v1620 = vld [vmem:[%s24 + $0x4] sm:$0xf]
    %v1621 = vld [vmem:[%s24 + $0x8] sm:$0xf]
    %v1622 = vld [vmem:[%s24 + $0xc] sm:$0xf]
    %v1623 = vld [vmem:[%s24 + $0x10] sm:$0xf]
    %v1624 = vld [vmem:[%s24 + $0x14] sm:$0xf]
    %v1625 = vld [vmem:[%s24 + $0x18] sm:$0xf]
    %v1626 = vld [vmem:[%s24 + $0x1c] sm:$0xf]
    %v1627 = vld [vmem:[#allocation4] sm:$0x1]
    %v1628 = vld [vmem:[#allocation6] sm:$0x1]
    %v1629 = vld [vmem:[#allocation7] sm:$0x1]
    %v1630 = vpack.c.bf16 %v1613, %v1612
    %v1632 = vperm.slane %v1618, 0
    %v1638 = vunpack.c.l.b16 %v1614
    %v1639 = vunpack.c.l.b16 %v1615
    %v1640 = vunpack.c.l.b16 %v1616
    %v1641 = vunpack.c.l.b16 %v1617
    %v1642 = vpack.c.b16 %v1639, %v1638
    %v1643 = vpack.c.b16 %v1641, %v1640
    %v1647 = vsel %vm194, %v1630, 0
    %1649 = vmatpush.bf16.msra.mxu0 0
    %1650 = vmatpush.bf16.msra.mxu0 0
    %1651 = vmatpush.bf16.msra.mxu0 0
    %1652 = vmatpush.bf16.msra.mxu0 0
    %1653 = vmatpush.bf16.msra.mxu0 0
    %1654 = vmatpush.bf16.msra.mxu0 0
    %1655 = vmatpush.bf16.msra.mxu0 %v1643
    %1656 = vmatpush.bf16.msra.mxu0 %v1642
    %1657 = vmatmul.bf16.gmra.mxu0 %v1647
    %v1658 = vpop.f32.mrf.mxu0
    %v1659 = vadd.f32 %v1632, %v1658
    %v1660 = vpop.f32.mrf.mxu0
    %v1661 = vadd.f32 %v1632, %v1660
    %1662 = vdwg.mxu0
    %v1663 = vmax.f32 %v1659, 0.0
    %v1664 = vmax.f32 %v1661, 0.0
    %v1665 = vpack.c.bf16 %v1664, %v1663
    %v1674 = vunpack.c.l.b16 %v1619
    %v1675 = vunpack.c.l.b16 %v1620
    %v1676 = vunpack.c.l.b16 %v1621
    %v1677 = vunpack.c.l.b16 %v1622
    %v1678 = vunpack.c.l.b16 %v1623
    %v1679 = vunpack.c.l.b16 %v1624
    %v1680 = vunpack.c.l.b16 %v1625
    %v1681 = vunpack.c.l.b16 %v1626
    %v1682 = vpack.c.b16 %v1675, %v1674
    %v1683 = vpack.c.b16 %v1677, %v1676
    %v1684 = vpack.c.b16 %v1679, %v1678
    %v1685 = vpack.c.b16 %v1681, %v1680
    %vm1690 = vcmask 523264
    %v1692 = vsel %vm1690, %v1665, 0
    %1694 = vmatpush.bf16.msra.mxu0 0
    %1695 = vmatpush.bf16.msra.mxu0 0
    %1696 = vmatpush.bf16.msra.mxu0 0
    %1697 = vmatpush.bf16.msra.mxu0 0
    %1698 = vmatpush.bf16.msra.mxu0 %v1685
    %1699 = vmatpush.bf16.msra.mxu0 %v1684
    %1700 = vmatpush.bf16.msra.mxu0 %v1683
    %1701 = vmatpush.bf16.msra.mxu0 %v1682
    %1702 = vmatmul.bf16.gmra.mxu0 %v1692
    %v1703 = vpop.f32.mrf.mxu0
    %v1704 = vadd.f32 0.0, %v1703
    %v1705 = vpop.f32.mrf.mxu0
    %v1706 = vadd.f32 0.0, %v1705
    %1707 = vdwg.mxu0
    %v1708 = vadd.f32 %v1612, %v1704
    %v1709 = vadd.f32 %v1613, %v1706
    %v1711 = vperm.slane %v1627, 0
    %v1713 = vadd.f32 %v1708, %v1711
    %v1714 = vadd.f32 %v1709, %v1711
    %v1715 = vsel %vm194, %v1713, 0.0
    %1716 = vadd.xlane.f32.xlu0 %v1715
    %v1717 = vpop.xlane.xlu0 %1716
    %v1718 = vsel %vm194, %v1714, 0.0
    %1719 = vadd.xlane.f32.xlu0 %v1718
    %v1720 = vpop.xlane.xlu0 %1719
    %v1721 = vmul.f32 %v1717, %v833
    %v1722 = vmul.f32 %v1720, %v833
    %v1723 = vsub.f32 %v1713, %v1721
    %v1724 = vsub.f32 %v1714, %v1722
    %v1725 = vmul.f32 %v1723, %v1723
    %v1726 = vmul.f32 %v1724, %v1724
    %v1727 = vsel %vm194, %v1725, 0.0
    %1728 = vadd.xlane.f32.xlu0 %v1727
    %v1729 = vpop.xlane.xlu0 %1728
    %v1730 = vsel %vm194, %v1726, 0.0
    %1731 = vadd.xlane.f32.xlu0 %v1730
    %v1732 = vpop.xlane.xlu0 %1731
    %v1733 = vmul.f32 %v1729, %v833
    %v1734 = vmul.f32 %v1732, %v833
    %v1735 = vadd.f32 %v1733, 1e-05
    %v1736 = vadd.f32 %v1734, 1e-05
    %v1737 = vrsqrt.pop %v1735
    %v1738 = vmul.f32 %v1737, %v1735
    %v1739 = vmul.f32 %v1738, %v1737
    %v1740 = vmul.f32 0.5, %v1739
    %v1741 = vsub.f32 1.5, %v1740
    %v1742 = vmul.f32 %v1737, %v1741
    %vm1743 = vweird.f32 %v1735
    %vm1744 = vweird.f32 %v1737
    %vm1745 = vmor %vm1743, %vm1744
    %v1746 = vsel %vm1745, %v1737, %v1742
    %v1747 = vrsqrt.pop %v1736
    %v1748 = vmul.f32 %v1747, %v1736
    %v1749 = vmul.f32 %v1748, %v1747
    %v1750 = vmul.f32 0.5, %v1749
    %v1751 = vsub.f32 1.5, %v1750
    %v1752 = vmul.f32 %v1747, %v1751
    %vm1753 = vweird.f32 %v1736
    %vm1754 = vweird.f32 %v1747
    %vm1755 = vmor %vm1753, %vm1754
    %v1756 = vsel %vm1755, %v1747, %v1752
    %v1757 = vmul.f32 %v1723, %v1746
    %v1758 = vmul.f32 %v1724, %v1756
    %v1760 = vperm.slane %v1628, 0
    %v1762 = vmul.f32 %v1757, %v1760
    %v1763 = vmul.f32 %v1758, %v1760
    %v1765 = vperm.slane %v1629, 0
    %v1767 = vadd.f32 %v1762, %v1765
    %v1768 = vadd.f32 %v1763, %v1765
    %v1769 = vpack.c.bf16 %v1767, %v1767
    %v1770 = vpack.c.bf16 %v1768, %v1768
    %vm1771 = vcmask 257024
    %1772 = vst.msk [vmem:[%s28] sm:$0xf] %vm1771, %v1769
    %1773 = vst.msk [vmem:[%s28 + $0x4] sm:$0xf] %vm1771, %v1770
    // Predicated region
    $region130: #{transformer_forward.7} parent=1 // pred_check
      _
    $region131: #{transformer_forward.7} parent=1 // pred_check_branch
      %1775 = sbr.rel (0) target = $region133
    $region132: #{transformer_forward.7} parent=1 // pred_region
      _
    $region133: #{transformer_forward.7} parent=1 // pred_fallthru
      _
    // Predicated region
    $region134: #{transformer_forward.7} parent=1 // pred_check
      _
    $region135: #{transformer_forward.7} parent=1 // pred_check_branch
      %1777 = sbr.rel (0) target = $region137
    $region136: #{transformer_forward.7} parent=1 // pred_region
      _
    $region137: #{transformer_forward.7} parent=1 // pred_fallthru
      _
    %1778 = vsyncpa [#allocation3], 1
    %1779 = vsyncpa [#allocation5], 1
    %1780 = vsyncpa [#allocation8], 1

// kernel: transformer_forward.9
$region0: #{transformer_forward.9}
  #allocation0 [shape = 'u32[]', space=smem, size = 0x4, offset = 0x4, fixed_abs, tag = 'smem constant byte address 0x4 - core index']
  #allocation1 [shape = 'u32[72,128]{1,0:T(1,128)}', space=vmem, size = 0x9000, scoped, tag = 'internal scratch']
  %s0 = inlined_call_operand.vmem [shape: bf16[16,32], index: 0, kind: input, shape index: {}]
  %s1 = inlined_call_operand.hbm [shape: f32[1,32], index: 1, kind: input, shape index: {}]
  %s2 = inlined_call_operand.hbm [shape: f32[1,32], index: 2, kind: input, shape index: {}]
  %s3 = inlined_call_operand.vmem [shape: bf16[32,128], index: 3, kind: input, shape index: {}]
  %s4 = inlined_call_operand.hbm [shape: f32[1,128], index: 4, kind: input, shape index: {}]
  %s5 = inlined_call_operand.vmem [shape: f32[16,128], index: 5, kind: output, shape index: {}]
  %s6 = sld [smem:[#allocation0]]
  $region42: #{transformer_forward.9} parent=0
    _
  %s8 = ssub.s32 1, %s6
  %s9 = scalar_select 0, %s8, %s6
  $region1: #{transformer_forward.9} parent=0
    #allocation2 [shape = 'u8[512]{0}', space=vmem, size = 0x400, scoped, tag = 'input window, operand 1, single buffered']
    #allocation3 [shape = 's32[1]{0}', space=sflag, size = 0x4, scoped, tag = 'scoped memory for transformer_forward.9']
    #allocation4 [shape = 'u8[512]{0}', space=vmem, size = 0x400, scoped, tag = 'input window, operand 2, single buffered']
    #allocation5 [shape = 's32[1]{0}', space=sflag, size = 0x4, scoped, tag = 'scoped memory for transformer_forward.9']
    #allocation6 [shape = 'u8[512]{0}', space=vmem, size = 0x400, scoped, tag = 'input window, operand 4, single buffered']
    %10 = vsyncpa [#allocation3], 0
    %11 = vsyncpa [#allocation5], 0
    // Predicated region
    $region2: #{transformer_forward.9} parent=1 // pred_check
      _
    $region3: #{transformer_forward.9} parent=1 // pred_check_branch
      %13 = sbr.rel (0) target = $region5
    $region4: #{transformer_forward.9} parent=1 // pred_region
      _
    $region5: #{transformer_forward.9} parent=1 // pred_fallthru
      _
    // Predicated region
    $region6: #{transformer_forward.9} parent=1 // pred_check
      _
    $region7: #{transformer_forward.9} parent=1 // pred_check_branch
      %15 = sbr.rel (0) target = $region9
    $region8: #{transformer_forward.9} parent=1 // pred_region
      %17 = vsyncadd [#allocation3], 0
      %s19 = sshll.u32 %s1, 4
      %s20 = int_to_ptr.hbm [resolvable:$true] %s19
      %s21 = sshll.u32 [#allocation2], 4
      %s22 = int_to_ptr.vmem [resolvable:$true] %s21
      %24 = dma.hbm_to_vmem [thread:$0]  %s20, 16, %s22, [#allocation3]
    $region9: #{transformer_forward.9} parent=1 // pred_fallthru
      _
    // Predicated region
    $region10: #{transformer_forward.9} parent=1 // pred_check
      _
    $region11: #{transformer_forward.9} parent=1 // pred_check_branch
      %26 = sbr.rel (0) target = $region13
    $region12: #{transformer_forward.9} parent=1 // pred_region
      %28 = vsyncadd [#allocation5], 0
      %s30 = sshll.u32 %s2, 4
      %s31 = int_to_ptr.hbm [resolvable:$true] %s30
      %s32 = sshll.u32 [#allocation4], 4
      %s33 = int_to_ptr.vmem [resolvable:$true] %s32
      %35 = dma.hbm_to_vmem [thread:$0]  %s31, 16, %s33, [#allocation5]
    $region13: #{transformer_forward.9} parent=1 // pred_fallthru
      _
    // Predicated region
    $region14: #{transformer_forward.9} parent=1 // pred_check
      _
    $region15: #{transformer_forward.9} parent=1 // pred_check_branch
      %37 = sbr.rel (0) target = $region17
    $region16: #{transformer_forward.9} parent=1 // pred_region
      _
    $region17: #{transformer_forward.9} parent=1 // pred_fallthru
      _
    // Predicated region
    $region18: #{transformer_forward.9} parent=1 // pred_check
      _
    $region19: #{transformer_forward.9} parent=1 // pred_check_branch
      %39 = sbr.rel (0) target = $region21
    $region20: #{transformer_forward.9} parent=1 // pred_region
      %41 = vsyncadd [#allocation5], 0
      %s43 = sshll.u32 %s4, 4
      %s44 = int_to_ptr.hbm [resolvable:$true] %s43
      %s45 = sshll.u32 [#allocation6], 4
      %s46 = int_to_ptr.vmem [resolvable:$true] %s45
      %48 = dma.hbm_to_vmem [thread:$0]  %s44, 16, %s46, [#allocation5]
    $region21: #{transformer_forward.9} parent=1 // pred_fallthru
      _
    // Predicated region
    $region22: #{transformer_forward.9} parent=1 // pred_check
      _
    $region23: #{transformer_forward.9} parent=1 // pred_check_branch
      %50 = sbr.rel (0) target = $region25
    $region24: #{transformer_forward.9} parent=1 // pred_region
      %52 = dma.done [#allocation3], 16
    $region25: #{transformer_forward.9} parent=1 // pred_fallthru
      _
    // Predicated region
    $region26: #{transformer_forward.9} parent=1 // pred_check
      _
    $region27: #{transformer_forward.9} parent=1 // pred_check_branch
      %54 = sbr.rel (0) target = $region29
    $region28: #{transformer_forward.9} parent=1 // pred_region
      %56 = dma.done [#allocation5], 16
    $region29: #{transformer_forward.9} parent=1 // pred_fallthru
      _
    // Predicated region
    $region30: #{transformer_forward.9} parent=1 // pred_check
      _
    $region31: #{transformer_forward.9} parent=1 // pred_check_branch
      %58 = sbr.rel (0) target = $region33
    $region32: #{transformer_forward.9} parent=1 // pred_region
      %60 = dma.done [#allocation5], 16
    $region33: #{transformer_forward.9} parent=1 // pred_fallthru
      _
    %v62 = vld [vmem:[%s0] sm:$0xf]
    %v63 = vld [vmem:[%s0 + $0x4] sm:$0xf]
    %v64 = vunpack.c.l.bf16 %v62
    %v65 = vunpack.c.l.bf16 %v63
    %v66 = vld [vmem:[#allocation2] sm:$0x1]
    %v67 = vld [vmem:[#allocation4] sm:$0x1]
    %vm68 = vcmask 261120
    %v69 = vsel %vm68, %v64, 0.0
    %70 = vadd.xlane.f32.xlu0 %v69
    %v71 = vpop.xlane.xlu0 %70
    %v72 = vsel %vm68, %v65, 0.0
    %73 = vadd.xlane.f32.xlu0 %v72
    %v74 = vpop.xlane.xlu0 %73
    %v75 = vrcp.pop 32.0
    %v76 = vmul.f32 32.0, %v75
    %v77 = vsub.f32 1.0, %v76
    %v78 = vmul.f32 %v75, %v77
    %v79 = vadd.f32 %v75, %v78
    %vm80 = vweird.f32 %v75
    %v81 = vsel %vm80, %v75, %v79
    %v82 = vmul.f32 %v71, %v81
    %v83 = vmul.f32 %v74, %v81
    %v84 = vsub.f32 %v64, %v82
    %v85 = vsub.f32 %v65, %v83
    %v86 = vmul.f32 %v84, %v84
    %v87 = vmul.f32 %v85, %v85
    %v88 = vsel %vm68, %v86, 0.0
    %89 = vadd.xlane.f32.xlu0 %v88
    %v90 = vpop.xlane.xlu0 %89
    %v91 = vsel %vm68, %v87, 0.0
    %92 = vadd.xlane.f32.xlu0 %v91
    %v93 = vpop.xlane.xlu0 %92
    %v94 = vmul.f32 %v90, %v81
    %v95 = vmul.f32 %v93, %v81
    %v96 = vadd.f32 %v94, 1e-05
    %v97 = vadd.f32 %v95, 1e-05
    %v98 = vrsqrt.pop %v96
    %v99 = vmul.f32 %v98, %v96
    %v100 = vmul.f32 %v99, %v98
    %v101 = vmul.f32 0.5, %v100
    %v102 = vsub.f32 1.5, %v101
    %v103 = vmul.f32 %v98, %v102
    %vm104 = vweird.f32 %v96
    %vm105 = vweird.f32 %v98
    %vm106 = vmor %vm104, %vm105
    %v107 = vsel %vm106, %v98, %v103
    %v108 = vrsqrt.pop %v97
    %v109 = vmul.f32 %v108, %v97
    %v110 = vmul.f32 %v109, %v108
    %v111 = vmul.f32 0.5, %v110
    %v112 = vsub.f32 1.5, %v111
    %v113 = vmul.f32 %v108, %v112
    %vm114 = vweird.f32 %v97
    %vm115 = vweird.f32 %v108
    %vm116 = vmor %vm114, %vm115
    %v117 = vsel %vm116, %v108, %v113
    %v118 = vmul.f32 %v84, %v107
    %v119 = vmul.f32 %v85, %v117
    %v121 = vperm.slane %v66, 0
    %v123 = vmul.f32 %v118, %v121
    %v124 = vmul.f32 %v119, %v121
    %v126 = vperm.slane %v67, 0
    %v128 = vadd.f32 %v123, %v126
    %v129 = vadd.f32 %v124, %v126
    %v130 = vpack.c.bf16 %v129, %v128
    %v131 = vld [vmem:[%s3] sm:$0xf]
    %v132 = vld [vmem:[%s3 + $0x4] sm:$0xf]
    %v133 = vld [vmem:[%s3 + $0x8] sm:$0xf]
    %v134 = vld [vmem:[%s3 + $0xc] sm:$0xf]
    %v135 = vld [vmem:[#allocation6] sm:$0x1]
    %v137 = vperm.slane %v135, 0
    %v143 = vunpack.c.l.b16 %v131
    %v144 = vunpack.c.l.b16 %v132
    %v145 = vunpack.c.l.b16 %v133
    %v146 = vunpack.c.l.b16 %v134
    %v147 = vpack.c.b16 %v144, %v143
    %v148 = vpack.c.b16 %v146, %v145
    %v152 = vsel %vm68, %v130, 0
    %154 = vmatpush.bf16.msra.mxu0 0
    %155 = vmatpush.bf16.msra.mxu0 0
    %156 = vmatpush.bf16.msra.mxu0 0
    %157 = vmatpush.bf16.msra.mxu0 0
    %158 = vmatpush.bf16.msra.mxu0 0
    %159 = vmatpush.bf16.msra.mxu0 0
    %160 = vmatpush.bf16.msra.mxu0 %v148
    %161 = vmatpush.bf16.msra.mxu0 %v147
    %162 = vmatmul.bf16.gmra.mxu0 %v152
    %v163 = vpop.f32.mrf.mxu0
    %v164 = vadd.f32 %v137, %v163
    %v165 = vpop.f32.mrf.mxu0
    %v166 = vadd.f32 %v137, %v165
    %167 = vdwg.mxu0
    %168 = vst [vmem:[%s5] sm:$0xff] %v164
    %169 = vst [vmem:[%s5 + $0x8] sm:$0xff] %v166
    // Predicated region
    $region34: #{transformer_forward.9} parent=1 // pred_check
      _
    $region35: #{transformer_forward.9} parent=1 // pred_check_branch
      %171 = sbr.rel (0) target = $region37
    $region36: #{transformer_forward.9} parent=1 // pred_region
      _
    $region37: #{transformer_forward.9} parent=1 // pred_fallthru
      _
    // Predicated region
    $region38: #{transformer_forward.9} parent=1 // pred_check
      _
    $region39: #{transformer_forward.9} parent=1 // pred_check_branch
      %173 = sbr.rel (0) target = $region41
    $region40: #{transformer_forward.9} parent=1 // pred_region
      _
    $region41: #{transformer_forward.9} parent=1 // pred_fallthru
      _
    %174 = vsyncpa [#allocation3], 1
    %175 = vsyncpa [#allocation5], 1

</llo_original>
